<compile_context>
chip_gen: v7x
topology: tpu7x:2x2x1
jax: 0.10.0
libtpu: 0.0.40
codegen_flags: <defaults>
</compile_context>

<pallas_src>
import functools

import jax
import jax.numpy as jnp
from jax.experimental import pallas as pl
from jax.experimental.pallas import tpu as pltpu


# ----------------------------------------------------------------------------
# Fused kernel: conv1 + relu + pool + conv2 + relu + pool + fc + relu
# ----------------------------------------------------------------------------
def _network_kernel(xs_ref, w1_ref, b1_ref, w2_ref, b2_ref, fcw_ref, fcb_ref,
                    o_ref, *, K, Lp1h, Lp2):
    C1 = w1_ref.shape[1]
    C2 = w2_ref.shape[1]
    NF = o_ref.shape[-1]

    # ---- layer 1: Conv2d(1xK) + ReLU + MaxPool(1x2, stride 2) --------------
    # xs_ref[0, s] holds the modulo-4 time stream s of this sample, so
    #   conv1[4*i + r] = sum_k W1_k @ x_{(r+k)%4}[:, (r+k)//4 + i]
    # accs[r][:, i] accumulates conv1 at output position 4*i + r.
    accs = [jnp.zeros((C1, Lp1h), jnp.float32) for _ in range(4)]
    for k in range(K):
        wk = w1_ref[k]                                  # (C1, Cin)
        for r in range(4):
            v = r + k
            s, q = v % 4, v // 4
            xsl = xs_ref[0, s, :, q:q + Lp1h]           # (Cin, Lp1h)
            accs[r] = accs[r] + jnp.dot(wk, xsl,
                                        preferred_element_type=jnp.float32)
    b1 = b1_ref[...]                                    # (C1, 1)
    # pooled1 even / odd time streams (length Lp1h each), relu(max(.,.) + b)
    p1e = jnp.maximum(jnp.maximum(accs[0], accs[1]) + b1, 0.0)   # pooled1[2i]
    p1o = jnp.maximum(jnp.maximum(accs[2], accs[3]) + b1, 0.0)   # pooled1[2i+1]

    # ---- layer 2: Conv2d(1xK) + ReLU + MaxPool(1x2, stride 2) --------------
    acc_e = jnp.zeros((C2, Lp2), jnp.float32)           # conv2 at 2j
    acc_o = jnp.zeros((C2, Lp2), jnp.float32)           # conv2 at 2j+1
    for k in range(K):
        wk = w2_ref[k]                                  # (C2, C1)
        if k % 2 == 0:
            m = k // 2
            acc_e = acc_e + jnp.dot(wk, p1e[:, m:m + Lp2],
                                    preferred_element_type=jnp.float32)
            acc_o = acc_o + jnp.dot(wk, p1o[:, m:m + Lp2],
                                    preferred_element_type=jnp.float32)
        else:
            m = (k - 1) // 2
            acc_e = acc_e + jnp.dot(wk, p1o[:, m:m + Lp2],
                                    preferred_element_type=jnp.float32)
            acc_o = acc_o + jnp.dot(wk, p1e[:, m + 1:m + 1 + Lp2],
                                    preferred_element_type=jnp.float32)
    b2 = b2_ref[...]                                    # (C2, 1)
    p2 = jnp.maximum(jnp.maximum(acc_e, acc_o) + b2, 0.0)        # (C2, Lp2)

    # ---- fc + relu ----------------------------------------------------------
    # feat[o] = sum_{c,t} p2[c, t] * fc_w[o, c*Lp2 + t]  (torch channel-major
    # flatten).  fcw_ref[t] is the (C2, NF) weight slab for time step t.
    acc = jnp.zeros((C2, NF), jnp.float32)
    for t in range(Lp2):
        acc = acc + p2[:, t:t + 1] * fcw_ref[t]         # (C2, NF)
    feat = jnp.sum(acc, axis=0, keepdims=True)          # (1, NF)
    o_ref[0] = jnp.maximum(feat + fcb_ref[...], 0.0).astype(o_ref.dtype)


# ----------------------------------------------------------------------------
# Parameter preparation (done once, outside the jitted forward)
# ----------------------------------------------------------------------------
def prepare_params(conv1_w, conv1_b, conv2_w, conv2_b, fc_w, fc_b):
    C1, Cin, _, K = conv1_w.shape
    C2 = conv2_w.shape[0]
    NF, FCIN = fc_w.shape
    Lp2 = FCIN // C2
    w1 = jnp.transpose(conv1_w[:, :, 0, :], (2, 0, 1))           # (K, C1, Cin)
    w2 = jnp.transpose(conv2_w[:, :, 0, :], (2, 0, 1))           # (K, C2, C1)
    b1 = conv1_b.reshape(C1, 1)
    b2 = conv2_b.reshape(C2, 1)
    fcw = jnp.transpose(fc_w.reshape(NF, C2, Lp2), (2, 1, 0))    # (Lp2, C2, NF)
    fcb = fc_b.reshape(1, NF)
    return w1, b1, w2, b2, fcw, fcb


# ----------------------------------------------------------------------------
# Jitted forward: input restructuring glue + single fused pallas_call
# ----------------------------------------------------------------------------
@jax.jit
def network_forward(x_nchw, w1, b1, w2, b2, fcw, fcb):
    B, Cin, _, L = x_nchw.shape
    K, C1, _ = w1.shape
    C2 = w2.shape[1]
    Lp2, _, NF = fcw.shape

    Lc1 = L - K + 1                 # conv1 output length
    Lp1 = Lc1 // 2                  # pool1 output length (floor)
    assert Lp1 % 2 == 0, "this fused kernel assumes an even pooled-1 length"
    Lp1h = Lp1 // 2
    assert (Lp1 - K + 1) // 2 == Lp2, "fc_size inconsistent with input length"

    # One-time modulo-4 deinterleave of the raw input time axis -> (B,4,Cin,N4)
    N4 = Lp1h + (K + 2) // 4
    assert 4 * (N4 - 1) + 3 <= L - 1
    x = x_nchw[:, :, 0, :]                               # (B, Cin, L)
    xs = jnp.stack([x[:, :, s:s + 4 * (N4 - 1) + 1:4] for s in range(4)],
                   axis=1)                               # (B, 4, Cin, N4)

    kernel = functools.partial(_network_kernel, K=K, Lp1h=Lp1h, Lp2=Lp2)
    out = pl.pallas_call(
        kernel,
        out_shape=jax.ShapeDtypeStruct((B, 1, NF), jnp.float32),
        grid=(B,),
        in_specs=[
            pl.BlockSpec((1, 4, Cin, N4), lambda i: (i, 0, 0, 0)),
            pl.BlockSpec((K, C1, Cin), lambda i: (0, 0, 0)),
            pl.BlockSpec((C1, 1), lambda i: (0, 0)),
            pl.BlockSpec((K, C2, C1), lambda i: (0, 0, 0)),
            pl.BlockSpec((C2, 1), lambda i: (0, 0)),
            pl.BlockSpec((Lp2, C2, NF), lambda i: (0, 0, 0)),
            pl.BlockSpec((1, NF), lambda i: (0, 0)),
        ],
        out_specs=pl.BlockSpec((1, 1, NF), lambda i: (i, 0, 0)),
        compiler_params=pltpu.CompilerParams(dimension_semantics=("parallel",)),
    )(xs, w1, b1, w2, b2, fcw, fcb)
    return out[:, 0, :]


# ----------------------------------------------------------------------------
# Pure-JAX reference (same math, no Pallas) for validation
# ----------------------------------------------------------------------------
def network_ref(x_nchw, conv1_w, conv1_b, conv2_w, conv2_b, fc_w, fc_b):
    hp = jax.lax.Precision.HIGHEST
    x = x_nchw[:, :, 0, :]                               # (B, C, L)
    for w_pt, b_pt in ((conv1_w, conv1_b), (conv2_w, conv2_b)):
        Cout, Cin, _, K = w_pt.shape
        B, _, L = x.shape
        Lc = L - K + 1
        conv = jnp.zeros((B, Cout, Lc), jnp.float32)
        for k in range(K):
            conv = conv + jnp.einsum('bcl,oc->bol', x[:, :, k:k + Lc],
                                     w_pt[:, :, 0, k], precision=hp)
        conv = conv + b_pt[None, :, None]
        h = jnp.maximum(conv, 0.0)
        Lp = (Lc - 2) // 2 + 1
        x = jnp.maximum(h[:, :, 0:2 * Lp:2], h[:, :, 1:2 * Lp:2])
    flat = x.reshape(x.shape[0], -1)
    return jnp.maximum(jnp.dot(flat, fc_w.T, precision=hp) + fc_b[None, :], 0.0)


# ----------------------------------------------------------------------------
if __name__ == "__main__":
    # dsads config: in_size=45, ker_size=9, fc_size=32*25  =>  input W = 125.
    B, C_IN, H, L = 2, 45, 1, 125
    K = 9
    N_FEATURE = 64
    FC_IN = 32 * 25

    key = jax.random.PRNGKey(0)
    keys = jax.random.split(key, 7)

    def uinit(k, shape, fan_in):
        bound = 1.0 / (fan_in ** 0.5)
        return jax.random.uniform(k, shape, jnp.float32, -bound, bound)

    conv1_w = uinit(keys[0], (16, C_IN, 1, K), C_IN * K)
    conv1_b = uinit(keys[1], (16,), C_IN * K)
    conv2_w = uinit(keys[2], (32, 16, 1, K), 16 * K)
    conv2_b = uinit(keys[3], (32,), 16 * K)
    fc_w = uinit(keys[4], (N_FEATURE, FC_IN), FC_IN)
    fc_b = uinit(keys[5], (N_FEATURE,), FC_IN)
    x = jax.random.normal(keys[6], (B, C_IN, H, L), jnp.float32)

    params = prepare_params(conv1_w, conv1_b, conv2_w, conv2_b, fc_w, fc_b)
    feat = jax.block_until_ready(network_forward(x, *params))

    ref = jax.block_until_ready(
        network_ref(x, conv1_w, conv1_b, conv2_w, conv2_b, fc_w, fc_b))

    assert feat.shape == (B, N_FEATURE), feat.shape
    max_err = float(jnp.max(jnp.abs(feat - ref)))
    # Kernel matmuls use default MXU precision vs HIGHEST in the reference.
    assert max_err < 1e-2, f"mismatch vs reference, max abs err = {max_err}"

    print("KERNEL_OK")
</pallas_src>

<mosaic_0001>
module attributes {stable_mosaic.version = 11 : i64} {
  func.func @_network_kernel(%arg0: i32, %arg1: memref<1x4x45x31xf32, #tpu.memory_space<vmem>>, %arg2: memref<9x16x45xf32, #tpu.memory_space<vmem>>, %arg3: memref<16x1xf32, #tpu.memory_space<vmem>>, %arg4: memref<9x32x16xf32, #tpu.memory_space<vmem>>, %arg5: memref<32x1xf32, #tpu.memory_space<vmem>>, %arg6: memref<25x32x64xf32, #tpu.memory_space<vmem>>, %arg7: memref<1x64xf32, #tpu.memory_space<vmem>>, %arg8: memref<1x1x64xf32, #tpu.memory_space<vmem>>) attributes {dimension_semantics = [#tpu.dimension_semantics<parallel>], iteration_bounds = array<i64: 2>, scalar_prefetch = 0 : i64, scratch_operands = 0 : i64, tpu.core_type = #tpu.core_type<tc>, window_params = [{transform_indices = @transform_0, window_bounds = array<i64: 1, 4, 45, 31>}, {pipeline_mode = #tpu.pipeline_mode<synchronous>, transform_indices = @transform_1, window_bounds = array<i64: 9, 16, 45>}, {pipeline_mode = #tpu.pipeline_mode<synchronous>, transform_indices = @transform_2, window_bounds = array<i64: 16, 1>}, {pipeline_mode = #tpu.pipeline_mode<synchronous>, transform_indices = @transform_3, window_bounds = array<i64: 9, 32, 16>}, {pipeline_mode = #tpu.pipeline_mode<synchronous>, transform_indices = @transform_4, window_bounds = array<i64: 32, 1>}, {pipeline_mode = #tpu.pipeline_mode<synchronous>, transform_indices = @transform_5, window_bounds = array<i64: 25, 32, 64>}, {pipeline_mode = #tpu.pipeline_mode<synchronous>, transform_indices = @transform_6, window_bounds = array<i64: 1, 64>}, {transform_indices = @transform_7, window_bounds = array<i64: 1, 1, 64>}]} {
    %cst = arith.constant 0.000000e+00 : f32
    %0 = vector.broadcast %cst : f32 to vector<16x29xf32>
    %cst_0 = arith.constant 0.000000e+00 : f32
    %1 = vector.broadcast %cst_0 : f32 to vector<16x29xf32>
    %cst_1 = arith.constant 0.000000e+00 : f32
    %2 = vector.broadcast %cst_1 : f32 to vector<16x29xf32>
    %cst_2 = arith.constant 0.000000e+00 : f32
    %3 = vector.broadcast %cst_2 : f32 to vector<16x29xf32>
    %c0 = arith.constant 0 : index
    %c0_3 = arith.constant 0 : index
    %c0_4 = arith.constant 0 : index
    %4 = vector.load %arg2[%c0, %c0_3, %c0_4] : memref<9x16x45xf32, #tpu.memory_space<vmem>>, vector<1x16x45xf32>
    %5 = vector.shape_cast %4 : vector<1x16x45xf32> to vector<16x45xf32>
    %c0_5 = arith.constant 0 : index
    %c0_6 = arith.constant 0 : index
    %c0_7 = arith.constant 0 : index
    %c0_8 = arith.constant 0 : index
    %6 = vector.load %arg1[%c0_5, %c0_6, %c0_7, %c0_8] : memref<1x4x45x31xf32, #tpu.memory_space<vmem>>, vector<1x1x45x29xf32>
    %7 = vector.shape_cast %6 : vector<1x1x45x29xf32> to vector<45x29xf32>
    %cst_9 = arith.constant dense<0.000000e+00> : vector<16x29xf32>
    %8 = tpu.matmul %5, %7, %cst_9 {dimension_numbers = #tpu.dot_dimension_numbers<[1], [0], [0], [1], [0, 0, 1, 1], [], []>} : vector<16x45xf32>, vector<45x29xf32>, vector<16x29xf32> -> vector<16x29xf32>
    %9 = arith.addf %0, %8 : vector<16x29xf32>
    %c0_10 = arith.constant 0 : index
    %c1 = arith.constant 1 : index
    %c0_11 = arith.constant 0 : index
    %c0_12 = arith.constant 0 : index
    %10 = vector.load %arg1[%c0_10, %c1, %c0_11, %c0_12] : memref<1x4x45x31xf32, #tpu.memory_space<vmem>>, vector<1x1x45x29xf32>
    %11 = vector.shape_cast %10 : vector<1x1x45x29xf32> to vector<45x29xf32>
    %cst_13 = arith.constant dense<0.000000e+00> : vector<16x29xf32>
    %12 = tpu.matmul %5, %11, %cst_13 {dimension_numbers = #tpu.dot_dimension_numbers<[1], [0], [0], [1], [0, 0, 1, 1], [], []>} : vector<16x45xf32>, vector<45x29xf32>, vector<16x29xf32> -> vector<16x29xf32>
    %13 = arith.addf %1, %12 : vector<16x29xf32>
    %c0_14 = arith.constant 0 : index
    %c2 = arith.constant 2 : index
    %c0_15 = arith.constant 0 : index
    %c0_16 = arith.constant 0 : index
    %14 = vector.load %arg1[%c0_14, %c2, %c0_15, %c0_16] : memref<1x4x45x31xf32, #tpu.memory_space<vmem>>, vector<1x1x45x29xf32>
    %15 = vector.shape_cast %14 : vector<1x1x45x29xf32> to vector<45x29xf32>
    %cst_17 = arith.constant dense<0.000000e+00> : vector<16x29xf32>
    %16 = tpu.matmul %5, %15, %cst_17 {dimension_numbers = #tpu.dot_dimension_numbers<[1], [0], [0], [1], [0, 0, 1, 1], [], []>} : vector<16x45xf32>, vector<45x29xf32>, vector<16x29xf32> -> vector<16x29xf32>
    %17 = arith.addf %2, %16 : vector<16x29xf32>
    %c0_18 = arith.constant 0 : index
    %c3 = arith.constant 3 : index
    %c0_19 = arith.constant 0 : index
    %c0_20 = arith.constant 0 : index
    %18 = vector.load %arg1[%c0_18, %c3, %c0_19, %c0_20] : memref<1x4x45x31xf32, #tpu.memory_space<vmem>>, vector<1x1x45x29xf32>
    %19 = vector.shape_cast %18 : vector<1x1x45x29xf32> to vector<45x29xf32>
    %cst_21 = arith.constant dense<0.000000e+00> : vector<16x29xf32>
    %20 = tpu.matmul %5, %19, %cst_21 {dimension_numbers = #tpu.dot_dimension_numbers<[1], [0], [0], [1], [0, 0, 1, 1], [], []>} : vector<16x45xf32>, vector<45x29xf32>, vector<16x29xf32> -> vector<16x29xf32>
    %21 = arith.addf %3, %20 : vector<16x29xf32>
    %c1_22 = arith.constant 1 : index
    %c0_23 = arith.constant 0 : index
    %c0_24 = arith.constant 0 : index
    %22 = vector.load %arg2[%c1_22, %c0_23, %c0_24] : memref<9x16x45xf32, #tpu.memory_space<vmem>>, vector<1x16x45xf32>
    %23 = vector.shape_cast %22 : vector<1x16x45xf32> to vector<16x45xf32>
    %c0_25 = arith.constant 0 : index
    %c1_26 = arith.constant 1 : index
    %c0_27 = arith.constant 0 : index
    %c0_28 = arith.constant 0 : index
    %24 = vector.load %arg1[%c0_25, %c1_26, %c0_27, %c0_28] : memref<1x4x45x31xf32, #tpu.memory_space<vmem>>, vector<1x1x45x29xf32>
    %25 = vector.shape_cast %24 : vector<1x1x45x29xf32> to vector<45x29xf32>
    %cst_29 = arith.constant dense<0.000000e+00> : vector<16x29xf32>
    %26 = tpu.matmul %23, %25, %cst_29 {dimension_numbers = #tpu.dot_dimension_numbers<[1], [0], [0], [1], [0, 0, 1, 1], [], []>} : vector<16x45xf32>, vector<45x29xf32>, vector<16x29xf32> -> vector<16x29xf32>
    %27 = arith.addf %9, %26 : vector<16x29xf32>
    %c0_30 = arith.constant 0 : index
    %c2_31 = arith.constant 2 : index
    %c0_32 = arith.constant 0 : index
    %c0_33 = arith.constant 0 : index
    %28 = vector.load %arg1[%c0_30, %c2_31, %c0_32, %c0_33] : memref<1x4x45x31xf32, #tpu.memory_space<vmem>>, vector<1x1x45x29xf32>
    %29 = vector.shape_cast %28 : vector<1x1x45x29xf32> to vector<45x29xf32>
    %cst_34 = arith.constant dense<0.000000e+00> : vector<16x29xf32>
    %30 = tpu.matmul %23, %29, %cst_34 {dimension_numbers = #tpu.dot_dimension_numbers<[1], [0], [0], [1], [0, 0, 1, 1], [], []>} : vector<16x45xf32>, vector<45x29xf32>, vector<16x29xf32> -> vector<16x29xf32>
    %31 = arith.addf %13, %30 : vector<16x29xf32>
    %c0_35 = arith.constant 0 : index
    %c3_36 = arith.constant 3 : index
    %c0_37 = arith.constant 0 : index
    %c0_38 = arith.constant 0 : index
    %32 = vector.load %arg1[%c0_35, %c3_36, %c0_37, %c0_38] : memref<1x4x45x31xf32, #tpu.memory_space<vmem>>, vector<1x1x45x29xf32>
    %33 = vector.shape_cast %32 : vector<1x1x45x29xf32> to vector<45x29xf32>
    %cst_39 = arith.constant dense<0.000000e+00> : vector<16x29xf32>
    %34 = tpu.matmul %23, %33, %cst_39 {dimension_numbers = #tpu.dot_dimension_numbers<[1], [0], [0], [1], [0, 0, 1, 1], [], []>} : vector<16x45xf32>, vector<45x29xf32>, vector<16x29xf32> -> vector<16x29xf32>
    %35 = arith.addf %17, %34 : vector<16x29xf32>
    %c0_40 = arith.constant 0 : index
    %c0_41 = arith.constant 0 : index
    %c0_42 = arith.constant 0 : index
    %c1_43 = arith.constant 1 : index
    %36 = vector.load %arg1[%c0_40, %c0_41, %c0_42, %c1_43] : memref<1x4x45x31xf32, #tpu.memory_space<vmem>>, vector<1x1x45x29xf32>
    %37 = vector.shape_cast %36 : vector<1x1x45x29xf32> to vector<45x29xf32>
    %cst_44 = arith.constant dense<0.000000e+00> : vector<16x29xf32>
    %38 = tpu.matmul %23, %37, %cst_44 {dimension_numbers = #tpu.dot_dimension_numbers<[1], [0], [0], [1], [0, 0, 1, 1], [], []>} : vector<16x45xf32>, vector<45x29xf32>, vector<16x29xf32> -> vector<16x29xf32>
    %39 = arith.addf %21, %38 : vector<16x29xf32>
    %c2_45 = arith.constant 2 : index
    %c0_46 = arith.constant 0 : index
    %c0_47 = arith.constant 0 : index
    %40 = vector.load %arg2[%c2_45, %c0_46, %c0_47] : memref<9x16x45xf32, #tpu.memory_space<vmem>>, vector<1x16x45xf32>
    %41 = vector.shape_cast %40 : vector<1x16x45xf32> to vector<16x45xf32>
    %c0_48 = arith.constant 0 : index
    %c2_49 = arith.constant 2 : index
    %c0_50 = arith.constant 0 : index
    %c0_51 = arith.constant 0 : index
    %42 = vector.load %arg1[%c0_48, %c2_49, %c0_50, %c0_51] : memref<1x4x45x31xf32, #tpu.memory_space<vmem>>, vector<1x1x45x29xf32>
    %43 = vector.shape_cast %42 : vector<1x1x45x29xf32> to vector<45x29xf32>
    %cst_52 = arith.constant dense<0.000000e+00> : vector<16x29xf32>
    %44 = tpu.matmul %41, %43, %cst_52 {dimension_numbers = #tpu.dot_dimension_numbers<[1], [0], [0], [1], [0, 0, 1, 1], [], []>} : vector<16x45xf32>, vector<45x29xf32>, vector<16x29xf32> -> vector<16x29xf32>
    %45 = arith.addf %27, %44 : vector<16x29xf32>
    %c0_53 = arith.constant 0 : index
    %c3_54 = arith.constant 3 : index
    %c0_55 = arith.constant 0 : index
    %c0_56 = arith.constant 0 : index
    %46 = vector.load %arg1[%c0_53, %c3_54, %c0_55, %c0_56] : memref<1x4x45x31xf32, #tpu.memory_space<vmem>>, vector<1x1x45x29xf32>
    %47 = vector.shape_cast %46 : vector<1x1x45x29xf32> to vector<45x29xf32>
    %cst_57 = arith.constant dense<0.000000e+00> : vector<16x29xf32>
    %48 = tpu.matmul %41, %47, %cst_57 {dimension_numbers = #tpu.dot_dimension_numbers<[1], [0], [0], [1], [0, 0, 1, 1], [], []>} : vector<16x45xf32>, vector<45x29xf32>, vector<16x29xf32> -> vector<16x29xf32>
    %49 = arith.addf %31, %48 : vector<16x29xf32>
    %c0_58 = arith.constant 0 : index
    %c0_59 = arith.constant 0 : index
    %c0_60 = arith.constant 0 : index
    %c1_61 = arith.constant 1 : index
    %50 = vector.load %arg1[%c0_58, %c0_59, %c0_60, %c1_61] : memref<1x4x45x31xf32, #tpu.memory_space<vmem>>, vector<1x1x45x29xf32>
    %51 = vector.shape_cast %50 : vector<1x1x45x29xf32> to vector<45x29xf32>
    %cst_62 = arith.constant dense<0.000000e+00> : vector<16x29xf32>
    %52 = tpu.matmul %41, %51, %cst_62 {dimension_numbers = #tpu.dot_dimension_numbers<[1], [0], [0], [1], [0, 0, 1, 1], [], []>} : vector<16x45xf32>, vector<45x29xf32>, vector<16x29xf32> -> vector<16x29xf32>
    %53 = arith.addf %35, %52 : vector<16x29xf32>
    %c0_63 = arith.constant 0 : index
    %c1_64 = arith.constant 1 : index
    %c0_65 = arith.constant 0 : index
    %c1_66 = arith.constant 1 : index
    %54 = vector.load %arg1[%c0_63, %c1_64, %c0_65, %c1_66] : memref<1x4x45x31xf32, #tpu.memory_space<vmem>>, vector<1x1x45x29xf32>
    %55 = vector.shape_cast %54 : vector<1x1x45x29xf32> to vector<45x29xf32>
    %cst_67 = arith.constant dense<0.000000e+00> : vector<16x29xf32>
    %56 = tpu.matmul %41, %55, %cst_67 {dimension_numbers = #tpu.dot_dimension_numbers<[1], [0], [0], [1], [0, 0, 1, 1], [], []>} : vector<16x45xf32>, vector<45x29xf32>, vector<16x29xf32> -> vector<16x29xf32>
    %57 = arith.addf %39, %56 : vector<16x29xf32>
    %c3_68 = arith.constant 3 : index
    %c0_69 = arith.constant 0 : index
    %c0_70 = arith.constant 0 : index
    %58 = vector.load %arg2[%c3_68, %c0_69, %c0_70] : memref<9x16x45xf32, #tpu.memory_space<vmem>>, vector<1x16x45xf32>
    %59 = vector.shape_cast %58 : vector<1x16x45xf32> to vector<16x45xf32>
    %c0_71 = arith.constant 0 : index
    %c3_72 = arith.constant 3 : index
    %c0_73 = arith.constant 0 : index
    %c0_74 = arith.constant 0 : index
    %60 = vector.load %arg1[%c0_71, %c3_72, %c0_73, %c0_74] : memref<1x4x45x31xf32, #tpu.memory_space<vmem>>, vector<1x1x45x29xf32>
    %61 = vector.shape_cast %60 : vector<1x1x45x29xf32> to vector<45x29xf32>
    %cst_75 = arith.constant dense<0.000000e+00> : vector<16x29xf32>
    %62 = tpu.matmul %59, %61, %cst_75 {dimension_numbers = #tpu.dot_dimension_numbers<[1], [0], [0], [1], [0, 0, 1, 1], [], []>} : vector<16x45xf32>, vector<45x29xf32>, vector<16x29xf32> -> vector<16x29xf32>
    %63 = arith.addf %45, %62 : vector<16x29xf32>
    %c0_76 = arith.constant 0 : index
    %c0_77 = arith.constant 0 : index
    %c0_78 = arith.constant 0 : index
    %c1_79 = arith.constant 1 : index
    %64 = vector.load %arg1[%c0_76, %c0_77, %c0_78, %c1_79] : memref<1x4x45x31xf32, #tpu.memory_space<vmem>>, vector<1x1x45x29xf32>
    %65 = vector.shape_cast %64 : vector<1x1x45x29xf32> to vector<45x29xf32>
    %cst_80 = arith.constant dense<0.000000e+00> : vector<16x29xf32>
    %66 = tpu.matmul %59, %65, %cst_80 {dimension_numbers = #tpu.dot_dimension_numbers<[1], [0], [0], [1], [0, 0, 1, 1], [], []>} : vector<16x45xf32>, vector<45x29xf32>, vector<16x29xf32> -> vector<16x29xf32>
    %67 = arith.addf %49, %66 : vector<16x29xf32>
    %c0_81 = arith.constant 0 : index
    %c1_82 = arith.constant 1 : index
    %c0_83 = arith.constant 0 : index
    %c1_84 = arith.constant 1 : index
    %68 = vector.load %arg1[%c0_81, %c1_82, %c0_83, %c1_84] : memref<1x4x45x31xf32, #tpu.memory_space<vmem>>, vector<1x1x45x29xf32>
    %69 = vector.shape_cast %68 : vector<1x1x45x29xf32> to vector<45x29xf32>
    %cst_85 = arith.constant dense<0.000000e+00> : vector<16x29xf32>
    %70 = tpu.matmul %59, %69, %cst_85 {dimension_numbers = #tpu.dot_dimension_numbers<[1], [0], [0], [1], [0, 0, 1, 1], [], []>} : vector<16x45xf32>, vector<45x29xf32>, vector<16x29xf32> -> vector<16x29xf32>
    %71 = arith.addf %53, %70 : vector<16x29xf32>
    %c0_86 = arith.constant 0 : index
    %c2_87 = arith.constant 2 : index
    %c0_88 = arith.constant 0 : index
    %c1_89 = arith.constant 1 : index
    %72 = vector.load %arg1[%c0_86, %c2_87, %c0_88, %c1_89] : memref<1x4x45x31xf32, #tpu.memory_space<vmem>>, vector<1x1x45x29xf32>
    %73 = vector.shape_cast %72 : vector<1x1x45x29xf32> to vector<45x29xf32>
    %cst_90 = arith.constant dense<0.000000e+00> : vector<16x29xf32>
    %74 = tpu.matmul %59, %73, %cst_90 {dimension_numbers = #tpu.dot_dimension_numbers<[1], [0], [0], [1], [0, 0, 1, 1], [], []>} : vector<16x45xf32>, vector<45x29xf32>, vector<16x29xf32> -> vector<16x29xf32>
    %75 = arith.addf %57, %74 : vector<16x29xf32>
    %c4 = arith.constant 4 : index
    %c0_91 = arith.constant 0 : index
    %c0_92 = arith.constant 0 : index
    %76 = vector.load %arg2[%c4, %c0_91, %c0_92] : memref<9x16x45xf32, #tpu.memory_space<vmem>>, vector<1x16x45xf32>
    %77 = vector.shape_cast %76 : vector<1x16x45xf32> to vector<16x45xf32>
    %c0_93 = arith.constant 0 : index
    %c0_94 = arith.constant 0 : index
    %c0_95 = arith.constant 0 : index
    %c1_96 = arith.constant 1 : index
    %78 = vector.load %arg1[%c0_93, %c0_94, %c0_95, %c1_96] : memref<1x4x45x31xf32, #tpu.memory_space<vmem>>, vector<1x1x45x29xf32>
    %79 = vector.shape_cast %78 : vector<1x1x45x29xf32> to vector<45x29xf32>
    %cst_97 = arith.constant dense<0.000000e+00> : vector<16x29xf32>
    %80 = tpu.matmul %77, %79, %cst_97 {dimension_numbers = #tpu.dot_dimension_numbers<[1], [0], [0], [1], [0, 0, 1, 1], [], []>} : vector<16x45xf32>, vector<45x29xf32>, vector<16x29xf32> -> vector<16x29xf32>
    %81 = arith.addf %63, %80 : vector<16x29xf32>
    %c0_98 = arith.constant 0 : index
    %c1_99 = arith.constant 1 : index
    %c0_100 = arith.constant 0 : index
    %c1_101 = arith.constant 1 : index
    %82 = vector.load %arg1[%c0_98, %c1_99, %c0_100, %c1_101] : memref<1x4x45x31xf32, #tpu.memory_space<vmem>>, vector<1x1x45x29xf32>
    %83 = vector.shape_cast %82 : vector<1x1x45x29xf32> to vector<45x29xf32>
    %cst_102 = arith.constant dense<0.000000e+00> : vector<16x29xf32>
    %84 = tpu.matmul %77, %83, %cst_102 {dimension_numbers = #tpu.dot_dimension_numbers<[1], [0], [0], [1], [0, 0, 1, 1], [], []>} : vector<16x45xf32>, vector<45x29xf32>, vector<16x29xf32> -> vector<16x29xf32>
    %85 = arith.addf %67, %84 : vector<16x29xf32>
    %c0_103 = arith.constant 0 : index
    %c2_104 = arith.constant 2 : index
    %c0_105 = arith.constant 0 : index
    %c1_106 = arith.constant 1 : index
    %86 = vector.load %arg1[%c0_103, %c2_104, %c0_105, %c1_106] : memref<1x4x45x31xf32, #tpu.memory_space<vmem>>, vector<1x1x45x29xf32>
    %87 = vector.shape_cast %86 : vector<1x1x45x29xf32> to vector<45x29xf32>
    %cst_107 = arith.constant dense<0.000000e+00> : vector<16x29xf32>
    %88 = tpu.matmul %77, %87, %cst_107 {dimension_numbers = #tpu.dot_dimension_numbers<[1], [0], [0], [1], [0, 0, 1, 1], [], []>} : vector<16x45xf32>, vector<45x29xf32>, vector<16x29xf32> -> vector<16x29xf32>
    %89 = arith.addf %71, %88 : vector<16x29xf32>
    %c0_108 = arith.constant 0 : index
    %c3_109 = arith.constant 3 : index
    %c0_110 = arith.constant 0 : index
    %c1_111 = arith.constant 1 : index
    %90 = vector.load %arg1[%c0_108, %c3_109, %c0_110, %c1_111] : memref<1x4x45x31xf32, #tpu.memory_space<vmem>>, vector<1x1x45x29xf32>
    %91 = vector.shape_cast %90 : vector<1x1x45x29xf32> to vector<45x29xf32>
    %cst_112 = arith.constant dense<0.000000e+00> : vector<16x29xf32>
    %92 = tpu.matmul %77, %91, %cst_112 {dimension_numbers = #tpu.dot_dimension_numbers<[1], [0], [0], [1], [0, 0, 1, 1], [], []>} : vector<16x45xf32>, vector<45x29xf32>, vector<16x29xf32> -> vector<16x29xf32>
    %93 = arith.addf %75, %92 : vector<16x29xf32>
    %c5 = arith.constant 5 : index
    %c0_113 = arith.constant 0 : index
    %c0_114 = arith.constant 0 : index
    %94 = vector.load %arg2[%c5, %c0_113, %c0_114] : memref<9x16x45xf32, #tpu.memory_space<vmem>>, vector<1x16x45xf32>
    %95 = vector.shape_cast %94 : vector<1x16x45xf32> to vector<16x45xf32>
    %c0_115 = arith.constant 0 : index
    %c1_116 = arith.constant 1 : index
    %c0_117 = arith.constant 0 : index
    %c1_118 = arith.constant 1 : index
    %96 = vector.load %arg1[%c0_115, %c1_116, %c0_117, %c1_118] : memref<1x4x45x31xf32, #tpu.memory_space<vmem>>, vector<1x1x45x29xf32>
    %97 = vector.shape_cast %96 : vector<1x1x45x29xf32> to vector<45x29xf32>
    %cst_119 = arith.constant dense<0.000000e+00> : vector<16x29xf32>
    %98 = tpu.matmul %95, %97, %cst_119 {dimension_numbers = #tpu.dot_dimension_numbers<[1], [0], [0], [1], [0, 0, 1, 1], [], []>} : vector<16x45xf32>, vector<45x29xf32>, vector<16x29xf32> -> vector<16x29xf32>
    %99 = arith.addf %81, %98 : vector<16x29xf32>
    %c0_120 = arith.constant 0 : index
    %c2_121 = arith.constant 2 : index
    %c0_122 = arith.constant 0 : index
    %c1_123 = arith.constant 1 : index
    %100 = vector.load %arg1[%c0_120, %c2_121, %c0_122, %c1_123] : memref<1x4x45x31xf32, #tpu.memory_space<vmem>>, vector<1x1x45x29xf32>
    %101 = vector.shape_cast %100 : vector<1x1x45x29xf32> to vector<45x29xf32>
    %cst_124 = arith.constant dense<0.000000e+00> : vector<16x29xf32>
    %102 = tpu.matmul %95, %101, %cst_124 {dimension_numbers = #tpu.dot_dimension_numbers<[1], [0], [0], [1], [0, 0, 1, 1], [], []>} : vector<16x45xf32>, vector<45x29xf32>, vector<16x29xf32> -> vector<16x29xf32>
    %103 = arith.addf %85, %102 : vector<16x29xf32>
    %c0_125 = arith.constant 0 : index
    %c3_126 = arith.constant 3 : index
    %c0_127 = arith.constant 0 : index
    %c1_128 = arith.constant 1 : index
    %104 = vector.load %arg1[%c0_125, %c3_126, %c0_127, %c1_128] : memref<1x4x45x31xf32, #tpu.memory_space<vmem>>, vector<1x1x45x29xf32>
    %105 = vector.shape_cast %104 : vector<1x1x45x29xf32> to vector<45x29xf32>
    %cst_129 = arith.constant dense<0.000000e+00> : vector<16x29xf32>
    %106 = tpu.matmul %95, %105, %cst_129 {dimension_numbers = #tpu.dot_dimension_numbers<[1], [0], [0], [1], [0, 0, 1, 1], [], []>} : vector<16x45xf32>, vector<45x29xf32>, vector<16x29xf32> -> vector<16x29xf32>
    %107 = arith.addf %89, %106 : vector<16x29xf32>
    %c0_130 = arith.constant 0 : index
    %c0_131 = arith.constant 0 : index
    %c0_132 = arith.constant 0 : index
    %c2_133 = arith.constant 2 : index
    %108 = vector.load %arg1[%c0_130, %c0_131, %c0_132, %c2_133] : memref<1x4x45x31xf32, #tpu.memory_space<vmem>>, vector<1x1x45x29xf32>
    %109 = vector.shape_cast %108 : vector<1x1x45x29xf32> to vector<45x29xf32>
    %cst_134 = arith.constant dense<0.000000e+00> : vector<16x29xf32>
    %110 = tpu.matmul %95, %109, %cst_134 {dimension_numbers = #tpu.dot_dimension_numbers<[1], [0], [0], [1], [0, 0, 1, 1], [], []>} : vector<16x45xf32>, vector<45x29xf32>, vector<16x29xf32> -> vector<16x29xf32>
    %111 = arith.addf %93, %110 : vector<16x29xf32>
    %c6 = arith.constant 6 : index
    %c0_135 = arith.constant 0 : index
    %c0_136 = arith.constant 0 : index
    %112 = vector.load %arg2[%c6, %c0_135, %c0_136] : memref<9x16x45xf32, #tpu.memory_space<vmem>>, vector<1x16x45xf32>
    %113 = vector.shape_cast %112 : vector<1x16x45xf32> to vector<16x45xf32>
    %c0_137 = arith.constant 0 : index
    %c2_138 = arith.constant 2 : index
    %c0_139 = arith.constant 0 : index
    %c1_140 = arith.constant 1 : index
    %114 = vector.load %arg1[%c0_137, %c2_138, %c0_139, %c1_140] : memref<1x4x45x31xf32, #tpu.memory_space<vmem>>, vector<1x1x45x29xf32>
    %115 = vector.shape_cast %114 : vector<1x1x45x29xf32> to vector<45x29xf32>
    %cst_141 = arith.constant dense<0.000000e+00> : vector<16x29xf32>
    %116 = tpu.matmul %113, %115, %cst_141 {dimension_numbers = #tpu.dot_dimension_numbers<[1], [0], [0], [1], [0, 0, 1, 1], [], []>} : vector<16x45xf32>, vector<45x29xf32>, vector<16x29xf32> -> vector<16x29xf32>
    %117 = arith.addf %99, %116 : vector<16x29xf32>
    %c0_142 = arith.constant 0 : index
    %c3_143 = arith.constant 3 : index
    %c0_144 = arith.constant 0 : index
    %c1_145 = arith.constant 1 : index
    %118 = vector.load %arg1[%c0_142, %c3_143, %c0_144, %c1_145] : memref<1x4x45x31xf32, #tpu.memory_space<vmem>>, vector<1x1x45x29xf32>
    %119 = vector.shape_cast %118 : vector<1x1x45x29xf32> to vector<45x29xf32>
    %cst_146 = arith.constant dense<0.000000e+00> : vector<16x29xf32>
    %120 = tpu.matmul %113, %119, %cst_146 {dimension_numbers = #tpu.dot_dimension_numbers<[1], [0], [0], [1], [0, 0, 1, 1], [], []>} : vector<16x45xf32>, vector<45x29xf32>, vector<16x29xf32> -> vector<16x29xf32>
    %121 = arith.addf %103, %120 : vector<16x29xf32>
    %c0_147 = arith.constant 0 : index
    %c0_148 = arith.constant 0 : index
    %c0_149 = arith.constant 0 : index
    %c2_150 = arith.constant 2 : index
    %122 = vector.load %arg1[%c0_147, %c0_148, %c0_149, %c2_150] : memref<1x4x45x31xf32, #tpu.memory_space<vmem>>, vector<1x1x45x29xf32>
    %123 = vector.shape_cast %122 : vector<1x1x45x29xf32> to vector<45x29xf32>
    %cst_151 = arith.constant dense<0.000000e+00> : vector<16x29xf32>
    %124 = tpu.matmul %113, %123, %cst_151 {dimension_numbers = #tpu.dot_dimension_numbers<[1], [0], [0], [1], [0, 0, 1, 1], [], []>} : vector<16x45xf32>, vector<45x29xf32>, vector<16x29xf32> -> vector<16x29xf32>
    %125 = arith.addf %107, %124 : vector<16x29xf32>
    %c0_152 = arith.constant 0 : index
    %c1_153 = arith.constant 1 : index
    %c0_154 = arith.constant 0 : index
    %c2_155 = arith.constant 2 : index
    %126 = vector.load %arg1[%c0_152, %c1_153, %c0_154, %c2_155] : memref<1x4x45x31xf32, #tpu.memory_space<vmem>>, vector<1x1x45x29xf32>
    %127 = vector.shape_cast %126 : vector<1x1x45x29xf32> to vector<45x29xf32>
    %cst_156 = arith.constant dense<0.000000e+00> : vector<16x29xf32>
    %128 = tpu.matmul %113, %127, %cst_156 {dimension_numbers = #tpu.dot_dimension_numbers<[1], [0], [0], [1], [0, 0, 1, 1], [], []>} : vector<16x45xf32>, vector<45x29xf32>, vector<16x29xf32> -> vector<16x29xf32>
    %129 = arith.addf %111, %128 : vector<16x29xf32>
    %c7 = arith.constant 7 : index
    %c0_157 = arith.constant 0 : index
    %c0_158 = arith.constant 0 : index
    %130 = vector.load %arg2[%c7, %c0_157, %c0_158] : memref<9x16x45xf32, #tpu.memory_space<vmem>>, vector<1x16x45xf32>
    %131 = vector.shape_cast %130 : vector<1x16x45xf32> to vector<16x45xf32>
    %c0_159 = arith.constant 0 : index
    %c3_160 = arith.constant 3 : index
    %c0_161 = arith.constant 0 : index
    %c1_162 = arith.constant 1 : index
    %132 = vector.load %arg1[%c0_159, %c3_160, %c0_161, %c1_162] : memref<1x4x45x31xf32, #tpu.memory_space<vmem>>, vector<1x1x45x29xf32>
    %133 = vector.shape_cast %132 : vector<1x1x45x29xf32> to vector<45x29xf32>
    %cst_163 = arith.constant dense<0.000000e+00> : vector<16x29xf32>
    %134 = tpu.matmul %131, %133, %cst_163 {dimension_numbers = #tpu.dot_dimension_numbers<[1], [0], [0], [1], [0, 0, 1, 1], [], []>} : vector<16x45xf32>, vector<45x29xf32>, vector<16x29xf32> -> vector<16x29xf32>
    %135 = arith.addf %117, %134 : vector<16x29xf32>
    %c0_164 = arith.constant 0 : index
    %c0_165 = arith.constant 0 : index
    %c0_166 = arith.constant 0 : index
    %c2_167 = arith.constant 2 : index
    %136 = vector.load %arg1[%c0_164, %c0_165, %c0_166, %c2_167] : memref<1x4x45x31xf32, #tpu.memory_space<vmem>>, vector<1x1x45x29xf32>
    %137 = vector.shape_cast %136 : vector<1x1x45x29xf32> to vector<45x29xf32>
    %cst_168 = arith.constant dense<0.000000e+00> : vector<16x29xf32>
    %138 = tpu.matmul %131, %137, %cst_168 {dimension_numbers = #tpu.dot_dimension_numbers<[1], [0], [0], [1], [0, 0, 1, 1], [], []>} : vector<16x45xf32>, vector<45x29xf32>, vector<16x29xf32> -> vector<16x29xf32>
    %139 = arith.addf %121, %138 : vector<16x29xf32>
    %c0_169 = arith.constant 0 : index
    %c1_170 = arith.constant 1 : index
    %c0_171 = arith.constant 0 : index
    %c2_172 = arith.constant 2 : index
    %140 = vector.load %arg1[%c0_169, %c1_170, %c0_171, %c2_172] : memref<1x4x45x31xf32, #tpu.memory_space<vmem>>, vector<1x1x45x29xf32>
    %141 = vector.shape_cast %140 : vector<1x1x45x29xf32> to vector<45x29xf32>
    %cst_173 = arith.constant dense<0.000000e+00> : vector<16x29xf32>
    %142 = tpu.matmul %131, %141, %cst_173 {dimension_numbers = #tpu.dot_dimension_numbers<[1], [0], [0], [1], [0, 0, 1, 1], [], []>} : vector<16x45xf32>, vector<45x29xf32>, vector<16x29xf32> -> vector<16x29xf32>
    %143 = arith.addf %125, %142 : vector<16x29xf32>
    %c0_174 = arith.constant 0 : index
    %c2_175 = arith.constant 2 : index
    %c0_176 = arith.constant 0 : index
    %c2_177 = arith.constant 2 : index
    %144 = vector.load %arg1[%c0_174, %c2_175, %c0_176, %c2_177] : memref<1x4x45x31xf32, #tpu.memory_space<vmem>>, vector<1x1x45x29xf32>
    %145 = vector.shape_cast %144 : vector<1x1x45x29xf32> to vector<45x29xf32>
    %cst_178 = arith.constant dense<0.000000e+00> : vector<16x29xf32>
    %146 = tpu.matmul %131, %145, %cst_178 {dimension_numbers = #tpu.dot_dimension_numbers<[1], [0], [0], [1], [0, 0, 1, 1], [], []>} : vector<16x45xf32>, vector<45x29xf32>, vector<16x29xf32> -> vector<16x29xf32>
    %147 = arith.addf %129, %146 : vector<16x29xf32>
    %c8 = arith.constant 8 : index
    %c0_179 = arith.constant 0 : index
    %c0_180 = arith.constant 0 : index
    %148 = vector.load %arg2[%c8, %c0_179, %c0_180] : memref<9x16x45xf32, #tpu.memory_space<vmem>>, vector<1x16x45xf32>
    %149 = vector.shape_cast %148 : vector<1x16x45xf32> to vector<16x45xf32>
    %c0_181 = arith.constant 0 : index
    %c0_182 = arith.constant 0 : index
    %c0_183 = arith.constant 0 : index
    %c2_184 = arith.constant 2 : index
    %150 = vector.load %arg1[%c0_181, %c0_182, %c0_183, %c2_184] : memref<1x4x45x31xf32, #tpu.memory_space<vmem>>, vector<1x1x45x29xf32>
    %151 = vector.shape_cast %150 : vector<1x1x45x29xf32> to vector<45x29xf32>
    %cst_185 = arith.constant dense<0.000000e+00> : vector<16x29xf32>
    %152 = tpu.matmul %149, %151, %cst_185 {dimension_numbers = #tpu.dot_dimension_numbers<[1], [0], [0], [1], [0, 0, 1, 1], [], []>} : vector<16x45xf32>, vector<45x29xf32>, vector<16x29xf32> -> vector<16x29xf32>
    %153 = arith.addf %135, %152 : vector<16x29xf32>
    %c0_186 = arith.constant 0 : index
    %c1_187 = arith.constant 1 : index
    %c0_188 = arith.constant 0 : index
    %c2_189 = arith.constant 2 : index
    %154 = vector.load %arg1[%c0_186, %c1_187, %c0_188, %c2_189] : memref<1x4x45x31xf32, #tpu.memory_space<vmem>>, vector<1x1x45x29xf32>
    %155 = vector.shape_cast %154 : vector<1x1x45x29xf32> to vector<45x29xf32>
    %cst_190 = arith.constant dense<0.000000e+00> : vector<16x29xf32>
    %156 = tpu.matmul %149, %155, %cst_190 {dimension_numbers = #tpu.dot_dimension_numbers<[1], [0], [0], [1], [0, 0, 1, 1], [], []>} : vector<16x45xf32>, vector<45x29xf32>, vector<16x29xf32> -> vector<16x29xf32>
    %157 = arith.addf %139, %156 : vector<16x29xf32>
    %c0_191 = arith.constant 0 : index
    %c2_192 = arith.constant 2 : index
    %c0_193 = arith.constant 0 : index
    %c2_194 = arith.constant 2 : index
    %158 = vector.load %arg1[%c0_191, %c2_192, %c0_193, %c2_194] : memref<1x4x45x31xf32, #tpu.memory_space<vmem>>, vector<1x1x45x29xf32>
    %159 = vector.shape_cast %158 : vector<1x1x45x29xf32> to vector<45x29xf32>
    %cst_195 = arith.constant dense<0.000000e+00> : vector<16x29xf32>
    %160 = tpu.matmul %149, %159, %cst_195 {dimension_numbers = #tpu.dot_dimension_numbers<[1], [0], [0], [1], [0, 0, 1, 1], [], []>} : vector<16x45xf32>, vector<45x29xf32>, vector<16x29xf32> -> vector<16x29xf32>
    %161 = arith.addf %143, %160 : vector<16x29xf32>
    %c0_196 = arith.constant 0 : index
    %c3_197 = arith.constant 3 : index
    %c0_198 = arith.constant 0 : index
    %c2_199 = arith.constant 2 : index
    %162 = vector.load %arg1[%c0_196, %c3_197, %c0_198, %c2_199] : memref<1x4x45x31xf32, #tpu.memory_space<vmem>>, vector<1x1x45x29xf32>
    %163 = vector.shape_cast %162 : vector<1x1x45x29xf32> to vector<45x29xf32>
    %cst_200 = arith.constant dense<0.000000e+00> : vector<16x29xf32>
    %164 = tpu.matmul %149, %163, %cst_200 {dimension_numbers = #tpu.dot_dimension_numbers<[1], [0], [0], [1], [0, 0, 1, 1], [], []>} : vector<16x45xf32>, vector<45x29xf32>, vector<16x29xf32> -> vector<16x29xf32>
    %165 = arith.addf %147, %164 : vector<16x29xf32>
    %c0_201 = arith.constant 0 : index
    %c0_202 = arith.constant 0 : index
    %166 = vector.load %arg3[%c0_201, %c0_202] : memref<16x1xf32, #tpu.memory_space<vmem>>, vector<16x1xf32>
    %167 = arith.maximumf %153, %157 : vector<16x29xf32>
    %168 = vector.broadcast %166 : vector<16x1xf32> to vector<16x29xf32>
    %169 = arith.addf %167, %168 : vector<16x29xf32>
    %cst_203 = arith.constant 0.000000e+00 : f32
    %170 = vector.broadcast %cst_203 : f32 to vector<16x29xf32>
    %171 = arith.maximumf %169, %170 : vector<16x29xf32>
    %172 = arith.maximumf %161, %165 : vector<16x29xf32>
    %173 = vector.broadcast %166 : vector<16x1xf32> to vector<16x29xf32>
    %174 = arith.addf %172, %173 : vector<16x29xf32>
    %cst_204 = arith.constant 0.000000e+00 : f32
    %175 = vector.broadcast %cst_204 : f32 to vector<16x29xf32>
    %176 = arith.maximumf %174, %175 : vector<16x29xf32>
    %cst_205 = arith.constant 0.000000e+00 : f32
    %177 = vector.broadcast %cst_205 : f32 to vector<32x25xf32>
    %cst_206 = arith.constant 0.000000e+00 : f32
    %178 = vector.broadcast %cst_206 : f32 to vector<32x25xf32>
    %c0_207 = arith.constant 0 : index
    %c0_208 = arith.constant 0 : index
    %c0_209 = arith.constant 0 : index
    %179 = vector.load %arg4[%c0_207, %c0_208, %c0_209] : memref<9x32x16xf32, #tpu.memory_space<vmem>>, vector<1x32x16xf32>
    %180 = vector.shape_cast %179 : vector<1x32x16xf32> to vector<32x16xf32>
    %181 = vector.extract_strided_slice %171 {offsets = [0, 0], sizes = [16, 25], strides = [1, 1]} : vector<16x29xf32> to vector<16x25xf32>
    %cst_210 = arith.constant dense<0.000000e+00> : vector<32x25xf32>
    %182 = tpu.matmul %180, %181, %cst_210 {dimension_numbers = #tpu.dot_dimension_numbers<[1], [0], [0], [1], [0, 0, 1, 1], [], []>} : vector<32x16xf32>, vector<16x25xf32>, vector<32x25xf32> -> vector<32x25xf32>
    %183 = arith.addf %177, %182 : vector<32x25xf32>
    %184 = vector.extract_strided_slice %176 {offsets = [0, 0], sizes = [16, 25], strides = [1, 1]} : vector<16x29xf32> to vector<16x25xf32>
    %cst_211 = arith.constant dense<0.000000e+00> : vector<32x25xf32>
    %185 = tpu.matmul %180, %184, %cst_211 {dimension_numbers = #tpu.dot_dimension_numbers<[1], [0], [0], [1], [0, 0, 1, 1], [], []>} : vector<32x16xf32>, vector<16x25xf32>, vector<32x25xf32> -> vector<32x25xf32>
    %186 = arith.addf %178, %185 : vector<32x25xf32>
    %c1_212 = arith.constant 1 : index
    %c0_213 = arith.constant 0 : index
    %c0_214 = arith.constant 0 : index
    %187 = vector.load %arg4[%c1_212, %c0_213, %c0_214] : memref<9x32x16xf32, #tpu.memory_space<vmem>>, vector<1x32x16xf32>
    %188 = vector.shape_cast %187 : vector<1x32x16xf32> to vector<32x16xf32>
    %189 = vector.extract_strided_slice %176 {offsets = [0, 0], sizes = [16, 25], strides = [1, 1]} : vector<16x29xf32> to vector<16x25xf32>
    %cst_215 = arith.constant dense<0.000000e+00> : vector<32x25xf32>
    %190 = tpu.matmul %188, %189, %cst_215 {dimension_numbers = #tpu.dot_dimension_numbers<[1], [0], [0], [1], [0, 0, 1, 1], [], []>} : vector<32x16xf32>, vector<16x25xf32>, vector<32x25xf32> -> vector<32x25xf32>
    %191 = arith.addf %183, %190 : vector<32x25xf32>
    %192 = vector.extract_strided_slice %171 {offsets = [0, 1], sizes = [16, 25], strides = [1, 1]} : vector<16x29xf32> to vector<16x25xf32>
    %cst_216 = arith.constant dense<0.000000e+00> : vector<32x25xf32>
    %193 = tpu.matmul %188, %192, %cst_216 {dimension_numbers = #tpu.dot_dimension_numbers<[1], [0], [0], [1], [0, 0, 1, 1], [], []>} : vector<32x16xf32>, vector<16x25xf32>, vector<32x25xf32> -> vector<32x25xf32>
    %194 = arith.addf %186, %193 : vector<32x25xf32>
    %c2_217 = arith.constant 2 : index
    %c0_218 = arith.constant 0 : index
    %c0_219 = arith.constant 0 : index
    %195 = vector.load %arg4[%c2_217, %c0_218, %c0_219] : memref<9x32x16xf32, #tpu.memory_space<vmem>>, vector<1x32x16xf32>
    %196 = vector.shape_cast %195 : vector<1x32x16xf32> to vector<32x16xf32>
    %197 = vector.extract_strided_slice %171 {offsets = [0, 1], sizes = [16, 25], strides = [1, 1]} : vector<16x29xf32> to vector<16x25xf32>
    %cst_220 = arith.constant dense<0.000000e+00> : vector<32x25xf32>
    %198 = tpu.matmul %196, %197, %cst_220 {dimension_numbers = #tpu.dot_dimension_numbers<[1], [0], [0], [1], [0, 0, 1, 1], [], []>} : vector<32x16xf32>, vector<16x25xf32>, vector<32x25xf32> -> vector<32x25xf32>
    %199 = arith.addf %191, %198 : vector<32x25xf32>
    %200 = vector.extract_strided_slice %176 {offsets = [0, 1], sizes = [16, 25], strides = [1, 1]} : vector<16x29xf32> to vector<16x25xf32>
    %cst_221 = arith.constant dense<0.000000e+00> : vector<32x25xf32>
    %201 = tpu.matmul %196, %200, %cst_221 {dimension_numbers = #tpu.dot_dimension_numbers<[1], [0], [0], [1], [0, 0, 1, 1], [], []>} : vector<32x16xf32>, vector<16x25xf32>, vector<32x25xf32> -> vector<32x25xf32>
    %202 = arith.addf %194, %201 : vector<32x25xf32>
    %c3_222 = arith.constant 3 : index
    %c0_223 = arith.constant 0 : index
    %c0_224 = arith.constant 0 : index
    %203 = vector.load %arg4[%c3_222, %c0_223, %c0_224] : memref<9x32x16xf32, #tpu.memory_space<vmem>>, vector<1x32x16xf32>
    %204 = vector.shape_cast %203 : vector<1x32x16xf32> to vector<32x16xf32>
    %205 = vector.extract_strided_slice %176 {offsets = [0, 1], sizes = [16, 25], strides = [1, 1]} : vector<16x29xf32> to vector<16x25xf32>
    %cst_225 = arith.constant dense<0.000000e+00> : vector<32x25xf32>
    %206 = tpu.matmul %204, %205, %cst_225 {dimension_numbers = #tpu.dot_dimension_numbers<[1], [0], [0], [1], [0, 0, 1, 1], [], []>} : vector<32x16xf32>, vector<16x25xf32>, vector<32x25xf32> -> vector<32x25xf32>
    %207 = arith.addf %199, %206 : vector<32x25xf32>
    %208 = vector.extract_strided_slice %171 {offsets = [0, 2], sizes = [16, 25], strides = [1, 1]} : vector<16x29xf32> to vector<16x25xf32>
    %cst_226 = arith.constant dense<0.000000e+00> : vector<32x25xf32>
    %209 = tpu.matmul %204, %208, %cst_226 {dimension_numbers = #tpu.dot_dimension_numbers<[1], [0], [0], [1], [0, 0, 1, 1], [], []>} : vector<32x16xf32>, vector<16x25xf32>, vector<32x25xf32> -> vector<32x25xf32>
    %210 = arith.addf %202, %209 : vector<32x25xf32>
    %c4_227 = arith.constant 4 : index
    %c0_228 = arith.constant 0 : index
    %c0_229 = arith.constant 0 : index
    %211 = vector.load %arg4[%c4_227, %c0_228, %c0_229] : memref<9x32x16xf32, #tpu.memory_space<vmem>>, vector<1x32x16xf32>
    %212 = vector.shape_cast %211 : vector<1x32x16xf32> to vector<32x16xf32>
    %213 = vector.extract_strided_slice %171 {offsets = [0, 2], sizes = [16, 25], strides = [1, 1]} : vector<16x29xf32> to vector<16x25xf32>
    %cst_230 = arith.constant dense<0.000000e+00> : vector<32x25xf32>
    %214 = tpu.matmul %212, %213, %cst_230 {dimension_numbers = #tpu.dot_dimension_numbers<[1], [0], [0], [1], [0, 0, 1, 1], [], []>} : vector<32x16xf32>, vector<16x25xf32>, vector<32x25xf32> -> vector<32x25xf32>
    %215 = arith.addf %207, %214 : vector<32x25xf32>
    %216 = vector.extract_strided_slice %176 {offsets = [0, 2], sizes = [16, 25], strides = [1, 1]} : vector<16x29xf32> to vector<16x25xf32>
    %cst_231 = arith.constant dense<0.000000e+00> : vector<32x25xf32>
    %217 = tpu.matmul %212, %216, %cst_231 {dimension_numbers = #tpu.dot_dimension_numbers<[1], [0], [0], [1], [0, 0, 1, 1], [], []>} : vector<32x16xf32>, vector<16x25xf32>, vector<32x25xf32> -> vector<32x25xf32>
    %218 = arith.addf %210, %217 : vector<32x25xf32>
    %c5_232 = arith.constant 5 : index
    %c0_233 = arith.constant 0 : index
    %c0_234 = arith.constant 0 : index
    %219 = vector.load %arg4[%c5_232, %c0_233, %c0_234] : memref<9x32x16xf32, #tpu.memory_space<vmem>>, vector<1x32x16xf32>
    %220 = vector.shape_cast %219 : vector<1x32x16xf32> to vector<32x16xf32>
    %221 = vector.extract_strided_slice %176 {offsets = [0, 2], sizes = [16, 25], strides = [1, 1]} : vector<16x29xf32> to vector<16x25xf32>
    %cst_235 = arith.constant dense<0.000000e+00> : vector<32x25xf32>
    %222 = tpu.matmul %220, %221, %cst_235 {dimension_numbers = #tpu.dot_dimension_numbers<[1], [0], [0], [1], [0, 0, 1, 1], [], []>} : vector<32x16xf32>, vector<16x25xf32>, vector<32x25xf32> -> vector<32x25xf32>
    %223 = arith.addf %215, %222 : vector<32x25xf32>
    %224 = vector.extract_strided_slice %171 {offsets = [0, 3], sizes = [16, 25], strides = [1, 1]} : vector<16x29xf32> to vector<16x25xf32>
    %cst_236 = arith.constant dense<0.000000e+00> : vector<32x25xf32>
    %225 = tpu.matmul %220, %224, %cst_236 {dimension_numbers = #tpu.dot_dimension_numbers<[1], [0], [0], [1], [0, 0, 1, 1], [], []>} : vector<32x16xf32>, vector<16x25xf32>, vector<32x25xf32> -> vector<32x25xf32>
    %226 = arith.addf %218, %225 : vector<32x25xf32>
    %c6_237 = arith.constant 6 : index
    %c0_238 = arith.constant 0 : index
    %c0_239 = arith.constant 0 : index
    %227 = vector.load %arg4[%c6_237, %c0_238, %c0_239] : memref<9x32x16xf32, #tpu.memory_space<vmem>>, vector<1x32x16xf32>
    %228 = vector.shape_cast %227 : vector<1x32x16xf32> to vector<32x16xf32>
    %229 = vector.extract_strided_slice %171 {offsets = [0, 3], sizes = [16, 25], strides = [1, 1]} : vector<16x29xf32> to vector<16x25xf32>
    %cst_240 = arith.constant dense<0.000000e+00> : vector<32x25xf32>
    %230 = tpu.matmul %228, %229, %cst_240 {dimension_numbers = #tpu.dot_dimension_numbers<[1], [0], [0], [1], [0, 0, 1, 1], [], []>} : vector<32x16xf32>, vector<16x25xf32>, vector<32x25xf32> -> vector<32x25xf32>
    %231 = arith.addf %223, %230 : vector<32x25xf32>
    %232 = vector.extract_strided_slice %176 {offsets = [0, 3], sizes = [16, 25], strides = [1, 1]} : vector<16x29xf32> to vector<16x25xf32>
    %cst_241 = arith.constant dense<0.000000e+00> : vector<32x25xf32>
    %233 = tpu.matmul %228, %232, %cst_241 {dimension_numbers = #tpu.dot_dimension_numbers<[1], [0], [0], [1], [0, 0, 1, 1], [], []>} : vector<32x16xf32>, vector<16x25xf32>, vector<32x25xf32> -> vector<32x25xf32>
    %234 = arith.addf %226, %233 : vector<32x25xf32>
    %c7_242 = arith.constant 7 : index
    %c0_243 = arith.constant 0 : index
    %c0_244 = arith.constant 0 : index
    %235 = vector.load %arg4[%c7_242, %c0_243, %c0_244] : memref<9x32x16xf32, #tpu.memory_space<vmem>>, vector<1x32x16xf32>
    %236 = vector.shape_cast %235 : vector<1x32x16xf32> to vector<32x16xf32>
    %237 = vector.extract_strided_slice %176 {offsets = [0, 3], sizes = [16, 25], strides = [1, 1]} : vector<16x29xf32> to vector<16x25xf32>
    %cst_245 = arith.constant dense<0.000000e+00> : vector<32x25xf32>
    %238 = tpu.matmul %236, %237, %cst_245 {dimension_numbers = #tpu.dot_dimension_numbers<[1], [0], [0], [1], [0, 0, 1, 1], [], []>} : vector<32x16xf32>, vector<16x25xf32>, vector<32x25xf32> -> vector<32x25xf32>
    %239 = arith.addf %231, %238 : vector<32x25xf32>
    %240 = vector.extract_strided_slice %171 {offsets = [0, 4], sizes = [16, 25], strides = [1, 1]} : vector<16x29xf32> to vector<16x25xf32>
    %cst_246 = arith.constant dense<0.000000e+00> : vector<32x25xf32>
    %241 = tpu.matmul %236, %240, %cst_246 {dimension_numbers = #tpu.dot_dimension_numbers<[1], [0], [0], [1], [0, 0, 1, 1], [], []>} : vector<32x16xf32>, vector<16x25xf32>, vector<32x25xf32> -> vector<32x25xf32>
    %242 = arith.addf %234, %241 : vector<32x25xf32>
    %c8_247 = arith.constant 8 : index
    %c0_248 = arith.constant 0 : index
    %c0_249 = arith.constant 0 : index
    %243 = vector.load %arg4[%c8_247, %c0_248, %c0_249] : memref<9x32x16xf32, #tpu.memory_space<vmem>>, vector<1x32x16xf32>
    %244 = vector.shape_cast %243 : vector<1x32x16xf32> to vector<32x16xf32>
    %245 = vector.extract_strided_slice %171 {offsets = [0, 4], sizes = [16, 25], strides = [1, 1]} : vector<16x29xf32> to vector<16x25xf32>
    %cst_250 = arith.constant dense<0.000000e+00> : vector<32x25xf32>
    %246 = tpu.matmul %244, %245, %cst_250 {dimension_numbers = #tpu.dot_dimension_numbers<[1], [0], [0], [1], [0, 0, 1, 1], [], []>} : vector<32x16xf32>, vector<16x25xf32>, vector<32x25xf32> -> vector<32x25xf32>
    %247 = arith.addf %239, %246 : vector<32x25xf32>
    %248 = vector.extract_strided_slice %176 {offsets = [0, 4], sizes = [16, 25], strides = [1, 1]} : vector<16x29xf32> to vector<16x25xf32>
    %cst_251 = arith.constant dense<0.000000e+00> : vector<32x25xf32>
    %249 = tpu.matmul %244, %248, %cst_251 {dimension_numbers = #tpu.dot_dimension_numbers<[1], [0], [0], [1], [0, 0, 1, 1], [], []>} : vector<32x16xf32>, vector<16x25xf32>, vector<32x25xf32> -> vector<32x25xf32>
    %250 = arith.addf %242, %249 : vector<32x25xf32>
    %c0_252 = arith.constant 0 : index
    %c0_253 = arith.constant 0 : index
    %251 = vector.load %arg5[%c0_252, %c0_253] : memref<32x1xf32, #tpu.memory_space<vmem>>, vector<32x1xf32>
    %252 = arith.maximumf %247, %250 : vector<32x25xf32>
    %253 = vector.broadcast %251 : vector<32x1xf32> to vector<32x25xf32>
    %254 = arith.addf %252, %253 : vector<32x25xf32>
    %cst_254 = arith.constant 0.000000e+00 : f32
    %255 = vector.broadcast %cst_254 : f32 to vector<32x25xf32>
    %256 = arith.maximumf %254, %255 : vector<32x25xf32>
    %cst_255 = arith.constant 0.000000e+00 : f32
    %257 = vector.broadcast %cst_255 : f32 to vector<32x64xf32>
    %258 = vector.extract_strided_slice %256 {offsets = [0, 0], sizes = [32, 1], strides = [1, 1]} : vector<32x25xf32> to vector<32x1xf32>
    %c0_256 = arith.constant 0 : index
    %c0_257 = arith.constant 0 : index
    %c0_258 = arith.constant 0 : index
    %259 = vector.load %arg6[%c0_256, %c0_257, %c0_258] : memref<25x32x64xf32, #tpu.memory_space<vmem>>, vector<1x32x64xf32>
    %260 = vector.shape_cast %259 : vector<1x32x64xf32> to vector<32x64xf32>
    %261 = vector.broadcast %258 : vector<32x1xf32> to vector<32x64xf32>
    %262 = arith.mulf %261, %260 : vector<32x64xf32>
    %263 = arith.addf %257, %262 : vector<32x64xf32>
    %264 = vector.extract_strided_slice %256 {offsets = [0, 1], sizes = [32, 1], strides = [1, 1]} : vector<32x25xf32> to vector<32x1xf32>
    %c1_259 = arith.constant 1 : index
    %c0_260 = arith.constant 0 : index
    %c0_261 = arith.constant 0 : index
    %265 = vector.load %arg6[%c1_259, %c0_260, %c0_261] : memref<25x32x64xf32, #tpu.memory_space<vmem>>, vector<1x32x64xf32>
    %266 = vector.shape_cast %265 : vector<1x32x64xf32> to vector<32x64xf32>
    %267 = vector.broadcast %264 : vector<32x1xf32> to vector<32x64xf32>
    %268 = arith.mulf %267, %266 : vector<32x64xf32>
    %269 = arith.addf %263, %268 : vector<32x64xf32>
    %270 = vector.extract_strided_slice %256 {offsets = [0, 2], sizes = [32, 1], strides = [1, 1]} : vector<32x25xf32> to vector<32x1xf32>
    %c2_262 = arith.constant 2 : index
    %c0_263 = arith.constant 0 : index
    %c0_264 = arith.constant 0 : index
    %271 = vector.load %arg6[%c2_262, %c0_263, %c0_264] : memref<25x32x64xf32, #tpu.memory_space<vmem>>, vector<1x32x64xf32>
    %272 = vector.shape_cast %271 : vector<1x32x64xf32> to vector<32x64xf32>
    %273 = vector.broadcast %270 : vector<32x1xf32> to vector<32x64xf32>
    %274 = arith.mulf %273, %272 : vector<32x64xf32>
    %275 = arith.addf %269, %274 : vector<32x64xf32>
    %276 = vector.extract_strided_slice %256 {offsets = [0, 3], sizes = [32, 1], strides = [1, 1]} : vector<32x25xf32> to vector<32x1xf32>
    %c3_265 = arith.constant 3 : index
    %c0_266 = arith.constant 0 : index
    %c0_267 = arith.constant 0 : index
    %277 = vector.load %arg6[%c3_265, %c0_266, %c0_267] : memref<25x32x64xf32, #tpu.memory_space<vmem>>, vector<1x32x64xf32>
    %278 = vector.shape_cast %277 : vector<1x32x64xf32> to vector<32x64xf32>
    %279 = vector.broadcast %276 : vector<32x1xf32> to vector<32x64xf32>
    %280 = arith.mulf %279, %278 : vector<32x64xf32>
    %281 = arith.addf %275, %280 : vector<32x64xf32>
    %282 = vector.extract_strided_slice %256 {offsets = [0, 4], sizes = [32, 1], strides = [1, 1]} : vector<32x25xf32> to vector<32x1xf32>
    %c4_268 = arith.constant 4 : index
    %c0_269 = arith.constant 0 : index
    %c0_270 = arith.constant 0 : index
    %283 = vector.load %arg6[%c4_268, %c0_269, %c0_270] : memref<25x32x64xf32, #tpu.memory_space<vmem>>, vector<1x32x64xf32>
    %284 = vector.shape_cast %283 : vector<1x32x64xf32> to vector<32x64xf32>
    %285 = vector.broadcast %282 : vector<32x1xf32> to vector<32x64xf32>
    %286 = arith.mulf %285, %284 : vector<32x64xf32>
    %287 = arith.addf %281, %286 : vector<32x64xf32>
    %288 = vector.extract_strided_slice %256 {offsets = [0, 5], sizes = [32, 1], strides = [1, 1]} : vector<32x25xf32> to vector<32x1xf32>
    %c5_271 = arith.constant 5 : index
    %c0_272 = arith.constant 0 : index
    %c0_273 = arith.constant 0 : index
    %289 = vector.load %arg6[%c5_271, %c0_272, %c0_273] : memref<25x32x64xf32, #tpu.memory_space<vmem>>, vector<1x32x64xf32>
    %290 = vector.shape_cast %289 : vector<1x32x64xf32> to vector<32x64xf32>
    %291 = vector.broadcast %288 : vector<32x1xf32> to vector<32x64xf32>
    %292 = arith.mulf %291, %290 : vector<32x64xf32>
    %293 = arith.addf %287, %292 : vector<32x64xf32>
    %294 = vector.extract_strided_slice %256 {offsets = [0, 6], sizes = [32, 1], strides = [1, 1]} : vector<32x25xf32> to vector<32x1xf32>
    %c6_274 = arith.constant 6 : index
    %c0_275 = arith.constant 0 : index
    %c0_276 = arith.constant 0 : index
    %295 = vector.load %arg6[%c6_274, %c0_275, %c0_276] : memref<25x32x64xf32, #tpu.memory_space<vmem>>, vector<1x32x64xf32>
    %296 = vector.shape_cast %295 : vector<1x32x64xf32> to vector<32x64xf32>
    %297 = vector.broadcast %294 : vector<32x1xf32> to vector<32x64xf32>
    %298 = arith.mulf %297, %296 : vector<32x64xf32>
    %299 = arith.addf %293, %298 : vector<32x64xf32>
    %300 = vector.extract_strided_slice %256 {offsets = [0, 7], sizes = [32, 1], strides = [1, 1]} : vector<32x25xf32> to vector<32x1xf32>
    %c7_277 = arith.constant 7 : index
    %c0_278 = arith.constant 0 : index
    %c0_279 = arith.constant 0 : index
    %301 = vector.load %arg6[%c7_277, %c0_278, %c0_279] : memref<25x32x64xf32, #tpu.memory_space<vmem>>, vector<1x32x64xf32>
    %302 = vector.shape_cast %301 : vector<1x32x64xf32> to vector<32x64xf32>
    %303 = vector.broadcast %300 : vector<32x1xf32> to vector<32x64xf32>
    %304 = arith.mulf %303, %302 : vector<32x64xf32>
    %305 = arith.addf %299, %304 : vector<32x64xf32>
    %306 = vector.extract_strided_slice %256 {offsets = [0, 8], sizes = [32, 1], strides = [1, 1]} : vector<32x25xf32> to vector<32x1xf32>
    %c8_280 = arith.constant 8 : index
    %c0_281 = arith.constant 0 : index
    %c0_282 = arith.constant 0 : index
    %307 = vector.load %arg6[%c8_280, %c0_281, %c0_282] : memref<25x32x64xf32, #tpu.memory_space<vmem>>, vector<1x32x64xf32>
    %308 = vector.shape_cast %307 : vector<1x32x64xf32> to vector<32x64xf32>
    %309 = vector.broadcast %306 : vector<32x1xf32> to vector<32x64xf32>
    %310 = arith.mulf %309, %308 : vector<32x64xf32>
    %311 = arith.addf %305, %310 : vector<32x64xf32>
    %312 = vector.extract_strided_slice %256 {offsets = [0, 9], sizes = [32, 1], strides = [1, 1]} : vector<32x25xf32> to vector<32x1xf32>
    %c9 = arith.constant 9 : index
    %c0_283 = arith.constant 0 : index
    %c0_284 = arith.constant 0 : index
    %313 = vector.load %arg6[%c9, %c0_283, %c0_284] : memref<25x32x64xf32, #tpu.memory_space<vmem>>, vector<1x32x64xf32>
    %314 = vector.shape_cast %313 : vector<1x32x64xf32> to vector<32x64xf32>
    %315 = vector.broadcast %312 : vector<32x1xf32> to vector<32x64xf32>
    %316 = arith.mulf %315, %314 : vector<32x64xf32>
    %317 = arith.addf %311, %316 : vector<32x64xf32>
    %318 = vector.extract_strided_slice %256 {offsets = [0, 10], sizes = [32, 1], strides = [1, 1]} : vector<32x25xf32> to vector<32x1xf32>
    %c10 = arith.constant 10 : index
    %c0_285 = arith.constant 0 : index
    %c0_286 = arith.constant 0 : index
    %319 = vector.load %arg6[%c10, %c0_285, %c0_286] : memref<25x32x64xf32, #tpu.memory_space<vmem>>, vector<1x32x64xf32>
    %320 = vector.shape_cast %319 : vector<1x32x64xf32> to vector<32x64xf32>
    %321 = vector.broadcast %318 : vector<32x1xf32> to vector<32x64xf32>
    %322 = arith.mulf %321, %320 : vector<32x64xf32>
    %323 = arith.addf %317, %322 : vector<32x64xf32>
    %324 = vector.extract_strided_slice %256 {offsets = [0, 11], sizes = [32, 1], strides = [1, 1]} : vector<32x25xf32> to vector<32x1xf32>
    %c11 = arith.constant 11 : index
    %c0_287 = arith.constant 0 : index
    %c0_288 = arith.constant 0 : index
    %325 = vector.load %arg6[%c11, %c0_287, %c0_288] : memref<25x32x64xf32, #tpu.memory_space<vmem>>, vector<1x32x64xf32>
    %326 = vector.shape_cast %325 : vector<1x32x64xf32> to vector<32x64xf32>
    %327 = vector.broadcast %324 : vector<32x1xf32> to vector<32x64xf32>
    %328 = arith.mulf %327, %326 : vector<32x64xf32>
    %329 = arith.addf %323, %328 : vector<32x64xf32>
    %330 = vector.extract_strided_slice %256 {offsets = [0, 12], sizes = [32, 1], strides = [1, 1]} : vector<32x25xf32> to vector<32x1xf32>
    %c12 = arith.constant 12 : index
    %c0_289 = arith.constant 0 : index
    %c0_290 = arith.constant 0 : index
    %331 = vector.load %arg6[%c12, %c0_289, %c0_290] : memref<25x32x64xf32, #tpu.memory_space<vmem>>, vector<1x32x64xf32>
    %332 = vector.shape_cast %331 : vector<1x32x64xf32> to vector<32x64xf32>
    %333 = vector.broadcast %330 : vector<32x1xf32> to vector<32x64xf32>
    %334 = arith.mulf %333, %332 : vector<32x64xf32>
    %335 = arith.addf %329, %334 : vector<32x64xf32>
    %336 = vector.extract_strided_slice %256 {offsets = [0, 13], sizes = [32, 1], strides = [1, 1]} : vector<32x25xf32> to vector<32x1xf32>
    %c13 = arith.constant 13 : index
    %c0_291 = arith.constant 0 : index
    %c0_292 = arith.constant 0 : index
    %337 = vector.load %arg6[%c13, %c0_291, %c0_292] : memref<25x32x64xf32, #tpu.memory_space<vmem>>, vector<1x32x64xf32>
    %338 = vector.shape_cast %337 : vector<1x32x64xf32> to vector<32x64xf32>
    %339 = vector.broadcast %336 : vector<32x1xf32> to vector<32x64xf32>
    %340 = arith.mulf %339, %338 : vector<32x64xf32>
    %341 = arith.addf %335, %340 : vector<32x64xf32>
    %342 = vector.extract_strided_slice %256 {offsets = [0, 14], sizes = [32, 1], strides = [1, 1]} : vector<32x25xf32> to vector<32x1xf32>
    %c14 = arith.constant 14 : index
    %c0_293 = arith.constant 0 : index
    %c0_294 = arith.constant 0 : index
    %343 = vector.load %arg6[%c14, %c0_293, %c0_294] : memref<25x32x64xf32, #tpu.memory_space<vmem>>, vector<1x32x64xf32>
    %344 = vector.shape_cast %343 : vector<1x32x64xf32> to vector<32x64xf32>
    %345 = vector.broadcast %342 : vector<32x1xf32> to vector<32x64xf32>
    %346 = arith.mulf %345, %344 : vector<32x64xf32>
    %347 = arith.addf %341, %346 : vector<32x64xf32>
    %348 = vector.extract_strided_slice %256 {offsets = [0, 15], sizes = [32, 1], strides = [1, 1]} : vector<32x25xf32> to vector<32x1xf32>
    %c15 = arith.constant 15 : index
    %c0_295 = arith.constant 0 : index
    %c0_296 = arith.constant 0 : index
    %349 = vector.load %arg6[%c15, %c0_295, %c0_296] : memref<25x32x64xf32, #tpu.memory_space<vmem>>, vector<1x32x64xf32>
    %350 = vector.shape_cast %349 : vector<1x32x64xf32> to vector<32x64xf32>
    %351 = vector.broadcast %348 : vector<32x1xf32> to vector<32x64xf32>
    %352 = arith.mulf %351, %350 : vector<32x64xf32>
    %353 = arith.addf %347, %352 : vector<32x64xf32>
    %354 = vector.extract_strided_slice %256 {offsets = [0, 16], sizes = [32, 1], strides = [1, 1]} : vector<32x25xf32> to vector<32x1xf32>
    %c16 = arith.constant 16 : index
    %c0_297 = arith.constant 0 : index
    %c0_298 = arith.constant 0 : index
    %355 = vector.load %arg6[%c16, %c0_297, %c0_298] : memref<25x32x64xf32, #tpu.memory_space<vmem>>, vector<1x32x64xf32>
    %356 = vector.shape_cast %355 : vector<1x32x64xf32> to vector<32x64xf32>
    %357 = vector.broadcast %354 : vector<32x1xf32> to vector<32x64xf32>
    %358 = arith.mulf %357, %356 : vector<32x64xf32>
    %359 = arith.addf %353, %358 : vector<32x64xf32>
    %360 = vector.extract_strided_slice %256 {offsets = [0, 17], sizes = [32, 1], strides = [1, 1]} : vector<32x25xf32> to vector<32x1xf32>
    %c17 = arith.constant 17 : index
    %c0_299 = arith.constant 0 : index
    %c0_300 = arith.constant 0 : index
    %361 = vector.load %arg6[%c17, %c0_299, %c0_300] : memref<25x32x64xf32, #tpu.memory_space<vmem>>, vector<1x32x64xf32>
    %362 = vector.shape_cast %361 : vector<1x32x64xf32> to vector<32x64xf32>
    %363 = vector.broadcast %360 : vector<32x1xf32> to vector<32x64xf32>
    %364 = arith.mulf %363, %362 : vector<32x64xf32>
    %365 = arith.addf %359, %364 : vector<32x64xf32>
    %366 = vector.extract_strided_slice %256 {offsets = [0, 18], sizes = [32, 1], strides = [1, 1]} : vector<32x25xf32> to vector<32x1xf32>
    %c18 = arith.constant 18 : index
    %c0_301 = arith.constant 0 : index
    %c0_302 = arith.constant 0 : index
    %367 = vector.load %arg6[%c18, %c0_301, %c0_302] : memref<25x32x64xf32, #tpu.memory_space<vmem>>, vector<1x32x64xf32>
    %368 = vector.shape_cast %367 : vector<1x32x64xf32> to vector<32x64xf32>
    %369 = vector.broadcast %366 : vector<32x1xf32> to vector<32x64xf32>
    %370 = arith.mulf %369, %368 : vector<32x64xf32>
    %371 = arith.addf %365, %370 : vector<32x64xf32>
    %372 = vector.extract_strided_slice %256 {offsets = [0, 19], sizes = [32, 1], strides = [1, 1]} : vector<32x25xf32> to vector<32x1xf32>
    %c19 = arith.constant 19 : index
    %c0_303 = arith.constant 0 : index
    %c0_304 = arith.constant 0 : index
    %373 = vector.load %arg6[%c19, %c0_303, %c0_304] : memref<25x32x64xf32, #tpu.memory_space<vmem>>, vector<1x32x64xf32>
    %374 = vector.shape_cast %373 : vector<1x32x64xf32> to vector<32x64xf32>
    %375 = vector.broadcast %372 : vector<32x1xf32> to vector<32x64xf32>
    %376 = arith.mulf %375, %374 : vector<32x64xf32>
    %377 = arith.addf %371, %376 : vector<32x64xf32>
    %378 = vector.extract_strided_slice %256 {offsets = [0, 20], sizes = [32, 1], strides = [1, 1]} : vector<32x25xf32> to vector<32x1xf32>
    %c20 = arith.constant 20 : index
    %c0_305 = arith.constant 0 : index
    %c0_306 = arith.constant 0 : index
    %379 = vector.load %arg6[%c20, %c0_305, %c0_306] : memref<25x32x64xf32, #tpu.memory_space<vmem>>, vector<1x32x64xf32>
    %380 = vector.shape_cast %379 : vector<1x32x64xf32> to vector<32x64xf32>
    %381 = vector.broadcast %378 : vector<32x1xf32> to vector<32x64xf32>
    %382 = arith.mulf %381, %380 : vector<32x64xf32>
    %383 = arith.addf %377, %382 : vector<32x64xf32>
    %384 = vector.extract_strided_slice %256 {offsets = [0, 21], sizes = [32, 1], strides = [1, 1]} : vector<32x25xf32> to vector<32x1xf32>
    %c21 = arith.constant 21 : index
    %c0_307 = arith.constant 0 : index
    %c0_308 = arith.constant 0 : index
    %385 = vector.load %arg6[%c21, %c0_307, %c0_308] : memref<25x32x64xf32, #tpu.memory_space<vmem>>, vector<1x32x64xf32>
    %386 = vector.shape_cast %385 : vector<1x32x64xf32> to vector<32x64xf32>
    %387 = vector.broadcast %384 : vector<32x1xf32> to vector<32x64xf32>
    %388 = arith.mulf %387, %386 : vector<32x64xf32>
    %389 = arith.addf %383, %388 : vector<32x64xf32>
    %390 = vector.extract_strided_slice %256 {offsets = [0, 22], sizes = [32, 1], strides = [1, 1]} : vector<32x25xf32> to vector<32x1xf32>
    %c22 = arith.constant 22 : index
    %c0_309 = arith.constant 0 : index
    %c0_310 = arith.constant 0 : index
    %391 = vector.load %arg6[%c22, %c0_309, %c0_310] : memref<25x32x64xf32, #tpu.memory_space<vmem>>, vector<1x32x64xf32>
    %392 = vector.shape_cast %391 : vector<1x32x64xf32> to vector<32x64xf32>
    %393 = vector.broadcast %390 : vector<32x1xf32> to vector<32x64xf32>
    %394 = arith.mulf %393, %392 : vector<32x64xf32>
    %395 = arith.addf %389, %394 : vector<32x64xf32>
    %396 = vector.extract_strided_slice %256 {offsets = [0, 23], sizes = [32, 1], strides = [1, 1]} : vector<32x25xf32> to vector<32x1xf32>
    %c23 = arith.constant 23 : index
    %c0_311 = arith.constant 0 : index
    %c0_312 = arith.constant 0 : index
    %397 = vector.load %arg6[%c23, %c0_311, %c0_312] : memref<25x32x64xf32, #tpu.memory_space<vmem>>, vector<1x32x64xf32>
    %398 = vector.shape_cast %397 : vector<1x32x64xf32> to vector<32x64xf32>
    %399 = vector.broadcast %396 : vector<32x1xf32> to vector<32x64xf32>
    %400 = arith.mulf %399, %398 : vector<32x64xf32>
    %401 = arith.addf %395, %400 : vector<32x64xf32>
    %402 = vector.extract_strided_slice %256 {offsets = [0, 24], sizes = [32, 1], strides = [1, 1]} : vector<32x25xf32> to vector<32x1xf32>
    %c24 = arith.constant 24 : index
    %c0_313 = arith.constant 0 : index
    %c0_314 = arith.constant 0 : index
    %403 = vector.load %arg6[%c24, %c0_313, %c0_314] : memref<25x32x64xf32, #tpu.memory_space<vmem>>, vector<1x32x64xf32>
    %404 = vector.shape_cast %403 : vector<1x32x64xf32> to vector<32x64xf32>
    %405 = vector.broadcast %402 : vector<32x1xf32> to vector<32x64xf32>
    %406 = arith.mulf %405, %404 : vector<32x64xf32>
    %407 = arith.addf %401, %406 : vector<32x64xf32>
    %cst_315 = arith.constant dense<0.000000e+00> : vector<64xf32>
    %408 = vector.multi_reduction <add>, %407, %cst_315 [0] : vector<32x64xf32> to vector<64xf32>
    %409 = vector.shape_cast %408 : vector<64xf32> to vector<1x64xf32>
    %c0_316 = arith.constant 0 : index
    %c0_317 = arith.constant 0 : index
    %410 = vector.load %arg7[%c0_316, %c0_317] : memref<1x64xf32, #tpu.memory_space<vmem>>, vector<1x64xf32>
    %411 = arith.addf %409, %410 : vector<1x64xf32>
    %cst_318 = arith.constant 0.000000e+00 : f32
    %412 = vector.broadcast %cst_318 : f32 to vector<1x64xf32>
    %413 = arith.maximumf %411, %412 : vector<1x64xf32>
    %c0_319 = arith.constant 0 : index
    %c0_320 = arith.constant 0 : index
    %c0_321 = arith.constant 0 : index
    %414 = vector.load %arg8[%c0_319, %c0_320, %c0_321] : memref<1x1x64xf32, #tpu.memory_space<vmem>>, vector<1x1x64xf32>
    %415 = vector.shape_cast %414 : vector<1x1x64xf32> to vector<1x64xf32>
    %416 = vector.shape_cast %413 : vector<1x64xf32> to vector<1x1x64xf32>
    tpu.vector_store %arg8[%c0_319, %c0_320, %c0_321], %416 {strides = array<i32>} : memref<1x1x64xf32, #tpu.memory_space<vmem>>, vector<1x1x64xf32>,
    return
  }
  func.func @transform_0(%arg0: i32) -> (i32, i32, i32, i32) {
    %c0_i32 = arith.constant 0 : i32
    %c0_i32_0 = arith.constant 0 : i32
    %c0_i32_1 = arith.constant 0 : i32
    %c0_i32_2 = arith.constant 0 : i32
    return %arg0, %c0_i32, %c0_i32_0, %c0_i32_1 : i32, i32, i32, i32
  }
  func.func @transform_1(%arg0: i32) -> (i32, i32, i32) {
    %c0_i32 = arith.constant 0 : i32
    %c0_i32_0 = arith.constant 0 : i32
    %c0_i32_1 = arith.constant 0 : i32
    %c0_i32_2 = arith.constant 0 : i32
    return %c0_i32, %c0_i32_0, %c0_i32_1 : i32, i32, i32
  }
  func.func @transform_2(%arg0: i32) -> (i32, i32) {
    %c0_i32 = arith.constant 0 : i32
    %c0_i32_0 = arith.constant 0 : i32
    %c0_i32_1 = arith.constant 0 : i32
    return %c0_i32, %c0_i32_0 : i32, i32
  }
  func.func @transform_3(%arg0: i32) -> (i32, i32, i32) {
    %c0_i32 = arith.constant 0 : i32
    %c0_i32_0 = arith.constant 0 : i32
    %c0_i32_1 = arith.constant 0 : i32
    %c0_i32_2 = arith.constant 0 : i32
    return %c0_i32, %c0_i32_0, %c0_i32_1 : i32, i32, i32
  }
  func.func @transform_4(%arg0: i32) -> (i32, i32) {
    %c0_i32 = arith.constant 0 : i32
    %c0_i32_0 = arith.constant 0 : i32
    %c0_i32_1 = arith.constant 0 : i32
    return %c0_i32, %c0_i32_0 : i32, i32
  }
  func.func @transform_5(%arg0: i32) -> (i32, i32, i32) {
    %c0_i32 = arith.constant 0 : i32
    %c0_i32_0 = arith.constant 0 : i32
    %c0_i32_1 = arith.constant 0 : i32
    %c0_i32_2 = arith.constant 0 : i32
    return %c0_i32, %c0_i32_0, %c0_i32_1 : i32, i32, i32
  }
  func.func @transform_6(%arg0: i32) -> (i32, i32) {
    %c0_i32 = arith.constant 0 : i32
    %c0_i32_0 = arith.constant 0 : i32
    %c0_i32_1 = arith.constant 0 : i32
    return %c0_i32, %c0_i32_0 : i32, i32
  }
  func.func @transform_7(%arg0: i32) -> (i32, i32, i32) {
    %c0_i32 = arith.constant 0 : i32
    %c0_i32_0 = arith.constant 0 : i32
    %c0_i32_1 = arith.constant 0 : i32
    return %arg0, %c0_i32, %c0_i32_0 : i32, i32, i32
  }
}

</mosaic_0001>

<llo_original>
// kernel: network_forward.1
$region0: #{network_forward.1}
  #allocation0 [shape = 'u32[]', space=smem, size = 0x4, offset = 0x4, fixed_abs, tag = 'smem constant byte address 0x4 - core index']
  #allocation1 [shape = 'u32[144,128]{1,0:T(1,128)}', space=vmem, size = 0x12000, scoped, tag = 'internal scratch']
  %s0 = inlined_call_operand.vmem [shape: f32[2,4,45,31], index: 0, kind: input, shape index: {}]
  %s1 = inlined_call_operand.vmem [shape: f32[9,16,45], index: 1, kind: input, shape index: {}]
  %s2 = inlined_call_operand.vmem [shape: f32[16,1], index: 2, kind: input, shape index: {}]
  %s3 = inlined_call_operand.vmem [shape: f32[9,32,16], index: 3, kind: input, shape index: {}]
  %s4 = inlined_call_operand.vmem [shape: f32[32,1], index: 4, kind: input, shape index: {}]
  %s5 = inlined_call_operand.vmem [shape: f32[25,32,64], index: 5, kind: input, shape index: {}]
  %s6 = inlined_call_operand.vmem [shape: f32[1,64], index: 6, kind: input, shape index: {}]
  %s7 = inlined_call_operand.hbm [shape: f32[2,1,64], index: 7, kind: output, shape index: {}]
  %s8 = sld [smem:[#allocation0]]
  $region61: #{network_forward.1} parent=0
    _
  %s10 = ssub.s32 1, %s8
  %s11 = scalar_select 0, %s10, %s8
  $region1: #{network_forward.1} parent=0
    #allocation2 [shape = 'u8[1024]{0}', space=vmem, size = 0x400, scoped, tag = 'output window, operand 0']
    #allocation3 [shape = 's32[2]{0}', space=sflag, size = 0x8, scoped, tag = 'scoped memory for network_forward.1']
    %12 = vsyncpa [#allocation3], 0
    %s13 = scalar_lea.sflag [#allocation3], 1
    %14 = vsyncpa %s13, 0
    loop: start=0, step=1, limit=4
    $region2: #{network_forward.1} parent=1 // loop_pre_header
      _
    $region3: #{network_forward.1} parent=1 // loop_header
      %s16 = sphi 0, %s20
      %p17 = scmp.ge.s32.totalorder %s16, 4
      %s26 = sphi 0, %s28
      %s29 = sphi 0, %s26
      %s30 = sphi 0, %s29
      %s46 = sphi 0, %s30
      %s50 = sphi 0, %s50
      %s52 = sphi 0, %s50
      %s53 = sphi 0, %s52
      %s67 = sphi 0, %s53
      %s71 = sphi 0, %s71
      %s73 = sphi 0, %s71
      %s74 = sphi 0, %s73
      %s88 = sphi 0, %s74
      %s92 = sphi 0, %s92
      %s94 = sphi 0, %s92
      %s95 = sphi 0, %s94
      %s109 = sphi 0, %s95
      %s113 = sphi 0, %s113
      %s115 = sphi 0, %s113
      %s116 = sphi 0, %s115
      %s130 = sphi 0, %s116
      %s134 = sphi 0, %s134
      %s136 = sphi 0, %s134
      %s137 = sphi 0, %s136
      %s151 = sphi 0, %s137
      %s155 = sphi 0, %s155
      %s157 = sphi 0, %s155
      %s158 = sphi 0, %s157
      %s172 = sphi 0, %s158
      %s178 = sphi 0, %s180
      %s181 = sphi 0, %s178
      %s182 = sphi 0, %s181
      %s198 = sphi 0, %s182
    $region4: #{network_forward.1} parent=1 // loop_header_branch
      %19 = sbr.rel (%p17) target = $region8
    $region5: #{network_forward.1} parent=1 // loop_body
      %s21 = ssub.s32 %s16, 1
      %s22 = ssub.s32 %s16, 2
      %s23 = sadd.s32 %s16, 1
      %s24 = ssub.s32 %s16, %s23
      %p25 = scmp.eq.s32.totalorder %s24, 0
      %s27 = sadd.s32 %s26, 1
      %s28 = scalar_select %p25, %s26, %s27
      %p31 = pneg %p25
      %p32 = scmp.eq.s32.totalorder %s16, 1
      %p33 = por %p31, %p32
      %p34 = scmp.ne.s32.totalorder %s26, %s29
      %p35 = scmp.eq.s32.totalorder %s16, 0
      %p36 = por %p34, %p35
      %p37 = scmp.ne.s32.totalorder %s26, %s29
      %p38 = scmp.eq.s32.totalorder %s21, 1
      %p39 = por %p37, %p38
      %p40 = scmp.ne.s32.totalorder %s29, %s30
      %p41 = scmp.eq.s32.totalorder %s21, 0
      %p42 = por %p40, %p41
      %p43 = scmp.ne.s32.totalorder %s29, %s30
      %p44 = scmp.eq.s32.totalorder %s22, 1
      %p45 = por %p43, %p44
      %p47 = scmp.ne.s32.totalorder %s30, %s46
      %p48 = scmp.eq.s32.totalorder %s22, 0
      %p49 = por %p47, %p48
      %s51 = sadd.s32 %s50, 1
      %p54 = scmp.eq.s32.totalorder %s16, 1
      %p55 = scmp.ne.s32.totalorder %s50, %s52
      %p56 = scmp.eq.s32.totalorder %s16, 0
      %p57 = por %p55, %p56
      %p58 = scmp.ne.s32.totalorder %s50, %s52
      %p59 = scmp.eq.s32.totalorder %s21, 1
      %p60 = por %p58, %p59
      %p61 = scmp.ne.s32.totalorder %s52, %s53
      %p62 = scmp.eq.s32.totalorder %s21, 0
      %p63 = por %p61, %p62
      %p64 = scmp.ne.s32.totalorder %s52, %s53
      %p65 = scmp.eq.s32.totalorder %s22, 1
      %p66 = por %p64, %p65
      %p68 = scmp.ne.s32.totalorder %s53, %s67
      %p69 = scmp.eq.s32.totalorder %s22, 0
      %p70 = por %p68, %p69
      %s72 = sadd.s32 %s71, 1
      %p75 = scmp.eq.s32.totalorder %s16, 1
      %p76 = scmp.ne.s32.totalorder %s71, %s73
      %p77 = scmp.eq.s32.totalorder %s16, 0
      %p78 = por %p76, %p77
      %p79 = scmp.ne.s32.totalorder %s71, %s73
      %p80 = scmp.eq.s32.totalorder %s21, 1
      %p81 = por %p79, %p80
      %p82 = scmp.ne.s32.totalorder %s73, %s74
      %p83 = scmp.eq.s32.totalorder %s21, 0
      %p84 = por %p82, %p83
      %p85 = scmp.ne.s32.totalorder %s73, %s74
      %p86 = scmp.eq.s32.totalorder %s22, 1
      %p87 = por %p85, %p86
      %p89 = scmp.ne.s32.totalorder %s74, %s88
      %p90 = scmp.eq.s32.totalorder %s22, 0
      %p91 = por %p89, %p90
      %s93 = sadd.s32 %s92, 1
      %p96 = scmp.eq.s32.totalorder %s16, 1
      %p97 = scmp.ne.s32.totalorder %s92, %s94
      %p98 = scmp.eq.s32.totalorder %s16, 0
      %p99 = por %p97, %p98
      %p100 = scmp.ne.s32.totalorder %s92, %s94
      %p101 = scmp.eq.s32.totalorder %s21, 1
      %p102 = por %p100, %p101
      %p103 = scmp.ne.s32.totalorder %s94, %s95
      %p104 = scmp.eq.s32.totalorder %s21, 0
      %p105 = por %p103, %p104
      %p106 = scmp.ne.s32.totalorder %s94, %s95
      %p107 = scmp.eq.s32.totalorder %s22, 1
      %p108 = por %p106, %p107
      %p110 = scmp.ne.s32.totalorder %s95, %s109
      %p111 = scmp.eq.s32.totalorder %s22, 0
      %p112 = por %p110, %p111
      %s114 = sadd.s32 %s113, 1
      %p117 = scmp.eq.s32.totalorder %s16, 1
      %p118 = scmp.ne.s32.totalorder %s113, %s115
      %p119 = scmp.eq.s32.totalorder %s16, 0
      %p120 = por %p118, %p119
      %p121 = scmp.ne.s32.totalorder %s113, %s115
      %p122 = scmp.eq.s32.totalorder %s21, 1
      %p123 = por %p121, %p122
      %p124 = scmp.ne.s32.totalorder %s115, %s116
      %p125 = scmp.eq.s32.totalorder %s21, 0
      %p126 = por %p124, %p125
      %p127 = scmp.ne.s32.totalorder %s115, %s116
      %p128 = scmp.eq.s32.totalorder %s22, 1
      %p129 = por %p127, %p128
      %p131 = scmp.ne.s32.totalorder %s116, %s130
      %p132 = scmp.eq.s32.totalorder %s22, 0
      %p133 = por %p131, %p132
      %s135 = sadd.s32 %s134, 1
      %p138 = scmp.eq.s32.totalorder %s16, 1
      %p139 = scmp.ne.s32.totalorder %s134, %s136
      %p140 = scmp.eq.s32.totalorder %s16, 0
      %p141 = por %p139, %p140
      %p142 = scmp.ne.s32.totalorder %s134, %s136
      %p143 = scmp.eq.s32.totalorder %s21, 1
      %p144 = por %p142, %p143
      %p145 = scmp.ne.s32.totalorder %s136, %s137
      %p146 = scmp.eq.s32.totalorder %s21, 0
      %p147 = por %p145, %p146
      %p148 = scmp.ne.s32.totalorder %s136, %s137
      %p149 = scmp.eq.s32.totalorder %s22, 1
      %p150 = por %p148, %p149
      %p152 = scmp.ne.s32.totalorder %s137, %s151
      %p153 = scmp.eq.s32.totalorder %s22, 0
      %p154 = por %p152, %p153
      %s156 = sadd.s32 %s155, 1
      %p159 = scmp.eq.s32.totalorder %s16, 1
      %p160 = scmp.ne.s32.totalorder %s155, %s157
      %p161 = scmp.eq.s32.totalorder %s16, 0
      %p162 = por %p160, %p161
      %p163 = scmp.ne.s32.totalorder %s155, %s157
      %p164 = scmp.eq.s32.totalorder %s21, 1
      %p165 = por %p163, %p164
      %p166 = scmp.ne.s32.totalorder %s157, %s158
      %p167 = scmp.eq.s32.totalorder %s21, 0
      %p168 = por %p166, %p167
      %p169 = scmp.ne.s32.totalorder %s157, %s158
      %p170 = scmp.eq.s32.totalorder %s22, 1
      %p171 = por %p169, %p170
      %p173 = scmp.ne.s32.totalorder %s158, %s172
      %p174 = scmp.eq.s32.totalorder %s22, 0
      %p175 = por %p173, %p174
      %s176 = ssub.s32 %s16, %s23
      %p177 = scmp.eq.s32.totalorder %s176, 0
      %s179 = sadd.s32 %s178, 1
      %s180 = scalar_select %p177, %s178, %s179
      %p183 = pneg %p177
      %p184 = scmp.eq.s32.totalorder %s16, 1
      %p185 = por %p183, %p184
      %p186 = scmp.ne.s32.totalorder %s178, %s181
      %p187 = scmp.eq.s32.totalorder %s16, 0
      %p188 = por %p186, %p187
      %p189 = scmp.ne.s32.totalorder %s178, %s181
      %p190 = scmp.eq.s32.totalorder %s21, 1
      %p191 = por %p189, %p190
      %p192 = scmp.ne.s32.totalorder %s181, %s182
      %p193 = scmp.eq.s32.totalorder %s21, 0
      %p194 = por %p192, %p193
      %p195 = scmp.ne.s32.totalorder %s181, %s182
      %p196 = scmp.eq.s32.totalorder %s22, 1
      %p197 = por %p195, %p196
      %p199 = scmp.ne.s32.totalorder %s182, %s198
      %p200 = scmp.eq.s32.totalorder %s22, 0
      %p201 = por %p199, %p200
      %p202 = scmp.le.s32.totalorder 1, %s16
      %p203 = scmp.lt.s32.totalorder %s16, 3
      %p204 = pnand %p202, %p203
      %p205 = pneg %p204
      // Predicated region
      $region9: #{network_forward.1} parent=5 // pred_check
        _
      $region10: #{network_forward.1} parent=5 // pred_check_branch
        %207 = sbr.rel (%p204) target = $region12
      $region11: #{network_forward.1} parent=5 // pred_region
        %s208 = ssub.s32 %s16, 1
        // Predicated region
        $region13: #{network_forward.1} parent=11 // pred_check
          %p209 = pneg %p63
        $region14: #{network_forward.1} parent=11 // pred_check_branch
          %211 = sbr.rel (%p209) target = $region16
        $region15: #{network_forward.1} parent=11 // pred_region
          _
        $region16: #{network_forward.1} parent=11 // pred_fallthru
          _
        // Predicated region
        $region17: #{network_forward.1} parent=11 // pred_check
          %p212 = pneg %p84
        $region18: #{network_forward.1} parent=11 // pred_check_branch
          %214 = sbr.rel (%p212) target = $region20
        $region19: #{network_forward.1} parent=11 // pred_region
          _
        $region20: #{network_forward.1} parent=11 // pred_fallthru
          _
        // Predicated region
        $region21: #{network_forward.1} parent=11 // pred_check
          %p215 = pneg %p105
        $region22: #{network_forward.1} parent=11 // pred_check_branch
          %217 = sbr.rel (%p215) target = $region24
        $region23: #{network_forward.1} parent=11 // pred_region
          _
        $region24: #{network_forward.1} parent=11 // pred_fallthru
          _
        // Predicated region
        $region25: #{network_forward.1} parent=11 // pred_check
          %p218 = pneg %p126
        $region26: #{network_forward.1} parent=11 // pred_check_branch
          %220 = sbr.rel (%p218) target = $region28
        $region27: #{network_forward.1} parent=11 // pred_region
          _
        $region28: #{network_forward.1} parent=11 // pred_fallthru
          _
        // Predicated region
        $region29: #{network_forward.1} parent=11 // pred_check
          %p221 = pneg %p147
        $region30: #{network_forward.1} parent=11 // pred_check_branch
          %223 = sbr.rel (%p221) target = $region32
        $region31: #{network_forward.1} parent=11 // pred_region
          _
        $region32: #{network_forward.1} parent=11 // pred_fallthru
          _
        // Predicated region
        $region33: #{network_forward.1} parent=11 // pred_check
          %p224 = pneg %p168
        $region34: #{network_forward.1} parent=11 // pred_check_branch
          %226 = sbr.rel (%p224) target = $region36
        $region35: #{network_forward.1} parent=11 // pred_region
          _
        $region36: #{network_forward.1} parent=11 // pred_fallthru
          _
      $region12: #{network_forward.1} parent=5 // pred_fallthru
        _
      %p227 = scmp.lt.s32.totalorder %s16, 2
      // Predicated region
      $region37: #{network_forward.1} parent=5 // pred_check
        %p228 = pneg %p227
      $region38: #{network_forward.1} parent=5 // pred_check_branch
        %230 = sbr.rel (%p228) target = $region40
      $region39: #{network_forward.1} parent=5 // pred_region
        // Predicated region
        $region41: #{network_forward.1} parent=39 // pred_check
          %p231 = pneg %p36
        $region42: #{network_forward.1} parent=39 // pred_check_branch
          %233 = sbr.rel (%p231) target = $region44
        $region43: #{network_forward.1} parent=39 // pred_region
          %p234 = scmp.lt.s32.totalorder %s16, 1
          %s235 = scalar_select %p234, %s16, 1
          %s236 = smul.addr %s235, 24
          %s237 = smul.addr %s236, 8
          %s238 = scalar_lea.vmem %s0, %s237
        $region44: #{network_forward.1} parent=39 // pred_fallthru
          _
      $region40: #{network_forward.1} parent=5 // pred_fallthru
        _
      %p239 = scmp.le.s32.totalorder 1, %s16
      %p240 = scmp.lt.s32.totalorder %s16, 3
      %p241 = pnand %p239, %p240
      %p242 = pneg %p241
      // Predicated region
      $region45: #{network_forward.1} parent=5 // pred_check
        _
      $region46: #{network_forward.1} parent=5 // pred_check_branch
        %244 = sbr.rel (%p241) target = $region48
      $region47: #{network_forward.1} parent=5 // pred_region
        %s245 = ssub.s32 %s16, 1
        %p246 = scmp.lt.s32.totalorder %s21, 1
        %s247 = scalar_select %p246, %s21, 1
        %s248 = smul.addr %s247, 24
        %s249 = smul.addr %s248, 8
        %s250 = scalar_lea.vmem %s0, %s249
        %p251 = pneg %p42
        %p252 = pneg %p39
        %p253 = pneg %p63
        %p254 = pneg %p60
        %p255 = pneg %p84
        %p256 = pneg %p81
        %p257 = pneg %p105
        %p258 = pneg %p102
        %p259 = pneg %p126
        %p260 = pneg %p123
        %p261 = pneg %p147
        %p262 = pneg %p144
        %p263 = pneg %p168
        %p264 = pneg %p165
        %p265 = pneg %p194
        %p266 = pneg %p191
        %s267 = sand.u32 %s181, 1
        %s268 = scalar_lea.sflag [#allocation3], %s267
        %s269 = sand.u32 %s181, 1
        %s270 = scalar_lea.vmem [#allocation2], %s269
        %p271 = scmp.lt.s32.totalorder %s21, 1
        %s272 = scalar_select %p271, %s21, 1
        %s273 = smul.addr %s272, 24
        %s274 = smul.addr %s273, 8
        %s275 = scalar_lea.vmem %s0, %s274
        %v276 = vld [vmem:[%s1] sm:$0xff]
        %v277 = vld [vmem:[%s1 + $0x8] sm:$0xff]
        %v278 = vld [vmem:[%s275] sm:$0xff]
        %v279 = vld [vmem:[%s275 + $0x8] sm:$0xff]
        %v280 = vld [vmem:[%s275 + $0x10] sm:$0xff]
        %v281 = vld [vmem:[%s275 + $0x18] sm:$0xff]
        %v282 = vld [vmem:[%s275 + $0x20] sm:$0xff]
        %v283 = vld [vmem:[%s275 + $0x28] sm:$0x1f]
        %s284 = scalar_lea.vmem %s275, 48
        %v285 = vld [vmem:[%s284] sm:$0xff]
        %v286 = vld [vmem:[%s284 + $0x8] sm:$0xff]
        %v287 = vld [vmem:[%s284 + $0x10] sm:$0xff]
        %v288 = vld [vmem:[%s284 + $0x18] sm:$0xff]
        %v289 = vld [vmem:[%s284 + $0x20] sm:$0xff]
        %v290 = vld [vmem:[%s284 + $0x28] sm:$0x1f]
        %s291 = scalar_lea.vmem %s275, 96
        %v292 = vld [vmem:[%s291] sm:$0xff]
        %v293 = vld [vmem:[%s291 + $0x8] sm:$0xff]
        %v294 = vld [vmem:[%s291 + $0x10] sm:$0xff]
        %v295 = vld [vmem:[%s291 + $0x18] sm:$0xff]
        %v296 = vld [vmem:[%s291 + $0x20] sm:$0xff]
        %v297 = vld [vmem:[%s291 + $0x28] sm:$0x1f]
        %s298 = scalar_lea.vmem %s275, 144
        %v299 = vld [vmem:[%s298] sm:$0xff]
        %v300 = vld [vmem:[%s298 + $0x8] sm:$0xff]
        %v301 = vld [vmem:[%s298 + $0x10] sm:$0xff]
        %v302 = vld [vmem:[%s298 + $0x18] sm:$0xff]
        %v303 = vld [vmem:[%s298 + $0x20] sm:$0xff]
        %v304 = vld [vmem:[%s298 + $0x28] sm:$0x1f]
        %s305 = scalar_lea.vmem %s1, 16
        %v306 = vld [vmem:[%s305] sm:$0xff]
        %v307 = vld [vmem:[%s305 + $0x8] sm:$0xff]
        %vm308 = vcmask 367616
        %v310 = vsel %vm308, %v306, 0
        %v313 = vsel %vm308, %v307, 0
        %vm315 = vcmask 1044480
        %v317 = vsel %vm315, %v290, 0
        %319 = vmatprep.subr.mxu0 0.0
        %320 = vmatpush1.msra.mxu0 %v285
        %321 = vmatprep.subr.mxu0 0.0
        %322 = vmatpush1.msra.mxu0 %v286
        %323 = vmatprep.subr.mxu0 0.0
        %324 = vmatpush1.msra.mxu0 %v287
        %325 = vmatprep.subr.mxu0 0.0
        %326 = vmatpush1.msra.mxu0 %v288
        %327 = vmatprep.subr.mxu0 0.0
        %328 = vmatpush1.msra.mxu0 %v289
        %329 = vmatprep.subr.mxu0 0.0
        %330 = vmatpush1.msra.mxu0 %v317
        %331 = vmatprep.subr.mxu0 0.0
        %332 = vmatpush1.msra.mxu0 0.0
        %333 = vmatprep.subr.mxu0 0.0
        %334 = vmatpush1.msra.mxu0 0.0
        %335 = vmatprep.subr.mxu0 0.0
        %336 = vmatpush1.msra.mxu0 0.0
        %337 = vmatprep.subr.mxu0 0.0
        %338 = vmatpush1.msra.mxu0 0.0
        %339 = vmatprep.subr.mxu0 0.0
        %340 = vmatpush1.msra.mxu0 0.0
        %341 = vmatprep.subr.mxu0 0.0
        %342 = vmatpush1.msra.mxu0 0.0
        %343 = vmatprep.subr.mxu0 0.0
        %344 = vmatpush1.msra.mxu0 0.0
        %345 = vmatprep.subr.mxu0 0.0
        %346 = vmatpush1.msra.mxu0 0.0
        %347 = vmatprep.subr.mxu0 0.0
        %348 = vmatpush1.msra.mxu0 0.0
        %349 = vmatprep.subr.mxu0 0.0
        %350 = vmatpush1.msra.mxu0 0.0
        %351 = vmatprep.subr.mxu0 0.0
        %352 = vmatpush1.msra.mxu0 0.0
        %353 = vmatprep.subr.mxu0 0.0
        %354 = vmatpush1.msra.mxu0 0.0
        %355 = vmatprep.subr.mxu0 0.0
        %356 = vmatpush1.msra.mxu0 0.0
        %357 = vmatprep.subr.mxu0 0.0
        %358 = vmatpush1.msra.mxu0 0.0
        %359 = vmatprep.subr.mxu0 0.0
        %360 = vmatpush1.msra.mxu0 0.0
        %361 = vmatprep.subr.mxu0 0.0
        %362 = vmatpush1.msra.mxu0 0.0
        %363 = vmatprep.subr.mxu0 0.0
        %364 = vmatpush1.msra.mxu0 0.0
        %365 = vmatprep.subr.mxu0 0.0
        %366 = vmatpush1.msra.mxu0 0.0
        %367 = vmatprep.subr.mxu0 0.0
        %368 = vmatpush1.msra.mxu0 0.0
        %369 = vmatprep.subr.mxu0 0.0
        %370 = vmatpush1.msra.mxu0 0.0
        %371 = vmatprep.subr.mxu0 0.0
        %372 = vmatpush1.msra.mxu0 0.0
        %373 = vmatprep.subr.mxu0 0.0
        %374 = vmatpush1.msra.mxu0 0.0
        %375 = vmatprep.subr.mxu0 0.0
        %376 = vmatpush1.msra.mxu0 0.0
        %377 = vmatprep.subr.mxu0 0.0
        %378 = vmatpush1.msra.mxu0 0.0
        %379 = vmatprep.subr.mxu0 0.0
        %380 = vmatpush1.msra.mxu0 0.0
        %381 = vmatprep.subr.mxu0 0.0
        %382 = vmatpush1.msra.mxu0 0.0
        %383 = vmatprep.mubr.f32.mxu0 0.0
        %384 = vmatmul.mubr.f32.gmra.mrb[0].mxu0 %v310
        %v385 = vpop.f32.mrb[0].mxu0
        %v386 = vadd.f32 0.0, %v385
        %v387 = vpop.f32.mrb[0].mxu0
        %388 = vmatprep.mubr.f32.mxu0 0.0
        %389 = vmatmul.mubr.f32.gmra.mrb[0].mxu0 %v313
        %v390 = vpop.f32.mrb[0].mxu0
        %v391 = vadd.f32 0.0, %v390
        %v392 = vpop.f32.mrb[0].mxu0
        %393 = vdwg.mxu0
        %v395 = vsel %vm308, %v276, 0
        %v398 = vsel %vm308, %v277, 0
        %v401 = vsel %vm315, %v283, 0
        %403 = vmatprep.subr.mxu0 0.0
        %404 = vmatpush1.msra.mxu0 %v278
        %405 = vmatprep.subr.mxu0 0.0
        %406 = vmatpush1.msra.mxu0 %v279
        %407 = vmatprep.subr.mxu0 0.0
        %408 = vmatpush1.msra.mxu0 %v280
        %409 = vmatprep.subr.mxu0 0.0
        %410 = vmatpush1.msra.mxu0 %v281
        %411 = vmatprep.subr.mxu0 0.0
        %412 = vmatpush1.msra.mxu0 %v282
        %413 = vmatprep.subr.mxu0 0.0
        %414 = vmatpush1.msra.mxu0 %v401
        %415 = vmatprep.subr.mxu0 0.0
        %416 = vmatpush1.msra.mxu0 0.0
        %417 = vmatprep.subr.mxu0 0.0
        %418 = vmatpush1.msra.mxu0 0.0
        %419 = vmatprep.subr.mxu0 0.0
        %420 = vmatpush1.msra.mxu0 0.0
        %421 = vmatprep.subr.mxu0 0.0
        %422 = vmatpush1.msra.mxu0 0.0
        %423 = vmatprep.subr.mxu0 0.0
        %424 = vmatpush1.msra.mxu0 0.0
        %425 = vmatprep.subr.mxu0 0.0
        %426 = vmatpush1.msra.mxu0 0.0
        %427 = vmatprep.subr.mxu0 0.0
        %428 = vmatpush1.msra.mxu0 0.0
        %429 = vmatprep.subr.mxu0 0.0
        %430 = vmatpush1.msra.mxu0 0.0
        %431 = vmatprep.subr.mxu0 0.0
        %432 = vmatpush1.msra.mxu0 0.0
        %433 = vmatprep.subr.mxu0 0.0
        %434 = vmatpush1.msra.mxu0 0.0
        %435 = vmatprep.subr.mxu0 0.0
        %436 = vmatpush1.msra.mxu0 0.0
        %437 = vmatprep.subr.mxu0 0.0
        %438 = vmatpush1.msra.mxu0 0.0
        %439 = vmatprep.subr.mxu0 0.0
        %440 = vmatpush1.msra.mxu0 0.0
        %441 = vmatprep.subr.mxu0 0.0
        %442 = vmatpush1.msra.mxu0 0.0
        %443 = vmatprep.subr.mxu0 0.0
        %444 = vmatpush1.msra.mxu0 0.0
        %445 = vmatprep.subr.mxu0 0.0
        %446 = vmatpush1.msra.mxu0 0.0
        %447 = vmatprep.subr.mxu0 0.0
        %448 = vmatpush1.msra.mxu0 0.0
        %449 = vmatprep.subr.mxu0 0.0
        %450 = vmatpush1.msra.mxu0 0.0
        %451 = vmatprep.subr.mxu0 0.0
        %452 = vmatpush1.msra.mxu0 0.0
        %453 = vmatprep.subr.mxu0 0.0
        %454 = vmatpush1.msra.mxu0 0.0
        %455 = vmatprep.subr.mxu0 0.0
        %456 = vmatpush1.msra.mxu0 0.0
        %457 = vmatprep.subr.mxu0 0.0
        %458 = vmatpush1.msra.mxu0 0.0
        %459 = vmatprep.subr.mxu0 0.0
        %460 = vmatpush1.msra.mxu0 0.0
        %461 = vmatprep.subr.mxu0 0.0
        %462 = vmatpush1.msra.mxu0 0.0
        %463 = vmatprep.subr.mxu0 0.0
        %464 = vmatpush1.msra.mxu0 0.0
        %465 = vmatprep.subr.mxu0 0.0
        %466 = vmatpush1.msra.mxu0 0.0
        %467 = vmatprep.mubr.f32.mxu0 0.0
        %468 = vmatmul.mubr.f32.gmra.mrb[0].mxu0 %v395
        %v469 = vpop.f32.mrb[0].mxu0
        %v470 = vadd.f32 %v386, %v469
        %v471 = vpop.f32.mrb[0].mxu0
        %472 = vmatprep.mubr.f32.mxu0 0.0
        %473 = vmatmul.mubr.f32.gmra.mrb[0].mxu0 %v398
        %v474 = vpop.f32.mrb[0].mxu0
        %v475 = vadd.f32 %v391, %v474
        %v476 = vpop.f32.mrb[0].mxu0
        %477 = vdwg.mxu0
        %v479 = vsel %vm315, %v297, 0
        %481 = vmatprep.subr.mxu0 0.0
        %482 = vmatpush1.msra.mxu0 %v292
        %483 = vmatprep.subr.mxu0 0.0
        %484 = vmatpush1.msra.mxu0 %v293
        %485 = vmatprep.subr.mxu0 0.0
        %486 = vmatpush1.msra.mxu0 %v294
        %487 = vmatprep.subr.mxu0 0.0
        %488 = vmatpush1.msra.mxu0 %v295
        %489 = vmatprep.subr.mxu0 0.0
        %490 = vmatpush1.msra.mxu0 %v296
        %491 = vmatprep.subr.mxu0 0.0
        %492 = vmatpush1.msra.mxu0 %v479
        %493 = vmatprep.subr.mxu0 0.0
        %494 = vmatpush1.msra.mxu0 0.0
        %495 = vmatprep.subr.mxu0 0.0
        %496 = vmatpush1.msra.mxu0 0.0
        %497 = vmatprep.subr.mxu0 0.0
        %498 = vmatpush1.msra.mxu0 0.0
        %499 = vmatprep.subr.mxu0 0.0
        %500 = vmatpush1.msra.mxu0 0.0
        %501 = vmatprep.subr.mxu0 0.0
        %502 = vmatpush1.msra.mxu0 0.0
        %503 = vmatprep.subr.mxu0 0.0
        %504 = vmatpush1.msra.mxu0 0.0
        %505 = vmatprep.subr.mxu0 0.0
        %506 = vmatpush1.msra.mxu0 0.0
        %507 = vmatprep.subr.mxu0 0.0
        %508 = vmatpush1.msra.mxu0 0.0
        %509 = vmatprep.subr.mxu0 0.0
        %510 = vmatpush1.msra.mxu0 0.0
        %511 = vmatprep.subr.mxu0 0.0
        %512 = vmatpush1.msra.mxu0 0.0
        %513 = vmatprep.subr.mxu0 0.0
        %514 = vmatpush1.msra.mxu0 0.0
        %515 = vmatprep.subr.mxu0 0.0
        %516 = vmatpush1.msra.mxu0 0.0
        %517 = vmatprep.subr.mxu0 0.0
        %518 = vmatpush1.msra.mxu0 0.0
        %519 = vmatprep.subr.mxu0 0.0
        %520 = vmatpush1.msra.mxu0 0.0
        %521 = vmatprep.subr.mxu0 0.0
        %522 = vmatpush1.msra.mxu0 0.0
        %523 = vmatprep.subr.mxu0 0.0
        %524 = vmatpush1.msra.mxu0 0.0
        %525 = vmatprep.subr.mxu0 0.0
        %526 = vmatpush1.msra.mxu0 0.0
        %527 = vmatprep.subr.mxu0 0.0
        %528 = vmatpush1.msra.mxu0 0.0
        %529 = vmatprep.subr.mxu0 0.0
        %530 = vmatpush1.msra.mxu0 0.0
        %531 = vmatprep.subr.mxu0 0.0
        %532 = vmatpush1.msra.mxu0 0.0
        %533 = vmatprep.subr.mxu0 0.0
        %534 = vmatpush1.msra.mxu0 0.0
        %535 = vmatprep.subr.mxu0 0.0
        %536 = vmatpush1.msra.mxu0 0.0
        %537 = vmatprep.subr.mxu0 0.0
        %538 = vmatpush1.msra.mxu0 0.0
        %539 = vmatprep.subr.mxu0 0.0
        %540 = vmatpush1.msra.mxu0 0.0
        %541 = vmatprep.subr.mxu0 0.0
        %542 = vmatpush1.msra.mxu0 0.0
        %543 = vmatprep.subr.mxu0 0.0
        %544 = vmatpush1.msra.mxu0 0.0
        %545 = vmatprep.mubr.f32.mxu0 0.0
        %546 = vmatmul.mubr.f32.gmra.mrb[0].mxu0 %v310
        %v547 = vpop.f32.mrb[0].mxu0
        %v548 = vadd.f32 0.0, %v547
        %v549 = vpop.f32.mrb[0].mxu0
        %550 = vmatprep.mubr.f32.mxu0 0.0
        %551 = vmatmul.mubr.f32.gmra.mrb[0].mxu0 %v313
        %v552 = vpop.f32.mrb[0].mxu0
        %v553 = vadd.f32 0.0, %v552
        %v554 = vpop.f32.mrb[0].mxu0
        %555 = vdwg.mxu0
        %556 = vmatprep.subr.mxu0 0.0
        %557 = vmatpush1.msra.mxu0 %v285
        %558 = vmatprep.subr.mxu0 0.0
        %559 = vmatpush1.msra.mxu0 %v286
        %560 = vmatprep.subr.mxu0 0.0
        %561 = vmatpush1.msra.mxu0 %v287
        %562 = vmatprep.subr.mxu0 0.0
        %563 = vmatpush1.msra.mxu0 %v288
        %564 = vmatprep.subr.mxu0 0.0
        %565 = vmatpush1.msra.mxu0 %v289
        %566 = vmatprep.subr.mxu0 0.0
        %567 = vmatpush1.msra.mxu0 %v317
        %568 = vmatprep.subr.mxu0 0.0
        %569 = vmatpush1.msra.mxu0 0.0
        %570 = vmatprep.subr.mxu0 0.0
        %571 = vmatpush1.msra.mxu0 0.0
        %572 = vmatprep.subr.mxu0 0.0
        %573 = vmatpush1.msra.mxu0 0.0
        %574 = vmatprep.subr.mxu0 0.0
        %575 = vmatpush1.msra.mxu0 0.0
        %576 = vmatprep.subr.mxu0 0.0
        %577 = vmatpush1.msra.mxu0 0.0
        %578 = vmatprep.subr.mxu0 0.0
        %579 = vmatpush1.msra.mxu0 0.0
        %580 = vmatprep.subr.mxu0 0.0
        %581 = vmatpush1.msra.mxu0 0.0
        %582 = vmatprep.subr.mxu0 0.0
        %583 = vmatpush1.msra.mxu0 0.0
        %584 = vmatprep.subr.mxu0 0.0
        %585 = vmatpush1.msra.mxu0 0.0
        %586 = vmatprep.subr.mxu0 0.0
        %587 = vmatpush1.msra.mxu0 0.0
        %588 = vmatprep.subr.mxu0 0.0
        %589 = vmatpush1.msra.mxu0 0.0
        %590 = vmatprep.subr.mxu0 0.0
        %591 = vmatpush1.msra.mxu0 0.0
        %592 = vmatprep.subr.mxu0 0.0
        %593 = vmatpush1.msra.mxu0 0.0
        %594 = vmatprep.subr.mxu0 0.0
        %595 = vmatpush1.msra.mxu0 0.0
        %596 = vmatprep.subr.mxu0 0.0
        %597 = vmatpush1.msra.mxu0 0.0
        %598 = vmatprep.subr.mxu0 0.0
        %599 = vmatpush1.msra.mxu0 0.0
        %600 = vmatprep.subr.mxu0 0.0
        %601 = vmatpush1.msra.mxu0 0.0
        %602 = vmatprep.subr.mxu0 0.0
        %603 = vmatpush1.msra.mxu0 0.0
        %604 = vmatprep.subr.mxu0 0.0
        %605 = vmatpush1.msra.mxu0 0.0
        %606 = vmatprep.subr.mxu0 0.0
        %607 = vmatpush1.msra.mxu0 0.0
        %608 = vmatprep.subr.mxu0 0.0
        %609 = vmatpush1.msra.mxu0 0.0
        %610 = vmatprep.subr.mxu0 0.0
        %611 = vmatpush1.msra.mxu0 0.0
        %612 = vmatprep.subr.mxu0 0.0
        %613 = vmatpush1.msra.mxu0 0.0
        %614 = vmatprep.subr.mxu0 0.0
        %615 = vmatpush1.msra.mxu0 0.0
        %616 = vmatprep.subr.mxu0 0.0
        %617 = vmatpush1.msra.mxu0 0.0
        %618 = vmatprep.subr.mxu0 0.0
        %619 = vmatpush1.msra.mxu0 0.0
        %620 = vmatprep.mubr.f32.mxu0 0.0
        %621 = vmatmul.mubr.f32.gmra.mrb[0].mxu0 %v395
        %v622 = vpop.f32.mrb[0].mxu0
        %v623 = vadd.f32 %v548, %v622
        %v624 = vpop.f32.mrb[0].mxu0
        %625 = vmatprep.mubr.f32.mxu0 0.0
        %626 = vmatmul.mubr.f32.gmra.mrb[0].mxu0 %v398
        %v627 = vpop.f32.mrb[0].mxu0
        %v628 = vadd.f32 %v553, %v627
        %v629 = vpop.f32.mrb[0].mxu0
        %630 = vdwg.mxu0
        %v632 = vsel %vm315, %v304, 0
        %634 = vmatprep.subr.mxu0 0.0
        %635 = vmatpush1.msra.mxu0 %v299
        %636 = vmatprep.subr.mxu0 0.0
        %637 = vmatpush1.msra.mxu0 %v300
        %638 = vmatprep.subr.mxu0 0.0
        %639 = vmatpush1.msra.mxu0 %v301
        %640 = vmatprep.subr.mxu0 0.0
        %641 = vmatpush1.msra.mxu0 %v302
        %642 = vmatprep.subr.mxu0 0.0
        %643 = vmatpush1.msra.mxu0 %v303
        %644 = vmatprep.subr.mxu0 0.0
        %645 = vmatpush1.msra.mxu0 %v632
        %646 = vmatprep.subr.mxu0 0.0
        %647 = vmatpush1.msra.mxu0 0.0
        %648 = vmatprep.subr.mxu0 0.0
        %649 = vmatpush1.msra.mxu0 0.0
        %650 = vmatprep.subr.mxu0 0.0
        %651 = vmatpush1.msra.mxu0 0.0
        %652 = vmatprep.subr.mxu0 0.0
        %653 = vmatpush1.msra.mxu0 0.0
        %654 = vmatprep.subr.mxu0 0.0
        %655 = vmatpush1.msra.mxu0 0.0
        %656 = vmatprep.subr.mxu0 0.0
        %657 = vmatpush1.msra.mxu0 0.0
        %658 = vmatprep.subr.mxu0 0.0
        %659 = vmatpush1.msra.mxu0 0.0
        %660 = vmatprep.subr.mxu0 0.0
        %661 = vmatpush1.msra.mxu0 0.0
        %662 = vmatprep.subr.mxu0 0.0
        %663 = vmatpush1.msra.mxu0 0.0
        %664 = vmatprep.subr.mxu0 0.0
        %665 = vmatpush1.msra.mxu0 0.0
        %666 = vmatprep.subr.mxu0 0.0
        %667 = vmatpush1.msra.mxu0 0.0
        %668 = vmatprep.subr.mxu0 0.0
        %669 = vmatpush1.msra.mxu0 0.0
        %670 = vmatprep.subr.mxu0 0.0
        %671 = vmatpush1.msra.mxu0 0.0
        %672 = vmatprep.subr.mxu0 0.0
        %673 = vmatpush1.msra.mxu0 0.0
        %674 = vmatprep.subr.mxu0 0.0
        %675 = vmatpush1.msra.mxu0 0.0
        %676 = vmatprep.subr.mxu0 0.0
        %677 = vmatpush1.msra.mxu0 0.0
        %678 = vmatprep.subr.mxu0 0.0
        %679 = vmatpush1.msra.mxu0 0.0
        %680 = vmatprep.subr.mxu0 0.0
        %681 = vmatpush1.msra.mxu0 0.0
        %682 = vmatprep.subr.mxu0 0.0
        %683 = vmatpush1.msra.mxu0 0.0
        %684 = vmatprep.subr.mxu0 0.0
        %685 = vmatpush1.msra.mxu0 0.0
        %686 = vmatprep.subr.mxu0 0.0
        %687 = vmatpush1.msra.mxu0 0.0
        %688 = vmatprep.subr.mxu0 0.0
        %689 = vmatpush1.msra.mxu0 0.0
        %690 = vmatprep.subr.mxu0 0.0
        %691 = vmatpush1.msra.mxu0 0.0
        %692 = vmatprep.subr.mxu0 0.0
        %693 = vmatpush1.msra.mxu0 0.0
        %694 = vmatprep.subr.mxu0 0.0
        %695 = vmatpush1.msra.mxu0 0.0
        %696 = vmatprep.subr.mxu0 0.0
        %697 = vmatpush1.msra.mxu0 0.0
        %698 = vmatprep.mubr.f32.mxu0 0.0
        %699 = vmatmul.mubr.f32.gmra.mrb[0].mxu0 %v310
        %v700 = vpop.f32.mrb[0].mxu0
        %v701 = vadd.f32 0.0, %v700
        %v702 = vpop.f32.mrb[0].mxu0
        %703 = vmatprep.mubr.f32.mxu0 0.0
        %704 = vmatmul.mubr.f32.gmra.mrb[0].mxu0 %v313
        %v705 = vpop.f32.mrb[0].mxu0
        %v706 = vadd.f32 0.0, %v705
        %v707 = vpop.f32.mrb[0].mxu0
        %708 = vdwg.mxu0
        %709 = vmatprep.subr.mxu0 0.0
        %710 = vmatpush1.msra.mxu0 %v292
        %711 = vmatprep.subr.mxu0 0.0
        %712 = vmatpush1.msra.mxu0 %v293
        %713 = vmatprep.subr.mxu0 0.0
        %714 = vmatpush1.msra.mxu0 %v294
        %715 = vmatprep.subr.mxu0 0.0
        %716 = vmatpush1.msra.mxu0 %v295
        %717 = vmatprep.subr.mxu0 0.0
        %718 = vmatpush1.msra.mxu0 %v296
        %719 = vmatprep.subr.mxu0 0.0
        %720 = vmatpush1.msra.mxu0 %v479
        %721 = vmatprep.subr.mxu0 0.0
        %722 = vmatpush1.msra.mxu0 0.0
        %723 = vmatprep.subr.mxu0 0.0
        %724 = vmatpush1.msra.mxu0 0.0
        %725 = vmatprep.subr.mxu0 0.0
        %726 = vmatpush1.msra.mxu0 0.0
        %727 = vmatprep.subr.mxu0 0.0
        %728 = vmatpush1.msra.mxu0 0.0
        %729 = vmatprep.subr.mxu0 0.0
        %730 = vmatpush1.msra.mxu0 0.0
        %731 = vmatprep.subr.mxu0 0.0
        %732 = vmatpush1.msra.mxu0 0.0
        %733 = vmatprep.subr.mxu0 0.0
        %734 = vmatpush1.msra.mxu0 0.0
        %735 = vmatprep.subr.mxu0 0.0
        %736 = vmatpush1.msra.mxu0 0.0
        %737 = vmatprep.subr.mxu0 0.0
        %738 = vmatpush1.msra.mxu0 0.0
        %739 = vmatprep.subr.mxu0 0.0
        %740 = vmatpush1.msra.mxu0 0.0
        %741 = vmatprep.subr.mxu0 0.0
        %742 = vmatpush1.msra.mxu0 0.0
        %743 = vmatprep.subr.mxu0 0.0
        %744 = vmatpush1.msra.mxu0 0.0
        %745 = vmatprep.subr.mxu0 0.0
        %746 = vmatpush1.msra.mxu0 0.0
        %747 = vmatprep.subr.mxu0 0.0
        %748 = vmatpush1.msra.mxu0 0.0
        %749 = vmatprep.subr.mxu0 0.0
        %750 = vmatpush1.msra.mxu0 0.0
        %751 = vmatprep.subr.mxu0 0.0
        %752 = vmatpush1.msra.mxu0 0.0
        %753 = vmatprep.subr.mxu0 0.0
        %754 = vmatpush1.msra.mxu0 0.0
        %755 = vmatprep.subr.mxu0 0.0
        %756 = vmatpush1.msra.mxu0 0.0
        %757 = vmatprep.subr.mxu0 0.0
        %758 = vmatpush1.msra.mxu0 0.0
        %759 = vmatprep.subr.mxu0 0.0
        %760 = vmatpush1.msra.mxu0 0.0
        %761 = vmatprep.subr.mxu0 0.0
        %762 = vmatpush1.msra.mxu0 0.0
        %763 = vmatprep.subr.mxu0 0.0
        %764 = vmatpush1.msra.mxu0 0.0
        %765 = vmatprep.subr.mxu0 0.0
        %766 = vmatpush1.msra.mxu0 0.0
        %767 = vmatprep.subr.mxu0 0.0
        %768 = vmatpush1.msra.mxu0 0.0
        %769 = vmatprep.subr.mxu0 0.0
        %770 = vmatpush1.msra.mxu0 0.0
        %771 = vmatprep.subr.mxu0 0.0
        %772 = vmatpush1.msra.mxu0 0.0
        %773 = vmatprep.mubr.f32.mxu0 0.0
        %774 = vmatmul.mubr.f32.gmra.mrb[0].mxu0 %v395
        %v775 = vpop.f32.mrb[0].mxu0
        %v776 = vadd.f32 %v701, %v775
        %v777 = vpop.f32.mrb[0].mxu0
        %778 = vmatprep.mubr.f32.mxu0 0.0
        %779 = vmatmul.mubr.f32.gmra.mrb[0].mxu0 %v398
        %v780 = vpop.f32.mrb[0].mxu0
        %v781 = vadd.f32 %v706, %v780
        %v782 = vpop.f32.mrb[0].mxu0
        %783 = vdwg.mxu0
        %789 = vrot.lane.b32.xlu0 %v278, 127
        %v790 = vpop.permute.xlu0 %789
        %791 = vrot.lane.b32.xlu0 %v279, 127
        %v792 = vpop.permute.xlu0 %791
        %793 = vrot.lane.b32.xlu0 %v280, 127
        %v794 = vpop.permute.xlu0 %793
        %795 = vrot.lane.b32.xlu0 %v281, 127
        %v796 = vpop.permute.xlu0 %795
        %797 = vrot.lane.b32.xlu0 %v282, 127
        %v798 = vpop.permute.xlu0 %797
        %799 = vrot.lane.b32.xlu0 %v283, 127
        %v800 = vpop.permute.xlu0 %799
        %v806 = vsel %vm315, %v800, 0
        %808 = vmatprep.subr.mxu0 0.0
        %809 = vmatpush1.msra.mxu0 %v790
        %810 = vmatprep.subr.mxu0 0.0
        %811 = vmatpush1.msra.mxu0 %v792
        %812 = vmatprep.subr.mxu0 0.0
        %813 = vmatpush1.msra.mxu0 %v794
        %814 = vmatprep.subr.mxu0 0.0
        %815 = vmatpush1.msra.mxu0 %v796
        %816 = vmatprep.subr.mxu0 0.0
        %817 = vmatpush1.msra.mxu0 %v798
        %818 = vmatprep.subr.mxu0 0.0
        %819 = vmatpush1.msra.mxu0 %v806
        %820 = vmatprep.subr.mxu0 0.0
        %821 = vmatpush1.msra.mxu0 0.0
        %822 = vmatprep.subr.mxu0 0.0
        %823 = vmatpush1.msra.mxu0 0.0
        %824 = vmatprep.subr.mxu0 0.0
        %825 = vmatpush1.msra.mxu0 0.0
        %826 = vmatprep.subr.mxu0 0.0
        %827 = vmatpush1.msra.mxu0 0.0
        %828 = vmatprep.subr.mxu0 0.0
        %829 = vmatpush1.msra.mxu0 0.0
        %830 = vmatprep.subr.mxu0 0.0
        %831 = vmatpush1.msra.mxu0 0.0
        %832 = vmatprep.subr.mxu0 0.0
        %833 = vmatpush1.msra.mxu0 0.0
        %834 = vmatprep.subr.mxu0 0.0
        %835 = vmatpush1.msra.mxu0 0.0
        %836 = vmatprep.subr.mxu0 0.0
        %837 = vmatpush1.msra.mxu0 0.0
        %838 = vmatprep.subr.mxu0 0.0
        %839 = vmatpush1.msra.mxu0 0.0
        %840 = vmatprep.subr.mxu0 0.0
        %841 = vmatpush1.msra.mxu0 0.0
        %842 = vmatprep.subr.mxu0 0.0
        %843 = vmatpush1.msra.mxu0 0.0
        %844 = vmatprep.subr.mxu0 0.0
        %845 = vmatpush1.msra.mxu0 0.0
        %846 = vmatprep.subr.mxu0 0.0
        %847 = vmatpush1.msra.mxu0 0.0
        %848 = vmatprep.subr.mxu0 0.0
        %849 = vmatpush1.msra.mxu0 0.0
        %850 = vmatprep.subr.mxu0 0.0
        %851 = vmatpush1.msra.mxu0 0.0
        %852 = vmatprep.subr.mxu0 0.0
        %853 = vmatpush1.msra.mxu0 0.0
        %854 = vmatprep.subr.mxu0 0.0
        %855 = vmatpush1.msra.mxu0 0.0
        %856 = vmatprep.subr.mxu0 0.0
        %857 = vmatpush1.msra.mxu0 0.0
        %858 = vmatprep.subr.mxu0 0.0
        %859 = vmatpush1.msra.mxu0 0.0
        %860 = vmatprep.subr.mxu0 0.0
        %861 = vmatpush1.msra.mxu0 0.0
        %862 = vmatprep.subr.mxu0 0.0
        %863 = vmatpush1.msra.mxu0 0.0
        %864 = vmatprep.subr.mxu0 0.0
        %865 = vmatpush1.msra.mxu0 0.0
        %866 = vmatprep.subr.mxu0 0.0
        %867 = vmatpush1.msra.mxu0 0.0
        %868 = vmatprep.subr.mxu0 0.0
        %869 = vmatpush1.msra.mxu0 0.0
        %870 = vmatprep.subr.mxu0 0.0
        %871 = vmatpush1.msra.mxu0 0.0
        %872 = vmatprep.mubr.f32.mxu0 0.0
        %873 = vmatmul.mubr.f32.gmra.mrb[0].mxu0 %v310
        %v874 = vpop.f32.mrb[0].mxu0
        %v875 = vadd.f32 0.0, %v874
        %v876 = vpop.f32.mrb[0].mxu0
        %877 = vmatprep.mubr.f32.mxu0 0.0
        %878 = vmatmul.mubr.f32.gmra.mrb[0].mxu0 %v313
        %v879 = vpop.f32.mrb[0].mxu0
        %v880 = vadd.f32 0.0, %v879
        %v881 = vpop.f32.mrb[0].mxu0
        %882 = vdwg.mxu0
        %883 = vmatprep.subr.mxu0 0.0
        %884 = vmatpush1.msra.mxu0 %v299
        %885 = vmatprep.subr.mxu0 0.0
        %886 = vmatpush1.msra.mxu0 %v300
        %887 = vmatprep.subr.mxu0 0.0
        %888 = vmatpush1.msra.mxu0 %v301
        %889 = vmatprep.subr.mxu0 0.0
        %890 = vmatpush1.msra.mxu0 %v302
        %891 = vmatprep.subr.mxu0 0.0
        %892 = vmatpush1.msra.mxu0 %v303
        %893 = vmatprep.subr.mxu0 0.0
        %894 = vmatpush1.msra.mxu0 %v632
        %895 = vmatprep.subr.mxu0 0.0
        %896 = vmatpush1.msra.mxu0 0.0
        %897 = vmatprep.subr.mxu0 0.0
        %898 = vmatpush1.msra.mxu0 0.0
        %899 = vmatprep.subr.mxu0 0.0
        %900 = vmatpush1.msra.mxu0 0.0
        %901 = vmatprep.subr.mxu0 0.0
        %902 = vmatpush1.msra.mxu0 0.0
        %903 = vmatprep.subr.mxu0 0.0
        %904 = vmatpush1.msra.mxu0 0.0
        %905 = vmatprep.subr.mxu0 0.0
        %906 = vmatpush1.msra.mxu0 0.0
        %907 = vmatprep.subr.mxu0 0.0
        %908 = vmatpush1.msra.mxu0 0.0
        %909 = vmatprep.subr.mxu0 0.0
        %910 = vmatpush1.msra.mxu0 0.0
        %911 = vmatprep.subr.mxu0 0.0
        %912 = vmatpush1.msra.mxu0 0.0
        %913 = vmatprep.subr.mxu0 0.0
        %914 = vmatpush1.msra.mxu0 0.0
        %915 = vmatprep.subr.mxu0 0.0
        %916 = vmatpush1.msra.mxu0 0.0
        %917 = vmatprep.subr.mxu0 0.0
        %918 = vmatpush1.msra.mxu0 0.0
        %919 = vmatprep.subr.mxu0 0.0
        %920 = vmatpush1.msra.mxu0 0.0
        %921 = vmatprep.subr.mxu0 0.0
        %922 = vmatpush1.msra.mxu0 0.0
        %923 = vmatprep.subr.mxu0 0.0
        %924 = vmatpush1.msra.mxu0 0.0
        %925 = vmatprep.subr.mxu0 0.0
        %926 = vmatpush1.msra.mxu0 0.0
        %927 = vmatprep.subr.mxu0 0.0
        %928 = vmatpush1.msra.mxu0 0.0
        %929 = vmatprep.subr.mxu0 0.0
        %930 = vmatpush1.msra.mxu0 0.0
        %931 = vmatprep.subr.mxu0 0.0
        %932 = vmatpush1.msra.mxu0 0.0
        %933 = vmatprep.subr.mxu0 0.0
        %934 = vmatpush1.msra.mxu0 0.0
        %935 = vmatprep.subr.mxu0 0.0
        %936 = vmatpush1.msra.mxu0 0.0
        %937 = vmatprep.subr.mxu0 0.0
        %938 = vmatpush1.msra.mxu0 0.0
        %939 = vmatprep.subr.mxu0 0.0
        %940 = vmatpush1.msra.mxu0 0.0
        %941 = vmatprep.subr.mxu0 0.0
        %942 = vmatpush1.msra.mxu0 0.0
        %943 = vmatprep.subr.mxu0 0.0
        %944 = vmatpush1.msra.mxu0 0.0
        %945 = vmatprep.subr.mxu0 0.0
        %946 = vmatpush1.msra.mxu0 0.0
        %947 = vmatprep.mubr.f32.mxu0 0.0
        %948 = vmatmul.mubr.f32.gmra.mrb[0].mxu0 %v395
        %v949 = vpop.f32.mrb[0].mxu0
        %v950 = vadd.f32 %v875, %v949
        %v951 = vpop.f32.mrb[0].mxu0
        %952 = vmatprep.mubr.f32.mxu0 0.0
        %953 = vmatmul.mubr.f32.gmra.mrb[0].mxu0 %v398
        %v954 = vpop.f32.mrb[0].mxu0
        %v955 = vadd.f32 %v880, %v954
        %v956 = vpop.f32.mrb[0].mxu0
        %957 = vdwg.mxu0
        %s958 = scalar_lea.vmem %s1, 32
        %v959 = vld [vmem:[%s958] sm:$0xff]
        %v960 = vld [vmem:[%s958 + $0x8] sm:$0xff]
        %v962 = vsel %vm308, %v959, 0
        %v965 = vsel %vm308, %v960, 0
        %967 = vmatprep.subr.mxu0 0.0
        %968 = vmatpush1.msra.mxu0 %v292
        %969 = vmatprep.subr.mxu0 0.0
        %970 = vmatpush1.msra.mxu0 %v293
        %971 = vmatprep.subr.mxu0 0.0
        %972 = vmatpush1.msra.mxu0 %v294
        %973 = vmatprep.subr.mxu0 0.0
        %974 = vmatpush1.msra.mxu0 %v295
        %975 = vmatprep.subr.mxu0 0.0
        %976 = vmatpush1.msra.mxu0 %v296
        %977 = vmatprep.subr.mxu0 0.0
        %978 = vmatpush1.msra.mxu0 %v479
        %979 = vmatprep.subr.mxu0 0.0
        %980 = vmatpush1.msra.mxu0 0.0
        %981 = vmatprep.subr.mxu0 0.0
        %982 = vmatpush1.msra.mxu0 0.0
        %983 = vmatprep.subr.mxu0 0.0
        %984 = vmatpush1.msra.mxu0 0.0
        %985 = vmatprep.subr.mxu0 0.0
        %986 = vmatpush1.msra.mxu0 0.0
        %987 = vmatprep.subr.mxu0 0.0
        %988 = vmatpush1.msra.mxu0 0.0
        %989 = vmatprep.subr.mxu0 0.0
        %990 = vmatpush1.msra.mxu0 0.0
        %991 = vmatprep.subr.mxu0 0.0
        %992 = vmatpush1.msra.mxu0 0.0
        %993 = vmatprep.subr.mxu0 0.0
        %994 = vmatpush1.msra.mxu0 0.0
        %995 = vmatprep.subr.mxu0 0.0
        %996 = vmatpush1.msra.mxu0 0.0
        %997 = vmatprep.subr.mxu0 0.0
        %998 = vmatpush1.msra.mxu0 0.0
        %999 = vmatprep.subr.mxu0 0.0
        %1000 = vmatpush1.msra.mxu0 0.0
        %1001 = vmatprep.subr.mxu0 0.0
        %1002 = vmatpush1.msra.mxu0 0.0
        %1003 = vmatprep.subr.mxu0 0.0
        %1004 = vmatpush1.msra.mxu0 0.0
        %1005 = vmatprep.subr.mxu0 0.0
        %1006 = vmatpush1.msra.mxu0 0.0
        %1007 = vmatprep.subr.mxu0 0.0
        %1008 = vmatpush1.msra.mxu0 0.0
        %1009 = vmatprep.subr.mxu0 0.0
        %1010 = vmatpush1.msra.mxu0 0.0
        %1011 = vmatprep.subr.mxu0 0.0
        %1012 = vmatpush1.msra.mxu0 0.0
        %1013 = vmatprep.subr.mxu0 0.0
        %1014 = vmatpush1.msra.mxu0 0.0
        %1015 = vmatprep.subr.mxu0 0.0
        %1016 = vmatpush1.msra.mxu0 0.0
        %1017 = vmatprep.subr.mxu0 0.0
        %1018 = vmatpush1.msra.mxu0 0.0
        %1019 = vmatprep.subr.mxu0 0.0
        %1020 = vmatpush1.msra.mxu0 0.0
        %1021 = vmatprep.subr.mxu0 0.0
        %1022 = vmatpush1.msra.mxu0 0.0
        %1023 = vmatprep.subr.mxu0 0.0
        %1024 = vmatpush1.msra.mxu0 0.0
        %1025 = vmatprep.subr.mxu0 0.0
        %1026 = vmatpush1.msra.mxu0 0.0
        %1027 = vmatprep.subr.mxu0 0.0
        %1028 = vmatpush1.msra.mxu0 0.0
        %1029 = vmatprep.subr.mxu0 0.0
        %1030 = vmatpush1.msra.mxu0 0.0
        %1031 = vmatprep.mubr.f32.mxu0 0.0
        %1032 = vmatmul.mubr.f32.gmra.mrb[0].mxu0 %v962
        %v1033 = vpop.f32.mrb[0].mxu0
        %v1034 = vadd.f32 0.0, %v1033
        %v1035 = vpop.f32.mrb[0].mxu0
        %1036 = vmatprep.mubr.f32.mxu0 0.0
        %1037 = vmatmul.mubr.f32.gmra.mrb[0].mxu0 %v965
        %v1038 = vpop.f32.mrb[0].mxu0
        %v1039 = vadd.f32 0.0, %v1038
        %v1040 = vpop.f32.mrb[0].mxu0
        %1041 = vdwg.mxu0
        %v1042 = vadd.f32 %v470, %v1034
        %v1043 = vadd.f32 %v475, %v1039
        %1044 = vmatprep.subr.mxu0 0.0
        %1045 = vmatpush1.msra.mxu0 %v299
        %1046 = vmatprep.subr.mxu0 0.0
        %1047 = vmatpush1.msra.mxu0 %v300
        %1048 = vmatprep.subr.mxu0 0.0
        %1049 = vmatpush1.msra.mxu0 %v301
        %1050 = vmatprep.subr.mxu0 0.0
        %1051 = vmatpush1.msra.mxu0 %v302
        %1052 = vmatprep.subr.mxu0 0.0
        %1053 = vmatpush1.msra.mxu0 %v303
        %1054 = vmatprep.subr.mxu0 0.0
        %1055 = vmatpush1.msra.mxu0 %v632
        %1056 = vmatprep.subr.mxu0 0.0
        %1057 = vmatpush1.msra.mxu0 0.0
        %1058 = vmatprep.subr.mxu0 0.0
        %1059 = vmatpush1.msra.mxu0 0.0
        %1060 = vmatprep.subr.mxu0 0.0
        %1061 = vmatpush1.msra.mxu0 0.0
        %1062 = vmatprep.subr.mxu0 0.0
        %1063 = vmatpush1.msra.mxu0 0.0
        %1064 = vmatprep.subr.mxu0 0.0
        %1065 = vmatpush1.msra.mxu0 0.0
        %1066 = vmatprep.subr.mxu0 0.0
        %1067 = vmatpush1.msra.mxu0 0.0
        %1068 = vmatprep.subr.mxu0 0.0
        %1069 = vmatpush1.msra.mxu0 0.0
        %1070 = vmatprep.subr.mxu0 0.0
        %1071 = vmatpush1.msra.mxu0 0.0
        %1072 = vmatprep.subr.mxu0 0.0
        %1073 = vmatpush1.msra.mxu0 0.0
        %1074 = vmatprep.subr.mxu0 0.0
        %1075 = vmatpush1.msra.mxu0 0.0
        %1076 = vmatprep.subr.mxu0 0.0
        %1077 = vmatpush1.msra.mxu0 0.0
        %1078 = vmatprep.subr.mxu0 0.0
        %1079 = vmatpush1.msra.mxu0 0.0
        %1080 = vmatprep.subr.mxu0 0.0
        %1081 = vmatpush1.msra.mxu0 0.0
        %1082 = vmatprep.subr.mxu0 0.0
        %1083 = vmatpush1.msra.mxu0 0.0
        %1084 = vmatprep.subr.mxu0 0.0
        %1085 = vmatpush1.msra.mxu0 0.0
        %1086 = vmatprep.subr.mxu0 0.0
        %1087 = vmatpush1.msra.mxu0 0.0
        %1088 = vmatprep.subr.mxu0 0.0
        %1089 = vmatpush1.msra.mxu0 0.0
        %1090 = vmatprep.subr.mxu0 0.0
        %1091 = vmatpush1.msra.mxu0 0.0
        %1092 = vmatprep.subr.mxu0 0.0
        %1093 = vmatpush1.msra.mxu0 0.0
        %1094 = vmatprep.subr.mxu0 0.0
        %1095 = vmatpush1.msra.mxu0 0.0
        %1096 = vmatprep.subr.mxu0 0.0
        %1097 = vmatpush1.msra.mxu0 0.0
        %1098 = vmatprep.subr.mxu0 0.0
        %1099 = vmatpush1.msra.mxu0 0.0
        %1100 = vmatprep.subr.mxu0 0.0
        %1101 = vmatpush1.msra.mxu0 0.0
        %1102 = vmatprep.subr.mxu0 0.0
        %1103 = vmatpush1.msra.mxu0 0.0
        %1104 = vmatprep.subr.mxu0 0.0
        %1105 = vmatpush1.msra.mxu0 0.0
        %1106 = vmatprep.subr.mxu0 0.0
        %1107 = vmatpush1.msra.mxu0 0.0
        %1108 = vmatprep.mubr.f32.mxu0 0.0
        %1109 = vmatmul.mubr.f32.gmra.mrb[0].mxu0 %v962
        %v1110 = vpop.f32.mrb[0].mxu0
        %v1111 = vadd.f32 0.0, %v1110
        %v1112 = vpop.f32.mrb[0].mxu0
        %1113 = vmatprep.mubr.f32.mxu0 0.0
        %1114 = vmatmul.mubr.f32.gmra.mrb[0].mxu0 %v965
        %v1115 = vpop.f32.mrb[0].mxu0
        %v1116 = vadd.f32 0.0, %v1115
        %v1117 = vpop.f32.mrb[0].mxu0
        %1118 = vdwg.mxu0
        %v1119 = vadd.f32 %v623, %v1111
        %v1120 = vadd.f32 %v628, %v1116
        %1121 = vmatprep.subr.mxu0 0.0
        %1122 = vmatpush1.msra.mxu0 %v790
        %1123 = vmatprep.subr.mxu0 0.0
        %1124 = vmatpush1.msra.mxu0 %v792
        %1125 = vmatprep.subr.mxu0 0.0
        %1126 = vmatpush1.msra.mxu0 %v794
        %1127 = vmatprep.subr.mxu0 0.0
        %1128 = vmatpush1.msra.mxu0 %v796
        %1129 = vmatprep.subr.mxu0 0.0
        %1130 = vmatpush1.msra.mxu0 %v798
        %1131 = vmatprep.subr.mxu0 0.0
        %1132 = vmatpush1.msra.mxu0 %v806
        %1133 = vmatprep.subr.mxu0 0.0
        %1134 = vmatpush1.msra.mxu0 0.0
        %1135 = vmatprep.subr.mxu0 0.0
        %1136 = vmatpush1.msra.mxu0 0.0
        %1137 = vmatprep.subr.mxu0 0.0
        %1138 = vmatpush1.msra.mxu0 0.0
        %1139 = vmatprep.subr.mxu0 0.0
        %1140 = vmatpush1.msra.mxu0 0.0
        %1141 = vmatprep.subr.mxu0 0.0
        %1142 = vmatpush1.msra.mxu0 0.0
        %1143 = vmatprep.subr.mxu0 0.0
        %1144 = vmatpush1.msra.mxu0 0.0
        %1145 = vmatprep.subr.mxu0 0.0
        %1146 = vmatpush1.msra.mxu0 0.0
        %1147 = vmatprep.subr.mxu0 0.0
        %1148 = vmatpush1.msra.mxu0 0.0
        %1149 = vmatprep.subr.mxu0 0.0
        %1150 = vmatpush1.msra.mxu0 0.0
        %1151 = vmatprep.subr.mxu0 0.0
        %1152 = vmatpush1.msra.mxu0 0.0
        %1153 = vmatprep.subr.mxu0 0.0
        %1154 = vmatpush1.msra.mxu0 0.0
        %1155 = vmatprep.subr.mxu0 0.0
        %1156 = vmatpush1.msra.mxu0 0.0
        %1157 = vmatprep.subr.mxu0 0.0
        %1158 = vmatpush1.msra.mxu0 0.0
        %1159 = vmatprep.subr.mxu0 0.0
        %1160 = vmatpush1.msra.mxu0 0.0
        %1161 = vmatprep.subr.mxu0 0.0
        %1162 = vmatpush1.msra.mxu0 0.0
        %1163 = vmatprep.subr.mxu0 0.0
        %1164 = vmatpush1.msra.mxu0 0.0
        %1165 = vmatprep.subr.mxu0 0.0
        %1166 = vmatpush1.msra.mxu0 0.0
        %1167 = vmatprep.subr.mxu0 0.0
        %1168 = vmatpush1.msra.mxu0 0.0
        %1169 = vmatprep.subr.mxu0 0.0
        %1170 = vmatpush1.msra.mxu0 0.0
        %1171 = vmatprep.subr.mxu0 0.0
        %1172 = vmatpush1.msra.mxu0 0.0
        %1173 = vmatprep.subr.mxu0 0.0
        %1174 = vmatpush1.msra.mxu0 0.0
        %1175 = vmatprep.subr.mxu0 0.0
        %1176 = vmatpush1.msra.mxu0 0.0
        %1177 = vmatprep.subr.mxu0 0.0
        %1178 = vmatpush1.msra.mxu0 0.0
        %1179 = vmatprep.subr.mxu0 0.0
        %1180 = vmatpush1.msra.mxu0 0.0
        %1181 = vmatprep.subr.mxu0 0.0
        %1182 = vmatpush1.msra.mxu0 0.0
        %1183 = vmatprep.subr.mxu0 0.0
        %1184 = vmatpush1.msra.mxu0 0.0
        %1185 = vmatprep.mubr.f32.mxu0 0.0
        %1186 = vmatmul.mubr.f32.gmra.mrb[0].mxu0 %v962
        %v1187 = vpop.f32.mrb[0].mxu0
        %v1188 = vadd.f32 0.0, %v1187
        %v1189 = vpop.f32.mrb[0].mxu0
        %1190 = vmatprep.mubr.f32.mxu0 0.0
        %1191 = vmatmul.mubr.f32.gmra.mrb[0].mxu0 %v965
        %v1192 = vpop.f32.mrb[0].mxu0
        %v1193 = vadd.f32 0.0, %v1192
        %v1194 = vpop.f32.mrb[0].mxu0
        %1195 = vdwg.mxu0
        %v1196 = vadd.f32 %v776, %v1188
        %v1197 = vadd.f32 %v781, %v1193
        %1203 = vrot.lane.b32.xlu0 %v285, 127
        %v1204 = vpop.permute.xlu0 %1203
        %1205 = vrot.lane.b32.xlu0 %v286, 127
        %v1206 = vpop.permute.xlu0 %1205
        %1207 = vrot.lane.b32.xlu0 %v287, 127
        %v1208 = vpop.permute.xlu0 %1207
        %1209 = vrot.lane.b32.xlu0 %v288, 127
        %v1210 = vpop.permute.xlu0 %1209
        %1211 = vrot.lane.b32.xlu0 %v289, 127
        %v1212 = vpop.permute.xlu0 %1211
        %1213 = vrot.lane.b32.xlu0 %v290, 127
        %v1214 = vpop.permute.xlu0 %1213
        %v1220 = vsel %vm315, %v1214, 0
        %1222 = vmatprep.subr.mxu0 0.0
        %1223 = vmatpush1.msra.mxu0 %v1204
        %1224 = vmatprep.subr.mxu0 0.0
        %1225 = vmatpush1.msra.mxu0 %v1206
        %1226 = vmatprep.subr.mxu0 0.0
        %1227 = vmatpush1.msra.mxu0 %v1208
        %1228 = vmatprep.subr.mxu0 0.0
        %1229 = vmatpush1.msra.mxu0 %v1210
        %1230 = vmatprep.subr.mxu0 0.0
        %1231 = vmatpush1.msra.mxu0 %v1212
        %1232 = vmatprep.subr.mxu0 0.0
        %1233 = vmatpush1.msra.mxu0 %v1220
        %1234 = vmatprep.subr.mxu0 0.0
        %1235 = vmatpush1.msra.mxu0 0.0
        %1236 = vmatprep.subr.mxu0 0.0
        %1237 = vmatpush1.msra.mxu0 0.0
        %1238 = vmatprep.subr.mxu0 0.0
        %1239 = vmatpush1.msra.mxu0 0.0
        %1240 = vmatprep.subr.mxu0 0.0
        %1241 = vmatpush1.msra.mxu0 0.0
        %1242 = vmatprep.subr.mxu0 0.0
        %1243 = vmatpush1.msra.mxu0 0.0
        %1244 = vmatprep.subr.mxu0 0.0
        %1245 = vmatpush1.msra.mxu0 0.0
        %1246 = vmatprep.subr.mxu0 0.0
        %1247 = vmatpush1.msra.mxu0 0.0
        %1248 = vmatprep.subr.mxu0 0.0
        %1249 = vmatpush1.msra.mxu0 0.0
        %1250 = vmatprep.subr.mxu0 0.0
        %1251 = vmatpush1.msra.mxu0 0.0
        %1252 = vmatprep.subr.mxu0 0.0
        %1253 = vmatpush1.msra.mxu0 0.0
        %1254 = vmatprep.subr.mxu0 0.0
        %1255 = vmatpush1.msra.mxu0 0.0
        %1256 = vmatprep.subr.mxu0 0.0
        %1257 = vmatpush1.msra.mxu0 0.0
        %1258 = vmatprep.subr.mxu0 0.0
        %1259 = vmatpush1.msra.mxu0 0.0
        %1260 = vmatprep.subr.mxu0 0.0
        %1261 = vmatpush1.msra.mxu0 0.0
        %1262 = vmatprep.subr.mxu0 0.0
        %1263 = vmatpush1.msra.mxu0 0.0
        %1264 = vmatprep.subr.mxu0 0.0
        %1265 = vmatpush1.msra.mxu0 0.0
        %1266 = vmatprep.subr.mxu0 0.0
        %1267 = vmatpush1.msra.mxu0 0.0
        %1268 = vmatprep.subr.mxu0 0.0
        %1269 = vmatpush1.msra.mxu0 0.0
        %1270 = vmatprep.subr.mxu0 0.0
        %1271 = vmatpush1.msra.mxu0 0.0
        %1272 = vmatprep.subr.mxu0 0.0
        %1273 = vmatpush1.msra.mxu0 0.0
        %1274 = vmatprep.subr.mxu0 0.0
        %1275 = vmatpush1.msra.mxu0 0.0
        %1276 = vmatprep.subr.mxu0 0.0
        %1277 = vmatpush1.msra.mxu0 0.0
        %1278 = vmatprep.subr.mxu0 0.0
        %1279 = vmatpush1.msra.mxu0 0.0
        %1280 = vmatprep.subr.mxu0 0.0
        %1281 = vmatpush1.msra.mxu0 0.0
        %1282 = vmatprep.subr.mxu0 0.0
        %1283 = vmatpush1.msra.mxu0 0.0
        %1284 = vmatprep.subr.mxu0 0.0
        %1285 = vmatpush1.msra.mxu0 0.0
        %1286 = vmatprep.mubr.f32.mxu0 0.0
        %1287 = vmatmul.mubr.f32.gmra.mrb[0].mxu0 %v962
        %v1288 = vpop.f32.mrb[0].mxu0
        %v1289 = vadd.f32 0.0, %v1288
        %v1290 = vpop.f32.mrb[0].mxu0
        %1291 = vmatprep.mubr.f32.mxu0 0.0
        %1292 = vmatmul.mubr.f32.gmra.mrb[0].mxu0 %v965
        %v1293 = vpop.f32.mrb[0].mxu0
        %v1294 = vadd.f32 0.0, %v1293
        %v1295 = vpop.f32.mrb[0].mxu0
        %1296 = vdwg.mxu0
        %v1297 = vadd.f32 %v950, %v1289
        %v1298 = vadd.f32 %v955, %v1294
        %s1299 = scalar_lea.vmem %s1, 48
        %v1300 = vld [vmem:[%s1299] sm:$0xff]
        %v1301 = vld [vmem:[%s1299 + $0x8] sm:$0xff]
        %v1303 = vsel %vm308, %v1300, 0
        %v1306 = vsel %vm308, %v1301, 0
        %1308 = vmatprep.subr.mxu0 0.0
        %1309 = vmatpush1.msra.mxu0 %v299
        %1310 = vmatprep.subr.mxu0 0.0
        %1311 = vmatpush1.msra.mxu0 %v300
        %1312 = vmatprep.subr.mxu0 0.0
        %1313 = vmatpush1.msra.mxu0 %v301
        %1314 = vmatprep.subr.mxu0 0.0
        %1315 = vmatpush1.msra.mxu0 %v302
        %1316 = vmatprep.subr.mxu0 0.0
        %1317 = vmatpush1.msra.mxu0 %v303
        %1318 = vmatprep.subr.mxu0 0.0
        %1319 = vmatpush1.msra.mxu0 %v632
        %1320 = vmatprep.subr.mxu0 0.0
        %1321 = vmatpush1.msra.mxu0 0.0
        %1322 = vmatprep.subr.mxu0 0.0
        %1323 = vmatpush1.msra.mxu0 0.0
        %1324 = vmatprep.subr.mxu0 0.0
        %1325 = vmatpush1.msra.mxu0 0.0
        %1326 = vmatprep.subr.mxu0 0.0
        %1327 = vmatpush1.msra.mxu0 0.0
        %1328 = vmatprep.subr.mxu0 0.0
        %1329 = vmatpush1.msra.mxu0 0.0
        %1330 = vmatprep.subr.mxu0 0.0
        %1331 = vmatpush1.msra.mxu0 0.0
        %1332 = vmatprep.subr.mxu0 0.0
        %1333 = vmatpush1.msra.mxu0 0.0
        %1334 = vmatprep.subr.mxu0 0.0
        %1335 = vmatpush1.msra.mxu0 0.0
        %1336 = vmatprep.subr.mxu0 0.0
        %1337 = vmatpush1.msra.mxu0 0.0
        %1338 = vmatprep.subr.mxu0 0.0
        %1339 = vmatpush1.msra.mxu0 0.0
        %1340 = vmatprep.subr.mxu0 0.0
        %1341 = vmatpush1.msra.mxu0 0.0
        %1342 = vmatprep.subr.mxu0 0.0
        %1343 = vmatpush1.msra.mxu0 0.0
        %1344 = vmatprep.subr.mxu0 0.0
        %1345 = vmatpush1.msra.mxu0 0.0
        %1346 = vmatprep.subr.mxu0 0.0
        %1347 = vmatpush1.msra.mxu0 0.0
        %1348 = vmatprep.subr.mxu0 0.0
        %1349 = vmatpush1.msra.mxu0 0.0
        %1350 = vmatprep.subr.mxu0 0.0
        %1351 = vmatpush1.msra.mxu0 0.0
        %1352 = vmatprep.subr.mxu0 0.0
        %1353 = vmatpush1.msra.mxu0 0.0
        %1354 = vmatprep.subr.mxu0 0.0
        %1355 = vmatpush1.msra.mxu0 0.0
        %1356 = vmatprep.subr.mxu0 0.0
        %1357 = vmatpush1.msra.mxu0 0.0
        %1358 = vmatprep.subr.mxu0 0.0
        %1359 = vmatpush1.msra.mxu0 0.0
        %1360 = vmatprep.subr.mxu0 0.0
        %1361 = vmatpush1.msra.mxu0 0.0
        %1362 = vmatprep.subr.mxu0 0.0
        %1363 = vmatpush1.msra.mxu0 0.0
        %1364 = vmatprep.subr.mxu0 0.0
        %1365 = vmatpush1.msra.mxu0 0.0
        %1366 = vmatprep.subr.mxu0 0.0
        %1367 = vmatpush1.msra.mxu0 0.0
        %1368 = vmatprep.subr.mxu0 0.0
        %1369 = vmatpush1.msra.mxu0 0.0
        %1370 = vmatprep.subr.mxu0 0.0
        %1371 = vmatpush1.msra.mxu0 0.0
        %1372 = vmatprep.mubr.f32.mxu0 0.0
        %1373 = vmatmul.mubr.f32.gmra.mrb[0].mxu0 %v1303
        %v1374 = vpop.f32.mrb[0].mxu0
        %v1375 = vadd.f32 0.0, %v1374
        %v1376 = vpop.f32.mrb[0].mxu0
        %1377 = vmatprep.mubr.f32.mxu0 0.0
        %1378 = vmatmul.mubr.f32.gmra.mrb[0].mxu0 %v1306
        %v1379 = vpop.f32.mrb[0].mxu0
        %v1380 = vadd.f32 0.0, %v1379
        %v1381 = vpop.f32.mrb[0].mxu0
        %1382 = vdwg.mxu0
        %v1383 = vadd.f32 %v1042, %v1375
        %v1384 = vadd.f32 %v1043, %v1380
        %1385 = vmatprep.subr.mxu0 0.0
        %1386 = vmatpush1.msra.mxu0 %v790
        %1387 = vmatprep.subr.mxu0 0.0
        %1388 = vmatpush1.msra.mxu0 %v792
        %1389 = vmatprep.subr.mxu0 0.0
        %1390 = vmatpush1.msra.mxu0 %v794
        %1391 = vmatprep.subr.mxu0 0.0
        %1392 = vmatpush1.msra.mxu0 %v796
        %1393 = vmatprep.subr.mxu0 0.0
        %1394 = vmatpush1.msra.mxu0 %v798
        %1395 = vmatprep.subr.mxu0 0.0
        %1396 = vmatpush1.msra.mxu0 %v806
        %1397 = vmatprep.subr.mxu0 0.0
        %1398 = vmatpush1.msra.mxu0 0.0
        %1399 = vmatprep.subr.mxu0 0.0
        %1400 = vmatpush1.msra.mxu0 0.0
        %1401 = vmatprep.subr.mxu0 0.0
        %1402 = vmatpush1.msra.mxu0 0.0
        %1403 = vmatprep.subr.mxu0 0.0
        %1404 = vmatpush1.msra.mxu0 0.0
        %1405 = vmatprep.subr.mxu0 0.0
        %1406 = vmatpush1.msra.mxu0 0.0
        %1407 = vmatprep.subr.mxu0 0.0
        %1408 = vmatpush1.msra.mxu0 0.0
        %1409 = vmatprep.subr.mxu0 0.0
        %1410 = vmatpush1.msra.mxu0 0.0
        %1411 = vmatprep.subr.mxu0 0.0
        %1412 = vmatpush1.msra.mxu0 0.0
        %1413 = vmatprep.subr.mxu0 0.0
        %1414 = vmatpush1.msra.mxu0 0.0
        %1415 = vmatprep.subr.mxu0 0.0
        %1416 = vmatpush1.msra.mxu0 0.0
        %1417 = vmatprep.subr.mxu0 0.0
        %1418 = vmatpush1.msra.mxu0 0.0
        %1419 = vmatprep.subr.mxu0 0.0
        %1420 = vmatpush1.msra.mxu0 0.0
        %1421 = vmatprep.subr.mxu0 0.0
        %1422 = vmatpush1.msra.mxu0 0.0
        %1423 = vmatprep.subr.mxu0 0.0
        %1424 = vmatpush1.msra.mxu0 0.0
        %1425 = vmatprep.subr.mxu0 0.0
        %1426 = vmatpush1.msra.mxu0 0.0
        %1427 = vmatprep.subr.mxu0 0.0
        %1428 = vmatpush1.msra.mxu0 0.0
        %1429 = vmatprep.subr.mxu0 0.0
        %1430 = vmatpush1.msra.mxu0 0.0
        %1431 = vmatprep.subr.mxu0 0.0
        %1432 = vmatpush1.msra.mxu0 0.0
        %1433 = vmatprep.subr.mxu0 0.0
        %1434 = vmatpush1.msra.mxu0 0.0
        %1435 = vmatprep.subr.mxu0 0.0
        %1436 = vmatpush1.msra.mxu0 0.0
        %1437 = vmatprep.subr.mxu0 0.0
        %1438 = vmatpush1.msra.mxu0 0.0
        %1439 = vmatprep.subr.mxu0 0.0
        %1440 = vmatpush1.msra.mxu0 0.0
        %1441 = vmatprep.subr.mxu0 0.0
        %1442 = vmatpush1.msra.mxu0 0.0
        %1443 = vmatprep.subr.mxu0 0.0
        %1444 = vmatpush1.msra.mxu0 0.0
        %1445 = vmatprep.subr.mxu0 0.0
        %1446 = vmatpush1.msra.mxu0 0.0
        %1447 = vmatprep.subr.mxu0 0.0
        %1448 = vmatpush1.msra.mxu0 0.0
        %1449 = vmatprep.mubr.f32.mxu0 0.0
        %1450 = vmatmul.mubr.f32.gmra.mrb[0].mxu0 %v1303
        %v1451 = vpop.f32.mrb[0].mxu0
        %v1452 = vadd.f32 0.0, %v1451
        %v1453 = vpop.f32.mrb[0].mxu0
        %1454 = vmatprep.mubr.f32.mxu0 0.0
        %1455 = vmatmul.mubr.f32.gmra.mrb[0].mxu0 %v1306
        %v1456 = vpop.f32.mrb[0].mxu0
        %v1457 = vadd.f32 0.0, %v1456
        %v1458 = vpop.f32.mrb[0].mxu0
        %1459 = vdwg.mxu0
        %v1460 = vadd.f32 %v1119, %v1452
        %v1461 = vadd.f32 %v1120, %v1457
        %1462 = vmatprep.subr.mxu0 0.0
        %1463 = vmatpush1.msra.mxu0 %v1204
        %1464 = vmatprep.subr.mxu0 0.0
        %1465 = vmatpush1.msra.mxu0 %v1206
        %1466 = vmatprep.subr.mxu0 0.0
        %1467 = vmatpush1.msra.mxu0 %v1208
        %1468 = vmatprep.subr.mxu0 0.0
        %1469 = vmatpush1.msra.mxu0 %v1210
        %1470 = vmatprep.subr.mxu0 0.0
        %1471 = vmatpush1.msra.mxu0 %v1212
        %1472 = vmatprep.subr.mxu0 0.0
        %1473 = vmatpush1.msra.mxu0 %v1220
        %1474 = vmatprep.subr.mxu0 0.0
        %1475 = vmatpush1.msra.mxu0 0.0
        %1476 = vmatprep.subr.mxu0 0.0
        %1477 = vmatpush1.msra.mxu0 0.0
        %1478 = vmatprep.subr.mxu0 0.0
        %1479 = vmatpush1.msra.mxu0 0.0
        %1480 = vmatprep.subr.mxu0 0.0
        %1481 = vmatpush1.msra.mxu0 0.0
        %1482 = vmatprep.subr.mxu0 0.0
        %1483 = vmatpush1.msra.mxu0 0.0
        %1484 = vmatprep.subr.mxu0 0.0
        %1485 = vmatpush1.msra.mxu0 0.0
        %1486 = vmatprep.subr.mxu0 0.0
        %1487 = vmatpush1.msra.mxu0 0.0
        %1488 = vmatprep.subr.mxu0 0.0
        %1489 = vmatpush1.msra.mxu0 0.0
        %1490 = vmatprep.subr.mxu0 0.0
        %1491 = vmatpush1.msra.mxu0 0.0
        %1492 = vmatprep.subr.mxu0 0.0
        %1493 = vmatpush1.msra.mxu0 0.0
        %1494 = vmatprep.subr.mxu0 0.0
        %1495 = vmatpush1.msra.mxu0 0.0
        %1496 = vmatprep.subr.mxu0 0.0
        %1497 = vmatpush1.msra.mxu0 0.0
        %1498 = vmatprep.subr.mxu0 0.0
        %1499 = vmatpush1.msra.mxu0 0.0
        %1500 = vmatprep.subr.mxu0 0.0
        %1501 = vmatpush1.msra.mxu0 0.0
        %1502 = vmatprep.subr.mxu0 0.0
        %1503 = vmatpush1.msra.mxu0 0.0
        %1504 = vmatprep.subr.mxu0 0.0
        %1505 = vmatpush1.msra.mxu0 0.0
        %1506 = vmatprep.subr.mxu0 0.0
        %1507 = vmatpush1.msra.mxu0 0.0
        %1508 = vmatprep.subr.mxu0 0.0
        %1509 = vmatpush1.msra.mxu0 0.0
        %1510 = vmatprep.subr.mxu0 0.0
        %1511 = vmatpush1.msra.mxu0 0.0
        %1512 = vmatprep.subr.mxu0 0.0
        %1513 = vmatpush1.msra.mxu0 0.0
        %1514 = vmatprep.subr.mxu0 0.0
        %1515 = vmatpush1.msra.mxu0 0.0
        %1516 = vmatprep.subr.mxu0 0.0
        %1517 = vmatpush1.msra.mxu0 0.0
        %1518 = vmatprep.subr.mxu0 0.0
        %1519 = vmatpush1.msra.mxu0 0.0
        %1520 = vmatprep.subr.mxu0 0.0
        %1521 = vmatpush1.msra.mxu0 0.0
        %1522 = vmatprep.subr.mxu0 0.0
        %1523 = vmatpush1.msra.mxu0 0.0
        %1524 = vmatprep.subr.mxu0 0.0
        %1525 = vmatpush1.msra.mxu0 0.0
        %1526 = vmatprep.mubr.f32.mxu0 0.0
        %1527 = vmatmul.mubr.f32.gmra.mrb[0].mxu0 %v1303
        %v1528 = vpop.f32.mrb[0].mxu0
        %v1529 = vadd.f32 0.0, %v1528
        %v1530 = vpop.f32.mrb[0].mxu0
        %1531 = vmatprep.mubr.f32.mxu0 0.0
        %1532 = vmatmul.mubr.f32.gmra.mrb[0].mxu0 %v1306
        %v1533 = vpop.f32.mrb[0].mxu0
        %v1534 = vadd.f32 0.0, %v1533
        %v1535 = vpop.f32.mrb[0].mxu0
        %1536 = vdwg.mxu0
        %v1537 = vadd.f32 %v1196, %v1529
        %v1538 = vadd.f32 %v1197, %v1534
        %1544 = vrot.lane.b32.xlu0 %v292, 127
        %v1545 = vpop.permute.xlu0 %1544
        %1546 = vrot.lane.b32.xlu0 %v293, 127
        %v1547 = vpop.permute.xlu0 %1546
        %1548 = vrot.lane.b32.xlu0 %v294, 127
        %v1549 = vpop.permute.xlu0 %1548
        %1550 = vrot.lane.b32.xlu0 %v295, 127
        %v1551 = vpop.permute.xlu0 %1550
        %1552 = vrot.lane.b32.xlu0 %v296, 127
        %v1553 = vpop.permute.xlu0 %1552
        %1554 = vrot.lane.b32.xlu0 %v297, 127
        %v1555 = vpop.permute.xlu0 %1554
        %v1561 = vsel %vm315, %v1555, 0
        %1563 = vmatprep.subr.mxu0 0.0
        %1564 = vmatpush1.msra.mxu0 %v1545
        %1565 = vmatprep.subr.mxu0 0.0
        %1566 = vmatpush1.msra.mxu0 %v1547
        %1567 = vmatprep.subr.mxu0 0.0
        %1568 = vmatpush1.msra.mxu0 %v1549
        %1569 = vmatprep.subr.mxu0 0.0
        %1570 = vmatpush1.msra.mxu0 %v1551
        %1571 = vmatprep.subr.mxu0 0.0
        %1572 = vmatpush1.msra.mxu0 %v1553
        %1573 = vmatprep.subr.mxu0 0.0
        %1574 = vmatpush1.msra.mxu0 %v1561
        %1575 = vmatprep.subr.mxu0 0.0
        %1576 = vmatpush1.msra.mxu0 0.0
        %1577 = vmatprep.subr.mxu0 0.0
        %1578 = vmatpush1.msra.mxu0 0.0
        %1579 = vmatprep.subr.mxu0 0.0
        %1580 = vmatpush1.msra.mxu0 0.0
        %1581 = vmatprep.subr.mxu0 0.0
        %1582 = vmatpush1.msra.mxu0 0.0
        %1583 = vmatprep.subr.mxu0 0.0
        %1584 = vmatpush1.msra.mxu0 0.0
        %1585 = vmatprep.subr.mxu0 0.0
        %1586 = vmatpush1.msra.mxu0 0.0
        %1587 = vmatprep.subr.mxu0 0.0
        %1588 = vmatpush1.msra.mxu0 0.0
        %1589 = vmatprep.subr.mxu0 0.0
        %1590 = vmatpush1.msra.mxu0 0.0
        %1591 = vmatprep.subr.mxu0 0.0
        %1592 = vmatpush1.msra.mxu0 0.0
        %1593 = vmatprep.subr.mxu0 0.0
        %1594 = vmatpush1.msra.mxu0 0.0
        %1595 = vmatprep.subr.mxu0 0.0
        %1596 = vmatpush1.msra.mxu0 0.0
        %1597 = vmatprep.subr.mxu0 0.0
        %1598 = vmatpush1.msra.mxu0 0.0
        %1599 = vmatprep.subr.mxu0 0.0
        %1600 = vmatpush1.msra.mxu0 0.0
        %1601 = vmatprep.subr.mxu0 0.0
        %1602 = vmatpush1.msra.mxu0 0.0
        %1603 = vmatprep.subr.mxu0 0.0
        %1604 = vmatpush1.msra.mxu0 0.0
        %1605 = vmatprep.subr.mxu0 0.0
        %1606 = vmatpush1.msra.mxu0 0.0
        %1607 = vmatprep.subr.mxu0 0.0
        %1608 = vmatpush1.msra.mxu0 0.0
        %1609 = vmatprep.subr.mxu0 0.0
        %1610 = vmatpush1.msra.mxu0 0.0
        %1611 = vmatprep.subr.mxu0 0.0
        %1612 = vmatpush1.msra.mxu0 0.0
        %1613 = vmatprep.subr.mxu0 0.0
        %1614 = vmatpush1.msra.mxu0 0.0
        %1615 = vmatprep.subr.mxu0 0.0
        %1616 = vmatpush1.msra.mxu0 0.0
        %1617 = vmatprep.subr.mxu0 0.0
        %1618 = vmatpush1.msra.mxu0 0.0
        %1619 = vmatprep.subr.mxu0 0.0
        %1620 = vmatpush1.msra.mxu0 0.0
        %1621 = vmatprep.subr.mxu0 0.0
        %1622 = vmatpush1.msra.mxu0 0.0
        %1623 = vmatprep.subr.mxu0 0.0
        %1624 = vmatpush1.msra.mxu0 0.0
        %1625 = vmatprep.subr.mxu0 0.0
        %1626 = vmatpush1.msra.mxu0 0.0
        %1627 = vmatprep.mubr.f32.mxu0 0.0
        %1628 = vmatmul.mubr.f32.gmra.mrb[0].mxu0 %v1303
        %v1629 = vpop.f32.mrb[0].mxu0
        %v1630 = vadd.f32 0.0, %v1629
        %v1631 = vpop.f32.mrb[0].mxu0
        %1632 = vmatprep.mubr.f32.mxu0 0.0
        %1633 = vmatmul.mubr.f32.gmra.mrb[0].mxu0 %v1306
        %v1634 = vpop.f32.mrb[0].mxu0
        %v1635 = vadd.f32 0.0, %v1634
        %v1636 = vpop.f32.mrb[0].mxu0
        %1637 = vdwg.mxu0
        %v1638 = vadd.f32 %v1297, %v1630
        %v1639 = vadd.f32 %v1298, %v1635
        %s1640 = scalar_lea.vmem %s1, 64
        %v1641 = vld [vmem:[%s1640] sm:$0xff]
        %v1642 = vld [vmem:[%s1640 + $0x8] sm:$0xff]
        %v1644 = vsel %vm308, %v1641, 0
        %v1647 = vsel %vm308, %v1642, 0
        %1649 = vmatprep.subr.mxu0 0.0
        %1650 = vmatpush1.msra.mxu0 %v790
        %1651 = vmatprep.subr.mxu0 0.0
        %1652 = vmatpush1.msra.mxu0 %v792
        %1653 = vmatprep.subr.mxu0 0.0
        %1654 = vmatpush1.msra.mxu0 %v794
        %1655 = vmatprep.subr.mxu0 0.0
        %1656 = vmatpush1.msra.mxu0 %v796
        %1657 = vmatprep.subr.mxu0 0.0
        %1658 = vmatpush1.msra.mxu0 %v798
        %1659 = vmatprep.subr.mxu0 0.0
        %1660 = vmatpush1.msra.mxu0 %v806
        %1661 = vmatprep.subr.mxu0 0.0
        %1662 = vmatpush1.msra.mxu0 0.0
        %1663 = vmatprep.subr.mxu0 0.0
        %1664 = vmatpush1.msra.mxu0 0.0
        %1665 = vmatprep.subr.mxu0 0.0
        %1666 = vmatpush1.msra.mxu0 0.0
        %1667 = vmatprep.subr.mxu0 0.0
        %1668 = vmatpush1.msra.mxu0 0.0
        %1669 = vmatprep.subr.mxu0 0.0
        %1670 = vmatpush1.msra.mxu0 0.0
        %1671 = vmatprep.subr.mxu0 0.0
        %1672 = vmatpush1.msra.mxu0 0.0
        %1673 = vmatprep.subr.mxu0 0.0
        %1674 = vmatpush1.msra.mxu0 0.0
        %1675 = vmatprep.subr.mxu0 0.0
        %1676 = vmatpush1.msra.mxu0 0.0
        %1677 = vmatprep.subr.mxu0 0.0
        %1678 = vmatpush1.msra.mxu0 0.0
        %1679 = vmatprep.subr.mxu0 0.0
        %1680 = vmatpush1.msra.mxu0 0.0
        %1681 = vmatprep.subr.mxu0 0.0
        %1682 = vmatpush1.msra.mxu0 0.0
        %1683 = vmatprep.subr.mxu0 0.0
        %1684 = vmatpush1.msra.mxu0 0.0
        %1685 = vmatprep.subr.mxu0 0.0
        %1686 = vmatpush1.msra.mxu0 0.0
        %1687 = vmatprep.subr.mxu0 0.0
        %1688 = vmatpush1.msra.mxu0 0.0
        %1689 = vmatprep.subr.mxu0 0.0
        %1690 = vmatpush1.msra.mxu0 0.0
        %1691 = vmatprep.subr.mxu0 0.0
        %1692 = vmatpush1.msra.mxu0 0.0
        %1693 = vmatprep.subr.mxu0 0.0
        %1694 = vmatpush1.msra.mxu0 0.0
        %1695 = vmatprep.subr.mxu0 0.0
        %1696 = vmatpush1.msra.mxu0 0.0
        %1697 = vmatprep.subr.mxu0 0.0
        %1698 = vmatpush1.msra.mxu0 0.0
        %1699 = vmatprep.subr.mxu0 0.0
        %1700 = vmatpush1.msra.mxu0 0.0
        %1701 = vmatprep.subr.mxu0 0.0
        %1702 = vmatpush1.msra.mxu0 0.0
        %1703 = vmatprep.subr.mxu0 0.0
        %1704 = vmatpush1.msra.mxu0 0.0
        %1705 = vmatprep.subr.mxu0 0.0
        %1706 = vmatpush1.msra.mxu0 0.0
        %1707 = vmatprep.subr.mxu0 0.0
        %1708 = vmatpush1.msra.mxu0 0.0
        %1709 = vmatprep.subr.mxu0 0.0
        %1710 = vmatpush1.msra.mxu0 0.0
        %1711 = vmatprep.subr.mxu0 0.0
        %1712 = vmatpush1.msra.mxu0 0.0
        %1713 = vmatprep.mubr.f32.mxu0 0.0
        %1714 = vmatmul.mubr.f32.gmra.mrb[0].mxu0 %v1644
        %v1715 = vpop.f32.mrb[0].mxu0
        %v1716 = vadd.f32 0.0, %v1715
        %v1717 = vpop.f32.mrb[0].mxu0
        %1718 = vmatprep.mubr.f32.mxu0 0.0
        %1719 = vmatmul.mubr.f32.gmra.mrb[0].mxu0 %v1647
        %v1720 = vpop.f32.mrb[0].mxu0
        %v1721 = vadd.f32 0.0, %v1720
        %v1722 = vpop.f32.mrb[0].mxu0
        %1723 = vdwg.mxu0
        %v1724 = vadd.f32 %v1383, %v1716
        %v1725 = vadd.f32 %v1384, %v1721
        %1726 = vmatprep.subr.mxu0 0.0
        %1727 = vmatpush1.msra.mxu0 %v1204
        %1728 = vmatprep.subr.mxu0 0.0
        %1729 = vmatpush1.msra.mxu0 %v1206
        %1730 = vmatprep.subr.mxu0 0.0
        %1731 = vmatpush1.msra.mxu0 %v1208
        %1732 = vmatprep.subr.mxu0 0.0
        %1733 = vmatpush1.msra.mxu0 %v1210
        %1734 = vmatprep.subr.mxu0 0.0
        %1735 = vmatpush1.msra.mxu0 %v1212
        %1736 = vmatprep.subr.mxu0 0.0
        %1737 = vmatpush1.msra.mxu0 %v1220
        %1738 = vmatprep.subr.mxu0 0.0
        %1739 = vmatpush1.msra.mxu0 0.0
        %1740 = vmatprep.subr.mxu0 0.0
        %1741 = vmatpush1.msra.mxu0 0.0
        %1742 = vmatprep.subr.mxu0 0.0
        %1743 = vmatpush1.msra.mxu0 0.0
        %1744 = vmatprep.subr.mxu0 0.0
        %1745 = vmatpush1.msra.mxu0 0.0
        %1746 = vmatprep.subr.mxu0 0.0
        %1747 = vmatpush1.msra.mxu0 0.0
        %1748 = vmatprep.subr.mxu0 0.0
        %1749 = vmatpush1.msra.mxu0 0.0
        %1750 = vmatprep.subr.mxu0 0.0
        %1751 = vmatpush1.msra.mxu0 0.0
        %1752 = vmatprep.subr.mxu0 0.0
        %1753 = vmatpush1.msra.mxu0 0.0
        %1754 = vmatprep.subr.mxu0 0.0
        %1755 = vmatpush1.msra.mxu0 0.0
        %1756 = vmatprep.subr.mxu0 0.0
        %1757 = vmatpush1.msra.mxu0 0.0
        %1758 = vmatprep.subr.mxu0 0.0
        %1759 = vmatpush1.msra.mxu0 0.0
        %1760 = vmatprep.subr.mxu0 0.0
        %1761 = vmatpush1.msra.mxu0 0.0
        %1762 = vmatprep.subr.mxu0 0.0
        %1763 = vmatpush1.msra.mxu0 0.0
        %1764 = vmatprep.subr.mxu0 0.0
        %1765 = vmatpush1.msra.mxu0 0.0
        %1766 = vmatprep.subr.mxu0 0.0
        %1767 = vmatpush1.msra.mxu0 0.0
        %1768 = vmatprep.subr.mxu0 0.0
        %1769 = vmatpush1.msra.mxu0 0.0
        %1770 = vmatprep.subr.mxu0 0.0
        %1771 = vmatpush1.msra.mxu0 0.0
        %1772 = vmatprep.subr.mxu0 0.0
        %1773 = vmatpush1.msra.mxu0 0.0
        %1774 = vmatprep.subr.mxu0 0.0
        %1775 = vmatpush1.msra.mxu0 0.0
        %1776 = vmatprep.subr.mxu0 0.0
        %1777 = vmatpush1.msra.mxu0 0.0
        %1778 = vmatprep.subr.mxu0 0.0
        %1779 = vmatpush1.msra.mxu0 0.0
        %1780 = vmatprep.subr.mxu0 0.0
        %1781 = vmatpush1.msra.mxu0 0.0
        %1782 = vmatprep.subr.mxu0 0.0
        %1783 = vmatpush1.msra.mxu0 0.0
        %1784 = vmatprep.subr.mxu0 0.0
        %1785 = vmatpush1.msra.mxu0 0.0
        %1786 = vmatprep.subr.mxu0 0.0
        %1787 = vmatpush1.msra.mxu0 0.0
        %1788 = vmatprep.subr.mxu0 0.0
        %1789 = vmatpush1.msra.mxu0 0.0
        %1790 = vmatprep.mubr.f32.mxu0 0.0
        %1791 = vmatmul.mubr.f32.gmra.mrb[0].mxu0 %v1644
        %v1792 = vpop.f32.mrb[0].mxu0
        %v1793 = vadd.f32 0.0, %v1792
        %v1794 = vpop.f32.mrb[0].mxu0
        %1795 = vmatprep.mubr.f32.mxu0 0.0
        %1796 = vmatmul.mubr.f32.gmra.mrb[0].mxu0 %v1647
        %v1797 = vpop.f32.mrb[0].mxu0
        %v1798 = vadd.f32 0.0, %v1797
        %v1799 = vpop.f32.mrb[0].mxu0
        %1800 = vdwg.mxu0
        %v1801 = vadd.f32 %v1460, %v1793
        %v1802 = vadd.f32 %v1461, %v1798
        %1803 = vmatprep.subr.mxu0 0.0
        %1804 = vmatpush1.msra.mxu0 %v1545
        %1805 = vmatprep.subr.mxu0 0.0
        %1806 = vmatpush1.msra.mxu0 %v1547
        %1807 = vmatprep.subr.mxu0 0.0
        %1808 = vmatpush1.msra.mxu0 %v1549
        %1809 = vmatprep.subr.mxu0 0.0
        %1810 = vmatpush1.msra.mxu0 %v1551
        %1811 = vmatprep.subr.mxu0 0.0
        %1812 = vmatpush1.msra.mxu0 %v1553
        %1813 = vmatprep.subr.mxu0 0.0
        %1814 = vmatpush1.msra.mxu0 %v1561
        %1815 = vmatprep.subr.mxu0 0.0
        %1816 = vmatpush1.msra.mxu0 0.0
        %1817 = vmatprep.subr.mxu0 0.0
        %1818 = vmatpush1.msra.mxu0 0.0
        %1819 = vmatprep.subr.mxu0 0.0
        %1820 = vmatpush1.msra.mxu0 0.0
        %1821 = vmatprep.subr.mxu0 0.0
        %1822 = vmatpush1.msra.mxu0 0.0
        %1823 = vmatprep.subr.mxu0 0.0
        %1824 = vmatpush1.msra.mxu0 0.0
        %1825 = vmatprep.subr.mxu0 0.0
        %1826 = vmatpush1.msra.mxu0 0.0
        %1827 = vmatprep.subr.mxu0 0.0
        %1828 = vmatpush1.msra.mxu0 0.0
        %1829 = vmatprep.subr.mxu0 0.0
        %1830 = vmatpush1.msra.mxu0 0.0
        %1831 = vmatprep.subr.mxu0 0.0
        %1832 = vmatpush1.msra.mxu0 0.0
        %1833 = vmatprep.subr.mxu0 0.0
        %1834 = vmatpush1.msra.mxu0 0.0
        %1835 = vmatprep.subr.mxu0 0.0
        %1836 = vmatpush1.msra.mxu0 0.0
        %1837 = vmatprep.subr.mxu0 0.0
        %1838 = vmatpush1.msra.mxu0 0.0
        %1839 = vmatprep.subr.mxu0 0.0
        %1840 = vmatpush1.msra.mxu0 0.0
        %1841 = vmatprep.subr.mxu0 0.0
        %1842 = vmatpush1.msra.mxu0 0.0
        %1843 = vmatprep.subr.mxu0 0.0
        %1844 = vmatpush1.msra.mxu0 0.0
        %1845 = vmatprep.subr.mxu0 0.0
        %1846 = vmatpush1.msra.mxu0 0.0
        %1847 = vmatprep.subr.mxu0 0.0
        %1848 = vmatpush1.msra.mxu0 0.0
        %1849 = vmatprep.subr.mxu0 0.0
        %1850 = vmatpush1.msra.mxu0 0.0
        %1851 = vmatprep.subr.mxu0 0.0
        %1852 = vmatpush1.msra.mxu0 0.0
        %1853 = vmatprep.subr.mxu0 0.0
        %1854 = vmatpush1.msra.mxu0 0.0
        %1855 = vmatprep.subr.mxu0 0.0
        %1856 = vmatpush1.msra.mxu0 0.0
        %1857 = vmatprep.subr.mxu0 0.0
        %1858 = vmatpush1.msra.mxu0 0.0
        %1859 = vmatprep.subr.mxu0 0.0
        %1860 = vmatpush1.msra.mxu0 0.0
        %1861 = vmatprep.subr.mxu0 0.0
        %1862 = vmatpush1.msra.mxu0 0.0
        %1863 = vmatprep.subr.mxu0 0.0
        %1864 = vmatpush1.msra.mxu0 0.0
        %1865 = vmatprep.subr.mxu0 0.0
        %1866 = vmatpush1.msra.mxu0 0.0
        %1867 = vmatprep.mubr.f32.mxu0 0.0
        %1868 = vmatmul.mubr.f32.gmra.mrb[0].mxu0 %v1644
        %v1869 = vpop.f32.mrb[0].mxu0
        %v1870 = vadd.f32 0.0, %v1869
        %v1871 = vpop.f32.mrb[0].mxu0
        %1872 = vmatprep.mubr.f32.mxu0 0.0
        %1873 = vmatmul.mubr.f32.gmra.mrb[0].mxu0 %v1647
        %v1874 = vpop.f32.mrb[0].mxu0
        %v1875 = vadd.f32 0.0, %v1874
        %v1876 = vpop.f32.mrb[0].mxu0
        %1877 = vdwg.mxu0
        %v1878 = vadd.f32 %v1537, %v1870
        %v1879 = vadd.f32 %v1538, %v1875
        %1885 = vrot.lane.b32.xlu0 %v299, 127
        %v1886 = vpop.permute.xlu0 %1885
        %1887 = vrot.lane.b32.xlu0 %v300, 127
        %v1888 = vpop.permute.xlu0 %1887
        %1889 = vrot.lane.b32.xlu0 %v301, 127
        %v1890 = vpop.permute.xlu0 %1889
        %1891 = vrot.lane.b32.xlu0 %v302, 127
        %v1892 = vpop.permute.xlu0 %1891
        %1893 = vrot.lane.b32.xlu0 %v303, 127
        %v1894 = vpop.permute.xlu0 %1893
        %1895 = vrot.lane.b32.xlu0 %v304, 127
        %v1896 = vpop.permute.xlu0 %1895
        %v1902 = vsel %vm315, %v1896, 0
        %1904 = vmatprep.subr.mxu0 0.0
        %1905 = vmatpush1.msra.mxu0 %v1886
        %1906 = vmatprep.subr.mxu0 0.0
        %1907 = vmatpush1.msra.mxu0 %v1888
        %1908 = vmatprep.subr.mxu0 0.0
        %1909 = vmatpush1.msra.mxu0 %v1890
        %1910 = vmatprep.subr.mxu0 0.0
        %1911 = vmatpush1.msra.mxu0 %v1892
        %1912 = vmatprep.subr.mxu0 0.0
        %1913 = vmatpush1.msra.mxu0 %v1894
        %1914 = vmatprep.subr.mxu0 0.0
        %1915 = vmatpush1.msra.mxu0 %v1902
        %1916 = vmatprep.subr.mxu0 0.0
        %1917 = vmatpush1.msra.mxu0 0.0
        %1918 = vmatprep.subr.mxu0 0.0
        %1919 = vmatpush1.msra.mxu0 0.0
        %1920 = vmatprep.subr.mxu0 0.0
        %1921 = vmatpush1.msra.mxu0 0.0
        %1922 = vmatprep.subr.mxu0 0.0
        %1923 = vmatpush1.msra.mxu0 0.0
        %1924 = vmatprep.subr.mxu0 0.0
        %1925 = vmatpush1.msra.mxu0 0.0
        %1926 = vmatprep.subr.mxu0 0.0
        %1927 = vmatpush1.msra.mxu0 0.0
        %1928 = vmatprep.subr.mxu0 0.0
        %1929 = vmatpush1.msra.mxu0 0.0
        %1930 = vmatprep.subr.mxu0 0.0
        %1931 = vmatpush1.msra.mxu0 0.0
        %1932 = vmatprep.subr.mxu0 0.0
        %1933 = vmatpush1.msra.mxu0 0.0
        %1934 = vmatprep.subr.mxu0 0.0
        %1935 = vmatpush1.msra.mxu0 0.0
        %1936 = vmatprep.subr.mxu0 0.0
        %1937 = vmatpush1.msra.mxu0 0.0
        %1938 = vmatprep.subr.mxu0 0.0
        %1939 = vmatpush1.msra.mxu0 0.0
        %1940 = vmatprep.subr.mxu0 0.0
        %1941 = vmatpush1.msra.mxu0 0.0
        %1942 = vmatprep.subr.mxu0 0.0
        %1943 = vmatpush1.msra.mxu0 0.0
        %1944 = vmatprep.subr.mxu0 0.0
        %1945 = vmatpush1.msra.mxu0 0.0
        %1946 = vmatprep.subr.mxu0 0.0
        %1947 = vmatpush1.msra.mxu0 0.0
        %1948 = vmatprep.subr.mxu0 0.0
        %1949 = vmatpush1.msra.mxu0 0.0
        %1950 = vmatprep.subr.mxu0 0.0
        %1951 = vmatpush1.msra.mxu0 0.0
        %1952 = vmatprep.subr.mxu0 0.0
        %1953 = vmatpush1.msra.mxu0 0.0
        %1954 = vmatprep.subr.mxu0 0.0
        %1955 = vmatpush1.msra.mxu0 0.0
        %1956 = vmatprep.subr.mxu0 0.0
        %1957 = vmatpush1.msra.mxu0 0.0
        %1958 = vmatprep.subr.mxu0 0.0
        %1959 = vmatpush1.msra.mxu0 0.0
        %1960 = vmatprep.subr.mxu0 0.0
        %1961 = vmatpush1.msra.mxu0 0.0
        %1962 = vmatprep.subr.mxu0 0.0
        %1963 = vmatpush1.msra.mxu0 0.0
        %1964 = vmatprep.subr.mxu0 0.0
        %1965 = vmatpush1.msra.mxu0 0.0
        %1966 = vmatprep.subr.mxu0 0.0
        %1967 = vmatpush1.msra.mxu0 0.0
        %1968 = vmatprep.mubr.f32.mxu0 0.0
        %1969 = vmatmul.mubr.f32.gmra.mrb[0].mxu0 %v1644
        %v1970 = vpop.f32.mrb[0].mxu0
        %v1971 = vadd.f32 0.0, %v1970
        %v1972 = vpop.f32.mrb[0].mxu0
        %1973 = vmatprep.mubr.f32.mxu0 0.0
        %1974 = vmatmul.mubr.f32.gmra.mrb[0].mxu0 %v1647
        %v1975 = vpop.f32.mrb[0].mxu0
        %v1976 = vadd.f32 0.0, %v1975
        %v1977 = vpop.f32.mrb[0].mxu0
        %1978 = vdwg.mxu0
        %v1979 = vadd.f32 %v1638, %v1971
        %v1980 = vadd.f32 %v1639, %v1976
        %s1981 = scalar_lea.vmem %s1, 80
        %v1982 = vld [vmem:[%s1981] sm:$0xff]
        %v1983 = vld [vmem:[%s1981 + $0x8] sm:$0xff]
        %v1985 = vsel %vm308, %v1982, 0
        %v1988 = vsel %vm308, %v1983, 0
        %1990 = vmatprep.subr.mxu0 0.0
        %1991 = vmatpush1.msra.mxu0 %v1204
        %1992 = vmatprep.subr.mxu0 0.0
        %1993 = vmatpush1.msra.mxu0 %v1206
        %1994 = vmatprep.subr.mxu0 0.0
        %1995 = vmatpush1.msra.mxu0 %v1208
        %1996 = vmatprep.subr.mxu0 0.0
        %1997 = vmatpush1.msra.mxu0 %v1210
        %1998 = vmatprep.subr.mxu0 0.0
        %1999 = vmatpush1.msra.mxu0 %v1212
        %2000 = vmatprep.subr.mxu0 0.0
        %2001 = vmatpush1.msra.mxu0 %v1220
        %2002 = vmatprep.subr.mxu0 0.0
        %2003 = vmatpush1.msra.mxu0 0.0
        %2004 = vmatprep.subr.mxu0 0.0
        %2005 = vmatpush1.msra.mxu0 0.0
        %2006 = vmatprep.subr.mxu0 0.0
        %2007 = vmatpush1.msra.mxu0 0.0
        %2008 = vmatprep.subr.mxu0 0.0
        %2009 = vmatpush1.msra.mxu0 0.0
        %2010 = vmatprep.subr.mxu0 0.0
        %2011 = vmatpush1.msra.mxu0 0.0
        %2012 = vmatprep.subr.mxu0 0.0
        %2013 = vmatpush1.msra.mxu0 0.0
        %2014 = vmatprep.subr.mxu0 0.0
        %2015 = vmatpush1.msra.mxu0 0.0
        %2016 = vmatprep.subr.mxu0 0.0
        %2017 = vmatpush1.msra.mxu0 0.0
        %2018 = vmatprep.subr.mxu0 0.0
        %2019 = vmatpush1.msra.mxu0 0.0
        %2020 = vmatprep.subr.mxu0 0.0
        %2021 = vmatpush1.msra.mxu0 0.0
        %2022 = vmatprep.subr.mxu0 0.0
        %2023 = vmatpush1.msra.mxu0 0.0
        %2024 = vmatprep.subr.mxu0 0.0
        %2025 = vmatpush1.msra.mxu0 0.0
        %2026 = vmatprep.subr.mxu0 0.0
        %2027 = vmatpush1.msra.mxu0 0.0
        %2028 = vmatprep.subr.mxu0 0.0
        %2029 = vmatpush1.msra.mxu0 0.0
        %2030 = vmatprep.subr.mxu0 0.0
        %2031 = vmatpush1.msra.mxu0 0.0
        %2032 = vmatprep.subr.mxu0 0.0
        %2033 = vmatpush1.msra.mxu0 0.0
        %2034 = vmatprep.subr.mxu0 0.0
        %2035 = vmatpush1.msra.mxu0 0.0
        %2036 = vmatprep.subr.mxu0 0.0
        %2037 = vmatpush1.msra.mxu0 0.0
        %2038 = vmatprep.subr.mxu0 0.0
        %2039 = vmatpush1.msra.mxu0 0.0
        %2040 = vmatprep.subr.mxu0 0.0
        %2041 = vmatpush1.msra.mxu0 0.0
        %2042 = vmatprep.subr.mxu0 0.0
        %2043 = vmatpush1.msra.mxu0 0.0
        %2044 = vmatprep.subr.mxu0 0.0
        %2045 = vmatpush1.msra.mxu0 0.0
        %2046 = vmatprep.subr.mxu0 0.0
        %2047 = vmatpush1.msra.mxu0 0.0
        %2048 = vmatprep.subr.mxu0 0.0
        %2049 = vmatpush1.msra.mxu0 0.0
        %2050 = vmatprep.subr.mxu0 0.0
        %2051 = vmatpush1.msra.mxu0 0.0
        %2052 = vmatprep.subr.mxu0 0.0
        %2053 = vmatpush1.msra.mxu0 0.0
        %2054 = vmatprep.mubr.f32.mxu0 0.0
        %2055 = vmatmul.mubr.f32.gmra.mrb[0].mxu0 %v1985
        %v2056 = vpop.f32.mrb[0].mxu0
        %v2057 = vadd.f32 0.0, %v2056
        %v2058 = vpop.f32.mrb[0].mxu0
        %2059 = vmatprep.mubr.f32.mxu0 0.0
        %2060 = vmatmul.mubr.f32.gmra.mrb[0].mxu0 %v1988
        %v2061 = vpop.f32.mrb[0].mxu0
        %v2062 = vadd.f32 0.0, %v2061
        %v2063 = vpop.f32.mrb[0].mxu0
        %2064 = vdwg.mxu0
        %v2065 = vadd.f32 %v1724, %v2057
        %v2066 = vadd.f32 %v1725, %v2062
        %2067 = vmatprep.subr.mxu0 0.0
        %2068 = vmatpush1.msra.mxu0 %v1545
        %2069 = vmatprep.subr.mxu0 0.0
        %2070 = vmatpush1.msra.mxu0 %v1547
        %2071 = vmatprep.subr.mxu0 0.0
        %2072 = vmatpush1.msra.mxu0 %v1549
        %2073 = vmatprep.subr.mxu0 0.0
        %2074 = vmatpush1.msra.mxu0 %v1551
        %2075 = vmatprep.subr.mxu0 0.0
        %2076 = vmatpush1.msra.mxu0 %v1553
        %2077 = vmatprep.subr.mxu0 0.0
        %2078 = vmatpush1.msra.mxu0 %v1561
        %2079 = vmatprep.subr.mxu0 0.0
        %2080 = vmatpush1.msra.mxu0 0.0
        %2081 = vmatprep.subr.mxu0 0.0
        %2082 = vmatpush1.msra.mxu0 0.0
        %2083 = vmatprep.subr.mxu0 0.0
        %2084 = vmatpush1.msra.mxu0 0.0
        %2085 = vmatprep.subr.mxu0 0.0
        %2086 = vmatpush1.msra.mxu0 0.0
        %2087 = vmatprep.subr.mxu0 0.0
        %2088 = vmatpush1.msra.mxu0 0.0
        %2089 = vmatprep.subr.mxu0 0.0
        %2090 = vmatpush1.msra.mxu0 0.0
        %2091 = vmatprep.subr.mxu0 0.0
        %2092 = vmatpush1.msra.mxu0 0.0
        %2093 = vmatprep.subr.mxu0 0.0
        %2094 = vmatpush1.msra.mxu0 0.0
        %2095 = vmatprep.subr.mxu0 0.0
        %2096 = vmatpush1.msra.mxu0 0.0
        %2097 = vmatprep.subr.mxu0 0.0
        %2098 = vmatpush1.msra.mxu0 0.0
        %2099 = vmatprep.subr.mxu0 0.0
        %2100 = vmatpush1.msra.mxu0 0.0
        %2101 = vmatprep.subr.mxu0 0.0
        %2102 = vmatpush1.msra.mxu0 0.0
        %2103 = vmatprep.subr.mxu0 0.0
        %2104 = vmatpush1.msra.mxu0 0.0
        %2105 = vmatprep.subr.mxu0 0.0
        %2106 = vmatpush1.msra.mxu0 0.0
        %2107 = vmatprep.subr.mxu0 0.0
        %2108 = vmatpush1.msra.mxu0 0.0
        %2109 = vmatprep.subr.mxu0 0.0
        %2110 = vmatpush1.msra.mxu0 0.0
        %2111 = vmatprep.subr.mxu0 0.0
        %2112 = vmatpush1.msra.mxu0 0.0
        %2113 = vmatprep.subr.mxu0 0.0
        %2114 = vmatpush1.msra.mxu0 0.0
        %2115 = vmatprep.subr.mxu0 0.0
        %2116 = vmatpush1.msra.mxu0 0.0
        %2117 = vmatprep.subr.mxu0 0.0
        %2118 = vmatpush1.msra.mxu0 0.0
        %2119 = vmatprep.subr.mxu0 0.0
        %2120 = vmatpush1.msra.mxu0 0.0
        %2121 = vmatprep.subr.mxu0 0.0
        %2122 = vmatpush1.msra.mxu0 0.0
        %2123 = vmatprep.subr.mxu0 0.0
        %2124 = vmatpush1.msra.mxu0 0.0
        %2125 = vmatprep.subr.mxu0 0.0
        %2126 = vmatpush1.msra.mxu0 0.0
        %2127 = vmatprep.subr.mxu0 0.0
        %2128 = vmatpush1.msra.mxu0 0.0
        %2129 = vmatprep.subr.mxu0 0.0
        %2130 = vmatpush1.msra.mxu0 0.0
        %2131 = vmatprep.mubr.f32.mxu0 0.0
        %2132 = vmatmul.mubr.f32.gmra.mrb[0].mxu0 %v1985
        %v2133 = vpop.f32.mrb[0].mxu0
        %v2134 = vadd.f32 0.0, %v2133
        %v2135 = vpop.f32.mrb[0].mxu0
        %2136 = vmatprep.mubr.f32.mxu0 0.0
        %2137 = vmatmul.mubr.f32.gmra.mrb[0].mxu0 %v1988
        %v2138 = vpop.f32.mrb[0].mxu0
        %v2139 = vadd.f32 0.0, %v2138
        %v2140 = vpop.f32.mrb[0].mxu0
        %2141 = vdwg.mxu0
        %v2142 = vadd.f32 %v1801, %v2134
        %v2143 = vadd.f32 %v1802, %v2139
        %2144 = vmatprep.subr.mxu0 0.0
        %2145 = vmatpush1.msra.mxu0 %v1886
        %2146 = vmatprep.subr.mxu0 0.0
        %2147 = vmatpush1.msra.mxu0 %v1888
        %2148 = vmatprep.subr.mxu0 0.0
        %2149 = vmatpush1.msra.mxu0 %v1890
        %2150 = vmatprep.subr.mxu0 0.0
        %2151 = vmatpush1.msra.mxu0 %v1892
        %2152 = vmatprep.subr.mxu0 0.0
        %2153 = vmatpush1.msra.mxu0 %v1894
        %2154 = vmatprep.subr.mxu0 0.0
        %2155 = vmatpush1.msra.mxu0 %v1902
        %2156 = vmatprep.subr.mxu0 0.0
        %2157 = vmatpush1.msra.mxu0 0.0
        %2158 = vmatprep.subr.mxu0 0.0
        %2159 = vmatpush1.msra.mxu0 0.0
        %2160 = vmatprep.subr.mxu0 0.0
        %2161 = vmatpush1.msra.mxu0 0.0
        %2162 = vmatprep.subr.mxu0 0.0
        %2163 = vmatpush1.msra.mxu0 0.0
        %2164 = vmatprep.subr.mxu0 0.0
        %2165 = vmatpush1.msra.mxu0 0.0
        %2166 = vmatprep.subr.mxu0 0.0
        %2167 = vmatpush1.msra.mxu0 0.0
        %2168 = vmatprep.subr.mxu0 0.0
        %2169 = vmatpush1.msra.mxu0 0.0
        %2170 = vmatprep.subr.mxu0 0.0
        %2171 = vmatpush1.msra.mxu0 0.0
        %2172 = vmatprep.subr.mxu0 0.0
        %2173 = vmatpush1.msra.mxu0 0.0
        %2174 = vmatprep.subr.mxu0 0.0
        %2175 = vmatpush1.msra.mxu0 0.0
        %2176 = vmatprep.subr.mxu0 0.0
        %2177 = vmatpush1.msra.mxu0 0.0
        %2178 = vmatprep.subr.mxu0 0.0
        %2179 = vmatpush1.msra.mxu0 0.0
        %2180 = vmatprep.subr.mxu0 0.0
        %2181 = vmatpush1.msra.mxu0 0.0
        %2182 = vmatprep.subr.mxu0 0.0
        %2183 = vmatpush1.msra.mxu0 0.0
        %2184 = vmatprep.subr.mxu0 0.0
        %2185 = vmatpush1.msra.mxu0 0.0
        %2186 = vmatprep.subr.mxu0 0.0
        %2187 = vmatpush1.msra.mxu0 0.0
        %2188 = vmatprep.subr.mxu0 0.0
        %2189 = vmatpush1.msra.mxu0 0.0
        %2190 = vmatprep.subr.mxu0 0.0
        %2191 = vmatpush1.msra.mxu0 0.0
        %2192 = vmatprep.subr.mxu0 0.0
        %2193 = vmatpush1.msra.mxu0 0.0
        %2194 = vmatprep.subr.mxu0 0.0
        %2195 = vmatpush1.msra.mxu0 0.0
        %2196 = vmatprep.subr.mxu0 0.0
        %2197 = vmatpush1.msra.mxu0 0.0
        %2198 = vmatprep.subr.mxu0 0.0
        %2199 = vmatpush1.msra.mxu0 0.0
        %2200 = vmatprep.subr.mxu0 0.0
        %2201 = vmatpush1.msra.mxu0 0.0
        %2202 = vmatprep.subr.mxu0 0.0
        %2203 = vmatpush1.msra.mxu0 0.0
        %2204 = vmatprep.subr.mxu0 0.0
        %2205 = vmatpush1.msra.mxu0 0.0
        %2206 = vmatprep.subr.mxu0 0.0
        %2207 = vmatpush1.msra.mxu0 0.0
        %2208 = vmatprep.mubr.f32.mxu0 0.0
        %2209 = vmatmul.mubr.f32.gmra.mrb[0].mxu0 %v1985
        %v2210 = vpop.f32.mrb[0].mxu0
        %v2211 = vadd.f32 0.0, %v2210
        %v2212 = vpop.f32.mrb[0].mxu0
        %2213 = vmatprep.mubr.f32.mxu0 0.0
        %2214 = vmatmul.mubr.f32.gmra.mrb[0].mxu0 %v1988
        %v2215 = vpop.f32.mrb[0].mxu0
        %v2216 = vadd.f32 0.0, %v2215
        %v2217 = vpop.f32.mrb[0].mxu0
        %2218 = vdwg.mxu0
        %v2219 = vadd.f32 %v1878, %v2211
        %v2220 = vadd.f32 %v1879, %v2216
        %2221 = vrot.lane.b32.xlu0 %v278, 126
        %v2222 = vpop.permute.xlu0 %2221
        %2223 = vrot.lane.b32.xlu0 %v279, 126
        %v2224 = vpop.permute.xlu0 %2223
        %2225 = vrot.lane.b32.xlu0 %v280, 126
        %v2226 = vpop.permute.xlu0 %2225
        %2227 = vrot.lane.b32.xlu0 %v281, 126
        %v2228 = vpop.permute.xlu0 %2227
        %2229 = vrot.lane.b32.xlu0 %v282, 126
        %v2230 = vpop.permute.xlu0 %2229
        %2231 = vrot.lane.b32.xlu0 %v283, 126
        %v2232 = vpop.permute.xlu0 %2231
        %v2238 = vsel %vm315, %v2232, 0
        %2240 = vmatprep.subr.mxu0 0.0
        %2241 = vmatpush1.msra.mxu0 %v2222
        %2242 = vmatprep.subr.mxu0 0.0
        %2243 = vmatpush1.msra.mxu0 %v2224
        %2244 = vmatprep.subr.mxu0 0.0
        %2245 = vmatpush1.msra.mxu0 %v2226
        %2246 = vmatprep.subr.mxu0 0.0
        %2247 = vmatpush1.msra.mxu0 %v2228
        %2248 = vmatprep.subr.mxu0 0.0
        %2249 = vmatpush1.msra.mxu0 %v2230
        %2250 = vmatprep.subr.mxu0 0.0
        %2251 = vmatpush1.msra.mxu0 %v2238
        %2252 = vmatprep.subr.mxu0 0.0
        %2253 = vmatpush1.msra.mxu0 0.0
        %2254 = vmatprep.subr.mxu0 0.0
        %2255 = vmatpush1.msra.mxu0 0.0
        %2256 = vmatprep.subr.mxu0 0.0
        %2257 = vmatpush1.msra.mxu0 0.0
        %2258 = vmatprep.subr.mxu0 0.0
        %2259 = vmatpush1.msra.mxu0 0.0
        %2260 = vmatprep.subr.mxu0 0.0
        %2261 = vmatpush1.msra.mxu0 0.0
        %2262 = vmatprep.subr.mxu0 0.0
        %2263 = vmatpush1.msra.mxu0 0.0
        %2264 = vmatprep.subr.mxu0 0.0
        %2265 = vmatpush1.msra.mxu0 0.0
        %2266 = vmatprep.subr.mxu0 0.0
        %2267 = vmatpush1.msra.mxu0 0.0
        %2268 = vmatprep.subr.mxu0 0.0
        %2269 = vmatpush1.msra.mxu0 0.0
        %2270 = vmatprep.subr.mxu0 0.0
        %2271 = vmatpush1.msra.mxu0 0.0
        %2272 = vmatprep.subr.mxu0 0.0
        %2273 = vmatpush1.msra.mxu0 0.0
        %2274 = vmatprep.subr.mxu0 0.0
        %2275 = vmatpush1.msra.mxu0 0.0
        %2276 = vmatprep.subr.mxu0 0.0
        %2277 = vmatpush1.msra.mxu0 0.0
        %2278 = vmatprep.subr.mxu0 0.0
        %2279 = vmatpush1.msra.mxu0 0.0
        %2280 = vmatprep.subr.mxu0 0.0
        %2281 = vmatpush1.msra.mxu0 0.0
        %2282 = vmatprep.subr.mxu0 0.0
        %2283 = vmatpush1.msra.mxu0 0.0
        %2284 = vmatprep.subr.mxu0 0.0
        %2285 = vmatpush1.msra.mxu0 0.0
        %2286 = vmatprep.subr.mxu0 0.0
        %2287 = vmatpush1.msra.mxu0 0.0
        %2288 = vmatprep.subr.mxu0 0.0
        %2289 = vmatpush1.msra.mxu0 0.0
        %2290 = vmatprep.subr.mxu0 0.0
        %2291 = vmatpush1.msra.mxu0 0.0
        %2292 = vmatprep.subr.mxu0 0.0
        %2293 = vmatpush1.msra.mxu0 0.0
        %2294 = vmatprep.subr.mxu0 0.0
        %2295 = vmatpush1.msra.mxu0 0.0
        %2296 = vmatprep.subr.mxu0 0.0
        %2297 = vmatpush1.msra.mxu0 0.0
        %2298 = vmatprep.subr.mxu0 0.0
        %2299 = vmatpush1.msra.mxu0 0.0
        %2300 = vmatprep.subr.mxu0 0.0
        %2301 = vmatpush1.msra.mxu0 0.0
        %2302 = vmatprep.subr.mxu0 0.0
        %2303 = vmatpush1.msra.mxu0 0.0
        %2304 = vmatprep.mubr.f32.mxu0 0.0
        %2305 = vmatmul.mubr.f32.gmra.mrb[0].mxu0 %v1985
        %v2306 = vpop.f32.mrb[0].mxu0
        %v2307 = vadd.f32 0.0, %v2306
        %v2308 = vpop.f32.mrb[0].mxu0
        %2309 = vmatprep.mubr.f32.mxu0 0.0
        %2310 = vmatmul.mubr.f32.gmra.mrb[0].mxu0 %v1988
        %v2311 = vpop.f32.mrb[0].mxu0
        %v2312 = vadd.f32 0.0, %v2311
        %v2313 = vpop.f32.mrb[0].mxu0
        %2314 = vdwg.mxu0
        %v2315 = vadd.f32 %v1979, %v2307
        %v2316 = vadd.f32 %v1980, %v2312
        %s2317 = scalar_lea.vmem %s1, 96
        %v2318 = vld [vmem:[%s2317] sm:$0xff]
        %v2319 = vld [vmem:[%s2317 + $0x8] sm:$0xff]
        %v2321 = vsel %vm308, %v2318, 0
        %v2324 = vsel %vm308, %v2319, 0
        %2326 = vmatprep.subr.mxu0 0.0
        %2327 = vmatpush1.msra.mxu0 %v1545
        %2328 = vmatprep.subr.mxu0 0.0
        %2329 = vmatpush1.msra.mxu0 %v1547
        %2330 = vmatprep.subr.mxu0 0.0
        %2331 = vmatpush1.msra.mxu0 %v1549
        %2332 = vmatprep.subr.mxu0 0.0
        %2333 = vmatpush1.msra.mxu0 %v1551
        %2334 = vmatprep.subr.mxu0 0.0
        %2335 = vmatpush1.msra.mxu0 %v1553
        %2336 = vmatprep.subr.mxu0 0.0
        %2337 = vmatpush1.msra.mxu0 %v1561
        %2338 = vmatprep.subr.mxu0 0.0
        %2339 = vmatpush1.msra.mxu0 0.0
        %2340 = vmatprep.subr.mxu0 0.0
        %2341 = vmatpush1.msra.mxu0 0.0
        %2342 = vmatprep.subr.mxu0 0.0
        %2343 = vmatpush1.msra.mxu0 0.0
        %2344 = vmatprep.subr.mxu0 0.0
        %2345 = vmatpush1.msra.mxu0 0.0
        %2346 = vmatprep.subr.mxu0 0.0
        %2347 = vmatpush1.msra.mxu0 0.0
        %2348 = vmatprep.subr.mxu0 0.0
        %2349 = vmatpush1.msra.mxu0 0.0
        %2350 = vmatprep.subr.mxu0 0.0
        %2351 = vmatpush1.msra.mxu0 0.0
        %2352 = vmatprep.subr.mxu0 0.0
        %2353 = vmatpush1.msra.mxu0 0.0
        %2354 = vmatprep.subr.mxu0 0.0
        %2355 = vmatpush1.msra.mxu0 0.0
        %2356 = vmatprep.subr.mxu0 0.0
        %2357 = vmatpush1.msra.mxu0 0.0
        %2358 = vmatprep.subr.mxu0 0.0
        %2359 = vmatpush1.msra.mxu0 0.0
        %2360 = vmatprep.subr.mxu0 0.0
        %2361 = vmatpush1.msra.mxu0 0.0
        %2362 = vmatprep.subr.mxu0 0.0
        %2363 = vmatpush1.msra.mxu0 0.0
        %2364 = vmatprep.subr.mxu0 0.0
        %2365 = vmatpush1.msra.mxu0 0.0
        %2366 = vmatprep.subr.mxu0 0.0
        %2367 = vmatpush1.msra.mxu0 0.0
        %2368 = vmatprep.subr.mxu0 0.0
        %2369 = vmatpush1.msra.mxu0 0.0
        %2370 = vmatprep.subr.mxu0 0.0
        %2371 = vmatpush1.msra.mxu0 0.0
        %2372 = vmatprep.subr.mxu0 0.0
        %2373 = vmatpush1.msra.mxu0 0.0
        %2374 = vmatprep.subr.mxu0 0.0
        %2375 = vmatpush1.msra.mxu0 0.0
        %2376 = vmatprep.subr.mxu0 0.0
        %2377 = vmatpush1.msra.mxu0 0.0
        %2378 = vmatprep.subr.mxu0 0.0
        %2379 = vmatpush1.msra.mxu0 0.0
        %2380 = vmatprep.subr.mxu0 0.0
        %2381 = vmatpush1.msra.mxu0 0.0
        %2382 = vmatprep.subr.mxu0 0.0
        %2383 = vmatpush1.msra.mxu0 0.0
        %2384 = vmatprep.subr.mxu0 0.0
        %2385 = vmatpush1.msra.mxu0 0.0
        %2386 = vmatprep.subr.mxu0 0.0
        %2387 = vmatpush1.msra.mxu0 0.0
        %2388 = vmatprep.subr.mxu0 0.0
        %2389 = vmatpush1.msra.mxu0 0.0
        %2390 = vmatprep.mubr.f32.mxu0 0.0
        %2391 = vmatmul.mubr.f32.gmra.mrb[0].mxu0 %v2321
        %v2392 = vpop.f32.mrb[0].mxu0
        %v2393 = vadd.f32 0.0, %v2392
        %v2394 = vpop.f32.mrb[0].mxu0
        %2395 = vmatprep.mubr.f32.mxu0 0.0
        %2396 = vmatmul.mubr.f32.gmra.mrb[0].mxu0 %v2324
        %v2397 = vpop.f32.mrb[0].mxu0
        %v2398 = vadd.f32 0.0, %v2397
        %v2399 = vpop.f32.mrb[0].mxu0
        %2400 = vdwg.mxu0
        %v2401 = vadd.f32 %v2065, %v2393
        %v2402 = vadd.f32 %v2066, %v2398
        %2403 = vmatprep.subr.mxu0 0.0
        %2404 = vmatpush1.msra.mxu0 %v1886
        %2405 = vmatprep.subr.mxu0 0.0
        %2406 = vmatpush1.msra.mxu0 %v1888
        %2407 = vmatprep.subr.mxu0 0.0
        %2408 = vmatpush1.msra.mxu0 %v1890
        %2409 = vmatprep.subr.mxu0 0.0
        %2410 = vmatpush1.msra.mxu0 %v1892
        %2411 = vmatprep.subr.mxu0 0.0
        %2412 = vmatpush1.msra.mxu0 %v1894
        %2413 = vmatprep.subr.mxu0 0.0
        %2414 = vmatpush1.msra.mxu0 %v1902
        %2415 = vmatprep.subr.mxu0 0.0
        %2416 = vmatpush1.msra.mxu0 0.0
        %2417 = vmatprep.subr.mxu0 0.0
        %2418 = vmatpush1.msra.mxu0 0.0
        %2419 = vmatprep.subr.mxu0 0.0
        %2420 = vmatpush1.msra.mxu0 0.0
        %2421 = vmatprep.subr.mxu0 0.0
        %2422 = vmatpush1.msra.mxu0 0.0
        %2423 = vmatprep.subr.mxu0 0.0
        %2424 = vmatpush1.msra.mxu0 0.0
        %2425 = vmatprep.subr.mxu0 0.0
        %2426 = vmatpush1.msra.mxu0 0.0
        %2427 = vmatprep.subr.mxu0 0.0
        %2428 = vmatpush1.msra.mxu0 0.0
        %2429 = vmatprep.subr.mxu0 0.0
        %2430 = vmatpush1.msra.mxu0 0.0
        %2431 = vmatprep.subr.mxu0 0.0
        %2432 = vmatpush1.msra.mxu0 0.0
        %2433 = vmatprep.subr.mxu0 0.0
        %2434 = vmatpush1.msra.mxu0 0.0
        %2435 = vmatprep.subr.mxu0 0.0
        %2436 = vmatpush1.msra.mxu0 0.0
        %2437 = vmatprep.subr.mxu0 0.0
        %2438 = vmatpush1.msra.mxu0 0.0
        %2439 = vmatprep.subr.mxu0 0.0
        %2440 = vmatpush1.msra.mxu0 0.0
        %2441 = vmatprep.subr.mxu0 0.0
        %2442 = vmatpush1.msra.mxu0 0.0
        %2443 = vmatprep.subr.mxu0 0.0
        %2444 = vmatpush1.msra.mxu0 0.0
        %2445 = vmatprep.subr.mxu0 0.0
        %2446 = vmatpush1.msra.mxu0 0.0
        %2447 = vmatprep.subr.mxu0 0.0
        %2448 = vmatpush1.msra.mxu0 0.0
        %2449 = vmatprep.subr.mxu0 0.0
        %2450 = vmatpush1.msra.mxu0 0.0
        %2451 = vmatprep.subr.mxu0 0.0
        %2452 = vmatpush1.msra.mxu0 0.0
        %2453 = vmatprep.subr.mxu0 0.0
        %2454 = vmatpush1.msra.mxu0 0.0
        %2455 = vmatprep.subr.mxu0 0.0
        %2456 = vmatpush1.msra.mxu0 0.0
        %2457 = vmatprep.subr.mxu0 0.0
        %2458 = vmatpush1.msra.mxu0 0.0
        %2459 = vmatprep.subr.mxu0 0.0
        %2460 = vmatpush1.msra.mxu0 0.0
        %2461 = vmatprep.subr.mxu0 0.0
        %2462 = vmatpush1.msra.mxu0 0.0
        %2463 = vmatprep.subr.mxu0 0.0
        %2464 = vmatpush1.msra.mxu0 0.0
        %2465 = vmatprep.subr.mxu0 0.0
        %2466 = vmatpush1.msra.mxu0 0.0
        %2467 = vmatprep.mubr.f32.mxu0 0.0
        %2468 = vmatmul.mubr.f32.gmra.mrb[0].mxu0 %v2321
        %v2469 = vpop.f32.mrb[0].mxu0
        %v2470 = vadd.f32 0.0, %v2469
        %v2471 = vpop.f32.mrb[0].mxu0
        %2472 = vmatprep.mubr.f32.mxu0 0.0
        %2473 = vmatmul.mubr.f32.gmra.mrb[0].mxu0 %v2324
        %v2474 = vpop.f32.mrb[0].mxu0
        %v2475 = vadd.f32 0.0, %v2474
        %v2476 = vpop.f32.mrb[0].mxu0
        %2477 = vdwg.mxu0
        %v2478 = vadd.f32 %v2142, %v2470
        %v2479 = vadd.f32 %v2143, %v2475
        %2480 = vmatprep.subr.mxu0 0.0
        %2481 = vmatpush1.msra.mxu0 %v2222
        %2482 = vmatprep.subr.mxu0 0.0
        %2483 = vmatpush1.msra.mxu0 %v2224
        %2484 = vmatprep.subr.mxu0 0.0
        %2485 = vmatpush1.msra.mxu0 %v2226
        %2486 = vmatprep.subr.mxu0 0.0
        %2487 = vmatpush1.msra.mxu0 %v2228
        %2488 = vmatprep.subr.mxu0 0.0
        %2489 = vmatpush1.msra.mxu0 %v2230
        %2490 = vmatprep.subr.mxu0 0.0
        %2491 = vmatpush1.msra.mxu0 %v2238
        %2492 = vmatprep.subr.mxu0 0.0
        %2493 = vmatpush1.msra.mxu0 0.0
        %2494 = vmatprep.subr.mxu0 0.0
        %2495 = vmatpush1.msra.mxu0 0.0
        %2496 = vmatprep.subr.mxu0 0.0
        %2497 = vmatpush1.msra.mxu0 0.0
        %2498 = vmatprep.subr.mxu0 0.0
        %2499 = vmatpush1.msra.mxu0 0.0
        %2500 = vmatprep.subr.mxu0 0.0
        %2501 = vmatpush1.msra.mxu0 0.0
        %2502 = vmatprep.subr.mxu0 0.0
        %2503 = vmatpush1.msra.mxu0 0.0
        %2504 = vmatprep.subr.mxu0 0.0
        %2505 = vmatpush1.msra.mxu0 0.0
        %2506 = vmatprep.subr.mxu0 0.0
        %2507 = vmatpush1.msra.mxu0 0.0
        %2508 = vmatprep.subr.mxu0 0.0
        %2509 = vmatpush1.msra.mxu0 0.0
        %2510 = vmatprep.subr.mxu0 0.0
        %2511 = vmatpush1.msra.mxu0 0.0
        %2512 = vmatprep.subr.mxu0 0.0
        %2513 = vmatpush1.msra.mxu0 0.0
        %2514 = vmatprep.subr.mxu0 0.0
        %2515 = vmatpush1.msra.mxu0 0.0
        %2516 = vmatprep.subr.mxu0 0.0
        %2517 = vmatpush1.msra.mxu0 0.0
        %2518 = vmatprep.subr.mxu0 0.0
        %2519 = vmatpush1.msra.mxu0 0.0
        %2520 = vmatprep.subr.mxu0 0.0
        %2521 = vmatpush1.msra.mxu0 0.0
        %2522 = vmatprep.subr.mxu0 0.0
        %2523 = vmatpush1.msra.mxu0 0.0
        %2524 = vmatprep.subr.mxu0 0.0
        %2525 = vmatpush1.msra.mxu0 0.0
        %2526 = vmatprep.subr.mxu0 0.0
        %2527 = vmatpush1.msra.mxu0 0.0
        %2528 = vmatprep.subr.mxu0 0.0
        %2529 = vmatpush1.msra.mxu0 0.0
        %2530 = vmatprep.subr.mxu0 0.0
        %2531 = vmatpush1.msra.mxu0 0.0
        %2532 = vmatprep.subr.mxu0 0.0
        %2533 = vmatpush1.msra.mxu0 0.0
        %2534 = vmatprep.subr.mxu0 0.0
        %2535 = vmatpush1.msra.mxu0 0.0
        %2536 = vmatprep.subr.mxu0 0.0
        %2537 = vmatpush1.msra.mxu0 0.0
        %2538 = vmatprep.subr.mxu0 0.0
        %2539 = vmatpush1.msra.mxu0 0.0
        %2540 = vmatprep.subr.mxu0 0.0
        %2541 = vmatpush1.msra.mxu0 0.0
        %2542 = vmatprep.subr.mxu0 0.0
        %2543 = vmatpush1.msra.mxu0 0.0
        %2544 = vmatprep.mubr.f32.mxu0 0.0
        %2545 = vmatmul.mubr.f32.gmra.mrb[0].mxu0 %v2321
        %v2546 = vpop.f32.mrb[0].mxu0
        %v2547 = vadd.f32 0.0, %v2546
        %v2548 = vpop.f32.mrb[0].mxu0
        %2549 = vmatprep.mubr.f32.mxu0 0.0
        %2550 = vmatmul.mubr.f32.gmra.mrb[0].mxu0 %v2324
        %v2551 = vpop.f32.mrb[0].mxu0
        %v2552 = vadd.f32 0.0, %v2551
        %v2553 = vpop.f32.mrb[0].mxu0
        %2554 = vdwg.mxu0
        %v2555 = vadd.f32 %v2219, %v2547
        %v2556 = vadd.f32 %v2220, %v2552
        %2557 = vrot.lane.b32.xlu0 %v285, 126
        %v2558 = vpop.permute.xlu0 %2557
        %2559 = vrot.lane.b32.xlu0 %v286, 126
        %v2560 = vpop.permute.xlu0 %2559
        %2561 = vrot.lane.b32.xlu0 %v287, 126
        %v2562 = vpop.permute.xlu0 %2561
        %2563 = vrot.lane.b32.xlu0 %v288, 126
        %v2564 = vpop.permute.xlu0 %2563
        %2565 = vrot.lane.b32.xlu0 %v289, 126
        %v2566 = vpop.permute.xlu0 %2565
        %2567 = vrot.lane.b32.xlu0 %v290, 126
        %v2568 = vpop.permute.xlu0 %2567
        %v2574 = vsel %vm315, %v2568, 0
        %2576 = vmatprep.subr.mxu0 0.0
        %2577 = vmatpush1.msra.mxu0 %v2558
        %2578 = vmatprep.subr.mxu0 0.0
        %2579 = vmatpush1.msra.mxu0 %v2560
        %2580 = vmatprep.subr.mxu0 0.0
        %2581 = vmatpush1.msra.mxu0 %v2562
        %2582 = vmatprep.subr.mxu0 0.0
        %2583 = vmatpush1.msra.mxu0 %v2564
        %2584 = vmatprep.subr.mxu0 0.0
        %2585 = vmatpush1.msra.mxu0 %v2566
        %2586 = vmatprep.subr.mxu0 0.0
        %2587 = vmatpush1.msra.mxu0 %v2574
        %2588 = vmatprep.subr.mxu0 0.0
        %2589 = vmatpush1.msra.mxu0 0.0
        %2590 = vmatprep.subr.mxu0 0.0
        %2591 = vmatpush1.msra.mxu0 0.0
        %2592 = vmatprep.subr.mxu0 0.0
        %2593 = vmatpush1.msra.mxu0 0.0
        %2594 = vmatprep.subr.mxu0 0.0
        %2595 = vmatpush1.msra.mxu0 0.0
        %2596 = vmatprep.subr.mxu0 0.0
        %2597 = vmatpush1.msra.mxu0 0.0
        %2598 = vmatprep.subr.mxu0 0.0
        %2599 = vmatpush1.msra.mxu0 0.0
        %2600 = vmatprep.subr.mxu0 0.0
        %2601 = vmatpush1.msra.mxu0 0.0
        %2602 = vmatprep.subr.mxu0 0.0
        %2603 = vmatpush1.msra.mxu0 0.0
        %2604 = vmatprep.subr.mxu0 0.0
        %2605 = vmatpush1.msra.mxu0 0.0
        %2606 = vmatprep.subr.mxu0 0.0
        %2607 = vmatpush1.msra.mxu0 0.0
        %2608 = vmatprep.subr.mxu0 0.0
        %2609 = vmatpush1.msra.mxu0 0.0
        %2610 = vmatprep.subr.mxu0 0.0
        %2611 = vmatpush1.msra.mxu0 0.0
        %2612 = vmatprep.subr.mxu0 0.0
        %2613 = vmatpush1.msra.mxu0 0.0
        %2614 = vmatprep.subr.mxu0 0.0
        %2615 = vmatpush1.msra.mxu0 0.0
        %2616 = vmatprep.subr.mxu0 0.0
        %2617 = vmatpush1.msra.mxu0 0.0
        %2618 = vmatprep.subr.mxu0 0.0
        %2619 = vmatpush1.msra.mxu0 0.0
        %2620 = vmatprep.subr.mxu0 0.0
        %2621 = vmatpush1.msra.mxu0 0.0
        %2622 = vmatprep.subr.mxu0 0.0
        %2623 = vmatpush1.msra.mxu0 0.0
        %2624 = vmatprep.subr.mxu0 0.0
        %2625 = vmatpush1.msra.mxu0 0.0
        %2626 = vmatprep.subr.mxu0 0.0
        %2627 = vmatpush1.msra.mxu0 0.0
        %2628 = vmatprep.subr.mxu0 0.0
        %2629 = vmatpush1.msra.mxu0 0.0
        %2630 = vmatprep.subr.mxu0 0.0
        %2631 = vmatpush1.msra.mxu0 0.0
        %2632 = vmatprep.subr.mxu0 0.0
        %2633 = vmatpush1.msra.mxu0 0.0
        %2634 = vmatprep.subr.mxu0 0.0
        %2635 = vmatpush1.msra.mxu0 0.0
        %2636 = vmatprep.subr.mxu0 0.0
        %2637 = vmatpush1.msra.mxu0 0.0
        %2638 = vmatprep.subr.mxu0 0.0
        %2639 = vmatpush1.msra.mxu0 0.0
        %2640 = vmatprep.mubr.f32.mxu0 0.0
        %2641 = vmatmul.mubr.f32.gmra.mrb[0].mxu0 %v2321
        %v2642 = vpop.f32.mrb[0].mxu0
        %v2643 = vadd.f32 0.0, %v2642
        %v2644 = vpop.f32.mrb[0].mxu0
        %2645 = vmatprep.mubr.f32.mxu0 0.0
        %2646 = vmatmul.mubr.f32.gmra.mrb[0].mxu0 %v2324
        %v2647 = vpop.f32.mrb[0].mxu0
        %v2648 = vadd.f32 0.0, %v2647
        %v2649 = vpop.f32.mrb[0].mxu0
        %2650 = vdwg.mxu0
        %v2651 = vadd.f32 %v2315, %v2643
        %v2652 = vadd.f32 %v2316, %v2648
        %s2653 = scalar_lea.vmem %s1, 112
        %v2654 = vld [vmem:[%s2653] sm:$0xff]
        %v2655 = vld [vmem:[%s2653 + $0x8] sm:$0xff]
        %v2657 = vsel %vm308, %v2654, 0
        %v2660 = vsel %vm308, %v2655, 0
        %2662 = vmatprep.subr.mxu0 0.0
        %2663 = vmatpush1.msra.mxu0 %v1886
        %2664 = vmatprep.subr.mxu0 0.0
        %2665 = vmatpush1.msra.mxu0 %v1888
        %2666 = vmatprep.subr.mxu0 0.0
        %2667 = vmatpush1.msra.mxu0 %v1890
        %2668 = vmatprep.subr.mxu0 0.0
        %2669 = vmatpush1.msra.mxu0 %v1892
        %2670 = vmatprep.subr.mxu0 0.0
        %2671 = vmatpush1.msra.mxu0 %v1894
        %2672 = vmatprep.subr.mxu0 0.0
        %2673 = vmatpush1.msra.mxu0 %v1902
        %2674 = vmatprep.subr.mxu0 0.0
        %2675 = vmatpush1.msra.mxu0 0.0
        %2676 = vmatprep.subr.mxu0 0.0
        %2677 = vmatpush1.msra.mxu0 0.0
        %2678 = vmatprep.subr.mxu0 0.0
        %2679 = vmatpush1.msra.mxu0 0.0
        %2680 = vmatprep.subr.mxu0 0.0
        %2681 = vmatpush1.msra.mxu0 0.0
        %2682 = vmatprep.subr.mxu0 0.0
        %2683 = vmatpush1.msra.mxu0 0.0
        %2684 = vmatprep.subr.mxu0 0.0
        %2685 = vmatpush1.msra.mxu0 0.0
        %2686 = vmatprep.subr.mxu0 0.0
        %2687 = vmatpush1.msra.mxu0 0.0
        %2688 = vmatprep.subr.mxu0 0.0
        %2689 = vmatpush1.msra.mxu0 0.0
        %2690 = vmatprep.subr.mxu0 0.0
        %2691 = vmatpush1.msra.mxu0 0.0
        %2692 = vmatprep.subr.mxu0 0.0
        %2693 = vmatpush1.msra.mxu0 0.0
        %2694 = vmatprep.subr.mxu0 0.0
        %2695 = vmatpush1.msra.mxu0 0.0
        %2696 = vmatprep.subr.mxu0 0.0
        %2697 = vmatpush1.msra.mxu0 0.0
        %2698 = vmatprep.subr.mxu0 0.0
        %2699 = vmatpush1.msra.mxu0 0.0
        %2700 = vmatprep.subr.mxu0 0.0
        %2701 = vmatpush1.msra.mxu0 0.0
        %2702 = vmatprep.subr.mxu0 0.0
        %2703 = vmatpush1.msra.mxu0 0.0
        %2704 = vmatprep.subr.mxu0 0.0
        %2705 = vmatpush1.msra.mxu0 0.0
        %2706 = vmatprep.subr.mxu0 0.0
        %2707 = vmatpush1.msra.mxu0 0.0
        %2708 = vmatprep.subr.mxu0 0.0
        %2709 = vmatpush1.msra.mxu0 0.0
        %2710 = vmatprep.subr.mxu0 0.0
        %2711 = vmatpush1.msra.mxu0 0.0
        %2712 = vmatprep.subr.mxu0 0.0
        %2713 = vmatpush1.msra.mxu0 0.0
        %2714 = vmatprep.subr.mxu0 0.0
        %2715 = vmatpush1.msra.mxu0 0.0
        %2716 = vmatprep.subr.mxu0 0.0
        %2717 = vmatpush1.msra.mxu0 0.0
        %2718 = vmatprep.subr.mxu0 0.0
        %2719 = vmatpush1.msra.mxu0 0.0
        %2720 = vmatprep.subr.mxu0 0.0
        %2721 = vmatpush1.msra.mxu0 0.0
        %2722 = vmatprep.subr.mxu0 0.0
        %2723 = vmatpush1.msra.mxu0 0.0
        %2724 = vmatprep.subr.mxu0 0.0
        %2725 = vmatpush1.msra.mxu0 0.0
        %2726 = vmatprep.mubr.f32.mxu0 0.0
        %2727 = vmatmul.mubr.f32.gmra.mrb[0].mxu0 %v2657
        %v2728 = vpop.f32.mrb[0].mxu0
        %v2729 = vadd.f32 0.0, %v2728
        %v2730 = vpop.f32.mrb[0].mxu0
        %2731 = vmatprep.mubr.f32.mxu0 0.0
        %2732 = vmatmul.mubr.f32.gmra.mrb[0].mxu0 %v2660
        %v2733 = vpop.f32.mrb[0].mxu0
        %v2734 = vadd.f32 0.0, %v2733
        %v2735 = vpop.f32.mrb[0].mxu0
        %2736 = vdwg.mxu0
        %v2737 = vadd.f32 %v2401, %v2729
        %v2738 = vadd.f32 %v2402, %v2734
        %2739 = vmatprep.subr.mxu0 0.0
        %2740 = vmatpush1.msra.mxu0 %v2222
        %2741 = vmatprep.subr.mxu0 0.0
        %2742 = vmatpush1.msra.mxu0 %v2224
        %2743 = vmatprep.subr.mxu0 0.0
        %2744 = vmatpush1.msra.mxu0 %v2226
        %2745 = vmatprep.subr.mxu0 0.0
        %2746 = vmatpush1.msra.mxu0 %v2228
        %2747 = vmatprep.subr.mxu0 0.0
        %2748 = vmatpush1.msra.mxu0 %v2230
        %2749 = vmatprep.subr.mxu0 0.0
        %2750 = vmatpush1.msra.mxu0 %v2238
        %2751 = vmatprep.subr.mxu0 0.0
        %2752 = vmatpush1.msra.mxu0 0.0
        %2753 = vmatprep.subr.mxu0 0.0
        %2754 = vmatpush1.msra.mxu0 0.0
        %2755 = vmatprep.subr.mxu0 0.0
        %2756 = vmatpush1.msra.mxu0 0.0
        %2757 = vmatprep.subr.mxu0 0.0
        %2758 = vmatpush1.msra.mxu0 0.0
        %2759 = vmatprep.subr.mxu0 0.0
        %2760 = vmatpush1.msra.mxu0 0.0
        %2761 = vmatprep.subr.mxu0 0.0
        %2762 = vmatpush1.msra.mxu0 0.0
        %2763 = vmatprep.subr.mxu0 0.0
        %2764 = vmatpush1.msra.mxu0 0.0
        %2765 = vmatprep.subr.mxu0 0.0
        %2766 = vmatpush1.msra.mxu0 0.0
        %2767 = vmatprep.subr.mxu0 0.0
        %2768 = vmatpush1.msra.mxu0 0.0
        %2769 = vmatprep.subr.mxu0 0.0
        %2770 = vmatpush1.msra.mxu0 0.0
        %2771 = vmatprep.subr.mxu0 0.0
        %2772 = vmatpush1.msra.mxu0 0.0
        %2773 = vmatprep.subr.mxu0 0.0
        %2774 = vmatpush1.msra.mxu0 0.0
        %2775 = vmatprep.subr.mxu0 0.0
        %2776 = vmatpush1.msra.mxu0 0.0
        %2777 = vmatprep.subr.mxu0 0.0
        %2778 = vmatpush1.msra.mxu0 0.0
        %2779 = vmatprep.subr.mxu0 0.0
        %2780 = vmatpush1.msra.mxu0 0.0
        %2781 = vmatprep.subr.mxu0 0.0
        %2782 = vmatpush1.msra.mxu0 0.0
        %2783 = vmatprep.subr.mxu0 0.0
        %2784 = vmatpush1.msra.mxu0 0.0
        %2785 = vmatprep.subr.mxu0 0.0
        %2786 = vmatpush1.msra.mxu0 0.0
        %2787 = vmatprep.subr.mxu0 0.0
        %2788 = vmatpush1.msra.mxu0 0.0
        %2789 = vmatprep.subr.mxu0 0.0
        %2790 = vmatpush1.msra.mxu0 0.0
        %2791 = vmatprep.subr.mxu0 0.0
        %2792 = vmatpush1.msra.mxu0 0.0
        %2793 = vmatprep.subr.mxu0 0.0
        %2794 = vmatpush1.msra.mxu0 0.0
        %2795 = vmatprep.subr.mxu0 0.0
        %2796 = vmatpush1.msra.mxu0 0.0
        %2797 = vmatprep.subr.mxu0 0.0
        %2798 = vmatpush1.msra.mxu0 0.0
        %2799 = vmatprep.subr.mxu0 0.0
        %2800 = vmatpush1.msra.mxu0 0.0
        %2801 = vmatprep.subr.mxu0 0.0
        %2802 = vmatpush1.msra.mxu0 0.0
        %2803 = vmatprep.mubr.f32.mxu0 0.0
        %2804 = vmatmul.mubr.f32.gmra.mrb[0].mxu0 %v2657
        %v2805 = vpop.f32.mrb[0].mxu0
        %v2806 = vadd.f32 0.0, %v2805
        %v2807 = vpop.f32.mrb[0].mxu0
        %2808 = vmatprep.mubr.f32.mxu0 0.0
        %2809 = vmatmul.mubr.f32.gmra.mrb[0].mxu0 %v2660
        %v2810 = vpop.f32.mrb[0].mxu0
        %v2811 = vadd.f32 0.0, %v2810
        %v2812 = vpop.f32.mrb[0].mxu0
        %2813 = vdwg.mxu0
        %v2814 = vadd.f32 %v2478, %v2806
        %v2815 = vadd.f32 %v2479, %v2811
        %2816 = vmatprep.subr.mxu0 0.0
        %2817 = vmatpush1.msra.mxu0 %v2558
        %2818 = vmatprep.subr.mxu0 0.0
        %2819 = vmatpush1.msra.mxu0 %v2560
        %2820 = vmatprep.subr.mxu0 0.0
        %2821 = vmatpush1.msra.mxu0 %v2562
        %2822 = vmatprep.subr.mxu0 0.0
        %2823 = vmatpush1.msra.mxu0 %v2564
        %2824 = vmatprep.subr.mxu0 0.0
        %2825 = vmatpush1.msra.mxu0 %v2566
        %2826 = vmatprep.subr.mxu0 0.0
        %2827 = vmatpush1.msra.mxu0 %v2574
        %2828 = vmatprep.subr.mxu0 0.0
        %2829 = vmatpush1.msra.mxu0 0.0
        %2830 = vmatprep.subr.mxu0 0.0
        %2831 = vmatpush1.msra.mxu0 0.0
        %2832 = vmatprep.subr.mxu0 0.0
        %2833 = vmatpush1.msra.mxu0 0.0
        %2834 = vmatprep.subr.mxu0 0.0
        %2835 = vmatpush1.msra.mxu0 0.0
        %2836 = vmatprep.subr.mxu0 0.0
        %2837 = vmatpush1.msra.mxu0 0.0
        %2838 = vmatprep.subr.mxu0 0.0
        %2839 = vmatpush1.msra.mxu0 0.0
        %2840 = vmatprep.subr.mxu0 0.0
        %2841 = vmatpush1.msra.mxu0 0.0
        %2842 = vmatprep.subr.mxu0 0.0
        %2843 = vmatpush1.msra.mxu0 0.0
        %2844 = vmatprep.subr.mxu0 0.0
        %2845 = vmatpush1.msra.mxu0 0.0
        %2846 = vmatprep.subr.mxu0 0.0
        %2847 = vmatpush1.msra.mxu0 0.0
        %2848 = vmatprep.subr.mxu0 0.0
        %2849 = vmatpush1.msra.mxu0 0.0
        %2850 = vmatprep.subr.mxu0 0.0
        %2851 = vmatpush1.msra.mxu0 0.0
        %2852 = vmatprep.subr.mxu0 0.0
        %2853 = vmatpush1.msra.mxu0 0.0
        %2854 = vmatprep.subr.mxu0 0.0
        %2855 = vmatpush1.msra.mxu0 0.0
        %2856 = vmatprep.subr.mxu0 0.0
        %2857 = vmatpush1.msra.mxu0 0.0
        %2858 = vmatprep.subr.mxu0 0.0
        %2859 = vmatpush1.msra.mxu0 0.0
        %2860 = vmatprep.subr.mxu0 0.0
        %2861 = vmatpush1.msra.mxu0 0.0
        %2862 = vmatprep.subr.mxu0 0.0
        %2863 = vmatpush1.msra.mxu0 0.0
        %2864 = vmatprep.subr.mxu0 0.0
        %2865 = vmatpush1.msra.mxu0 0.0
        %2866 = vmatprep.subr.mxu0 0.0
        %2867 = vmatpush1.msra.mxu0 0.0
        %2868 = vmatprep.subr.mxu0 0.0
        %2869 = vmatpush1.msra.mxu0 0.0
        %2870 = vmatprep.subr.mxu0 0.0
        %2871 = vmatpush1.msra.mxu0 0.0
        %2872 = vmatprep.subr.mxu0 0.0
        %2873 = vmatpush1.msra.mxu0 0.0
        %2874 = vmatprep.subr.mxu0 0.0
        %2875 = vmatpush1.msra.mxu0 0.0
        %2876 = vmatprep.subr.mxu0 0.0
        %2877 = vmatpush1.msra.mxu0 0.0
        %2878 = vmatprep.subr.mxu0 0.0
        %2879 = vmatpush1.msra.mxu0 0.0
        %2880 = vmatprep.mubr.f32.mxu0 0.0
        %2881 = vmatmul.mubr.f32.gmra.mrb[0].mxu0 %v2657
        %v2882 = vpop.f32.mrb[0].mxu0
        %v2883 = vadd.f32 0.0, %v2882
        %v2884 = vpop.f32.mrb[0].mxu0
        %2885 = vmatprep.mubr.f32.mxu0 0.0
        %2886 = vmatmul.mubr.f32.gmra.mrb[0].mxu0 %v2660
        %v2887 = vpop.f32.mrb[0].mxu0
        %v2888 = vadd.f32 0.0, %v2887
        %v2889 = vpop.f32.mrb[0].mxu0
        %2890 = vdwg.mxu0
        %v2891 = vadd.f32 %v2555, %v2883
        %v2892 = vadd.f32 %v2556, %v2888
        %2893 = vrot.lane.b32.xlu0 %v292, 126
        %v2894 = vpop.permute.xlu0 %2893
        %2895 = vrot.lane.b32.xlu0 %v293, 126
        %v2896 = vpop.permute.xlu0 %2895
        %2897 = vrot.lane.b32.xlu0 %v294, 126
        %v2898 = vpop.permute.xlu0 %2897
        %2899 = vrot.lane.b32.xlu0 %v295, 126
        %v2900 = vpop.permute.xlu0 %2899
        %2901 = vrot.lane.b32.xlu0 %v296, 126
        %v2902 = vpop.permute.xlu0 %2901
        %2903 = vrot.lane.b32.xlu0 %v297, 126
        %v2904 = vpop.permute.xlu0 %2903
        %v2910 = vsel %vm315, %v2904, 0
        %2912 = vmatprep.subr.mxu0 0.0
        %2913 = vmatpush1.msra.mxu0 %v2894
        %2914 = vmatprep.subr.mxu0 0.0
        %2915 = vmatpush1.msra.mxu0 %v2896
        %2916 = vmatprep.subr.mxu0 0.0
        %2917 = vmatpush1.msra.mxu0 %v2898
        %2918 = vmatprep.subr.mxu0 0.0
        %2919 = vmatpush1.msra.mxu0 %v2900
        %2920 = vmatprep.subr.mxu0 0.0
        %2921 = vmatpush1.msra.mxu0 %v2902
        %2922 = vmatprep.subr.mxu0 0.0
        %2923 = vmatpush1.msra.mxu0 %v2910
        %2924 = vmatprep.subr.mxu0 0.0
        %2925 = vmatpush1.msra.mxu0 0.0
        %2926 = vmatprep.subr.mxu0 0.0
        %2927 = vmatpush1.msra.mxu0 0.0
        %2928 = vmatprep.subr.mxu0 0.0
        %2929 = vmatpush1.msra.mxu0 0.0
        %2930 = vmatprep.subr.mxu0 0.0
        %2931 = vmatpush1.msra.mxu0 0.0
        %2932 = vmatprep.subr.mxu0 0.0
        %2933 = vmatpush1.msra.mxu0 0.0
        %2934 = vmatprep.subr.mxu0 0.0
        %2935 = vmatpush1.msra.mxu0 0.0
        %2936 = vmatprep.subr.mxu0 0.0
        %2937 = vmatpush1.msra.mxu0 0.0
        %2938 = vmatprep.subr.mxu0 0.0
        %2939 = vmatpush1.msra.mxu0 0.0
        %2940 = vmatprep.subr.mxu0 0.0
        %2941 = vmatpush1.msra.mxu0 0.0
        %2942 = vmatprep.subr.mxu0 0.0
        %2943 = vmatpush1.msra.mxu0 0.0
        %2944 = vmatprep.subr.mxu0 0.0
        %2945 = vmatpush1.msra.mxu0 0.0
        %2946 = vmatprep.subr.mxu0 0.0
        %2947 = vmatpush1.msra.mxu0 0.0
        %2948 = vmatprep.subr.mxu0 0.0
        %2949 = vmatpush1.msra.mxu0 0.0
        %2950 = vmatprep.subr.mxu0 0.0
        %2951 = vmatpush1.msra.mxu0 0.0
        %2952 = vmatprep.subr.mxu0 0.0
        %2953 = vmatpush1.msra.mxu0 0.0
        %2954 = vmatprep.subr.mxu0 0.0
        %2955 = vmatpush1.msra.mxu0 0.0
        %2956 = vmatprep.subr.mxu0 0.0
        %2957 = vmatpush1.msra.mxu0 0.0
        %2958 = vmatprep.subr.mxu0 0.0
        %2959 = vmatpush1.msra.mxu0 0.0
        %2960 = vmatprep.subr.mxu0 0.0
        %2961 = vmatpush1.msra.mxu0 0.0
        %2962 = vmatprep.subr.mxu0 0.0
        %2963 = vmatpush1.msra.mxu0 0.0
        %2964 = vmatprep.subr.mxu0 0.0
        %2965 = vmatpush1.msra.mxu0 0.0
        %2966 = vmatprep.subr.mxu0 0.0
        %2967 = vmatpush1.msra.mxu0 0.0
        %2968 = vmatprep.subr.mxu0 0.0
        %2969 = vmatpush1.msra.mxu0 0.0
        %2970 = vmatprep.subr.mxu0 0.0
        %2971 = vmatpush1.msra.mxu0 0.0
        %2972 = vmatprep.subr.mxu0 0.0
        %2973 = vmatpush1.msra.mxu0 0.0
        %2974 = vmatprep.subr.mxu0 0.0
        %2975 = vmatpush1.msra.mxu0 0.0
        %2976 = vmatprep.mubr.f32.mxu0 0.0
        %2977 = vmatmul.mubr.f32.gmra.mrb[0].mxu0 %v2657
        %v2978 = vpop.f32.mrb[0].mxu0
        %v2979 = vadd.f32 0.0, %v2978
        %v2980 = vpop.f32.mrb[0].mxu0
        %2981 = vmatprep.mubr.f32.mxu0 0.0
        %2982 = vmatmul.mubr.f32.gmra.mrb[0].mxu0 %v2660
        %v2983 = vpop.f32.mrb[0].mxu0
        %v2984 = vadd.f32 0.0, %v2983
        %v2985 = vpop.f32.mrb[0].mxu0
        %2986 = vdwg.mxu0
        %v2987 = vadd.f32 %v2651, %v2979
        %v2988 = vadd.f32 %v2652, %v2984
        %s2989 = scalar_lea.vmem %s1, 128
        %v2990 = vld [vmem:[%s2989] sm:$0xff]
        %v2991 = vld [vmem:[%s2989 + $0x8] sm:$0xff]
        %v2993 = vsel %vm308, %v2990, 0
        %v2996 = vsel %vm308, %v2991, 0
        %2998 = vmatprep.subr.mxu0 0.0
        %2999 = vmatpush1.msra.mxu0 %v2222
        %3000 = vmatprep.subr.mxu0 0.0
        %3001 = vmatpush1.msra.mxu0 %v2224
        %3002 = vmatprep.subr.mxu0 0.0
        %3003 = vmatpush1.msra.mxu0 %v2226
        %3004 = vmatprep.subr.mxu0 0.0
        %3005 = vmatpush1.msra.mxu0 %v2228
        %3006 = vmatprep.subr.mxu0 0.0
        %3007 = vmatpush1.msra.mxu0 %v2230
        %3008 = vmatprep.subr.mxu0 0.0
        %3009 = vmatpush1.msra.mxu0 %v2238
        %3010 = vmatprep.subr.mxu0 0.0
        %3011 = vmatpush1.msra.mxu0 0.0
        %3012 = vmatprep.subr.mxu0 0.0
        %3013 = vmatpush1.msra.mxu0 0.0
        %3014 = vmatprep.subr.mxu0 0.0
        %3015 = vmatpush1.msra.mxu0 0.0
        %3016 = vmatprep.subr.mxu0 0.0
        %3017 = vmatpush1.msra.mxu0 0.0
        %3018 = vmatprep.subr.mxu0 0.0
        %3019 = vmatpush1.msra.mxu0 0.0
        %3020 = vmatprep.subr.mxu0 0.0
        %3021 = vmatpush1.msra.mxu0 0.0
        %3022 = vmatprep.subr.mxu0 0.0
        %3023 = vmatpush1.msra.mxu0 0.0
        %3024 = vmatprep.subr.mxu0 0.0
        %3025 = vmatpush1.msra.mxu0 0.0
        %3026 = vmatprep.subr.mxu0 0.0
        %3027 = vmatpush1.msra.mxu0 0.0
        %3028 = vmatprep.subr.mxu0 0.0
        %3029 = vmatpush1.msra.mxu0 0.0
        %3030 = vmatprep.subr.mxu0 0.0
        %3031 = vmatpush1.msra.mxu0 0.0
        %3032 = vmatprep.subr.mxu0 0.0
        %3033 = vmatpush1.msra.mxu0 0.0
        %3034 = vmatprep.subr.mxu0 0.0
        %3035 = vmatpush1.msra.mxu0 0.0
        %3036 = vmatprep.subr.mxu0 0.0
        %3037 = vmatpush1.msra.mxu0 0.0
        %3038 = vmatprep.subr.mxu0 0.0
        %3039 = vmatpush1.msra.mxu0 0.0
        %3040 = vmatprep.subr.mxu0 0.0
        %3041 = vmatpush1.msra.mxu0 0.0
        %3042 = vmatprep.subr.mxu0 0.0
        %3043 = vmatpush1.msra.mxu0 0.0
        %3044 = vmatprep.subr.mxu0 0.0
        %3045 = vmatpush1.msra.mxu0 0.0
        %3046 = vmatprep.subr.mxu0 0.0
        %3047 = vmatpush1.msra.mxu0 0.0
        %3048 = vmatprep.subr.mxu0 0.0
        %3049 = vmatpush1.msra.mxu0 0.0
        %3050 = vmatprep.subr.mxu0 0.0
        %3051 = vmatpush1.msra.mxu0 0.0
        %3052 = vmatprep.subr.mxu0 0.0
        %3053 = vmatpush1.msra.mxu0 0.0
        %3054 = vmatprep.subr.mxu0 0.0
        %3055 = vmatpush1.msra.mxu0 0.0
        %3056 = vmatprep.subr.mxu0 0.0
        %3057 = vmatpush1.msra.mxu0 0.0
        %3058 = vmatprep.subr.mxu0 0.0
        %3059 = vmatpush1.msra.mxu0 0.0
        %3060 = vmatprep.subr.mxu0 0.0
        %3061 = vmatpush1.msra.mxu0 0.0
        %3062 = vmatprep.mubr.f32.mxu0 0.0
        %3063 = vmatmul.mubr.f32.gmra.mrb[0].mxu0 %v2993
        %v3064 = vpop.f32.mrb[0].mxu0
        %v3065 = vadd.f32 0.0, %v3064
        %v3066 = vpop.f32.mrb[0].mxu0
        %3067 = vmatprep.mubr.f32.mxu0 0.0
        %3068 = vmatmul.mubr.f32.gmra.mrb[0].mxu0 %v2996
        %v3069 = vpop.f32.mrb[0].mxu0
        %v3070 = vadd.f32 0.0, %v3069
        %v3071 = vpop.f32.mrb[0].mxu0
        %3072 = vdwg.mxu0
        %v3073 = vadd.f32 %v2737, %v3065
        %v3074 = vadd.f32 %v2738, %v3070
        %3075 = vmatprep.subr.mxu0 0.0
        %3076 = vmatpush1.msra.mxu0 %v2558
        %3077 = vmatprep.subr.mxu0 0.0
        %3078 = vmatpush1.msra.mxu0 %v2560
        %3079 = vmatprep.subr.mxu0 0.0
        %3080 = vmatpush1.msra.mxu0 %v2562
        %3081 = vmatprep.subr.mxu0 0.0
        %3082 = vmatpush1.msra.mxu0 %v2564
        %3083 = vmatprep.subr.mxu0 0.0
        %3084 = vmatpush1.msra.mxu0 %v2566
        %3085 = vmatprep.subr.mxu0 0.0
        %3086 = vmatpush1.msra.mxu0 %v2574
        %3087 = vmatprep.subr.mxu0 0.0
        %3088 = vmatpush1.msra.mxu0 0.0
        %3089 = vmatprep.subr.mxu0 0.0
        %3090 = vmatpush1.msra.mxu0 0.0
        %3091 = vmatprep.subr.mxu0 0.0
        %3092 = vmatpush1.msra.mxu0 0.0
        %3093 = vmatprep.subr.mxu0 0.0
        %3094 = vmatpush1.msra.mxu0 0.0
        %3095 = vmatprep.subr.mxu0 0.0
        %3096 = vmatpush1.msra.mxu0 0.0
        %3097 = vmatprep.subr.mxu0 0.0
        %3098 = vmatpush1.msra.mxu0 0.0
        %3099 = vmatprep.subr.mxu0 0.0
        %3100 = vmatpush1.msra.mxu0 0.0
        %3101 = vmatprep.subr.mxu0 0.0
        %3102 = vmatpush1.msra.mxu0 0.0
        %3103 = vmatprep.subr.mxu0 0.0
        %3104 = vmatpush1.msra.mxu0 0.0
        %3105 = vmatprep.subr.mxu0 0.0
        %3106 = vmatpush1.msra.mxu0 0.0
        %3107 = vmatprep.subr.mxu0 0.0
        %3108 = vmatpush1.msra.mxu0 0.0
        %3109 = vmatprep.subr.mxu0 0.0
        %3110 = vmatpush1.msra.mxu0 0.0
        %3111 = vmatprep.subr.mxu0 0.0
        %3112 = vmatpush1.msra.mxu0 0.0
        %3113 = vmatprep.subr.mxu0 0.0
        %3114 = vmatpush1.msra.mxu0 0.0
        %3115 = vmatprep.subr.mxu0 0.0
        %3116 = vmatpush1.msra.mxu0 0.0
        %3117 = vmatprep.subr.mxu0 0.0
        %3118 = vmatpush1.msra.mxu0 0.0
        %3119 = vmatprep.subr.mxu0 0.0
        %3120 = vmatpush1.msra.mxu0 0.0
        %3121 = vmatprep.subr.mxu0 0.0
        %3122 = vmatpush1.msra.mxu0 0.0
        %3123 = vmatprep.subr.mxu0 0.0
        %3124 = vmatpush1.msra.mxu0 0.0
        %3125 = vmatprep.subr.mxu0 0.0
        %3126 = vmatpush1.msra.mxu0 0.0
        %3127 = vmatprep.subr.mxu0 0.0
        %3128 = vmatpush1.msra.mxu0 0.0
        %3129 = vmatprep.subr.mxu0 0.0
        %3130 = vmatpush1.msra.mxu0 0.0
        %3131 = vmatprep.subr.mxu0 0.0
        %3132 = vmatpush1.msra.mxu0 0.0
        %3133 = vmatprep.subr.mxu0 0.0
        %3134 = vmatpush1.msra.mxu0 0.0
        %3135 = vmatprep.subr.mxu0 0.0
        %3136 = vmatpush1.msra.mxu0 0.0
        %3137 = vmatprep.subr.mxu0 0.0
        %3138 = vmatpush1.msra.mxu0 0.0
        %3139 = vmatprep.mubr.f32.mxu0 0.0
        %3140 = vmatmul.mubr.f32.gmra.mrb[0].mxu0 %v2993
        %v3141 = vpop.f32.mrb[0].mxu0
        %v3142 = vadd.f32 0.0, %v3141
        %v3143 = vpop.f32.mrb[0].mxu0
        %3144 = vmatprep.mubr.f32.mxu0 0.0
        %3145 = vmatmul.mubr.f32.gmra.mrb[0].mxu0 %v2996
        %v3146 = vpop.f32.mrb[0].mxu0
        %v3147 = vadd.f32 0.0, %v3146
        %v3148 = vpop.f32.mrb[0].mxu0
        %3149 = vdwg.mxu0
        %v3150 = vadd.f32 %v2814, %v3142
        %v3151 = vadd.f32 %v2815, %v3147
        %3152 = vmatprep.subr.mxu0 0.0
        %3153 = vmatpush1.msra.mxu0 %v2894
        %3154 = vmatprep.subr.mxu0 0.0
        %3155 = vmatpush1.msra.mxu0 %v2896
        %3156 = vmatprep.subr.mxu0 0.0
        %3157 = vmatpush1.msra.mxu0 %v2898
        %3158 = vmatprep.subr.mxu0 0.0
        %3159 = vmatpush1.msra.mxu0 %v2900
        %3160 = vmatprep.subr.mxu0 0.0
        %3161 = vmatpush1.msra.mxu0 %v2902
        %3162 = vmatprep.subr.mxu0 0.0
        %3163 = vmatpush1.msra.mxu0 %v2910
        %3164 = vmatprep.subr.mxu0 0.0
        %3165 = vmatpush1.msra.mxu0 0.0
        %3166 = vmatprep.subr.mxu0 0.0
        %3167 = vmatpush1.msra.mxu0 0.0
        %3168 = vmatprep.subr.mxu0 0.0
        %3169 = vmatpush1.msra.mxu0 0.0
        %3170 = vmatprep.subr.mxu0 0.0
        %3171 = vmatpush1.msra.mxu0 0.0
        %3172 = vmatprep.subr.mxu0 0.0
        %3173 = vmatpush1.msra.mxu0 0.0
        %3174 = vmatprep.subr.mxu0 0.0
        %3175 = vmatpush1.msra.mxu0 0.0
        %3176 = vmatprep.subr.mxu0 0.0
        %3177 = vmatpush1.msra.mxu0 0.0
        %3178 = vmatprep.subr.mxu0 0.0
        %3179 = vmatpush1.msra.mxu0 0.0
        %3180 = vmatprep.subr.mxu0 0.0
        %3181 = vmatpush1.msra.mxu0 0.0
        %3182 = vmatprep.subr.mxu0 0.0
        %3183 = vmatpush1.msra.mxu0 0.0
        %3184 = vmatprep.subr.mxu0 0.0
        %3185 = vmatpush1.msra.mxu0 0.0
        %3186 = vmatprep.subr.mxu0 0.0
        %3187 = vmatpush1.msra.mxu0 0.0
        %3188 = vmatprep.subr.mxu0 0.0
        %3189 = vmatpush1.msra.mxu0 0.0
        %3190 = vmatprep.subr.mxu0 0.0
        %3191 = vmatpush1.msra.mxu0 0.0
        %3192 = vmatprep.subr.mxu0 0.0
        %3193 = vmatpush1.msra.mxu0 0.0
        %3194 = vmatprep.subr.mxu0 0.0
        %3195 = vmatpush1.msra.mxu0 0.0
        %3196 = vmatprep.subr.mxu0 0.0
        %3197 = vmatpush1.msra.mxu0 0.0
        %3198 = vmatprep.subr.mxu0 0.0
        %3199 = vmatpush1.msra.mxu0 0.0
        %3200 = vmatprep.subr.mxu0 0.0
        %3201 = vmatpush1.msra.mxu0 0.0
        %3202 = vmatprep.subr.mxu0 0.0
        %3203 = vmatpush1.msra.mxu0 0.0
        %3204 = vmatprep.subr.mxu0 0.0
        %3205 = vmatpush1.msra.mxu0 0.0
        %3206 = vmatprep.subr.mxu0 0.0
        %3207 = vmatpush1.msra.mxu0 0.0
        %3208 = vmatprep.subr.mxu0 0.0
        %3209 = vmatpush1.msra.mxu0 0.0
        %3210 = vmatprep.subr.mxu0 0.0
        %3211 = vmatpush1.msra.mxu0 0.0
        %3212 = vmatprep.subr.mxu0 0.0
        %3213 = vmatpush1.msra.mxu0 0.0
        %3214 = vmatprep.subr.mxu0 0.0
        %3215 = vmatpush1.msra.mxu0 0.0
        %3216 = vmatprep.mubr.f32.mxu0 0.0
        %3217 = vmatmul.mubr.f32.gmra.mrb[0].mxu0 %v2993
        %v3218 = vpop.f32.mrb[0].mxu0
        %v3219 = vadd.f32 0.0, %v3218
        %v3220 = vpop.f32.mrb[0].mxu0
        %3221 = vmatprep.mubr.f32.mxu0 0.0
        %3222 = vmatmul.mubr.f32.gmra.mrb[0].mxu0 %v2996
        %v3223 = vpop.f32.mrb[0].mxu0
        %v3224 = vadd.f32 0.0, %v3223
        %v3225 = vpop.f32.mrb[0].mxu0
        %3226 = vdwg.mxu0
        %v3227 = vadd.f32 %v2891, %v3219
        %v3228 = vadd.f32 %v2892, %v3224
        %3229 = vrot.lane.b32.xlu0 %v299, 126
        %v3230 = vpop.permute.xlu0 %3229
        %3231 = vrot.lane.b32.xlu0 %v300, 126
        %v3232 = vpop.permute.xlu0 %3231
        %3233 = vrot.lane.b32.xlu0 %v301, 126
        %v3234 = vpop.permute.xlu0 %3233
        %3235 = vrot.lane.b32.xlu0 %v302, 126
        %v3236 = vpop.permute.xlu0 %3235
        %3237 = vrot.lane.b32.xlu0 %v303, 126
        %v3238 = vpop.permute.xlu0 %3237
        %3239 = vrot.lane.b32.xlu0 %v304, 126
        %v3240 = vpop.permute.xlu0 %3239
        %v3246 = vsel %vm315, %v3240, 0
        %3248 = vmatprep.subr.mxu0 0.0
        %3249 = vmatpush1.msra.mxu0 %v3230
        %3250 = vmatprep.subr.mxu0 0.0
        %3251 = vmatpush1.msra.mxu0 %v3232
        %3252 = vmatprep.subr.mxu0 0.0
        %3253 = vmatpush1.msra.mxu0 %v3234
        %3254 = vmatprep.subr.mxu0 0.0
        %3255 = vmatpush1.msra.mxu0 %v3236
        %3256 = vmatprep.subr.mxu0 0.0
        %3257 = vmatpush1.msra.mxu0 %v3238
        %3258 = vmatprep.subr.mxu0 0.0
        %3259 = vmatpush1.msra.mxu0 %v3246
        %3260 = vmatprep.subr.mxu0 0.0
        %3261 = vmatpush1.msra.mxu0 0.0
        %3262 = vmatprep.subr.mxu0 0.0
        %3263 = vmatpush1.msra.mxu0 0.0
        %3264 = vmatprep.subr.mxu0 0.0
        %3265 = vmatpush1.msra.mxu0 0.0
        %3266 = vmatprep.subr.mxu0 0.0
        %3267 = vmatpush1.msra.mxu0 0.0
        %3268 = vmatprep.subr.mxu0 0.0
        %3269 = vmatpush1.msra.mxu0 0.0
        %3270 = vmatprep.subr.mxu0 0.0
        %3271 = vmatpush1.msra.mxu0 0.0
        %3272 = vmatprep.subr.mxu0 0.0
        %3273 = vmatpush1.msra.mxu0 0.0
        %3274 = vmatprep.subr.mxu0 0.0
        %3275 = vmatpush1.msra.mxu0 0.0
        %3276 = vmatprep.subr.mxu0 0.0
        %3277 = vmatpush1.msra.mxu0 0.0
        %3278 = vmatprep.subr.mxu0 0.0
        %3279 = vmatpush1.msra.mxu0 0.0
        %3280 = vmatprep.subr.mxu0 0.0
        %3281 = vmatpush1.msra.mxu0 0.0
        %3282 = vmatprep.subr.mxu0 0.0
        %3283 = vmatpush1.msra.mxu0 0.0
        %3284 = vmatprep.subr.mxu0 0.0
        %3285 = vmatpush1.msra.mxu0 0.0
        %3286 = vmatprep.subr.mxu0 0.0
        %3287 = vmatpush1.msra.mxu0 0.0
        %3288 = vmatprep.subr.mxu0 0.0
        %3289 = vmatpush1.msra.mxu0 0.0
        %3290 = vmatprep.subr.mxu0 0.0
        %3291 = vmatpush1.msra.mxu0 0.0
        %3292 = vmatprep.subr.mxu0 0.0
        %3293 = vmatpush1.msra.mxu0 0.0
        %3294 = vmatprep.subr.mxu0 0.0
        %3295 = vmatpush1.msra.mxu0 0.0
        %3296 = vmatprep.subr.mxu0 0.0
        %3297 = vmatpush1.msra.mxu0 0.0
        %3298 = vmatprep.subr.mxu0 0.0
        %3299 = vmatpush1.msra.mxu0 0.0
        %3300 = vmatprep.subr.mxu0 0.0
        %3301 = vmatpush1.msra.mxu0 0.0
        %3302 = vmatprep.subr.mxu0 0.0
        %3303 = vmatpush1.msra.mxu0 0.0
        %3304 = vmatprep.subr.mxu0 0.0
        %3305 = vmatpush1.msra.mxu0 0.0
        %3306 = vmatprep.subr.mxu0 0.0
        %3307 = vmatpush1.msra.mxu0 0.0
        %3308 = vmatprep.subr.mxu0 0.0
        %3309 = vmatpush1.msra.mxu0 0.0
        %3310 = vmatprep.subr.mxu0 0.0
        %3311 = vmatpush1.msra.mxu0 0.0
        %3312 = vmatprep.mubr.f32.mxu0 0.0
        %3313 = vmatmul.mubr.f32.gmra.mrb[0].mxu0 %v2993
        %v3314 = vpop.f32.mrb[0].mxu0
        %v3315 = vadd.f32 0.0, %v3314
        %v3316 = vpop.f32.mrb[0].mxu0
        %3317 = vmatprep.mubr.f32.mxu0 0.0
        %3318 = vmatmul.mubr.f32.gmra.mrb[0].mxu0 %v2996
        %v3319 = vpop.f32.mrb[0].mxu0
        %v3320 = vadd.f32 0.0, %v3319
        %v3321 = vpop.f32.mrb[0].mxu0
        %3322 = vdwg.mxu0
        %v3323 = vadd.f32 %v2987, %v3315
        %v3324 = vadd.f32 %v2988, %v3320
        %v3325 = vld [vmem:[%s2] sm:$0xff]
        %v3326 = vld [vmem:[%s2 + $0x8] sm:$0xff]
        %v3327 = vmax.f32 %v3073, %v3150
        %v3328 = vmax.f32 %v3074, %v3151
        %3330 = vset.pattern.permute.xlu0 0
        %3331 = vperm.xlu0 %3330, %v3325
        %v3332 = vpop.permute.xlu0 %3331
        %3335 = vset.pattern.permute.xlu0 0
        %3336 = vperm.xlu0 %3335, %v3326
        %v3337 = vpop.permute.xlu0 %3336
        %v3339 = vadd.f32 %v3327, %v3332
        %v3340 = vadd.f32 %v3328, %v3337
        %v3341 = vmax.f32 %v3339, 0.0
        %v3342 = vmax.f32 %v3340, 0.0
        %v3343 = vmax.f32 %v3227, %v3323
        %v3344 = vmax.f32 %v3228, %v3324
        %v3345 = vadd.f32 %v3343, %v3332
        %v3346 = vadd.f32 %v3344, %v3337
        %v3347 = vmax.f32 %v3345, 0.0
        %v3348 = vmax.f32 %v3346, 0.0
        %v3349 = vld [vmem:[%s3] sm:$0xff]
        %v3350 = vld [vmem:[%s3 + $0x8] sm:$0xff]
        %v3351 = vld [vmem:[%s3 + $0x10] sm:$0xff]
        %v3352 = vld [vmem:[%s3 + $0x18] sm:$0xff]
        %s3353 = scalar_lea.vmem %s3, 32
        %v3354 = vld [vmem:[%s3353] sm:$0xff]
        %v3355 = vld [vmem:[%s3353 + $0x8] sm:$0xff]
        %v3356 = vld [vmem:[%s3353 + $0x10] sm:$0xff]
        %v3357 = vld [vmem:[%s3353 + $0x18] sm:$0xff]
        %vm3358 = vcmask 130048
        %v3360 = vsel %vm3358, %v3354, 0
        %v3363 = vsel %vm3358, %v3355, 0
        %v3366 = vsel %vm3358, %v3356, 0
        %v3369 = vsel %vm3358, %v3357, 0
        %3371 = vmatprep.subr.mxu0 0.0
        %3372 = vmatpush1.msra.mxu0 %v3347
        %3373 = vmatprep.subr.mxu0 0.0
        %3374 = vmatpush1.msra.mxu0 %v3348
        %3375 = vmatprep.subr.mxu0 0.0
        %3376 = vmatpush1.msra.mxu0 0.0
        %3377 = vmatprep.subr.mxu0 0.0
        %3378 = vmatpush1.msra.mxu0 0.0
        %3379 = vmatprep.subr.mxu0 0.0
        %3380 = vmatpush1.msra.mxu0 0.0
        %3381 = vmatprep.subr.mxu0 0.0
        %3382 = vmatpush1.msra.mxu0 0.0
        %3383 = vmatprep.subr.mxu0 0.0
        %3384 = vmatpush1.msra.mxu0 0.0
        %3385 = vmatprep.subr.mxu0 0.0
        %3386 = vmatpush1.msra.mxu0 0.0
        %3387 = vmatprep.subr.mxu0 0.0
        %3388 = vmatpush1.msra.mxu0 0.0
        %3389 = vmatprep.subr.mxu0 0.0
        %3390 = vmatpush1.msra.mxu0 0.0
        %3391 = vmatprep.subr.mxu0 0.0
        %3392 = vmatpush1.msra.mxu0 0.0
        %3393 = vmatprep.subr.mxu0 0.0
        %3394 = vmatpush1.msra.mxu0 0.0
        %3395 = vmatprep.subr.mxu0 0.0
        %3396 = vmatpush1.msra.mxu0 0.0
        %3397 = vmatprep.subr.mxu0 0.0
        %3398 = vmatpush1.msra.mxu0 0.0
        %3399 = vmatprep.subr.mxu0 0.0
        %3400 = vmatpush1.msra.mxu0 0.0
        %3401 = vmatprep.subr.mxu0 0.0
        %3402 = vmatpush1.msra.mxu0 0.0
        %3403 = vmatprep.subr.mxu0 0.0
        %3404 = vmatpush1.msra.mxu0 0.0
        %3405 = vmatprep.subr.mxu0 0.0
        %3406 = vmatpush1.msra.mxu0 0.0
        %3407 = vmatprep.subr.mxu0 0.0
        %3408 = vmatpush1.msra.mxu0 0.0
        %3409 = vmatprep.subr.mxu0 0.0
        %3410 = vmatpush1.msra.mxu0 0.0
        %3411 = vmatprep.subr.mxu0 0.0
        %3412 = vmatpush1.msra.mxu0 0.0
        %3413 = vmatprep.subr.mxu0 0.0
        %3414 = vmatpush1.msra.mxu0 0.0
        %3415 = vmatprep.subr.mxu0 0.0
        %3416 = vmatpush1.msra.mxu0 0.0
        %3417 = vmatprep.subr.mxu0 0.0
        %3418 = vmatpush1.msra.mxu0 0.0
        %3419 = vmatprep.subr.mxu0 0.0
        %3420 = vmatpush1.msra.mxu0 0.0
        %3421 = vmatprep.subr.mxu0 0.0
        %3422 = vmatpush1.msra.mxu0 0.0
        %3423 = vmatprep.subr.mxu0 0.0
        %3424 = vmatpush1.msra.mxu0 0.0
        %3425 = vmatprep.subr.mxu0 0.0
        %3426 = vmatpush1.msra.mxu0 0.0
        %3427 = vmatprep.subr.mxu0 0.0
        %3428 = vmatpush1.msra.mxu0 0.0
        %3429 = vmatprep.subr.mxu0 0.0
        %3430 = vmatpush1.msra.mxu0 0.0
        %3431 = vmatprep.subr.mxu0 0.0
        %3432 = vmatpush1.msra.mxu0 0.0
        %3433 = vmatprep.subr.mxu0 0.0
        %3434 = vmatpush1.msra.mxu0 0.0
        %3435 = vmatprep.mubr.f32.mxu0 0.0
        %3436 = vmatmul.mubr.f32.gmra.mrb[0].mxu0 %v3360
        %v3437 = vpop.f32.mrb[0].mxu0
        %v3438 = vadd.f32 0.0, %v3437
        %v3439 = vpop.f32.mrb[0].mxu0
        %3440 = vmatprep.mubr.f32.mxu0 0.0
        %3441 = vmatmul.mubr.f32.gmra.mrb[0].mxu0 %v3363
        %v3442 = vpop.f32.mrb[0].mxu0
        %v3443 = vadd.f32 0.0, %v3442
        %v3444 = vpop.f32.mrb[0].mxu0
        %3445 = vmatprep.mubr.f32.mxu0 0.0
        %3446 = vmatmul.mubr.f32.gmra.mrb[0].mxu0 %v3366
        %v3447 = vpop.f32.mrb[0].mxu0
        %v3448 = vadd.f32 0.0, %v3447
        %v3449 = vpop.f32.mrb[0].mxu0
        %3450 = vmatprep.mubr.f32.mxu0 0.0
        %3451 = vmatmul.mubr.f32.gmra.mrb[0].mxu0 %v3369
        %v3452 = vpop.f32.mrb[0].mxu0
        %v3453 = vadd.f32 0.0, %v3452
        %v3454 = vpop.f32.mrb[0].mxu0
        %3455 = vdwg.mxu0
        %v3457 = vsel %vm3358, %v3349, 0
        %v3460 = vsel %vm3358, %v3350, 0
        %v3463 = vsel %vm3358, %v3351, 0
        %v3466 = vsel %vm3358, %v3352, 0
        %3468 = vmatprep.subr.mxu0 0.0
        %3469 = vmatpush1.msra.mxu0 %v3341
        %3470 = vmatprep.subr.mxu0 0.0
        %3471 = vmatpush1.msra.mxu0 %v3342
        %3472 = vmatprep.subr.mxu0 0.0
        %3473 = vmatpush1.msra.mxu0 0.0
        %3474 = vmatprep.subr.mxu0 0.0
        %3475 = vmatpush1.msra.mxu0 0.0
        %3476 = vmatprep.subr.mxu0 0.0
        %3477 = vmatpush1.msra.mxu0 0.0
        %3478 = vmatprep.subr.mxu0 0.0
        %3479 = vmatpush1.msra.mxu0 0.0
        %3480 = vmatprep.subr.mxu0 0.0
        %3481 = vmatpush1.msra.mxu0 0.0
        %3482 = vmatprep.subr.mxu0 0.0
        %3483 = vmatpush1.msra.mxu0 0.0
        %3484 = vmatprep.subr.mxu0 0.0
        %3485 = vmatpush1.msra.mxu0 0.0
        %3486 = vmatprep.subr.mxu0 0.0
        %3487 = vmatpush1.msra.mxu0 0.0
        %3488 = vmatprep.subr.mxu0 0.0
        %3489 = vmatpush1.msra.mxu0 0.0
        %3490 = vmatprep.subr.mxu0 0.0
        %3491 = vmatpush1.msra.mxu0 0.0
        %3492 = vmatprep.subr.mxu0 0.0
        %3493 = vmatpush1.msra.mxu0 0.0
        %3494 = vmatprep.subr.mxu0 0.0
        %3495 = vmatpush1.msra.mxu0 0.0
        %3496 = vmatprep.subr.mxu0 0.0
        %3497 = vmatpush1.msra.mxu0 0.0
        %3498 = vmatprep.subr.mxu0 0.0
        %3499 = vmatpush1.msra.mxu0 0.0
        %3500 = vmatprep.subr.mxu0 0.0
        %3501 = vmatpush1.msra.mxu0 0.0
        %3502 = vmatprep.subr.mxu0 0.0
        %3503 = vmatpush1.msra.mxu0 0.0
        %3504 = vmatprep.subr.mxu0 0.0
        %3505 = vmatpush1.msra.mxu0 0.0
        %3506 = vmatprep.subr.mxu0 0.0
        %3507 = vmatpush1.msra.mxu0 0.0
        %3508 = vmatprep.subr.mxu0 0.0
        %3509 = vmatpush1.msra.mxu0 0.0
        %3510 = vmatprep.subr.mxu0 0.0
        %3511 = vmatpush1.msra.mxu0 0.0
        %3512 = vmatprep.subr.mxu0 0.0
        %3513 = vmatpush1.msra.mxu0 0.0
        %3514 = vmatprep.subr.mxu0 0.0
        %3515 = vmatpush1.msra.mxu0 0.0
        %3516 = vmatprep.subr.mxu0 0.0
        %3517 = vmatpush1.msra.mxu0 0.0
        %3518 = vmatprep.subr.mxu0 0.0
        %3519 = vmatpush1.msra.mxu0 0.0
        %3520 = vmatprep.subr.mxu0 0.0
        %3521 = vmatpush1.msra.mxu0 0.0
        %3522 = vmatprep.subr.mxu0 0.0
        %3523 = vmatpush1.msra.mxu0 0.0
        %3524 = vmatprep.subr.mxu0 0.0
        %3525 = vmatpush1.msra.mxu0 0.0
        %3526 = vmatprep.subr.mxu0 0.0
        %3527 = vmatpush1.msra.mxu0 0.0
        %3528 = vmatprep.subr.mxu0 0.0
        %3529 = vmatpush1.msra.mxu0 0.0
        %3530 = vmatprep.subr.mxu0 0.0
        %3531 = vmatpush1.msra.mxu0 0.0
        %3532 = vmatprep.mubr.f32.mxu0 0.0
        %3533 = vmatmul.mubr.f32.gmra.mrb[0].mxu0 %v3457
        %v3534 = vpop.f32.mrb[0].mxu0
        %v3535 = vadd.f32 %v3438, %v3534
        %v3536 = vpop.f32.mrb[0].mxu0
        %3537 = vmatprep.mubr.f32.mxu0 0.0
        %3538 = vmatmul.mubr.f32.gmra.mrb[0].mxu0 %v3460
        %v3539 = vpop.f32.mrb[0].mxu0
        %v3540 = vadd.f32 %v3443, %v3539
        %v3541 = vpop.f32.mrb[0].mxu0
        %3542 = vmatprep.mubr.f32.mxu0 0.0
        %3543 = vmatmul.mubr.f32.gmra.mrb[0].mxu0 %v3463
        %v3544 = vpop.f32.mrb[0].mxu0
        %v3545 = vadd.f32 %v3448, %v3544
        %v3546 = vpop.f32.mrb[0].mxu0
        %3547 = vmatprep.mubr.f32.mxu0 0.0
        %3548 = vmatmul.mubr.f32.gmra.mrb[0].mxu0 %v3466
        %v3549 = vpop.f32.mrb[0].mxu0
        %v3550 = vadd.f32 %v3453, %v3549
        %v3551 = vpop.f32.mrb[0].mxu0
        %3552 = vdwg.mxu0
        %3555 = vrot.lane.b32.xlu0 %v3341, 127
        %v3556 = vpop.permute.xlu0 %3555
        %3557 = vrot.lane.b32.xlu0 %v3342, 127
        %v3558 = vpop.permute.xlu0 %3557
        %3561 = vmatprep.subr.mxu0 0.0
        %3562 = vmatpush1.msra.mxu0 %v3556
        %3563 = vmatprep.subr.mxu0 0.0
        %3564 = vmatpush1.msra.mxu0 %v3558
        %3565 = vmatprep.subr.mxu0 0.0
        %3566 = vmatpush1.msra.mxu0 0.0
        %3567 = vmatprep.subr.mxu0 0.0
        %3568 = vmatpush1.msra.mxu0 0.0
        %3569 = vmatprep.subr.mxu0 0.0
        %3570 = vmatpush1.msra.mxu0 0.0
        %3571 = vmatprep.subr.mxu0 0.0
        %3572 = vmatpush1.msra.mxu0 0.0
        %3573 = vmatprep.subr.mxu0 0.0
        %3574 = vmatpush1.msra.mxu0 0.0
        %3575 = vmatprep.subr.mxu0 0.0
        %3576 = vmatpush1.msra.mxu0 0.0
        %3577 = vmatprep.subr.mxu0 0.0
        %3578 = vmatpush1.msra.mxu0 0.0
        %3579 = vmatprep.subr.mxu0 0.0
        %3580 = vmatpush1.msra.mxu0 0.0
        %3581 = vmatprep.subr.mxu0 0.0
        %3582 = vmatpush1.msra.mxu0 0.0
        %3583 = vmatprep.subr.mxu0 0.0
        %3584 = vmatpush1.msra.mxu0 0.0
        %3585 = vmatprep.subr.mxu0 0.0
        %3586 = vmatpush1.msra.mxu0 0.0
        %3587 = vmatprep.subr.mxu0 0.0
        %3588 = vmatpush1.msra.mxu0 0.0
        %3589 = vmatprep.subr.mxu0 0.0
        %3590 = vmatpush1.msra.mxu0 0.0
        %3591 = vmatprep.subr.mxu0 0.0
        %3592 = vmatpush1.msra.mxu0 0.0
        %3593 = vmatprep.subr.mxu0 0.0
        %3594 = vmatpush1.msra.mxu0 0.0
        %3595 = vmatprep.subr.mxu0 0.0
        %3596 = vmatpush1.msra.mxu0 0.0
        %3597 = vmatprep.subr.mxu0 0.0
        %3598 = vmatpush1.msra.mxu0 0.0
        %3599 = vmatprep.subr.mxu0 0.0
        %3600 = vmatpush1.msra.mxu0 0.0
        %3601 = vmatprep.subr.mxu0 0.0
        %3602 = vmatpush1.msra.mxu0 0.0
        %3603 = vmatprep.subr.mxu0 0.0
        %3604 = vmatpush1.msra.mxu0 0.0
        %3605 = vmatprep.subr.mxu0 0.0
        %3606 = vmatpush1.msra.mxu0 0.0
        %3607 = vmatprep.subr.mxu0 0.0
        %3608 = vmatpush1.msra.mxu0 0.0
        %3609 = vmatprep.subr.mxu0 0.0
        %3610 = vmatpush1.msra.mxu0 0.0
        %3611 = vmatprep.subr.mxu0 0.0
        %3612 = vmatpush1.msra.mxu0 0.0
        %3613 = vmatprep.subr.mxu0 0.0
        %3614 = vmatpush1.msra.mxu0 0.0
        %3615 = vmatprep.subr.mxu0 0.0
        %3616 = vmatpush1.msra.mxu0 0.0
        %3617 = vmatprep.subr.mxu0 0.0
        %3618 = vmatpush1.msra.mxu0 0.0
        %3619 = vmatprep.subr.mxu0 0.0
        %3620 = vmatpush1.msra.mxu0 0.0
        %3621 = vmatprep.subr.mxu0 0.0
        %3622 = vmatpush1.msra.mxu0 0.0
        %3623 = vmatprep.subr.mxu0 0.0
        %3624 = vmatpush1.msra.mxu0 0.0
        %3625 = vmatprep.mubr.f32.mxu0 0.0
        %3626 = vmatmul.mubr.f32.gmra.mrb[0].mxu0 %v3360
        %v3627 = vpop.f32.mrb[0].mxu0
        %v3628 = vadd.f32 0.0, %v3627
        %v3629 = vpop.f32.mrb[0].mxu0
        %3630 = vmatprep.mubr.f32.mxu0 0.0
        %3631 = vmatmul.mubr.f32.gmra.mrb[0].mxu0 %v3363
        %v3632 = vpop.f32.mrb[0].mxu0
        %v3633 = vadd.f32 0.0, %v3632
        %v3634 = vpop.f32.mrb[0].mxu0
        %3635 = vmatprep.mubr.f32.mxu0 0.0
        %3636 = vmatmul.mubr.f32.gmra.mrb[0].mxu0 %v3366
        %v3637 = vpop.f32.mrb[0].mxu0
        %v3638 = vadd.f32 0.0, %v3637
        %v3639 = vpop.f32.mrb[0].mxu0
        %3640 = vmatprep.mubr.f32.mxu0 0.0
        %3641 = vmatmul.mubr.f32.gmra.mrb[0].mxu0 %v3369
        %v3642 = vpop.f32.mrb[0].mxu0
        %v3643 = vadd.f32 0.0, %v3642
        %v3644 = vpop.f32.mrb[0].mxu0
        %3645 = vdwg.mxu0
        %3646 = vmatprep.subr.mxu0 0.0
        %3647 = vmatpush1.msra.mxu0 %v3347
        %3648 = vmatprep.subr.mxu0 0.0
        %3649 = vmatpush1.msra.mxu0 %v3348
        %3650 = vmatprep.subr.mxu0 0.0
        %3651 = vmatpush1.msra.mxu0 0.0
        %3652 = vmatprep.subr.mxu0 0.0
        %3653 = vmatpush1.msra.mxu0 0.0
        %3654 = vmatprep.subr.mxu0 0.0
        %3655 = vmatpush1.msra.mxu0 0.0
        %3656 = vmatprep.subr.mxu0 0.0
        %3657 = vmatpush1.msra.mxu0 0.0
        %3658 = vmatprep.subr.mxu0 0.0
        %3659 = vmatpush1.msra.mxu0 0.0
        %3660 = vmatprep.subr.mxu0 0.0
        %3661 = vmatpush1.msra.mxu0 0.0
        %3662 = vmatprep.subr.mxu0 0.0
        %3663 = vmatpush1.msra.mxu0 0.0
        %3664 = vmatprep.subr.mxu0 0.0
        %3665 = vmatpush1.msra.mxu0 0.0
        %3666 = vmatprep.subr.mxu0 0.0
        %3667 = vmatpush1.msra.mxu0 0.0
        %3668 = vmatprep.subr.mxu0 0.0
        %3669 = vmatpush1.msra.mxu0 0.0
        %3670 = vmatprep.subr.mxu0 0.0
        %3671 = vmatpush1.msra.mxu0 0.0
        %3672 = vmatprep.subr.mxu0 0.0
        %3673 = vmatpush1.msra.mxu0 0.0
        %3674 = vmatprep.subr.mxu0 0.0
        %3675 = vmatpush1.msra.mxu0 0.0
        %3676 = vmatprep.subr.mxu0 0.0
        %3677 = vmatpush1.msra.mxu0 0.0
        %3678 = vmatprep.subr.mxu0 0.0
        %3679 = vmatpush1.msra.mxu0 0.0
        %3680 = vmatprep.subr.mxu0 0.0
        %3681 = vmatpush1.msra.mxu0 0.0
        %3682 = vmatprep.subr.mxu0 0.0
        %3683 = vmatpush1.msra.mxu0 0.0
        %3684 = vmatprep.subr.mxu0 0.0
        %3685 = vmatpush1.msra.mxu0 0.0
        %3686 = vmatprep.subr.mxu0 0.0
        %3687 = vmatpush1.msra.mxu0 0.0
        %3688 = vmatprep.subr.mxu0 0.0
        %3689 = vmatpush1.msra.mxu0 0.0
        %3690 = vmatprep.subr.mxu0 0.0
        %3691 = vmatpush1.msra.mxu0 0.0
        %3692 = vmatprep.subr.mxu0 0.0
        %3693 = vmatpush1.msra.mxu0 0.0
        %3694 = vmatprep.subr.mxu0 0.0
        %3695 = vmatpush1.msra.mxu0 0.0
        %3696 = vmatprep.subr.mxu0 0.0
        %3697 = vmatpush1.msra.mxu0 0.0
        %3698 = vmatprep.subr.mxu0 0.0
        %3699 = vmatpush1.msra.mxu0 0.0
        %3700 = vmatprep.subr.mxu0 0.0
        %3701 = vmatpush1.msra.mxu0 0.0
        %3702 = vmatprep.subr.mxu0 0.0
        %3703 = vmatpush1.msra.mxu0 0.0
        %3704 = vmatprep.subr.mxu0 0.0
        %3705 = vmatpush1.msra.mxu0 0.0
        %3706 = vmatprep.subr.mxu0 0.0
        %3707 = vmatpush1.msra.mxu0 0.0
        %3708 = vmatprep.subr.mxu0 0.0
        %3709 = vmatpush1.msra.mxu0 0.0
        %3710 = vmatprep.mubr.f32.mxu0 0.0
        %3711 = vmatmul.mubr.f32.gmra.mrb[0].mxu0 %v3457
        %v3712 = vpop.f32.mrb[0].mxu0
        %v3713 = vadd.f32 %v3628, %v3712
        %v3714 = vpop.f32.mrb[0].mxu0
        %3715 = vmatprep.mubr.f32.mxu0 0.0
        %3716 = vmatmul.mubr.f32.gmra.mrb[0].mxu0 %v3460
        %v3717 = vpop.f32.mrb[0].mxu0
        %v3718 = vadd.f32 %v3633, %v3717
        %v3719 = vpop.f32.mrb[0].mxu0
        %3720 = vmatprep.mubr.f32.mxu0 0.0
        %3721 = vmatmul.mubr.f32.gmra.mrb[0].mxu0 %v3463
        %v3722 = vpop.f32.mrb[0].mxu0
        %v3723 = vadd.f32 %v3638, %v3722
        %v3724 = vpop.f32.mrb[0].mxu0
        %3725 = vmatprep.mubr.f32.mxu0 0.0
        %3726 = vmatmul.mubr.f32.gmra.mrb[0].mxu0 %v3466
        %v3727 = vpop.f32.mrb[0].mxu0
        %v3728 = vadd.f32 %v3643, %v3727
        %v3729 = vpop.f32.mrb[0].mxu0
        %3730 = vdwg.mxu0
        %s3731 = scalar_lea.vmem %s3, 64
        %v3732 = vld [vmem:[%s3731] sm:$0xff]
        %v3733 = vld [vmem:[%s3731 + $0x8] sm:$0xff]
        %v3734 = vld [vmem:[%s3731 + $0x10] sm:$0xff]
        %v3735 = vld [vmem:[%s3731 + $0x18] sm:$0xff]
        %v3737 = vsel %vm3358, %v3732, 0
        %v3740 = vsel %vm3358, %v3733, 0
        %v3743 = vsel %vm3358, %v3734, 0
        %v3746 = vsel %vm3358, %v3735, 0
        %3748 = vmatprep.subr.mxu0 0.0
        %3749 = vmatpush1.msra.mxu0 %v3556
        %3750 = vmatprep.subr.mxu0 0.0
        %3751 = vmatpush1.msra.mxu0 %v3558
        %3752 = vmatprep.subr.mxu0 0.0
        %3753 = vmatpush1.msra.mxu0 0.0
        %3754 = vmatprep.subr.mxu0 0.0
        %3755 = vmatpush1.msra.mxu0 0.0
        %3756 = vmatprep.subr.mxu0 0.0
        %3757 = vmatpush1.msra.mxu0 0.0
        %3758 = vmatprep.subr.mxu0 0.0
        %3759 = vmatpush1.msra.mxu0 0.0
        %3760 = vmatprep.subr.mxu0 0.0
        %3761 = vmatpush1.msra.mxu0 0.0
        %3762 = vmatprep.subr.mxu0 0.0
        %3763 = vmatpush1.msra.mxu0 0.0
        %3764 = vmatprep.subr.mxu0 0.0
        %3765 = vmatpush1.msra.mxu0 0.0
        %3766 = vmatprep.subr.mxu0 0.0
        %3767 = vmatpush1.msra.mxu0 0.0
        %3768 = vmatprep.subr.mxu0 0.0
        %3769 = vmatpush1.msra.mxu0 0.0
        %3770 = vmatprep.subr.mxu0 0.0
        %3771 = vmatpush1.msra.mxu0 0.0
        %3772 = vmatprep.subr.mxu0 0.0
        %3773 = vmatpush1.msra.mxu0 0.0
        %3774 = vmatprep.subr.mxu0 0.0
        %3775 = vmatpush1.msra.mxu0 0.0
        %3776 = vmatprep.subr.mxu0 0.0
        %3777 = vmatpush1.msra.mxu0 0.0
        %3778 = vmatprep.subr.mxu0 0.0
        %3779 = vmatpush1.msra.mxu0 0.0
        %3780 = vmatprep.subr.mxu0 0.0
        %3781 = vmatpush1.msra.mxu0 0.0
        %3782 = vmatprep.subr.mxu0 0.0
        %3783 = vmatpush1.msra.mxu0 0.0
        %3784 = vmatprep.subr.mxu0 0.0
        %3785 = vmatpush1.msra.mxu0 0.0
        %3786 = vmatprep.subr.mxu0 0.0
        %3787 = vmatpush1.msra.mxu0 0.0
        %3788 = vmatprep.subr.mxu0 0.0
        %3789 = vmatpush1.msra.mxu0 0.0
        %3790 = vmatprep.subr.mxu0 0.0
        %3791 = vmatpush1.msra.mxu0 0.0
        %3792 = vmatprep.subr.mxu0 0.0
        %3793 = vmatpush1.msra.mxu0 0.0
        %3794 = vmatprep.subr.mxu0 0.0
        %3795 = vmatpush1.msra.mxu0 0.0
        %3796 = vmatprep.subr.mxu0 0.0
        %3797 = vmatpush1.msra.mxu0 0.0
        %3798 = vmatprep.subr.mxu0 0.0
        %3799 = vmatpush1.msra.mxu0 0.0
        %3800 = vmatprep.subr.mxu0 0.0
        %3801 = vmatpush1.msra.mxu0 0.0
        %3802 = vmatprep.subr.mxu0 0.0
        %3803 = vmatpush1.msra.mxu0 0.0
        %3804 = vmatprep.subr.mxu0 0.0
        %3805 = vmatpush1.msra.mxu0 0.0
        %3806 = vmatprep.subr.mxu0 0.0
        %3807 = vmatpush1.msra.mxu0 0.0
        %3808 = vmatprep.subr.mxu0 0.0
        %3809 = vmatpush1.msra.mxu0 0.0
        %3810 = vmatprep.subr.mxu0 0.0
        %3811 = vmatpush1.msra.mxu0 0.0
        %3812 = vmatprep.mubr.f32.mxu0 0.0
        %3813 = vmatmul.mubr.f32.gmra.mrb[0].mxu0 %v3737
        %v3814 = vpop.f32.mrb[0].mxu0
        %v3815 = vadd.f32 0.0, %v3814
        %v3816 = vpop.f32.mrb[0].mxu0
        %3817 = vmatprep.mubr.f32.mxu0 0.0
        %3818 = vmatmul.mubr.f32.gmra.mrb[0].mxu0 %v3740
        %v3819 = vpop.f32.mrb[0].mxu0
        %v3820 = vadd.f32 0.0, %v3819
        %v3821 = vpop.f32.mrb[0].mxu0
        %3822 = vmatprep.mubr.f32.mxu0 0.0
        %3823 = vmatmul.mubr.f32.gmra.mrb[0].mxu0 %v3743
        %v3824 = vpop.f32.mrb[0].mxu0
        %v3825 = vadd.f32 0.0, %v3824
        %v3826 = vpop.f32.mrb[0].mxu0
        %3827 = vmatprep.mubr.f32.mxu0 0.0
        %3828 = vmatmul.mubr.f32.gmra.mrb[0].mxu0 %v3746
        %v3829 = vpop.f32.mrb[0].mxu0
        %v3830 = vadd.f32 0.0, %v3829
        %v3831 = vpop.f32.mrb[0].mxu0
        %3832 = vdwg.mxu0
        %v3833 = vadd.f32 %v3535, %v3815
        %v3834 = vadd.f32 %v3540, %v3820
        %v3835 = vadd.f32 %v3545, %v3825
        %v3836 = vadd.f32 %v3550, %v3830
        %3839 = vrot.lane.b32.xlu0 %v3347, 127
        %v3840 = vpop.permute.xlu0 %3839
        %3841 = vrot.lane.b32.xlu0 %v3348, 127
        %v3842 = vpop.permute.xlu0 %3841
        %3845 = vmatprep.subr.mxu0 0.0
        %3846 = vmatpush1.msra.mxu0 %v3840
        %3847 = vmatprep.subr.mxu0 0.0
        %3848 = vmatpush1.msra.mxu0 %v3842
        %3849 = vmatprep.subr.mxu0 0.0
        %3850 = vmatpush1.msra.mxu0 0.0
        %3851 = vmatprep.subr.mxu0 0.0
        %3852 = vmatpush1.msra.mxu0 0.0
        %3853 = vmatprep.subr.mxu0 0.0
        %3854 = vmatpush1.msra.mxu0 0.0
        %3855 = vmatprep.subr.mxu0 0.0
        %3856 = vmatpush1.msra.mxu0 0.0
        %3857 = vmatprep.subr.mxu0 0.0
        %3858 = vmatpush1.msra.mxu0 0.0
        %3859 = vmatprep.subr.mxu0 0.0
        %3860 = vmatpush1.msra.mxu0 0.0
        %3861 = vmatprep.subr.mxu0 0.0
        %3862 = vmatpush1.msra.mxu0 0.0
        %3863 = vmatprep.subr.mxu0 0.0
        %3864 = vmatpush1.msra.mxu0 0.0
        %3865 = vmatprep.subr.mxu0 0.0
        %3866 = vmatpush1.msra.mxu0 0.0
        %3867 = vmatprep.subr.mxu0 0.0
        %3868 = vmatpush1.msra.mxu0 0.0
        %3869 = vmatprep.subr.mxu0 0.0
        %3870 = vmatpush1.msra.mxu0 0.0
        %3871 = vmatprep.subr.mxu0 0.0
        %3872 = vmatpush1.msra.mxu0 0.0
        %3873 = vmatprep.subr.mxu0 0.0
        %3874 = vmatpush1.msra.mxu0 0.0
        %3875 = vmatprep.subr.mxu0 0.0
        %3876 = vmatpush1.msra.mxu0 0.0
        %3877 = vmatprep.subr.mxu0 0.0
        %3878 = vmatpush1.msra.mxu0 0.0
        %3879 = vmatprep.subr.mxu0 0.0
        %3880 = vmatpush1.msra.mxu0 0.0
        %3881 = vmatprep.subr.mxu0 0.0
        %3882 = vmatpush1.msra.mxu0 0.0
        %3883 = vmatprep.subr.mxu0 0.0
        %3884 = vmatpush1.msra.mxu0 0.0
        %3885 = vmatprep.subr.mxu0 0.0
        %3886 = vmatpush1.msra.mxu0 0.0
        %3887 = vmatprep.subr.mxu0 0.0
        %3888 = vmatpush1.msra.mxu0 0.0
        %3889 = vmatprep.subr.mxu0 0.0
        %3890 = vmatpush1.msra.mxu0 0.0
        %3891 = vmatprep.subr.mxu0 0.0
        %3892 = vmatpush1.msra.mxu0 0.0
        %3893 = vmatprep.subr.mxu0 0.0
        %3894 = vmatpush1.msra.mxu0 0.0
        %3895 = vmatprep.subr.mxu0 0.0
        %3896 = vmatpush1.msra.mxu0 0.0
        %3897 = vmatprep.subr.mxu0 0.0
        %3898 = vmatpush1.msra.mxu0 0.0
        %3899 = vmatprep.subr.mxu0 0.0
        %3900 = vmatpush1.msra.mxu0 0.0
        %3901 = vmatprep.subr.mxu0 0.0
        %3902 = vmatpush1.msra.mxu0 0.0
        %3903 = vmatprep.subr.mxu0 0.0
        %3904 = vmatpush1.msra.mxu0 0.0
        %3905 = vmatprep.subr.mxu0 0.0
        %3906 = vmatpush1.msra.mxu0 0.0
        %3907 = vmatprep.subr.mxu0 0.0
        %3908 = vmatpush1.msra.mxu0 0.0
        %3909 = vmatprep.mubr.f32.mxu0 0.0
        %3910 = vmatmul.mubr.f32.gmra.mrb[0].mxu0 %v3737
        %v3911 = vpop.f32.mrb[0].mxu0
        %v3912 = vadd.f32 0.0, %v3911
        %v3913 = vpop.f32.mrb[0].mxu0
        %3914 = vmatprep.mubr.f32.mxu0 0.0
        %3915 = vmatmul.mubr.f32.gmra.mrb[0].mxu0 %v3740
        %v3916 = vpop.f32.mrb[0].mxu0
        %v3917 = vadd.f32 0.0, %v3916
        %v3918 = vpop.f32.mrb[0].mxu0
        %3919 = vmatprep.mubr.f32.mxu0 0.0
        %3920 = vmatmul.mubr.f32.gmra.mrb[0].mxu0 %v3743
        %v3921 = vpop.f32.mrb[0].mxu0
        %v3922 = vadd.f32 0.0, %v3921
        %v3923 = vpop.f32.mrb[0].mxu0
        %3924 = vmatprep.mubr.f32.mxu0 0.0
        %3925 = vmatmul.mubr.f32.gmra.mrb[0].mxu0 %v3746
        %v3926 = vpop.f32.mrb[0].mxu0
        %v3927 = vadd.f32 0.0, %v3926
        %v3928 = vpop.f32.mrb[0].mxu0
        %3929 = vdwg.mxu0
        %v3930 = vadd.f32 %v3713, %v3912
        %v3931 = vadd.f32 %v3718, %v3917
        %v3932 = vadd.f32 %v3723, %v3922
        %v3933 = vadd.f32 %v3728, %v3927
        %s3934 = scalar_lea.vmem %s3, 96
        %v3935 = vld [vmem:[%s3934] sm:$0xff]
        %v3936 = vld [vmem:[%s3934 + $0x8] sm:$0xff]
        %v3937 = vld [vmem:[%s3934 + $0x10] sm:$0xff]
        %v3938 = vld [vmem:[%s3934 + $0x18] sm:$0xff]
        %v3940 = vsel %vm3358, %v3935, 0
        %v3943 = vsel %vm3358, %v3936, 0
        %v3946 = vsel %vm3358, %v3937, 0
        %v3949 = vsel %vm3358, %v3938, 0
        %3951 = vmatprep.subr.mxu0 0.0
        %3952 = vmatpush1.msra.mxu0 %v3840
        %3953 = vmatprep.subr.mxu0 0.0
        %3954 = vmatpush1.msra.mxu0 %v3842
        %3955 = vmatprep.subr.mxu0 0.0
        %3956 = vmatpush1.msra.mxu0 0.0
        %3957 = vmatprep.subr.mxu0 0.0
        %3958 = vmatpush1.msra.mxu0 0.0
        %3959 = vmatprep.subr.mxu0 0.0
        %3960 = vmatpush1.msra.mxu0 0.0
        %3961 = vmatprep.subr.mxu0 0.0
        %3962 = vmatpush1.msra.mxu0 0.0
        %3963 = vmatprep.subr.mxu0 0.0
        %3964 = vmatpush1.msra.mxu0 0.0
        %3965 = vmatprep.subr.mxu0 0.0
        %3966 = vmatpush1.msra.mxu0 0.0
        %3967 = vmatprep.subr.mxu0 0.0
        %3968 = vmatpush1.msra.mxu0 0.0
        %3969 = vmatprep.subr.mxu0 0.0
        %3970 = vmatpush1.msra.mxu0 0.0
        %3971 = vmatprep.subr.mxu0 0.0
        %3972 = vmatpush1.msra.mxu0 0.0
        %3973 = vmatprep.subr.mxu0 0.0
        %3974 = vmatpush1.msra.mxu0 0.0
        %3975 = vmatprep.subr.mxu0 0.0
        %3976 = vmatpush1.msra.mxu0 0.0
        %3977 = vmatprep.subr.mxu0 0.0
        %3978 = vmatpush1.msra.mxu0 0.0
        %3979 = vmatprep.subr.mxu0 0.0
        %3980 = vmatpush1.msra.mxu0 0.0
        %3981 = vmatprep.subr.mxu0 0.0
        %3982 = vmatpush1.msra.mxu0 0.0
        %3983 = vmatprep.subr.mxu0 0.0
        %3984 = vmatpush1.msra.mxu0 0.0
        %3985 = vmatprep.subr.mxu0 0.0
        %3986 = vmatpush1.msra.mxu0 0.0
        %3987 = vmatprep.subr.mxu0 0.0
        %3988 = vmatpush1.msra.mxu0 0.0
        %3989 = vmatprep.subr.mxu0 0.0
        %3990 = vmatpush1.msra.mxu0 0.0
        %3991 = vmatprep.subr.mxu0 0.0
        %3992 = vmatpush1.msra.mxu0 0.0
        %3993 = vmatprep.subr.mxu0 0.0
        %3994 = vmatpush1.msra.mxu0 0.0
        %3995 = vmatprep.subr.mxu0 0.0
        %3996 = vmatpush1.msra.mxu0 0.0
        %3997 = vmatprep.subr.mxu0 0.0
        %3998 = vmatpush1.msra.mxu0 0.0
        %3999 = vmatprep.subr.mxu0 0.0
        %4000 = vmatpush1.msra.mxu0 0.0
        %4001 = vmatprep.subr.mxu0 0.0
        %4002 = vmatpush1.msra.mxu0 0.0
        %4003 = vmatprep.subr.mxu0 0.0
        %4004 = vmatpush1.msra.mxu0 0.0
        %4005 = vmatprep.subr.mxu0 0.0
        %4006 = vmatpush1.msra.mxu0 0.0
        %4007 = vmatprep.subr.mxu0 0.0
        %4008 = vmatpush1.msra.mxu0 0.0
        %4009 = vmatprep.subr.mxu0 0.0
        %4010 = vmatpush1.msra.mxu0 0.0
        %4011 = vmatprep.subr.mxu0 0.0
        %4012 = vmatpush1.msra.mxu0 0.0
        %4013 = vmatprep.subr.mxu0 0.0
        %4014 = vmatpush1.msra.mxu0 0.0
        %4015 = vmatprep.mubr.f32.mxu0 0.0
        %4016 = vmatmul.mubr.f32.gmra.mrb[0].mxu0 %v3940
        %v4017 = vpop.f32.mrb[0].mxu0
        %v4018 = vadd.f32 0.0, %v4017
        %v4019 = vpop.f32.mrb[0].mxu0
        %4020 = vmatprep.mubr.f32.mxu0 0.0
        %4021 = vmatmul.mubr.f32.gmra.mrb[0].mxu0 %v3943
        %v4022 = vpop.f32.mrb[0].mxu0
        %v4023 = vadd.f32 0.0, %v4022
        %v4024 = vpop.f32.mrb[0].mxu0
        %4025 = vmatprep.mubr.f32.mxu0 0.0
        %4026 = vmatmul.mubr.f32.gmra.mrb[0].mxu0 %v3946
        %v4027 = vpop.f32.mrb[0].mxu0
        %v4028 = vadd.f32 0.0, %v4027
        %v4029 = vpop.f32.mrb[0].mxu0
        %4030 = vmatprep.mubr.f32.mxu0 0.0
        %4031 = vmatmul.mubr.f32.gmra.mrb[0].mxu0 %v3949
        %v4032 = vpop.f32.mrb[0].mxu0
        %v4033 = vadd.f32 0.0, %v4032
        %v4034 = vpop.f32.mrb[0].mxu0
        %4035 = vdwg.mxu0
        %v4036 = vadd.f32 %v3833, %v4018
        %v4037 = vadd.f32 %v3834, %v4023
        %v4038 = vadd.f32 %v3835, %v4028
        %v4039 = vadd.f32 %v3836, %v4033
        %4040 = vrot.lane.b32.xlu0 %v3341, 126
        %v4041 = vpop.permute.xlu0 %4040
        %4042 = vrot.lane.b32.xlu0 %v3342, 126
        %v4043 = vpop.permute.xlu0 %4042
        %4046 = vmatprep.subr.mxu0 0.0
        %4047 = vmatpush1.msra.mxu0 %v4041
        %4048 = vmatprep.subr.mxu0 0.0
        %4049 = vmatpush1.msra.mxu0 %v4043
        %4050 = vmatprep.subr.mxu0 0.0
        %4051 = vmatpush1.msra.mxu0 0.0
        %4052 = vmatprep.subr.mxu0 0.0
        %4053 = vmatpush1.msra.mxu0 0.0
        %4054 = vmatprep.subr.mxu0 0.0
        %4055 = vmatpush1.msra.mxu0 0.0
        %4056 = vmatprep.subr.mxu0 0.0
        %4057 = vmatpush1.msra.mxu0 0.0
        %4058 = vmatprep.subr.mxu0 0.0
        %4059 = vmatpush1.msra.mxu0 0.0
        %4060 = vmatprep.subr.mxu0 0.0
        %4061 = vmatpush1.msra.mxu0 0.0
        %4062 = vmatprep.subr.mxu0 0.0
        %4063 = vmatpush1.msra.mxu0 0.0
        %4064 = vmatprep.subr.mxu0 0.0
        %4065 = vmatpush1.msra.mxu0 0.0
        %4066 = vmatprep.subr.mxu0 0.0
        %4067 = vmatpush1.msra.mxu0 0.0
        %4068 = vmatprep.subr.mxu0 0.0
        %4069 = vmatpush1.msra.mxu0 0.0
        %4070 = vmatprep.subr.mxu0 0.0
        %4071 = vmatpush1.msra.mxu0 0.0
        %4072 = vmatprep.subr.mxu0 0.0
        %4073 = vmatpush1.msra.mxu0 0.0
        %4074 = vmatprep.subr.mxu0 0.0
        %4075 = vmatpush1.msra.mxu0 0.0
        %4076 = vmatprep.subr.mxu0 0.0
        %4077 = vmatpush1.msra.mxu0 0.0
        %4078 = vmatprep.subr.mxu0 0.0
        %4079 = vmatpush1.msra.mxu0 0.0
        %4080 = vmatprep.subr.mxu0 0.0
        %4081 = vmatpush1.msra.mxu0 0.0
        %4082 = vmatprep.subr.mxu0 0.0
        %4083 = vmatpush1.msra.mxu0 0.0
        %4084 = vmatprep.subr.mxu0 0.0
        %4085 = vmatpush1.msra.mxu0 0.0
        %4086 = vmatprep.subr.mxu0 0.0
        %4087 = vmatpush1.msra.mxu0 0.0
        %4088 = vmatprep.subr.mxu0 0.0
        %4089 = vmatpush1.msra.mxu0 0.0
        %4090 = vmatprep.subr.mxu0 0.0
        %4091 = vmatpush1.msra.mxu0 0.0
        %4092 = vmatprep.subr.mxu0 0.0
        %4093 = vmatpush1.msra.mxu0 0.0
        %4094 = vmatprep.subr.mxu0 0.0
        %4095 = vmatpush1.msra.mxu0 0.0
        %4096 = vmatprep.subr.mxu0 0.0
        %4097 = vmatpush1.msra.mxu0 0.0
        %4098 = vmatprep.subr.mxu0 0.0
        %4099 = vmatpush1.msra.mxu0 0.0
        %4100 = vmatprep.subr.mxu0 0.0
        %4101 = vmatpush1.msra.mxu0 0.0
        %4102 = vmatprep.subr.mxu0 0.0
        %4103 = vmatpush1.msra.mxu0 0.0
        %4104 = vmatprep.subr.mxu0 0.0
        %4105 = vmatpush1.msra.mxu0 0.0
        %4106 = vmatprep.subr.mxu0 0.0
        %4107 = vmatpush1.msra.mxu0 0.0
        %4108 = vmatprep.subr.mxu0 0.0
        %4109 = vmatpush1.msra.mxu0 0.0
        %4110 = vmatprep.mubr.f32.mxu0 0.0
        %4111 = vmatmul.mubr.f32.gmra.mrb[0].mxu0 %v3940
        %v4112 = vpop.f32.mrb[0].mxu0
        %v4113 = vadd.f32 0.0, %v4112
        %v4114 = vpop.f32.mrb[0].mxu0
        %4115 = vmatprep.mubr.f32.mxu0 0.0
        %4116 = vmatmul.mubr.f32.gmra.mrb[0].mxu0 %v3943
        %v4117 = vpop.f32.mrb[0].mxu0
        %v4118 = vadd.f32 0.0, %v4117
        %v4119 = vpop.f32.mrb[0].mxu0
        %4120 = vmatprep.mubr.f32.mxu0 0.0
        %4121 = vmatmul.mubr.f32.gmra.mrb[0].mxu0 %v3946
        %v4122 = vpop.f32.mrb[0].mxu0
        %v4123 = vadd.f32 0.0, %v4122
        %v4124 = vpop.f32.mrb[0].mxu0
        %4125 = vmatprep.mubr.f32.mxu0 0.0
        %4126 = vmatmul.mubr.f32.gmra.mrb[0].mxu0 %v3949
        %v4127 = vpop.f32.mrb[0].mxu0
        %v4128 = vadd.f32 0.0, %v4127
        %v4129 = vpop.f32.mrb[0].mxu0
        %4130 = vdwg.mxu0
        %v4131 = vadd.f32 %v3930, %v4113
        %v4132 = vadd.f32 %v3931, %v4118
        %v4133 = vadd.f32 %v3932, %v4123
        %v4134 = vadd.f32 %v3933, %v4128
        %s4135 = scalar_lea.vmem %s3, 128
        %v4136 = vld [vmem:[%s4135] sm:$0xff]
        %v4137 = vld [vmem:[%s4135 + $0x8] sm:$0xff]
        %v4138 = vld [vmem:[%s4135 + $0x10] sm:$0xff]
        %v4139 = vld [vmem:[%s4135 + $0x18] sm:$0xff]
        %v4141 = vsel %vm3358, %v4136, 0
        %v4144 = vsel %vm3358, %v4137, 0
        %v4147 = vsel %vm3358, %v4138, 0
        %v4150 = vsel %vm3358, %v4139, 0
        %4152 = vmatprep.subr.mxu0 0.0
        %4153 = vmatpush1.msra.mxu0 %v4041
        %4154 = vmatprep.subr.mxu0 0.0
        %4155 = vmatpush1.msra.mxu0 %v4043
        %4156 = vmatprep.subr.mxu0 0.0
        %4157 = vmatpush1.msra.mxu0 0.0
        %4158 = vmatprep.subr.mxu0 0.0
        %4159 = vmatpush1.msra.mxu0 0.0
        %4160 = vmatprep.subr.mxu0 0.0
        %4161 = vmatpush1.msra.mxu0 0.0
        %4162 = vmatprep.subr.mxu0 0.0
        %4163 = vmatpush1.msra.mxu0 0.0
        %4164 = vmatprep.subr.mxu0 0.0
        %4165 = vmatpush1.msra.mxu0 0.0
        %4166 = vmatprep.subr.mxu0 0.0
        %4167 = vmatpush1.msra.mxu0 0.0
        %4168 = vmatprep.subr.mxu0 0.0
        %4169 = vmatpush1.msra.mxu0 0.0
        %4170 = vmatprep.subr.mxu0 0.0
        %4171 = vmatpush1.msra.mxu0 0.0
        %4172 = vmatprep.subr.mxu0 0.0
        %4173 = vmatpush1.msra.mxu0 0.0
        %4174 = vmatprep.subr.mxu0 0.0
        %4175 = vmatpush1.msra.mxu0 0.0
        %4176 = vmatprep.subr.mxu0 0.0
        %4177 = vmatpush1.msra.mxu0 0.0
        %4178 = vmatprep.subr.mxu0 0.0
        %4179 = vmatpush1.msra.mxu0 0.0
        %4180 = vmatprep.subr.mxu0 0.0
        %4181 = vmatpush1.msra.mxu0 0.0
        %4182 = vmatprep.subr.mxu0 0.0
        %4183 = vmatpush1.msra.mxu0 0.0
        %4184 = vmatprep.subr.mxu0 0.0
        %4185 = vmatpush1.msra.mxu0 0.0
        %4186 = vmatprep.subr.mxu0 0.0
        %4187 = vmatpush1.msra.mxu0 0.0
        %4188 = vmatprep.subr.mxu0 0.0
        %4189 = vmatpush1.msra.mxu0 0.0
        %4190 = vmatprep.subr.mxu0 0.0
        %4191 = vmatpush1.msra.mxu0 0.0
        %4192 = vmatprep.subr.mxu0 0.0
        %4193 = vmatpush1.msra.mxu0 0.0
        %4194 = vmatprep.subr.mxu0 0.0
        %4195 = vmatpush1.msra.mxu0 0.0
        %4196 = vmatprep.subr.mxu0 0.0
        %4197 = vmatpush1.msra.mxu0 0.0
        %4198 = vmatprep.subr.mxu0 0.0
        %4199 = vmatpush1.msra.mxu0 0.0
        %4200 = vmatprep.subr.mxu0 0.0
        %4201 = vmatpush1.msra.mxu0 0.0
        %4202 = vmatprep.subr.mxu0 0.0
        %4203 = vmatpush1.msra.mxu0 0.0
        %4204 = vmatprep.subr.mxu0 0.0
        %4205 = vmatpush1.msra.mxu0 0.0
        %4206 = vmatprep.subr.mxu0 0.0
        %4207 = vmatpush1.msra.mxu0 0.0
        %4208 = vmatprep.subr.mxu0 0.0
        %4209 = vmatpush1.msra.mxu0 0.0
        %4210 = vmatprep.subr.mxu0 0.0
        %4211 = vmatpush1.msra.mxu0 0.0
        %4212 = vmatprep.subr.mxu0 0.0
        %4213 = vmatpush1.msra.mxu0 0.0
        %4214 = vmatprep.subr.mxu0 0.0
        %4215 = vmatpush1.msra.mxu0 0.0
        %4216 = vmatprep.mubr.f32.mxu0 0.0
        %4217 = vmatmul.mubr.f32.gmra.mrb[0].mxu0 %v4141
        %v4218 = vpop.f32.mrb[0].mxu0
        %v4219 = vadd.f32 0.0, %v4218
        %v4220 = vpop.f32.mrb[0].mxu0
        %4221 = vmatprep.mubr.f32.mxu0 0.0
        %4222 = vmatmul.mubr.f32.gmra.mrb[0].mxu0 %v4144
        %v4223 = vpop.f32.mrb[0].mxu0
        %v4224 = vadd.f32 0.0, %v4223
        %v4225 = vpop.f32.mrb[0].mxu0
        %4226 = vmatprep.mubr.f32.mxu0 0.0
        %4227 = vmatmul.mubr.f32.gmra.mrb[0].mxu0 %v4147
        %v4228 = vpop.f32.mrb[0].mxu0
        %v4229 = vadd.f32 0.0, %v4228
        %v4230 = vpop.f32.mrb[0].mxu0
        %4231 = vmatprep.mubr.f32.mxu0 0.0
        %4232 = vmatmul.mubr.f32.gmra.mrb[0].mxu0 %v4150
        %v4233 = vpop.f32.mrb[0].mxu0
        %v4234 = vadd.f32 0.0, %v4233
        %v4235 = vpop.f32.mrb[0].mxu0
        %4236 = vdwg.mxu0
        %v4237 = vadd.f32 %v4036, %v4219
        %v4238 = vadd.f32 %v4037, %v4224
        %v4239 = vadd.f32 %v4038, %v4229
        %v4240 = vadd.f32 %v4039, %v4234
        %4241 = vrot.lane.b32.xlu0 %v3347, 126
        %v4242 = vpop.permute.xlu0 %4241
        %4243 = vrot.lane.b32.xlu0 %v3348, 126
        %v4244 = vpop.permute.xlu0 %4243
        %4247 = vmatprep.subr.mxu0 0.0
        %4248 = vmatpush1.msra.mxu0 %v4242
        %4249 = vmatprep.subr.mxu0 0.0
        %4250 = vmatpush1.msra.mxu0 %v4244
        %4251 = vmatprep.subr.mxu0 0.0
        %4252 = vmatpush1.msra.mxu0 0.0
        %4253 = vmatprep.subr.mxu0 0.0
        %4254 = vmatpush1.msra.mxu0 0.0
        %4255 = vmatprep.subr.mxu0 0.0
        %4256 = vmatpush1.msra.mxu0 0.0
        %4257 = vmatprep.subr.mxu0 0.0
        %4258 = vmatpush1.msra.mxu0 0.0
        %4259 = vmatprep.subr.mxu0 0.0
        %4260 = vmatpush1.msra.mxu0 0.0
        %4261 = vmatprep.subr.mxu0 0.0
        %4262 = vmatpush1.msra.mxu0 0.0
        %4263 = vmatprep.subr.mxu0 0.0
        %4264 = vmatpush1.msra.mxu0 0.0
        %4265 = vmatprep.subr.mxu0 0.0
        %4266 = vmatpush1.msra.mxu0 0.0
        %4267 = vmatprep.subr.mxu0 0.0
        %4268 = vmatpush1.msra.mxu0 0.0
        %4269 = vmatprep.subr.mxu0 0.0
        %4270 = vmatpush1.msra.mxu0 0.0
        %4271 = vmatprep.subr.mxu0 0.0
        %4272 = vmatpush1.msra.mxu0 0.0
        %4273 = vmatprep.subr.mxu0 0.0
        %4274 = vmatpush1.msra.mxu0 0.0
        %4275 = vmatprep.subr.mxu0 0.0
        %4276 = vmatpush1.msra.mxu0 0.0
        %4277 = vmatprep.subr.mxu0 0.0
        %4278 = vmatpush1.msra.mxu0 0.0
        %4279 = vmatprep.subr.mxu0 0.0
        %4280 = vmatpush1.msra.mxu0 0.0
        %4281 = vmatprep.subr.mxu0 0.0
        %4282 = vmatpush1.msra.mxu0 0.0
        %4283 = vmatprep.subr.mxu0 0.0
        %4284 = vmatpush1.msra.mxu0 0.0
        %4285 = vmatprep.subr.mxu0 0.0
        %4286 = vmatpush1.msra.mxu0 0.0
        %4287 = vmatprep.subr.mxu0 0.0
        %4288 = vmatpush1.msra.mxu0 0.0
        %4289 = vmatprep.subr.mxu0 0.0
        %4290 = vmatpush1.msra.mxu0 0.0
        %4291 = vmatprep.subr.mxu0 0.0
        %4292 = vmatpush1.msra.mxu0 0.0
        %4293 = vmatprep.subr.mxu0 0.0
        %4294 = vmatpush1.msra.mxu0 0.0
        %4295 = vmatprep.subr.mxu0 0.0
        %4296 = vmatpush1.msra.mxu0 0.0
        %4297 = vmatprep.subr.mxu0 0.0
        %4298 = vmatpush1.msra.mxu0 0.0
        %4299 = vmatprep.subr.mxu0 0.0
        %4300 = vmatpush1.msra.mxu0 0.0
        %4301 = vmatprep.subr.mxu0 0.0
        %4302 = vmatpush1.msra.mxu0 0.0
        %4303 = vmatprep.subr.mxu0 0.0
        %4304 = vmatpush1.msra.mxu0 0.0
        %4305 = vmatprep.subr.mxu0 0.0
        %4306 = vmatpush1.msra.mxu0 0.0
        %4307 = vmatprep.subr.mxu0 0.0
        %4308 = vmatpush1.msra.mxu0 0.0
        %4309 = vmatprep.subr.mxu0 0.0
        %4310 = vmatpush1.msra.mxu0 0.0
        %4311 = vmatprep.mubr.f32.mxu0 0.0
        %4312 = vmatmul.mubr.f32.gmra.mrb[0].mxu0 %v4141
        %v4313 = vpop.f32.mrb[0].mxu0
        %v4314 = vadd.f32 0.0, %v4313
        %v4315 = vpop.f32.mrb[0].mxu0
        %4316 = vmatprep.mubr.f32.mxu0 0.0
        %4317 = vmatmul.mubr.f32.gmra.mrb[0].mxu0 %v4144
        %v4318 = vpop.f32.mrb[0].mxu0
        %v4319 = vadd.f32 0.0, %v4318
        %v4320 = vpop.f32.mrb[0].mxu0
        %4321 = vmatprep.mubr.f32.mxu0 0.0
        %4322 = vmatmul.mubr.f32.gmra.mrb[0].mxu0 %v4147
        %v4323 = vpop.f32.mrb[0].mxu0
        %v4324 = vadd.f32 0.0, %v4323
        %v4325 = vpop.f32.mrb[0].mxu0
        %4326 = vmatprep.mubr.f32.mxu0 0.0
        %4327 = vmatmul.mubr.f32.gmra.mrb[0].mxu0 %v4150
        %v4328 = vpop.f32.mrb[0].mxu0
        %v4329 = vadd.f32 0.0, %v4328
        %v4330 = vpop.f32.mrb[0].mxu0
        %4331 = vdwg.mxu0
        %v4332 = vadd.f32 %v4131, %v4314
        %v4333 = vadd.f32 %v4132, %v4319
        %v4334 = vadd.f32 %v4133, %v4324
        %v4335 = vadd.f32 %v4134, %v4329
        %s4336 = scalar_lea.vmem %s3, 160
        %v4337 = vld [vmem:[%s4336] sm:$0xff]
        %v4338 = vld [vmem:[%s4336 + $0x8] sm:$0xff]
        %v4339 = vld [vmem:[%s4336 + $0x10] sm:$0xff]
        %v4340 = vld [vmem:[%s4336 + $0x18] sm:$0xff]
        %v4342 = vsel %vm3358, %v4337, 0
        %v4345 = vsel %vm3358, %v4338, 0
        %v4348 = vsel %vm3358, %v4339, 0
        %v4351 = vsel %vm3358, %v4340, 0
        %4353 = vmatprep.subr.mxu0 0.0
        %4354 = vmatpush1.msra.mxu0 %v4242
        %4355 = vmatprep.subr.mxu0 0.0
        %4356 = vmatpush1.msra.mxu0 %v4244
        %4357 = vmatprep.subr.mxu0 0.0
        %4358 = vmatpush1.msra.mxu0 0.0
        %4359 = vmatprep.subr.mxu0 0.0
        %4360 = vmatpush1.msra.mxu0 0.0
        %4361 = vmatprep.subr.mxu0 0.0
        %4362 = vmatpush1.msra.mxu0 0.0
        %4363 = vmatprep.subr.mxu0 0.0
        %4364 = vmatpush1.msra.mxu0 0.0
        %4365 = vmatprep.subr.mxu0 0.0
        %4366 = vmatpush1.msra.mxu0 0.0
        %4367 = vmatprep.subr.mxu0 0.0
        %4368 = vmatpush1.msra.mxu0 0.0
        %4369 = vmatprep.subr.mxu0 0.0
        %4370 = vmatpush1.msra.mxu0 0.0
        %4371 = vmatprep.subr.mxu0 0.0
        %4372 = vmatpush1.msra.mxu0 0.0
        %4373 = vmatprep.subr.mxu0 0.0
        %4374 = vmatpush1.msra.mxu0 0.0
        %4375 = vmatprep.subr.mxu0 0.0
        %4376 = vmatpush1.msra.mxu0 0.0
        %4377 = vmatprep.subr.mxu0 0.0
        %4378 = vmatpush1.msra.mxu0 0.0
        %4379 = vmatprep.subr.mxu0 0.0
        %4380 = vmatpush1.msra.mxu0 0.0
        %4381 = vmatprep.subr.mxu0 0.0
        %4382 = vmatpush1.msra.mxu0 0.0
        %4383 = vmatprep.subr.mxu0 0.0
        %4384 = vmatpush1.msra.mxu0 0.0
        %4385 = vmatprep.subr.mxu0 0.0
        %4386 = vmatpush1.msra.mxu0 0.0
        %4387 = vmatprep.subr.mxu0 0.0
        %4388 = vmatpush1.msra.mxu0 0.0
        %4389 = vmatprep.subr.mxu0 0.0
        %4390 = vmatpush1.msra.mxu0 0.0
        %4391 = vmatprep.subr.mxu0 0.0
        %4392 = vmatpush1.msra.mxu0 0.0
        %4393 = vmatprep.subr.mxu0 0.0
        %4394 = vmatpush1.msra.mxu0 0.0
        %4395 = vmatprep.subr.mxu0 0.0
        %4396 = vmatpush1.msra.mxu0 0.0
        %4397 = vmatprep.subr.mxu0 0.0
        %4398 = vmatpush1.msra.mxu0 0.0
        %4399 = vmatprep.subr.mxu0 0.0
        %4400 = vmatpush1.msra.mxu0 0.0
        %4401 = vmatprep.subr.mxu0 0.0
        %4402 = vmatpush1.msra.mxu0 0.0
        %4403 = vmatprep.subr.mxu0 0.0
        %4404 = vmatpush1.msra.mxu0 0.0
        %4405 = vmatprep.subr.mxu0 0.0
        %4406 = vmatpush1.msra.mxu0 0.0
        %4407 = vmatprep.subr.mxu0 0.0
        %4408 = vmatpush1.msra.mxu0 0.0
        %4409 = vmatprep.subr.mxu0 0.0
        %4410 = vmatpush1.msra.mxu0 0.0
        %4411 = vmatprep.subr.mxu0 0.0
        %4412 = vmatpush1.msra.mxu0 0.0
        %4413 = vmatprep.subr.mxu0 0.0
        %4414 = vmatpush1.msra.mxu0 0.0
        %4415 = vmatprep.subr.mxu0 0.0
        %4416 = vmatpush1.msra.mxu0 0.0
        %4417 = vmatprep.mubr.f32.mxu0 0.0
        %4418 = vmatmul.mubr.f32.gmra.mrb[0].mxu0 %v4342
        %v4419 = vpop.f32.mrb[0].mxu0
        %v4420 = vadd.f32 0.0, %v4419
        %v4421 = vpop.f32.mrb[0].mxu0
        %4422 = vmatprep.mubr.f32.mxu0 0.0
        %4423 = vmatmul.mubr.f32.gmra.mrb[0].mxu0 %v4345
        %v4424 = vpop.f32.mrb[0].mxu0
        %v4425 = vadd.f32 0.0, %v4424
        %v4426 = vpop.f32.mrb[0].mxu0
        %4427 = vmatprep.mubr.f32.mxu0 0.0
        %4428 = vmatmul.mubr.f32.gmra.mrb[0].mxu0 %v4348
        %v4429 = vpop.f32.mrb[0].mxu0
        %v4430 = vadd.f32 0.0, %v4429
        %v4431 = vpop.f32.mrb[0].mxu0
        %4432 = vmatprep.mubr.f32.mxu0 0.0
        %4433 = vmatmul.mubr.f32.gmra.mrb[0].mxu0 %v4351
        %v4434 = vpop.f32.mrb[0].mxu0
        %v4435 = vadd.f32 0.0, %v4434
        %v4436 = vpop.f32.mrb[0].mxu0
        %4437 = vdwg.mxu0
        %v4438 = vadd.f32 %v4237, %v4420
        %v4439 = vadd.f32 %v4238, %v4425
        %v4440 = vadd.f32 %v4239, %v4430
        %v4441 = vadd.f32 %v4240, %v4435
        %4442 = vrot.lane.b32.xlu0 %v3341, 125
        %v4443 = vpop.permute.xlu0 %4442
        %4444 = vrot.lane.b32.xlu0 %v3342, 125
        %v4445 = vpop.permute.xlu0 %4444
        %4448 = vmatprep.subr.mxu0 0.0
        %4449 = vmatpush1.msra.mxu0 %v4443
        %4450 = vmatprep.subr.mxu0 0.0
        %4451 = vmatpush1.msra.mxu0 %v4445
        %4452 = vmatprep.subr.mxu0 0.0
        %4453 = vmatpush1.msra.mxu0 0.0
        %4454 = vmatprep.subr.mxu0 0.0
        %4455 = vmatpush1.msra.mxu0 0.0
        %4456 = vmatprep.subr.mxu0 0.0
        %4457 = vmatpush1.msra.mxu0 0.0
        %4458 = vmatprep.subr.mxu0 0.0
        %4459 = vmatpush1.msra.mxu0 0.0
        %4460 = vmatprep.subr.mxu0 0.0
        %4461 = vmatpush1.msra.mxu0 0.0
        %4462 = vmatprep.subr.mxu0 0.0
        %4463 = vmatpush1.msra.mxu0 0.0
        %4464 = vmatprep.subr.mxu0 0.0
        %4465 = vmatpush1.msra.mxu0 0.0
        %4466 = vmatprep.subr.mxu0 0.0
        %4467 = vmatpush1.msra.mxu0 0.0
        %4468 = vmatprep.subr.mxu0 0.0
        %4469 = vmatpush1.msra.mxu0 0.0
        %4470 = vmatprep.subr.mxu0 0.0
        %4471 = vmatpush1.msra.mxu0 0.0
        %4472 = vmatprep.subr.mxu0 0.0
        %4473 = vmatpush1.msra.mxu0 0.0
        %4474 = vmatprep.subr.mxu0 0.0
        %4475 = vmatpush1.msra.mxu0 0.0
        %4476 = vmatprep.subr.mxu0 0.0
        %4477 = vmatpush1.msra.mxu0 0.0
        %4478 = vmatprep.subr.mxu0 0.0
        %4479 = vmatpush1.msra.mxu0 0.0
        %4480 = vmatprep.subr.mxu0 0.0
        %4481 = vmatpush1.msra.mxu0 0.0
        %4482 = vmatprep.subr.mxu0 0.0
        %4483 = vmatpush1.msra.mxu0 0.0
        %4484 = vmatprep.subr.mxu0 0.0
        %4485 = vmatpush1.msra.mxu0 0.0
        %4486 = vmatprep.subr.mxu0 0.0
        %4487 = vmatpush1.msra.mxu0 0.0
        %4488 = vmatprep.subr.mxu0 0.0
        %4489 = vmatpush1.msra.mxu0 0.0
        %4490 = vmatprep.subr.mxu0 0.0
        %4491 = vmatpush1.msra.mxu0 0.0
        %4492 = vmatprep.subr.mxu0 0.0
        %4493 = vmatpush1.msra.mxu0 0.0
        %4494 = vmatprep.subr.mxu0 0.0
        %4495 = vmatpush1.msra.mxu0 0.0
        %4496 = vmatprep.subr.mxu0 0.0
        %4497 = vmatpush1.msra.mxu0 0.0
        %4498 = vmatprep.subr.mxu0 0.0
        %4499 = vmatpush1.msra.mxu0 0.0
        %4500 = vmatprep.subr.mxu0 0.0
        %4501 = vmatpush1.msra.mxu0 0.0
        %4502 = vmatprep.subr.mxu0 0.0
        %4503 = vmatpush1.msra.mxu0 0.0
        %4504 = vmatprep.subr.mxu0 0.0
        %4505 = vmatpush1.msra.mxu0 0.0
        %4506 = vmatprep.subr.mxu0 0.0
        %4507 = vmatpush1.msra.mxu0 0.0
        %4508 = vmatprep.subr.mxu0 0.0
        %4509 = vmatpush1.msra.mxu0 0.0
        %4510 = vmatprep.subr.mxu0 0.0
        %4511 = vmatpush1.msra.mxu0 0.0
        %4512 = vmatprep.mubr.f32.mxu0 0.0
        %4513 = vmatmul.mubr.f32.gmra.mrb[0].mxu0 %v4342
        %v4514 = vpop.f32.mrb[0].mxu0
        %v4515 = vadd.f32 0.0, %v4514
        %v4516 = vpop.f32.mrb[0].mxu0
        %4517 = vmatprep.mubr.f32.mxu0 0.0
        %4518 = vmatmul.mubr.f32.gmra.mrb[0].mxu0 %v4345
        %v4519 = vpop.f32.mrb[0].mxu0
        %v4520 = vadd.f32 0.0, %v4519
        %v4521 = vpop.f32.mrb[0].mxu0
        %4522 = vmatprep.mubr.f32.mxu0 0.0
        %4523 = vmatmul.mubr.f32.gmra.mrb[0].mxu0 %v4348
        %v4524 = vpop.f32.mrb[0].mxu0
        %v4525 = vadd.f32 0.0, %v4524
        %v4526 = vpop.f32.mrb[0].mxu0
        %4527 = vmatprep.mubr.f32.mxu0 0.0
        %4528 = vmatmul.mubr.f32.gmra.mrb[0].mxu0 %v4351
        %v4529 = vpop.f32.mrb[0].mxu0
        %v4530 = vadd.f32 0.0, %v4529
        %v4531 = vpop.f32.mrb[0].mxu0
        %4532 = vdwg.mxu0
        %v4533 = vadd.f32 %v4332, %v4515
        %v4534 = vadd.f32 %v4333, %v4520
        %v4535 = vadd.f32 %v4334, %v4525
        %v4536 = vadd.f32 %v4335, %v4530
        %s4537 = scalar_lea.vmem %s3, 192
        %v4538 = vld [vmem:[%s4537] sm:$0xff]
        %v4539 = vld [vmem:[%s4537 + $0x8] sm:$0xff]
        %v4540 = vld [vmem:[%s4537 + $0x10] sm:$0xff]
        %v4541 = vld [vmem:[%s4537 + $0x18] sm:$0xff]
        %v4543 = vsel %vm3358, %v4538, 0
        %v4546 = vsel %vm3358, %v4539, 0
        %v4549 = vsel %vm3358, %v4540, 0
        %v4552 = vsel %vm3358, %v4541, 0
        %4554 = vmatprep.subr.mxu0 0.0
        %4555 = vmatpush1.msra.mxu0 %v4443
        %4556 = vmatprep.subr.mxu0 0.0
        %4557 = vmatpush1.msra.mxu0 %v4445
        %4558 = vmatprep.subr.mxu0 0.0
        %4559 = vmatpush1.msra.mxu0 0.0
        %4560 = vmatprep.subr.mxu0 0.0
        %4561 = vmatpush1.msra.mxu0 0.0
        %4562 = vmatprep.subr.mxu0 0.0
        %4563 = vmatpush1.msra.mxu0 0.0
        %4564 = vmatprep.subr.mxu0 0.0
        %4565 = vmatpush1.msra.mxu0 0.0
        %4566 = vmatprep.subr.mxu0 0.0
        %4567 = vmatpush1.msra.mxu0 0.0
        %4568 = vmatprep.subr.mxu0 0.0
        %4569 = vmatpush1.msra.mxu0 0.0
        %4570 = vmatprep.subr.mxu0 0.0
        %4571 = vmatpush1.msra.mxu0 0.0
        %4572 = vmatprep.subr.mxu0 0.0
        %4573 = vmatpush1.msra.mxu0 0.0
        %4574 = vmatprep.subr.mxu0 0.0
        %4575 = vmatpush1.msra.mxu0 0.0
        %4576 = vmatprep.subr.mxu0 0.0
        %4577 = vmatpush1.msra.mxu0 0.0
        %4578 = vmatprep.subr.mxu0 0.0
        %4579 = vmatpush1.msra.mxu0 0.0
        %4580 = vmatprep.subr.mxu0 0.0
        %4581 = vmatpush1.msra.mxu0 0.0
        %4582 = vmatprep.subr.mxu0 0.0
        %4583 = vmatpush1.msra.mxu0 0.0
        %4584 = vmatprep.subr.mxu0 0.0
        %4585 = vmatpush1.msra.mxu0 0.0
        %4586 = vmatprep.subr.mxu0 0.0
        %4587 = vmatpush1.msra.mxu0 0.0
        %4588 = vmatprep.subr.mxu0 0.0
        %4589 = vmatpush1.msra.mxu0 0.0
        %4590 = vmatprep.subr.mxu0 0.0
        %4591 = vmatpush1.msra.mxu0 0.0
        %4592 = vmatprep.subr.mxu0 0.0
        %4593 = vmatpush1.msra.mxu0 0.0
        %4594 = vmatprep.subr.mxu0 0.0
        %4595 = vmatpush1.msra.mxu0 0.0
        %4596 = vmatprep.subr.mxu0 0.0
        %4597 = vmatpush1.msra.mxu0 0.0
        %4598 = vmatprep.subr.mxu0 0.0
        %4599 = vmatpush1.msra.mxu0 0.0
        %4600 = vmatprep.subr.mxu0 0.0
        %4601 = vmatpush1.msra.mxu0 0.0
        %4602 = vmatprep.subr.mxu0 0.0
        %4603 = vmatpush1.msra.mxu0 0.0
        %4604 = vmatprep.subr.mxu0 0.0
        %4605 = vmatpush1.msra.mxu0 0.0
        %4606 = vmatprep.subr.mxu0 0.0
        %4607 = vmatpush1.msra.mxu0 0.0
        %4608 = vmatprep.subr.mxu0 0.0
        %4609 = vmatpush1.msra.mxu0 0.0
        %4610 = vmatprep.subr.mxu0 0.0
        %4611 = vmatpush1.msra.mxu0 0.0
        %4612 = vmatprep.subr.mxu0 0.0
        %4613 = vmatpush1.msra.mxu0 0.0
        %4614 = vmatprep.subr.mxu0 0.0
        %4615 = vmatpush1.msra.mxu0 0.0
        %4616 = vmatprep.subr.mxu0 0.0
        %4617 = vmatpush1.msra.mxu0 0.0
        %4618 = vmatprep.mubr.f32.mxu0 0.0
        %4619 = vmatmul.mubr.f32.gmra.mrb[0].mxu0 %v4543
        %v4620 = vpop.f32.mrb[0].mxu0
        %v4621 = vadd.f32 0.0, %v4620
        %v4622 = vpop.f32.mrb[0].mxu0
        %4623 = vmatprep.mubr.f32.mxu0 0.0
        %4624 = vmatmul.mubr.f32.gmra.mrb[0].mxu0 %v4546
        %v4625 = vpop.f32.mrb[0].mxu0
        %v4626 = vadd.f32 0.0, %v4625
        %v4627 = vpop.f32.mrb[0].mxu0
        %4628 = vmatprep.mubr.f32.mxu0 0.0
        %4629 = vmatmul.mubr.f32.gmra.mrb[0].mxu0 %v4549
        %v4630 = vpop.f32.mrb[0].mxu0
        %v4631 = vadd.f32 0.0, %v4630
        %v4632 = vpop.f32.mrb[0].mxu0
        %4633 = vmatprep.mubr.f32.mxu0 0.0
        %4634 = vmatmul.mubr.f32.gmra.mrb[0].mxu0 %v4552
        %v4635 = vpop.f32.mrb[0].mxu0
        %v4636 = vadd.f32 0.0, %v4635
        %v4637 = vpop.f32.mrb[0].mxu0
        %4638 = vdwg.mxu0
        %v4639 = vadd.f32 %v4438, %v4621
        %v4640 = vadd.f32 %v4439, %v4626
        %v4641 = vadd.f32 %v4440, %v4631
        %v4642 = vadd.f32 %v4441, %v4636
        %4643 = vrot.lane.b32.xlu0 %v3347, 125
        %v4644 = vpop.permute.xlu0 %4643
        %4645 = vrot.lane.b32.xlu0 %v3348, 125
        %v4646 = vpop.permute.xlu0 %4645
        %4649 = vmatprep.subr.mxu0 0.0
        %4650 = vmatpush1.msra.mxu0 %v4644
        %4651 = vmatprep.subr.mxu0 0.0
        %4652 = vmatpush1.msra.mxu0 %v4646
        %4653 = vmatprep.subr.mxu0 0.0
        %4654 = vmatpush1.msra.mxu0 0.0
        %4655 = vmatprep.subr.mxu0 0.0
        %4656 = vmatpush1.msra.mxu0 0.0
        %4657 = vmatprep.subr.mxu0 0.0
        %4658 = vmatpush1.msra.mxu0 0.0
        %4659 = vmatprep.subr.mxu0 0.0
        %4660 = vmatpush1.msra.mxu0 0.0
        %4661 = vmatprep.subr.mxu0 0.0
        %4662 = vmatpush1.msra.mxu0 0.0
        %4663 = vmatprep.subr.mxu0 0.0
        %4664 = vmatpush1.msra.mxu0 0.0
        %4665 = vmatprep.subr.mxu0 0.0
        %4666 = vmatpush1.msra.mxu0 0.0
        %4667 = vmatprep.subr.mxu0 0.0
        %4668 = vmatpush1.msra.mxu0 0.0
        %4669 = vmatprep.subr.mxu0 0.0
        %4670 = vmatpush1.msra.mxu0 0.0
        %4671 = vmatprep.subr.mxu0 0.0
        %4672 = vmatpush1.msra.mxu0 0.0
        %4673 = vmatprep.subr.mxu0 0.0
        %4674 = vmatpush1.msra.mxu0 0.0
        %4675 = vmatprep.subr.mxu0 0.0
        %4676 = vmatpush1.msra.mxu0 0.0
        %4677 = vmatprep.subr.mxu0 0.0
        %4678 = vmatpush1.msra.mxu0 0.0
        %4679 = vmatprep.subr.mxu0 0.0
        %4680 = vmatpush1.msra.mxu0 0.0
        %4681 = vmatprep.subr.mxu0 0.0
        %4682 = vmatpush1.msra.mxu0 0.0
        %4683 = vmatprep.subr.mxu0 0.0
        %4684 = vmatpush1.msra.mxu0 0.0
        %4685 = vmatprep.subr.mxu0 0.0
        %4686 = vmatpush1.msra.mxu0 0.0
        %4687 = vmatprep.subr.mxu0 0.0
        %4688 = vmatpush1.msra.mxu0 0.0
        %4689 = vmatprep.subr.mxu0 0.0
        %4690 = vmatpush1.msra.mxu0 0.0
        %4691 = vmatprep.subr.mxu0 0.0
        %4692 = vmatpush1.msra.mxu0 0.0
        %4693 = vmatprep.subr.mxu0 0.0
        %4694 = vmatpush1.msra.mxu0 0.0
        %4695 = vmatprep.subr.mxu0 0.0
        %4696 = vmatpush1.msra.mxu0 0.0
        %4697 = vmatprep.subr.mxu0 0.0
        %4698 = vmatpush1.msra.mxu0 0.0
        %4699 = vmatprep.subr.mxu0 0.0
        %4700 = vmatpush1.msra.mxu0 0.0
        %4701 = vmatprep.subr.mxu0 0.0
        %4702 = vmatpush1.msra.mxu0 0.0
        %4703 = vmatprep.subr.mxu0 0.0
        %4704 = vmatpush1.msra.mxu0 0.0
        %4705 = vmatprep.subr.mxu0 0.0
        %4706 = vmatpush1.msra.mxu0 0.0
        %4707 = vmatprep.subr.mxu0 0.0
        %4708 = vmatpush1.msra.mxu0 0.0
        %4709 = vmatprep.subr.mxu0 0.0
        %4710 = vmatpush1.msra.mxu0 0.0
        %4711 = vmatprep.subr.mxu0 0.0
        %4712 = vmatpush1.msra.mxu0 0.0
        %4713 = vmatprep.mubr.f32.mxu0 0.0
        %4714 = vmatmul.mubr.f32.gmra.mrb[0].mxu0 %v4543
        %v4715 = vpop.f32.mrb[0].mxu0
        %v4716 = vadd.f32 0.0, %v4715
        %v4717 = vpop.f32.mrb[0].mxu0
        %4718 = vmatprep.mubr.f32.mxu0 0.0
        %4719 = vmatmul.mubr.f32.gmra.mrb[0].mxu0 %v4546
        %v4720 = vpop.f32.mrb[0].mxu0
        %v4721 = vadd.f32 0.0, %v4720
        %v4722 = vpop.f32.mrb[0].mxu0
        %4723 = vmatprep.mubr.f32.mxu0 0.0
        %4724 = vmatmul.mubr.f32.gmra.mrb[0].mxu0 %v4549
        %v4725 = vpop.f32.mrb[0].mxu0
        %v4726 = vadd.f32 0.0, %v4725
        %v4727 = vpop.f32.mrb[0].mxu0
        %4728 = vmatprep.mubr.f32.mxu0 0.0
        %4729 = vmatmul.mubr.f32.gmra.mrb[0].mxu0 %v4552
        %v4730 = vpop.f32.mrb[0].mxu0
        %v4731 = vadd.f32 0.0, %v4730
        %v4732 = vpop.f32.mrb[0].mxu0
        %4733 = vdwg.mxu0
        %v4734 = vadd.f32 %v4533, %v4716
        %v4735 = vadd.f32 %v4534, %v4721
        %v4736 = vadd.f32 %v4535, %v4726
        %v4737 = vadd.f32 %v4536, %v4731
        %s4738 = scalar_lea.vmem %s3, 224
        %v4739 = vld [vmem:[%s4738] sm:$0xff]
        %v4740 = vld [vmem:[%s4738 + $0x8] sm:$0xff]
        %v4741 = vld [vmem:[%s4738 + $0x10] sm:$0xff]
        %v4742 = vld [vmem:[%s4738 + $0x18] sm:$0xff]
        %v4744 = vsel %vm3358, %v4739, 0
        %v4747 = vsel %vm3358, %v4740, 0
        %v4750 = vsel %vm3358, %v4741, 0
        %v4753 = vsel %vm3358, %v4742, 0
        %4755 = vmatprep.subr.mxu0 0.0
        %4756 = vmatpush1.msra.mxu0 %v4644
        %4757 = vmatprep.subr.mxu0 0.0
        %4758 = vmatpush1.msra.mxu0 %v4646
        %4759 = vmatprep.subr.mxu0 0.0
        %4760 = vmatpush1.msra.mxu0 0.0
        %4761 = vmatprep.subr.mxu0 0.0
        %4762 = vmatpush1.msra.mxu0 0.0
        %4763 = vmatprep.subr.mxu0 0.0
        %4764 = vmatpush1.msra.mxu0 0.0
        %4765 = vmatprep.subr.mxu0 0.0
        %4766 = vmatpush1.msra.mxu0 0.0
        %4767 = vmatprep.subr.mxu0 0.0
        %4768 = vmatpush1.msra.mxu0 0.0
        %4769 = vmatprep.subr.mxu0 0.0
        %4770 = vmatpush1.msra.mxu0 0.0
        %4771 = vmatprep.subr.mxu0 0.0
        %4772 = vmatpush1.msra.mxu0 0.0
        %4773 = vmatprep.subr.mxu0 0.0
        %4774 = vmatpush1.msra.mxu0 0.0
        %4775 = vmatprep.subr.mxu0 0.0
        %4776 = vmatpush1.msra.mxu0 0.0
        %4777 = vmatprep.subr.mxu0 0.0
        %4778 = vmatpush1.msra.mxu0 0.0
        %4779 = vmatprep.subr.mxu0 0.0
        %4780 = vmatpush1.msra.mxu0 0.0
        %4781 = vmatprep.subr.mxu0 0.0
        %4782 = vmatpush1.msra.mxu0 0.0
        %4783 = vmatprep.subr.mxu0 0.0
        %4784 = vmatpush1.msra.mxu0 0.0
        %4785 = vmatprep.subr.mxu0 0.0
        %4786 = vmatpush1.msra.mxu0 0.0
        %4787 = vmatprep.subr.mxu0 0.0
        %4788 = vmatpush1.msra.mxu0 0.0
        %4789 = vmatprep.subr.mxu0 0.0
        %4790 = vmatpush1.msra.mxu0 0.0
        %4791 = vmatprep.subr.mxu0 0.0
        %4792 = vmatpush1.msra.mxu0 0.0
        %4793 = vmatprep.subr.mxu0 0.0
        %4794 = vmatpush1.msra.mxu0 0.0
        %4795 = vmatprep.subr.mxu0 0.0
        %4796 = vmatpush1.msra.mxu0 0.0
        %4797 = vmatprep.subr.mxu0 0.0
        %4798 = vmatpush1.msra.mxu0 0.0
        %4799 = vmatprep.subr.mxu0 0.0
        %4800 = vmatpush1.msra.mxu0 0.0
        %4801 = vmatprep.subr.mxu0 0.0
        %4802 = vmatpush1.msra.mxu0 0.0
        %4803 = vmatprep.subr.mxu0 0.0
        %4804 = vmatpush1.msra.mxu0 0.0
        %4805 = vmatprep.subr.mxu0 0.0
        %4806 = vmatpush1.msra.mxu0 0.0
        %4807 = vmatprep.subr.mxu0 0.0
        %4808 = vmatpush1.msra.mxu0 0.0
        %4809 = vmatprep.subr.mxu0 0.0
        %4810 = vmatpush1.msra.mxu0 0.0
        %4811 = vmatprep.subr.mxu0 0.0
        %4812 = vmatpush1.msra.mxu0 0.0
        %4813 = vmatprep.subr.mxu0 0.0
        %4814 = vmatpush1.msra.mxu0 0.0
        %4815 = vmatprep.subr.mxu0 0.0
        %4816 = vmatpush1.msra.mxu0 0.0
        %4817 = vmatprep.subr.mxu0 0.0
        %4818 = vmatpush1.msra.mxu0 0.0
        %4819 = vmatprep.mubr.f32.mxu0 0.0
        %4820 = vmatmul.mubr.f32.gmra.mrb[0].mxu0 %v4744
        %v4821 = vpop.f32.mrb[0].mxu0
        %v4822 = vadd.f32 0.0, %v4821
        %v4823 = vpop.f32.mrb[0].mxu0
        %4824 = vmatprep.mubr.f32.mxu0 0.0
        %4825 = vmatmul.mubr.f32.gmra.mrb[0].mxu0 %v4747
        %v4826 = vpop.f32.mrb[0].mxu0
        %v4827 = vadd.f32 0.0, %v4826
        %v4828 = vpop.f32.mrb[0].mxu0
        %4829 = vmatprep.mubr.f32.mxu0 0.0
        %4830 = vmatmul.mubr.f32.gmra.mrb[0].mxu0 %v4750
        %v4831 = vpop.f32.mrb[0].mxu0
        %v4832 = vadd.f32 0.0, %v4831
        %v4833 = vpop.f32.mrb[0].mxu0
        %4834 = vmatprep.mubr.f32.mxu0 0.0
        %4835 = vmatmul.mubr.f32.gmra.mrb[0].mxu0 %v4753
        %v4836 = vpop.f32.mrb[0].mxu0
        %v4837 = vadd.f32 0.0, %v4836
        %v4838 = vpop.f32.mrb[0].mxu0
        %4839 = vdwg.mxu0
        %v4840 = vadd.f32 %v4639, %v4822
        %v4841 = vadd.f32 %v4640, %v4827
        %v4842 = vadd.f32 %v4641, %v4832
        %v4843 = vadd.f32 %v4642, %v4837
        %4844 = vrot.lane.b32.xlu0 %v3341, 124
        %v4845 = vpop.permute.xlu0 %4844
        %4846 = vrot.lane.b32.xlu0 %v3342, 124
        %v4847 = vpop.permute.xlu0 %4846
        %4850 = vmatprep.subr.mxu0 0.0
        %4851 = vmatpush1.msra.mxu0 %v4845
        %4852 = vmatprep.subr.mxu0 0.0
        %4853 = vmatpush1.msra.mxu0 %v4847
        %4854 = vmatprep.subr.mxu0 0.0
        %4855 = vmatpush1.msra.mxu0 0.0
        %4856 = vmatprep.subr.mxu0 0.0
        %4857 = vmatpush1.msra.mxu0 0.0
        %4858 = vmatprep.subr.mxu0 0.0
        %4859 = vmatpush1.msra.mxu0 0.0
        %4860 = vmatprep.subr.mxu0 0.0
        %4861 = vmatpush1.msra.mxu0 0.0
        %4862 = vmatprep.subr.mxu0 0.0
        %4863 = vmatpush1.msra.mxu0 0.0
        %4864 = vmatprep.subr.mxu0 0.0
        %4865 = vmatpush1.msra.mxu0 0.0
        %4866 = vmatprep.subr.mxu0 0.0
        %4867 = vmatpush1.msra.mxu0 0.0
        %4868 = vmatprep.subr.mxu0 0.0
        %4869 = vmatpush1.msra.mxu0 0.0
        %4870 = vmatprep.subr.mxu0 0.0
        %4871 = vmatpush1.msra.mxu0 0.0
        %4872 = vmatprep.subr.mxu0 0.0
        %4873 = vmatpush1.msra.mxu0 0.0
        %4874 = vmatprep.subr.mxu0 0.0
        %4875 = vmatpush1.msra.mxu0 0.0
        %4876 = vmatprep.subr.mxu0 0.0
        %4877 = vmatpush1.msra.mxu0 0.0
        %4878 = vmatprep.subr.mxu0 0.0
        %4879 = vmatpush1.msra.mxu0 0.0
        %4880 = vmatprep.subr.mxu0 0.0
        %4881 = vmatpush1.msra.mxu0 0.0
        %4882 = vmatprep.subr.mxu0 0.0
        %4883 = vmatpush1.msra.mxu0 0.0
        %4884 = vmatprep.subr.mxu0 0.0
        %4885 = vmatpush1.msra.mxu0 0.0
        %4886 = vmatprep.subr.mxu0 0.0
        %4887 = vmatpush1.msra.mxu0 0.0
        %4888 = vmatprep.subr.mxu0 0.0
        %4889 = vmatpush1.msra.mxu0 0.0
        %4890 = vmatprep.subr.mxu0 0.0
        %4891 = vmatpush1.msra.mxu0 0.0
        %4892 = vmatprep.subr.mxu0 0.0
        %4893 = vmatpush1.msra.mxu0 0.0
        %4894 = vmatprep.subr.mxu0 0.0
        %4895 = vmatpush1.msra.mxu0 0.0
        %4896 = vmatprep.subr.mxu0 0.0
        %4897 = vmatpush1.msra.mxu0 0.0
        %4898 = vmatprep.subr.mxu0 0.0
        %4899 = vmatpush1.msra.mxu0 0.0
        %4900 = vmatprep.subr.mxu0 0.0
        %4901 = vmatpush1.msra.mxu0 0.0
        %4902 = vmatprep.subr.mxu0 0.0
        %4903 = vmatpush1.msra.mxu0 0.0
        %4904 = vmatprep.subr.mxu0 0.0
        %4905 = vmatpush1.msra.mxu0 0.0
        %4906 = vmatprep.subr.mxu0 0.0
        %4907 = vmatpush1.msra.mxu0 0.0
        %4908 = vmatprep.subr.mxu0 0.0
        %4909 = vmatpush1.msra.mxu0 0.0
        %4910 = vmatprep.subr.mxu0 0.0
        %4911 = vmatpush1.msra.mxu0 0.0
        %4912 = vmatprep.subr.mxu0 0.0
        %4913 = vmatpush1.msra.mxu0 0.0
        %4914 = vmatprep.mubr.f32.mxu0 0.0
        %4915 = vmatmul.mubr.f32.gmra.mrb[0].mxu0 %v4744
        %v4916 = vpop.f32.mrb[0].mxu0
        %v4917 = vadd.f32 0.0, %v4916
        %v4918 = vpop.f32.mrb[0].mxu0
        %4919 = vmatprep.mubr.f32.mxu0 0.0
        %4920 = vmatmul.mubr.f32.gmra.mrb[0].mxu0 %v4747
        %v4921 = vpop.f32.mrb[0].mxu0
        %v4922 = vadd.f32 0.0, %v4921
        %v4923 = vpop.f32.mrb[0].mxu0
        %4924 = vmatprep.mubr.f32.mxu0 0.0
        %4925 = vmatmul.mubr.f32.gmra.mrb[0].mxu0 %v4750
        %v4926 = vpop.f32.mrb[0].mxu0
        %v4927 = vadd.f32 0.0, %v4926
        %v4928 = vpop.f32.mrb[0].mxu0
        %4929 = vmatprep.mubr.f32.mxu0 0.0
        %4930 = vmatmul.mubr.f32.gmra.mrb[0].mxu0 %v4753
        %v4931 = vpop.f32.mrb[0].mxu0
        %v4932 = vadd.f32 0.0, %v4931
        %v4933 = vpop.f32.mrb[0].mxu0
        %4934 = vdwg.mxu0
        %v4935 = vadd.f32 %v4734, %v4917
        %v4936 = vadd.f32 %v4735, %v4922
        %v4937 = vadd.f32 %v4736, %v4927
        %v4938 = vadd.f32 %v4737, %v4932
        %s4939 = scalar_lea.vmem %s3, 256
        %v4940 = vld [vmem:[%s4939] sm:$0xff]
        %v4941 = vld [vmem:[%s4939 + $0x8] sm:$0xff]
        %v4942 = vld [vmem:[%s4939 + $0x10] sm:$0xff]
        %v4943 = vld [vmem:[%s4939 + $0x18] sm:$0xff]
        %v4945 = vsel %vm3358, %v4940, 0
        %v4948 = vsel %vm3358, %v4941, 0
        %v4951 = vsel %vm3358, %v4942, 0
        %v4954 = vsel %vm3358, %v4943, 0
        %4956 = vmatprep.subr.mxu0 0.0
        %4957 = vmatpush1.msra.mxu0 %v4845
        %4958 = vmatprep.subr.mxu0 0.0
        %4959 = vmatpush1.msra.mxu0 %v4847
        %4960 = vmatprep.subr.mxu0 0.0
        %4961 = vmatpush1.msra.mxu0 0.0
        %4962 = vmatprep.subr.mxu0 0.0
        %4963 = vmatpush1.msra.mxu0 0.0
        %4964 = vmatprep.subr.mxu0 0.0
        %4965 = vmatpush1.msra.mxu0 0.0
        %4966 = vmatprep.subr.mxu0 0.0
        %4967 = vmatpush1.msra.mxu0 0.0
        %4968 = vmatprep.subr.mxu0 0.0
        %4969 = vmatpush1.msra.mxu0 0.0
        %4970 = vmatprep.subr.mxu0 0.0
        %4971 = vmatpush1.msra.mxu0 0.0
        %4972 = vmatprep.subr.mxu0 0.0
        %4973 = vmatpush1.msra.mxu0 0.0
        %4974 = vmatprep.subr.mxu0 0.0
        %4975 = vmatpush1.msra.mxu0 0.0
        %4976 = vmatprep.subr.mxu0 0.0
        %4977 = vmatpush1.msra.mxu0 0.0
        %4978 = vmatprep.subr.mxu0 0.0
        %4979 = vmatpush1.msra.mxu0 0.0
        %4980 = vmatprep.subr.mxu0 0.0
        %4981 = vmatpush1.msra.mxu0 0.0
        %4982 = vmatprep.subr.mxu0 0.0
        %4983 = vmatpush1.msra.mxu0 0.0
        %4984 = vmatprep.subr.mxu0 0.0
        %4985 = vmatpush1.msra.mxu0 0.0
        %4986 = vmatprep.subr.mxu0 0.0
        %4987 = vmatpush1.msra.mxu0 0.0
        %4988 = vmatprep.subr.mxu0 0.0
        %4989 = vmatpush1.msra.mxu0 0.0
        %4990 = vmatprep.subr.mxu0 0.0
        %4991 = vmatpush1.msra.mxu0 0.0
        %4992 = vmatprep.subr.mxu0 0.0
        %4993 = vmatpush1.msra.mxu0 0.0
        %4994 = vmatprep.subr.mxu0 0.0
        %4995 = vmatpush1.msra.mxu0 0.0
        %4996 = vmatprep.subr.mxu0 0.0
        %4997 = vmatpush1.msra.mxu0 0.0
        %4998 = vmatprep.subr.mxu0 0.0
        %4999 = vmatpush1.msra.mxu0 0.0
        %5000 = vmatprep.subr.mxu0 0.0
        %5001 = vmatpush1.msra.mxu0 0.0
        %5002 = vmatprep.subr.mxu0 0.0
        %5003 = vmatpush1.msra.mxu0 0.0
        %5004 = vmatprep.subr.mxu0 0.0
        %5005 = vmatpush1.msra.mxu0 0.0
        %5006 = vmatprep.subr.mxu0 0.0
        %5007 = vmatpush1.msra.mxu0 0.0
        %5008 = vmatprep.subr.mxu0 0.0
        %5009 = vmatpush1.msra.mxu0 0.0
        %5010 = vmatprep.subr.mxu0 0.0
        %5011 = vmatpush1.msra.mxu0 0.0
        %5012 = vmatprep.subr.mxu0 0.0
        %5013 = vmatpush1.msra.mxu0 0.0
        %5014 = vmatprep.subr.mxu0 0.0
        %5015 = vmatpush1.msra.mxu0 0.0
        %5016 = vmatprep.subr.mxu0 0.0
        %5017 = vmatpush1.msra.mxu0 0.0
        %5018 = vmatprep.subr.mxu0 0.0
        %5019 = vmatpush1.msra.mxu0 0.0
        %5020 = vmatprep.mubr.f32.mxu0 0.0
        %5021 = vmatmul.mubr.f32.gmra.mrb[0].mxu0 %v4945
        %v5022 = vpop.f32.mrb[0].mxu0
        %v5023 = vadd.f32 0.0, %v5022
        %v5024 = vpop.f32.mrb[0].mxu0
        %5025 = vmatprep.mubr.f32.mxu0 0.0
        %5026 = vmatmul.mubr.f32.gmra.mrb[0].mxu0 %v4948
        %v5027 = vpop.f32.mrb[0].mxu0
        %v5028 = vadd.f32 0.0, %v5027
        %v5029 = vpop.f32.mrb[0].mxu0
        %5030 = vmatprep.mubr.f32.mxu0 0.0
        %5031 = vmatmul.mubr.f32.gmra.mrb[0].mxu0 %v4951
        %v5032 = vpop.f32.mrb[0].mxu0
        %v5033 = vadd.f32 0.0, %v5032
        %v5034 = vpop.f32.mrb[0].mxu0
        %5035 = vmatprep.mubr.f32.mxu0 0.0
        %5036 = vmatmul.mubr.f32.gmra.mrb[0].mxu0 %v4954
        %v5037 = vpop.f32.mrb[0].mxu0
        %v5038 = vadd.f32 0.0, %v5037
        %v5039 = vpop.f32.mrb[0].mxu0
        %5040 = vdwg.mxu0
        %v5041 = vadd.f32 %v4840, %v5023
        %v5042 = vadd.f32 %v4841, %v5028
        %v5043 = vadd.f32 %v4842, %v5033
        %v5044 = vadd.f32 %v4843, %v5038
        %5045 = vrot.lane.b32.xlu0 %v3347, 124
        %v5046 = vpop.permute.xlu0 %5045
        %5047 = vrot.lane.b32.xlu0 %v3348, 124
        %v5048 = vpop.permute.xlu0 %5047
        %5051 = vmatprep.subr.mxu0 0.0
        %5052 = vmatpush1.msra.mxu0 %v5046
        %5053 = vmatprep.subr.mxu0 0.0
        %5054 = vmatpush1.msra.mxu0 %v5048
        %5055 = vmatprep.subr.mxu0 0.0
        %5056 = vmatpush1.msra.mxu0 0.0
        %5057 = vmatprep.subr.mxu0 0.0
        %5058 = vmatpush1.msra.mxu0 0.0
        %5059 = vmatprep.subr.mxu0 0.0
        %5060 = vmatpush1.msra.mxu0 0.0
        %5061 = vmatprep.subr.mxu0 0.0
        %5062 = vmatpush1.msra.mxu0 0.0
        %5063 = vmatprep.subr.mxu0 0.0
        %5064 = vmatpush1.msra.mxu0 0.0
        %5065 = vmatprep.subr.mxu0 0.0
        %5066 = vmatpush1.msra.mxu0 0.0
        %5067 = vmatprep.subr.mxu0 0.0
        %5068 = vmatpush1.msra.mxu0 0.0
        %5069 = vmatprep.subr.mxu0 0.0
        %5070 = vmatpush1.msra.mxu0 0.0
        %5071 = vmatprep.subr.mxu0 0.0
        %5072 = vmatpush1.msra.mxu0 0.0
        %5073 = vmatprep.subr.mxu0 0.0
        %5074 = vmatpush1.msra.mxu0 0.0
        %5075 = vmatprep.subr.mxu0 0.0
        %5076 = vmatpush1.msra.mxu0 0.0
        %5077 = vmatprep.subr.mxu0 0.0
        %5078 = vmatpush1.msra.mxu0 0.0
        %5079 = vmatprep.subr.mxu0 0.0
        %5080 = vmatpush1.msra.mxu0 0.0
        %5081 = vmatprep.subr.mxu0 0.0
        %5082 = vmatpush1.msra.mxu0 0.0
        %5083 = vmatprep.subr.mxu0 0.0
        %5084 = vmatpush1.msra.mxu0 0.0
        %5085 = vmatprep.subr.mxu0 0.0
        %5086 = vmatpush1.msra.mxu0 0.0
        %5087 = vmatprep.subr.mxu0 0.0
        %5088 = vmatpush1.msra.mxu0 0.0
        %5089 = vmatprep.subr.mxu0 0.0
        %5090 = vmatpush1.msra.mxu0 0.0
        %5091 = vmatprep.subr.mxu0 0.0
        %5092 = vmatpush1.msra.mxu0 0.0
        %5093 = vmatprep.subr.mxu0 0.0
        %5094 = vmatpush1.msra.mxu0 0.0
        %5095 = vmatprep.subr.mxu0 0.0
        %5096 = vmatpush1.msra.mxu0 0.0
        %5097 = vmatprep.subr.mxu0 0.0
        %5098 = vmatpush1.msra.mxu0 0.0
        %5099 = vmatprep.subr.mxu0 0.0
        %5100 = vmatpush1.msra.mxu0 0.0
        %5101 = vmatprep.subr.mxu0 0.0
        %5102 = vmatpush1.msra.mxu0 0.0
        %5103 = vmatprep.subr.mxu0 0.0
        %5104 = vmatpush1.msra.mxu0 0.0
        %5105 = vmatprep.subr.mxu0 0.0
        %5106 = vmatpush1.msra.mxu0 0.0
        %5107 = vmatprep.subr.mxu0 0.0
        %5108 = vmatpush1.msra.mxu0 0.0
        %5109 = vmatprep.subr.mxu0 0.0
        %5110 = vmatpush1.msra.mxu0 0.0
        %5111 = vmatprep.subr.mxu0 0.0
        %5112 = vmatpush1.msra.mxu0 0.0
        %5113 = vmatprep.subr.mxu0 0.0
        %5114 = vmatpush1.msra.mxu0 0.0
        %5115 = vmatprep.mubr.f32.mxu0 0.0
        %5116 = vmatmul.mubr.f32.gmra.mrb[0].mxu0 %v4945
        %v5117 = vpop.f32.mrb[0].mxu0
        %v5118 = vadd.f32 0.0, %v5117
        %v5119 = vpop.f32.mrb[0].mxu0
        %5120 = vmatprep.mubr.f32.mxu0 0.0
        %5121 = vmatmul.mubr.f32.gmra.mrb[0].mxu0 %v4948
        %v5122 = vpop.f32.mrb[0].mxu0
        %v5123 = vadd.f32 0.0, %v5122
        %v5124 = vpop.f32.mrb[0].mxu0
        %5125 = vmatprep.mubr.f32.mxu0 0.0
        %5126 = vmatmul.mubr.f32.gmra.mrb[0].mxu0 %v4951
        %v5127 = vpop.f32.mrb[0].mxu0
        %v5128 = vadd.f32 0.0, %v5127
        %v5129 = vpop.f32.mrb[0].mxu0
        %5130 = vmatprep.mubr.f32.mxu0 0.0
        %5131 = vmatmul.mubr.f32.gmra.mrb[0].mxu0 %v4954
        %v5132 = vpop.f32.mrb[0].mxu0
        %v5133 = vadd.f32 0.0, %v5132
        %v5134 = vpop.f32.mrb[0].mxu0
        %5135 = vdwg.mxu0
        %v5136 = vadd.f32 %v4935, %v5118
        %v5137 = vadd.f32 %v4936, %v5123
        %v5138 = vadd.f32 %v4937, %v5128
        %v5139 = vadd.f32 %v4938, %v5133
        %v5140 = vld [vmem:[%s4] sm:$0xff]
        %v5141 = vld [vmem:[%s4 + $0x8] sm:$0xff]
        %v5142 = vld [vmem:[%s4 + $0x10] sm:$0xff]
        %v5143 = vld [vmem:[%s4 + $0x18] sm:$0xff]
        %v5144 = vmax.f32 %v5041, %v5136
        %v5145 = vmax.f32 %v5042, %v5137
        %v5146 = vmax.f32 %v5043, %v5138
        %v5147 = vmax.f32 %v5044, %v5139
        %5149 = vset.pattern.permute.xlu0 0
        %5150 = vperm.xlu0 %5149, %v5140
        %v5151 = vpop.permute.xlu0 %5150
        %5154 = vset.pattern.permute.xlu0 0
        %5155 = vperm.xlu0 %5154, %v5141
        %v5156 = vpop.permute.xlu0 %5155
        %5159 = vset.pattern.permute.xlu0 0
        %5160 = vperm.xlu0 %5159, %v5142
        %v5161 = vpop.permute.xlu0 %5160
        %5164 = vset.pattern.permute.xlu0 0
        %5165 = vperm.xlu0 %5164, %v5143
        %v5166 = vpop.permute.xlu0 %5165
        %v5168 = vadd.f32 %v5144, %v5151
        %v5169 = vadd.f32 %v5145, %v5156
        %v5170 = vadd.f32 %v5146, %v5161
        %v5171 = vadd.f32 %v5147, %v5166
        %v5172 = vmax.f32 %v5168, 0.0
        %v5173 = vmax.f32 %v5169, 0.0
        %v5174 = vmax.f32 %v5170, 0.0
        %v5175 = vmax.f32 %v5171, 0.0
        %v5176 = vld [vmem:[%s5] sm:$0xff]
        %v5177 = vld [vmem:[%s5 + $0x8] sm:$0xff]
        %v5178 = vld [vmem:[%s5 + $0x10] sm:$0xff]
        %v5179 = vld [vmem:[%s5 + $0x18] sm:$0xff]
        %5181 = vset.pattern.permute.xlu0 0
        %5182 = vperm.xlu0 %5181, %v5172
        %v5183 = vpop.permute.xlu0 %5182
        %5186 = vset.pattern.permute.xlu0 0
        %5187 = vperm.xlu0 %5186, %v5173
        %v5188 = vpop.permute.xlu0 %5187
        %5191 = vset.pattern.permute.xlu0 0
        %5192 = vperm.xlu0 %5191, %v5174
        %v5193 = vpop.permute.xlu0 %5192
        %5196 = vset.pattern.permute.xlu0 0
        %5197 = vperm.xlu0 %5196, %v5175
        %v5198 = vpop.permute.xlu0 %5197
        %v5200 = vmul.f32 %v5183, %v5176
        %v5201 = vmul.f32 %v5188, %v5177
        %v5202 = vmul.f32 %v5193, %v5178
        %v5203 = vmul.f32 %v5198, %v5179
        %v5204 = vadd.f32 %v5200, 0.0
        %v5205 = vadd.f32 %v5201, 0.0
        %v5206 = vadd.f32 %v5202, 0.0
        %v5207 = vadd.f32 %v5203, 0.0
        %s5208 = scalar_lea.vmem %s5, 32
        %v5209 = vld [vmem:[%s5208] sm:$0xff]
        %v5210 = vld [vmem:[%s5208 + $0x8] sm:$0xff]
        %v5211 = vld [vmem:[%s5208 + $0x10] sm:$0xff]
        %v5212 = vld [vmem:[%s5208 + $0x18] sm:$0xff]
        %5213 = vset.pattern.permute.xlu0 1
        %5214 = vperm.xlu0 %5213, %v5172
        %v5215 = vpop.permute.xlu0 %5214
        %5217 = vset.pattern.permute.xlu0 1
        %5218 = vperm.xlu0 %5217, %v5173
        %v5219 = vpop.permute.xlu0 %5218
        %5221 = vset.pattern.permute.xlu0 1
        %5222 = vperm.xlu0 %5221, %v5174
        %v5223 = vpop.permute.xlu0 %5222
        %5225 = vset.pattern.permute.xlu0 1
        %5226 = vperm.xlu0 %5225, %v5175
        %v5227 = vpop.permute.xlu0 %5226
        %v5229 = vmul.f32 %v5215, %v5209
        %v5230 = vmul.f32 %v5219, %v5210
        %v5231 = vmul.f32 %v5223, %v5211
        %v5232 = vmul.f32 %v5227, %v5212
        %v5233 = vadd.f32 %v5204, %v5229
        %v5234 = vadd.f32 %v5205, %v5230
        %v5235 = vadd.f32 %v5206, %v5231
        %v5236 = vadd.f32 %v5207, %v5232
        %s5237 = scalar_lea.vmem %s5, 64
        %v5238 = vld [vmem:[%s5237] sm:$0xff]
        %v5239 = vld [vmem:[%s5237 + $0x8] sm:$0xff]
        %v5240 = vld [vmem:[%s5237 + $0x10] sm:$0xff]
        %v5241 = vld [vmem:[%s5237 + $0x18] sm:$0xff]
        %5242 = vset.pattern.permute.xlu0 2
        %5243 = vperm.xlu0 %5242, %v5172
        %v5244 = vpop.permute.xlu0 %5243
        %5246 = vset.pattern.permute.xlu0 2
        %5247 = vperm.xlu0 %5246, %v5173
        %v5248 = vpop.permute.xlu0 %5247
        %5250 = vset.pattern.permute.xlu0 2
        %5251 = vperm.xlu0 %5250, %v5174
        %v5252 = vpop.permute.xlu0 %5251
        %5254 = vset.pattern.permute.xlu0 2
        %5255 = vperm.xlu0 %5254, %v5175
        %v5256 = vpop.permute.xlu0 %5255
        %v5258 = vmul.f32 %v5244, %v5238
        %v5259 = vmul.f32 %v5248, %v5239
        %v5260 = vmul.f32 %v5252, %v5240
        %v5261 = vmul.f32 %v5256, %v5241
        %v5262 = vadd.f32 %v5233, %v5258
        %v5263 = vadd.f32 %v5234, %v5259
        %v5264 = vadd.f32 %v5235, %v5260
        %v5265 = vadd.f32 %v5236, %v5261
        %s5266 = scalar_lea.vmem %s5, 96
        %v5267 = vld [vmem:[%s5266] sm:$0xff]
        %v5268 = vld [vmem:[%s5266 + $0x8] sm:$0xff]
        %v5269 = vld [vmem:[%s5266 + $0x10] sm:$0xff]
        %v5270 = vld [vmem:[%s5266 + $0x18] sm:$0xff]
        %5271 = vset.pattern.permute.xlu0 3
        %5272 = vperm.xlu0 %5271, %v5172
        %v5273 = vpop.permute.xlu0 %5272
        %5275 = vset.pattern.permute.xlu0 3
        %5276 = vperm.xlu0 %5275, %v5173
        %v5277 = vpop.permute.xlu0 %5276
        %5279 = vset.pattern.permute.xlu0 3
        %5280 = vperm.xlu0 %5279, %v5174
        %v5281 = vpop.permute.xlu0 %5280
        %5283 = vset.pattern.permute.xlu0 3
        %5284 = vperm.xlu0 %5283, %v5175
        %v5285 = vpop.permute.xlu0 %5284
        %v5287 = vmul.f32 %v5273, %v5267
        %v5288 = vmul.f32 %v5277, %v5268
        %v5289 = vmul.f32 %v5281, %v5269
        %v5290 = vmul.f32 %v5285, %v5270
        %v5291 = vadd.f32 %v5262, %v5287
        %v5292 = vadd.f32 %v5263, %v5288
        %v5293 = vadd.f32 %v5264, %v5289
        %v5294 = vadd.f32 %v5265, %v5290
        %s5295 = scalar_lea.vmem %s5, 128
        %v5296 = vld [vmem:[%s5295] sm:$0xff]
        %v5297 = vld [vmem:[%s5295 + $0x8] sm:$0xff]
        %v5298 = vld [vmem:[%s5295 + $0x10] sm:$0xff]
        %v5299 = vld [vmem:[%s5295 + $0x18] sm:$0xff]
        %5300 = vset.pattern.permute.xlu0 4
        %5301 = vperm.xlu0 %5300, %v5172
        %v5302 = vpop.permute.xlu0 %5301
        %5304 = vset.pattern.permute.xlu0 4
        %5305 = vperm.xlu0 %5304, %v5173
        %v5306 = vpop.permute.xlu0 %5305
        %5308 = vset.pattern.permute.xlu0 4
        %5309 = vperm.xlu0 %5308, %v5174
        %v5310 = vpop.permute.xlu0 %5309
        %5312 = vset.pattern.permute.xlu0 4
        %5313 = vperm.xlu0 %5312, %v5175
        %v5314 = vpop.permute.xlu0 %5313
        %v5316 = vmul.f32 %v5302, %v5296
        %v5317 = vmul.f32 %v5306, %v5297
        %v5318 = vmul.f32 %v5310, %v5298
        %v5319 = vmul.f32 %v5314, %v5299
        %v5320 = vadd.f32 %v5291, %v5316
        %v5321 = vadd.f32 %v5292, %v5317
        %v5322 = vadd.f32 %v5293, %v5318
        %v5323 = vadd.f32 %v5294, %v5319
        %s5324 = scalar_lea.vmem %s5, 160
        %v5325 = vld [vmem:[%s5324] sm:$0xff]
        %v5326 = vld [vmem:[%s5324 + $0x8] sm:$0xff]
        %v5327 = vld [vmem:[%s5324 + $0x10] sm:$0xff]
        %v5328 = vld [vmem:[%s5324 + $0x18] sm:$0xff]
        %5329 = vset.pattern.permute.xlu0 5
        %5330 = vperm.xlu0 %5329, %v5172
        %v5331 = vpop.permute.xlu0 %5330
        %5333 = vset.pattern.permute.xlu0 5
        %5334 = vperm.xlu0 %5333, %v5173
        %v5335 = vpop.permute.xlu0 %5334
        %5337 = vset.pattern.permute.xlu0 5
        %5338 = vperm.xlu0 %5337, %v5174
        %v5339 = vpop.permute.xlu0 %5338
        %5341 = vset.pattern.permute.xlu0 5
        %5342 = vperm.xlu0 %5341, %v5175
        %v5343 = vpop.permute.xlu0 %5342
        %v5345 = vmul.f32 %v5331, %v5325
        %v5346 = vmul.f32 %v5335, %v5326
        %v5347 = vmul.f32 %v5339, %v5327
        %v5348 = vmul.f32 %v5343, %v5328
        %v5349 = vadd.f32 %v5320, %v5345
        %v5350 = vadd.f32 %v5321, %v5346
        %v5351 = vadd.f32 %v5322, %v5347
        %v5352 = vadd.f32 %v5323, %v5348
        %s5353 = scalar_lea.vmem %s5, 192
        %v5354 = vld [vmem:[%s5353] sm:$0xff]
        %v5355 = vld [vmem:[%s5353 + $0x8] sm:$0xff]
        %v5356 = vld [vmem:[%s5353 + $0x10] sm:$0xff]
        %v5357 = vld [vmem:[%s5353 + $0x18] sm:$0xff]
        %5358 = vset.pattern.permute.xlu0 6
        %5359 = vperm.xlu0 %5358, %v5172
        %v5360 = vpop.permute.xlu0 %5359
        %5362 = vset.pattern.permute.xlu0 6
        %5363 = vperm.xlu0 %5362, %v5173
        %v5364 = vpop.permute.xlu0 %5363
        %5366 = vset.pattern.permute.xlu0 6
        %5367 = vperm.xlu0 %5366, %v5174
        %v5368 = vpop.permute.xlu0 %5367
        %5370 = vset.pattern.permute.xlu0 6
        %5371 = vperm.xlu0 %5370, %v5175
        %v5372 = vpop.permute.xlu0 %5371
        %v5374 = vmul.f32 %v5360, %v5354
        %v5375 = vmul.f32 %v5364, %v5355
        %v5376 = vmul.f32 %v5368, %v5356
        %v5377 = vmul.f32 %v5372, %v5357
        %v5378 = vadd.f32 %v5349, %v5374
        %v5379 = vadd.f32 %v5350, %v5375
        %v5380 = vadd.f32 %v5351, %v5376
        %v5381 = vadd.f32 %v5352, %v5377
        %s5382 = scalar_lea.vmem %s5, 224
        %v5383 = vld [vmem:[%s5382] sm:$0xff]
        %v5384 = vld [vmem:[%s5382 + $0x8] sm:$0xff]
        %v5385 = vld [vmem:[%s5382 + $0x10] sm:$0xff]
        %v5386 = vld [vmem:[%s5382 + $0x18] sm:$0xff]
        %5387 = vset.pattern.permute.xlu0 7
        %5388 = vperm.xlu0 %5387, %v5172
        %v5389 = vpop.permute.xlu0 %5388
        %5391 = vset.pattern.permute.xlu0 7
        %5392 = vperm.xlu0 %5391, %v5173
        %v5393 = vpop.permute.xlu0 %5392
        %5395 = vset.pattern.permute.xlu0 7
        %5396 = vperm.xlu0 %5395, %v5174
        %v5397 = vpop.permute.xlu0 %5396
        %5399 = vset.pattern.permute.xlu0 7
        %5400 = vperm.xlu0 %5399, %v5175
        %v5401 = vpop.permute.xlu0 %5400
        %v5403 = vmul.f32 %v5389, %v5383
        %v5404 = vmul.f32 %v5393, %v5384
        %v5405 = vmul.f32 %v5397, %v5385
        %v5406 = vmul.f32 %v5401, %v5386
        %v5407 = vadd.f32 %v5378, %v5403
        %v5408 = vadd.f32 %v5379, %v5404
        %v5409 = vadd.f32 %v5380, %v5405
        %v5410 = vadd.f32 %v5381, %v5406
        %s5411 = scalar_lea.vmem %s5, 256
        %v5412 = vld [vmem:[%s5411] sm:$0xff]
        %v5413 = vld [vmem:[%s5411 + $0x8] sm:$0xff]
        %v5414 = vld [vmem:[%s5411 + $0x10] sm:$0xff]
        %v5415 = vld [vmem:[%s5411 + $0x18] sm:$0xff]
        %5416 = vset.pattern.permute.xlu0 8
        %5417 = vperm.xlu0 %5416, %v5172
        %v5418 = vpop.permute.xlu0 %5417
        %5420 = vset.pattern.permute.xlu0 8
        %5421 = vperm.xlu0 %5420, %v5173
        %v5422 = vpop.permute.xlu0 %5421
        %5424 = vset.pattern.permute.xlu0 8
        %5425 = vperm.xlu0 %5424, %v5174
        %v5426 = vpop.permute.xlu0 %5425
        %5428 = vset.pattern.permute.xlu0 8
        %5429 = vperm.xlu0 %5428, %v5175
        %v5430 = vpop.permute.xlu0 %5429
        %v5432 = vmul.f32 %v5418, %v5412
        %v5433 = vmul.f32 %v5422, %v5413
        %v5434 = vmul.f32 %v5426, %v5414
        %v5435 = vmul.f32 %v5430, %v5415
        %v5436 = vadd.f32 %v5407, %v5432
        %v5437 = vadd.f32 %v5408, %v5433
        %v5438 = vadd.f32 %v5409, %v5434
        %v5439 = vadd.f32 %v5410, %v5435
        %s5440 = scalar_lea.vmem %s5, 288
        %v5441 = vld [vmem:[%s5440] sm:$0xff]
        %v5442 = vld [vmem:[%s5440 + $0x8] sm:$0xff]
        %v5443 = vld [vmem:[%s5440 + $0x10] sm:$0xff]
        %v5444 = vld [vmem:[%s5440 + $0x18] sm:$0xff]
        %5445 = vset.pattern.permute.xlu0 9
        %5446 = vperm.xlu0 %5445, %v5172
        %v5447 = vpop.permute.xlu0 %5446
        %5449 = vset.pattern.permute.xlu0 9
        %5450 = vperm.xlu0 %5449, %v5173
        %v5451 = vpop.permute.xlu0 %5450
        %5453 = vset.pattern.permute.xlu0 9
        %5454 = vperm.xlu0 %5453, %v5174
        %v5455 = vpop.permute.xlu0 %5454
        %5457 = vset.pattern.permute.xlu0 9
        %5458 = vperm.xlu0 %5457, %v5175
        %v5459 = vpop.permute.xlu0 %5458
        %v5461 = vmul.f32 %v5447, %v5441
        %v5462 = vmul.f32 %v5451, %v5442
        %v5463 = vmul.f32 %v5455, %v5443
        %v5464 = vmul.f32 %v5459, %v5444
        %v5465 = vadd.f32 %v5436, %v5461
        %v5466 = vadd.f32 %v5437, %v5462
        %v5467 = vadd.f32 %v5438, %v5463
        %v5468 = vadd.f32 %v5439, %v5464
        %s5469 = scalar_lea.vmem %s5, 320
        %v5470 = vld [vmem:[%s5469] sm:$0xff]
        %v5471 = vld [vmem:[%s5469 + $0x8] sm:$0xff]
        %v5472 = vld [vmem:[%s5469 + $0x10] sm:$0xff]
        %v5473 = vld [vmem:[%s5469 + $0x18] sm:$0xff]
        %5474 = vset.pattern.permute.xlu0 10
        %5475 = vperm.xlu0 %5474, %v5172
        %v5476 = vpop.permute.xlu0 %5475
        %5478 = vset.pattern.permute.xlu0 10
        %5479 = vperm.xlu0 %5478, %v5173
        %v5480 = vpop.permute.xlu0 %5479
        %5482 = vset.pattern.permute.xlu0 10
        %5483 = vperm.xlu0 %5482, %v5174
        %v5484 = vpop.permute.xlu0 %5483
        %5486 = vset.pattern.permute.xlu0 10
        %5487 = vperm.xlu0 %5486, %v5175
        %v5488 = vpop.permute.xlu0 %5487
        %v5490 = vmul.f32 %v5476, %v5470
        %v5491 = vmul.f32 %v5480, %v5471
        %v5492 = vmul.f32 %v5484, %v5472
        %v5493 = vmul.f32 %v5488, %v5473
        %v5494 = vadd.f32 %v5465, %v5490
        %v5495 = vadd.f32 %v5466, %v5491
        %v5496 = vadd.f32 %v5467, %v5492
        %v5497 = vadd.f32 %v5468, %v5493
        %s5498 = scalar_lea.vmem %s5, 352
        %v5499 = vld [vmem:[%s5498] sm:$0xff]
        %v5500 = vld [vmem:[%s5498 + $0x8] sm:$0xff]
        %v5501 = vld [vmem:[%s5498 + $0x10] sm:$0xff]
        %v5502 = vld [vmem:[%s5498 + $0x18] sm:$0xff]
        %5503 = vset.pattern.permute.xlu0 11
        %5504 = vperm.xlu0 %5503, %v5172
        %v5505 = vpop.permute.xlu0 %5504
        %5507 = vset.pattern.permute.xlu0 11
        %5508 = vperm.xlu0 %5507, %v5173
        %v5509 = vpop.permute.xlu0 %5508
        %5511 = vset.pattern.permute.xlu0 11
        %5512 = vperm.xlu0 %5511, %v5174
        %v5513 = vpop.permute.xlu0 %5512
        %5515 = vset.pattern.permute.xlu0 11
        %5516 = vperm.xlu0 %5515, %v5175
        %v5517 = vpop.permute.xlu0 %5516
        %v5519 = vmul.f32 %v5505, %v5499
        %v5520 = vmul.f32 %v5509, %v5500
        %v5521 = vmul.f32 %v5513, %v5501
        %v5522 = vmul.f32 %v5517, %v5502
        %v5523 = vadd.f32 %v5494, %v5519
        %v5524 = vadd.f32 %v5495, %v5520
        %v5525 = vadd.f32 %v5496, %v5521
        %v5526 = vadd.f32 %v5497, %v5522
        %s5527 = scalar_lea.vmem %s5, 384
        %v5528 = vld [vmem:[%s5527] sm:$0xff]
        %v5529 = vld [vmem:[%s5527 + $0x8] sm:$0xff]
        %v5530 = vld [vmem:[%s5527 + $0x10] sm:$0xff]
        %v5531 = vld [vmem:[%s5527 + $0x18] sm:$0xff]
        %5532 = vset.pattern.permute.xlu0 12
        %5533 = vperm.xlu0 %5532, %v5172
        %v5534 = vpop.permute.xlu0 %5533
        %5536 = vset.pattern.permute.xlu0 12
        %5537 = vperm.xlu0 %5536, %v5173
        %v5538 = vpop.permute.xlu0 %5537
        %5540 = vset.pattern.permute.xlu0 12
        %5541 = vperm.xlu0 %5540, %v5174
        %v5542 = vpop.permute.xlu0 %5541
        %5544 = vset.pattern.permute.xlu0 12
        %5545 = vperm.xlu0 %5544, %v5175
        %v5546 = vpop.permute.xlu0 %5545
        %v5548 = vmul.f32 %v5534, %v5528
        %v5549 = vmul.f32 %v5538, %v5529
        %v5550 = vmul.f32 %v5542, %v5530
        %v5551 = vmul.f32 %v5546, %v5531
        %v5552 = vadd.f32 %v5523, %v5548
        %v5553 = vadd.f32 %v5524, %v5549
        %v5554 = vadd.f32 %v5525, %v5550
        %v5555 = vadd.f32 %v5526, %v5551
        %s5556 = scalar_lea.vmem %s5, 416
        %v5557 = vld [vmem:[%s5556] sm:$0xff]
        %v5558 = vld [vmem:[%s5556 + $0x8] sm:$0xff]
        %v5559 = vld [vmem:[%s5556 + $0x10] sm:$0xff]
        %v5560 = vld [vmem:[%s5556 + $0x18] sm:$0xff]
        %5561 = vset.pattern.permute.xlu0 13
        %5562 = vperm.xlu0 %5561, %v5172
        %v5563 = vpop.permute.xlu0 %5562
        %5565 = vset.pattern.permute.xlu0 13
        %5566 = vperm.xlu0 %5565, %v5173
        %v5567 = vpop.permute.xlu0 %5566
        %5569 = vset.pattern.permute.xlu0 13
        %5570 = vperm.xlu0 %5569, %v5174
        %v5571 = vpop.permute.xlu0 %5570
        %5573 = vset.pattern.permute.xlu0 13
        %5574 = vperm.xlu0 %5573, %v5175
        %v5575 = vpop.permute.xlu0 %5574
        %v5577 = vmul.f32 %v5563, %v5557
        %v5578 = vmul.f32 %v5567, %v5558
        %v5579 = vmul.f32 %v5571, %v5559
        %v5580 = vmul.f32 %v5575, %v5560
        %v5581 = vadd.f32 %v5552, %v5577
        %v5582 = vadd.f32 %v5553, %v5578
        %v5583 = vadd.f32 %v5554, %v5579
        %v5584 = vadd.f32 %v5555, %v5580
        %s5585 = scalar_lea.vmem %s5, 448
        %v5586 = vld [vmem:[%s5585] sm:$0xff]
        %v5587 = vld [vmem:[%s5585 + $0x8] sm:$0xff]
        %v5588 = vld [vmem:[%s5585 + $0x10] sm:$0xff]
        %v5589 = vld [vmem:[%s5585 + $0x18] sm:$0xff]
        %5590 = vset.pattern.permute.xlu0 14
        %5591 = vperm.xlu0 %5590, %v5172
        %v5592 = vpop.permute.xlu0 %5591
        %5594 = vset.pattern.permute.xlu0 14
        %5595 = vperm.xlu0 %5594, %v5173
        %v5596 = vpop.permute.xlu0 %5595
        %5598 = vset.pattern.permute.xlu0 14
        %5599 = vperm.xlu0 %5598, %v5174
        %v5600 = vpop.permute.xlu0 %5599
        %5602 = vset.pattern.permute.xlu0 14
        %5603 = vperm.xlu0 %5602, %v5175
        %v5604 = vpop.permute.xlu0 %5603
        %v5606 = vmul.f32 %v5592, %v5586
        %v5607 = vmul.f32 %v5596, %v5587
        %v5608 = vmul.f32 %v5600, %v5588
        %v5609 = vmul.f32 %v5604, %v5589
        %v5610 = vadd.f32 %v5581, %v5606
        %v5611 = vadd.f32 %v5582, %v5607
        %v5612 = vadd.f32 %v5583, %v5608
        %v5613 = vadd.f32 %v5584, %v5609
        %s5614 = scalar_lea.vmem %s5, 480
        %v5615 = vld [vmem:[%s5614] sm:$0xff]
        %v5616 = vld [vmem:[%s5614 + $0x8] sm:$0xff]
        %v5617 = vld [vmem:[%s5614 + $0x10] sm:$0xff]
        %v5618 = vld [vmem:[%s5614 + $0x18] sm:$0xff]
        %5619 = vset.pattern.permute.xlu0 15
        %5620 = vperm.xlu0 %5619, %v5172
        %v5621 = vpop.permute.xlu0 %5620
        %5623 = vset.pattern.permute.xlu0 15
        %5624 = vperm.xlu0 %5623, %v5173
        %v5625 = vpop.permute.xlu0 %5624
        %5627 = vset.pattern.permute.xlu0 15
        %5628 = vperm.xlu0 %5627, %v5174
        %v5629 = vpop.permute.xlu0 %5628
        %5631 = vset.pattern.permute.xlu0 15
        %5632 = vperm.xlu0 %5631, %v5175
        %v5633 = vpop.permute.xlu0 %5632
        %v5635 = vmul.f32 %v5621, %v5615
        %v5636 = vmul.f32 %v5625, %v5616
        %v5637 = vmul.f32 %v5629, %v5617
        %v5638 = vmul.f32 %v5633, %v5618
        %v5639 = vadd.f32 %v5610, %v5635
        %v5640 = vadd.f32 %v5611, %v5636
        %v5641 = vadd.f32 %v5612, %v5637
        %v5642 = vadd.f32 %v5613, %v5638
        %s5643 = scalar_lea.vmem %s5, 512
        %v5644 = vld [vmem:[%s5643] sm:$0xff]
        %v5645 = vld [vmem:[%s5643 + $0x8] sm:$0xff]
        %v5646 = vld [vmem:[%s5643 + $0x10] sm:$0xff]
        %v5647 = vld [vmem:[%s5643 + $0x18] sm:$0xff]
        %5648 = vset.pattern.permute.xlu0 16
        %5649 = vperm.xlu0 %5648, %v5172
        %v5650 = vpop.permute.xlu0 %5649
        %5652 = vset.pattern.permute.xlu0 16
        %5653 = vperm.xlu0 %5652, %v5173
        %v5654 = vpop.permute.xlu0 %5653
        %5656 = vset.pattern.permute.xlu0 16
        %5657 = vperm.xlu0 %5656, %v5174
        %v5658 = vpop.permute.xlu0 %5657
        %5660 = vset.pattern.permute.xlu0 16
        %5661 = vperm.xlu0 %5660, %v5175
        %v5662 = vpop.permute.xlu0 %5661
        %v5664 = vmul.f32 %v5650, %v5644
        %v5665 = vmul.f32 %v5654, %v5645
        %v5666 = vmul.f32 %v5658, %v5646
        %v5667 = vmul.f32 %v5662, %v5647
        %v5668 = vadd.f32 %v5639, %v5664
        %v5669 = vadd.f32 %v5640, %v5665
        %v5670 = vadd.f32 %v5641, %v5666
        %v5671 = vadd.f32 %v5642, %v5667
        %s5672 = scalar_lea.vmem %s5, 544
        %v5673 = vld [vmem:[%s5672] sm:$0xff]
        %v5674 = vld [vmem:[%s5672 + $0x8] sm:$0xff]
        %v5675 = vld [vmem:[%s5672 + $0x10] sm:$0xff]
        %v5676 = vld [vmem:[%s5672 + $0x18] sm:$0xff]
        %5677 = vset.pattern.permute.xlu0 17
        %5678 = vperm.xlu0 %5677, %v5172
        %v5679 = vpop.permute.xlu0 %5678
        %5681 = vset.pattern.permute.xlu0 17
        %5682 = vperm.xlu0 %5681, %v5173
        %v5683 = vpop.permute.xlu0 %5682
        %5685 = vset.pattern.permute.xlu0 17
        %5686 = vperm.xlu0 %5685, %v5174
        %v5687 = vpop.permute.xlu0 %5686
        %5689 = vset.pattern.permute.xlu0 17
        %5690 = vperm.xlu0 %5689, %v5175
        %v5691 = vpop.permute.xlu0 %5690
        %v5693 = vmul.f32 %v5679, %v5673
        %v5694 = vmul.f32 %v5683, %v5674
        %v5695 = vmul.f32 %v5687, %v5675
        %v5696 = vmul.f32 %v5691, %v5676
        %v5697 = vadd.f32 %v5668, %v5693
        %v5698 = vadd.f32 %v5669, %v5694
        %v5699 = vadd.f32 %v5670, %v5695
        %v5700 = vadd.f32 %v5671, %v5696
        %s5701 = scalar_lea.vmem %s5, 576
        %v5702 = vld [vmem:[%s5701] sm:$0xff]
        %v5703 = vld [vmem:[%s5701 + $0x8] sm:$0xff]
        %v5704 = vld [vmem:[%s5701 + $0x10] sm:$0xff]
        %v5705 = vld [vmem:[%s5701 + $0x18] sm:$0xff]
        %5706 = vset.pattern.permute.xlu0 18
        %5707 = vperm.xlu0 %5706, %v5172
        %v5708 = vpop.permute.xlu0 %5707
        %5710 = vset.pattern.permute.xlu0 18
        %5711 = vperm.xlu0 %5710, %v5173
        %v5712 = vpop.permute.xlu0 %5711
        %5714 = vset.pattern.permute.xlu0 18
        %5715 = vperm.xlu0 %5714, %v5174
        %v5716 = vpop.permute.xlu0 %5715
        %5718 = vset.pattern.permute.xlu0 18
        %5719 = vperm.xlu0 %5718, %v5175
        %v5720 = vpop.permute.xlu0 %5719
        %v5722 = vmul.f32 %v5708, %v5702
        %v5723 = vmul.f32 %v5712, %v5703
        %v5724 = vmul.f32 %v5716, %v5704
        %v5725 = vmul.f32 %v5720, %v5705
        %v5726 = vadd.f32 %v5697, %v5722
        %v5727 = vadd.f32 %v5698, %v5723
        %v5728 = vadd.f32 %v5699, %v5724
        %v5729 = vadd.f32 %v5700, %v5725
        %s5730 = scalar_lea.vmem %s5, 608
        %v5731 = vld [vmem:[%s5730] sm:$0xff]
        %v5732 = vld [vmem:[%s5730 + $0x8] sm:$0xff]
        %v5733 = vld [vmem:[%s5730 + $0x10] sm:$0xff]
        %v5734 = vld [vmem:[%s5730 + $0x18] sm:$0xff]
        %5735 = vset.pattern.permute.xlu0 19
        %5736 = vperm.xlu0 %5735, %v5172
        %v5737 = vpop.permute.xlu0 %5736
        %5739 = vset.pattern.permute.xlu0 19
        %5740 = vperm.xlu0 %5739, %v5173
        %v5741 = vpop.permute.xlu0 %5740
        %5743 = vset.pattern.permute.xlu0 19
        %5744 = vperm.xlu0 %5743, %v5174
        %v5745 = vpop.permute.xlu0 %5744
        %5747 = vset.pattern.permute.xlu0 19
        %5748 = vperm.xlu0 %5747, %v5175
        %v5749 = vpop.permute.xlu0 %5748
        %v5751 = vmul.f32 %v5737, %v5731
        %v5752 = vmul.f32 %v5741, %v5732
        %v5753 = vmul.f32 %v5745, %v5733
        %v5754 = vmul.f32 %v5749, %v5734
        %v5755 = vadd.f32 %v5726, %v5751
        %v5756 = vadd.f32 %v5727, %v5752
        %v5757 = vadd.f32 %v5728, %v5753
        %v5758 = vadd.f32 %v5729, %v5754
        %s5759 = scalar_lea.vmem %s5, 640
        %v5760 = vld [vmem:[%s5759] sm:$0xff]
        %v5761 = vld [vmem:[%s5759 + $0x8] sm:$0xff]
        %v5762 = vld [vmem:[%s5759 + $0x10] sm:$0xff]
        %v5763 = vld [vmem:[%s5759 + $0x18] sm:$0xff]
        %5764 = vset.pattern.permute.xlu0 20
        %5765 = vperm.xlu0 %5764, %v5172
        %v5766 = vpop.permute.xlu0 %5765
        %5768 = vset.pattern.permute.xlu0 20
        %5769 = vperm.xlu0 %5768, %v5173
        %v5770 = vpop.permute.xlu0 %5769
        %5772 = vset.pattern.permute.xlu0 20
        %5773 = vperm.xlu0 %5772, %v5174
        %v5774 = vpop.permute.xlu0 %5773
        %5776 = vset.pattern.permute.xlu0 20
        %5777 = vperm.xlu0 %5776, %v5175
        %v5778 = vpop.permute.xlu0 %5777
        %v5780 = vmul.f32 %v5766, %v5760
        %v5781 = vmul.f32 %v5770, %v5761
        %v5782 = vmul.f32 %v5774, %v5762
        %v5783 = vmul.f32 %v5778, %v5763
        %v5784 = vadd.f32 %v5755, %v5780
        %v5785 = vadd.f32 %v5756, %v5781
        %v5786 = vadd.f32 %v5757, %v5782
        %v5787 = vadd.f32 %v5758, %v5783
        %s5788 = scalar_lea.vmem %s5, 672
        %v5789 = vld [vmem:[%s5788] sm:$0xff]
        %v5790 = vld [vmem:[%s5788 + $0x8] sm:$0xff]
        %v5791 = vld [vmem:[%s5788 + $0x10] sm:$0xff]
        %v5792 = vld [vmem:[%s5788 + $0x18] sm:$0xff]
        %5793 = vset.pattern.permute.xlu0 21
        %5794 = vperm.xlu0 %5793, %v5172
        %v5795 = vpop.permute.xlu0 %5794
        %5797 = vset.pattern.permute.xlu0 21
        %5798 = vperm.xlu0 %5797, %v5173
        %v5799 = vpop.permute.xlu0 %5798
        %5801 = vset.pattern.permute.xlu0 21
        %5802 = vperm.xlu0 %5801, %v5174
        %v5803 = vpop.permute.xlu0 %5802
        %5805 = vset.pattern.permute.xlu0 21
        %5806 = vperm.xlu0 %5805, %v5175
        %v5807 = vpop.permute.xlu0 %5806
        %v5809 = vmul.f32 %v5795, %v5789
        %v5810 = vmul.f32 %v5799, %v5790
        %v5811 = vmul.f32 %v5803, %v5791
        %v5812 = vmul.f32 %v5807, %v5792
        %v5813 = vadd.f32 %v5784, %v5809
        %v5814 = vadd.f32 %v5785, %v5810
        %v5815 = vadd.f32 %v5786, %v5811
        %v5816 = vadd.f32 %v5787, %v5812
        %s5817 = scalar_lea.vmem %s5, 704
        %v5818 = vld [vmem:[%s5817] sm:$0xff]
        %v5819 = vld [vmem:[%s5817 + $0x8] sm:$0xff]
        %v5820 = vld [vmem:[%s5817 + $0x10] sm:$0xff]
        %v5821 = vld [vmem:[%s5817 + $0x18] sm:$0xff]
        %5822 = vset.pattern.permute.xlu0 22
        %5823 = vperm.xlu0 %5822, %v5172
        %v5824 = vpop.permute.xlu0 %5823
        %5826 = vset.pattern.permute.xlu0 22
        %5827 = vperm.xlu0 %5826, %v5173
        %v5828 = vpop.permute.xlu0 %5827
        %5830 = vset.pattern.permute.xlu0 22
        %5831 = vperm.xlu0 %5830, %v5174
        %v5832 = vpop.permute.xlu0 %5831
        %5834 = vset.pattern.permute.xlu0 22
        %5835 = vperm.xlu0 %5834, %v5175
        %v5836 = vpop.permute.xlu0 %5835
        %v5838 = vmul.f32 %v5824, %v5818
        %v5839 = vmul.f32 %v5828, %v5819
        %v5840 = vmul.f32 %v5832, %v5820
        %v5841 = vmul.f32 %v5836, %v5821
        %v5842 = vadd.f32 %v5813, %v5838
        %v5843 = vadd.f32 %v5814, %v5839
        %v5844 = vadd.f32 %v5815, %v5840
        %v5845 = vadd.f32 %v5816, %v5841
        %s5846 = scalar_lea.vmem %s5, 736
        %v5847 = vld [vmem:[%s5846] sm:$0xff]
        %v5848 = vld [vmem:[%s5846 + $0x8] sm:$0xff]
        %v5849 = vld [vmem:[%s5846 + $0x10] sm:$0xff]
        %v5850 = vld [vmem:[%s5846 + $0x18] sm:$0xff]
        %5851 = vset.pattern.permute.xlu0 23
        %5852 = vperm.xlu0 %5851, %v5172
        %v5853 = vpop.permute.xlu0 %5852
        %5855 = vset.pattern.permute.xlu0 23
        %5856 = vperm.xlu0 %5855, %v5173
        %v5857 = vpop.permute.xlu0 %5856
        %5859 = vset.pattern.permute.xlu0 23
        %5860 = vperm.xlu0 %5859, %v5174
        %v5861 = vpop.permute.xlu0 %5860
        %5863 = vset.pattern.permute.xlu0 23
        %5864 = vperm.xlu0 %5863, %v5175
        %v5865 = vpop.permute.xlu0 %5864
        %v5867 = vmul.f32 %v5853, %v5847
        %v5868 = vmul.f32 %v5857, %v5848
        %v5869 = vmul.f32 %v5861, %v5849
        %v5870 = vmul.f32 %v5865, %v5850
        %v5871 = vadd.f32 %v5842, %v5867
        %v5872 = vadd.f32 %v5843, %v5868
        %v5873 = vadd.f32 %v5844, %v5869
        %v5874 = vadd.f32 %v5845, %v5870
        %s5875 = scalar_lea.vmem %s5, 768
        %v5876 = vld [vmem:[%s5875] sm:$0xff]
        %v5877 = vld [vmem:[%s5875 + $0x8] sm:$0xff]
        %v5878 = vld [vmem:[%s5875 + $0x10] sm:$0xff]
        %v5879 = vld [vmem:[%s5875 + $0x18] sm:$0xff]
        %5880 = vset.pattern.permute.xlu0 24
        %5881 = vperm.xlu0 %5880, %v5172
        %v5882 = vpop.permute.xlu0 %5881
        %5884 = vset.pattern.permute.xlu0 24
        %5885 = vperm.xlu0 %5884, %v5173
        %v5886 = vpop.permute.xlu0 %5885
        %5888 = vset.pattern.permute.xlu0 24
        %5889 = vperm.xlu0 %5888, %v5174
        %v5890 = vpop.permute.xlu0 %5889
        %5892 = vset.pattern.permute.xlu0 24
        %5893 = vperm.xlu0 %5892, %v5175
        %v5894 = vpop.permute.xlu0 %5893
        %v5896 = vmul.f32 %v5882, %v5876
        %v5897 = vmul.f32 %v5886, %v5877
        %v5898 = vmul.f32 %v5890, %v5878
        %v5899 = vmul.f32 %v5894, %v5879
        %v5900 = vadd.f32 %v5871, %v5896
        %v5901 = vadd.f32 %v5872, %v5897
        %v5902 = vadd.f32 %v5873, %v5898
        %v5903 = vadd.f32 %v5874, %v5899
        %vm5904 = vcmask 523264
        %v5905 = vsel %vm5904, %v5900, 0.0
        %v5906 = vsel %vm5904, %v5901, 0.0
        %v5907 = vadd.f32 %v5905, %v5906
        %v5908 = vsel %vm5904, %v5902, 0.0
        %v5909 = vadd.f32 %v5907, %v5908
        %v5910 = vsel %vm5904, %v5903, 0.0
        %v5911 = vadd.f32 %v5909, %v5910
        %v5912 = vrot.slane %v5911, 4
        %v5913 = vadd.f32 %v5911, %v5912
        %v5914 = vrot.slane %v5913, 2
        %v5915 = vadd.f32 %v5913, %v5914
        %v5916 = vrot.slane %v5915, 1
        %v5917 = vadd.f32 %v5915, %v5916
        %v5918 = vld [vmem:[%s6] sm:$0x1]
        %v5919 = vadd.f32 %v5917, %v5918
        %v5920 = vmax.f32 %v5919, 0.0
        %vm5921 = vcmask 516096
        %5922 = vst.msk [vmem:[%s270] sm:$0x1] %vm5921, %v5920
        %s5923 = sand.u32 %s181, 1
        %s5924 = scalar_lea.sflag [#allocation3], %s5923
        %s5925 = sand.u32 %s181, 1
        %s5926 = scalar_lea.vmem [#allocation2], %s5925
        // Predicated region
        $region49: #{network_forward.1} parent=47 // pred_check
          %p5927 = pneg %p191
        $region50: #{network_forward.1} parent=47 // pred_check_branch
          %5929 = sbr.rel (%p5927) target = $region52
        $region51: #{network_forward.1} parent=47 // pred_region
          %s5931 = ssub.s32 16, 16
          %5932 = vsyncadd %s5924, %s5931
          %s5933 = smul.addr %s21, 16
          %s5934 = scalar_lea.hbm %s7, %s5933
          %s5936 = sshll.u32 %s5926, 4
          %s5937 = int_to_ptr.vmem [resolvable:$true] %s5936
          %5939 = dma.vmem_to_hbm [thread:$0]  %s5937, 16, %s5934, %s5924
        $region52: #{network_forward.1} parent=47 // pred_fallthru
          _
      $region48: #{network_forward.1} parent=5 // pred_fallthru
        _
      %p5940 = scmp.le.s32.totalorder 2, %s16
      // Predicated region
      $region53: #{network_forward.1} parent=5 // pred_check
        %p5941 = pneg %p5940
      $region54: #{network_forward.1} parent=5 // pred_check_branch
        %5943 = sbr.rel (%p5941) target = $region56
      $region55: #{network_forward.1} parent=5 // pred_region
        %s5944 = ssub.s32 %s16, 2
        // Predicated region
        $region57: #{network_forward.1} parent=55 // pred_check
          %p5945 = pneg %p197
        $region58: #{network_forward.1} parent=55 // pred_check_branch
          %5947 = sbr.rel (%p5945) target = $region60
        $region59: #{network_forward.1} parent=55 // pred_region
          %s5948 = sand.u32 %s182, 1
          %s5949 = scalar_lea.sflag [#allocation3], %s5948
          %s5950 = sand.u32 %s182, 1
          %s5951 = scalar_lea.vmem [#allocation2], %s5950
          %5952 = dma.done %s5949, 16
        $region60: #{network_forward.1} parent=55 // pred_fallthru
          _
      $region56: #{network_forward.1} parent=5 // pred_fallthru
        _
    $region6: #{network_forward.1} parent=1 // loop_footer
      %s20 = sadd.s32 1, %s16
    $region7: #{network_forward.1} parent=1 // loop_footer_branch
      %15 = sbr.rel target = $region3
    $region8: #{network_forward.1} parent=1 // loop_exit
      _
    %5953 = vsyncpa [#allocation3], 1
    %s5954 = scalar_lea.sflag [#allocation3], 1
    %5955 = vsyncpa %s5954, 1

</llo_original>
